<compile_context>
chip_gen: v7x
topology: tpu7x:2x2x1
jax: 0.10.0
libtpu: 0.0.40
codegen_flags: <defaults>
</compile_context>

<pallas_src>
import functools

import jax
import jax.numpy as jnp
from jax.experimental import pallas as pl
from jax.experimental.pallas import tpu as pltpu


def _fused_sr_kernel(x_ref, w1_ref, b1_ref, w2_ref, b2_ref, w3_ref, b3_ref,
                     o_ref,
                     xp_ref, acc1_ref, patch1_ref, h2p_ref, patch3_ref,
                     *, K1, K3):
    """Fused conv1(9x9)+ReLU -> conv2(1x1)+ReLU -> conv3(5x5), grid over kh.

    x_ref     : (N, H, W, C0)            f32 input (grid-invariant block)
    w1_ref    : (1, K1*C0, C1)           bf16, row kh of conv1 weights
    w2_ref    : (C1, C2)                 bf16
    w3_ref    : (K3*K3*C2, C3)           bf16
    b*_ref    : (1, C*)                  f32 biases
    o_ref     : (N, H, W, C3)            f32 output (written on last step)
    xp_ref    : (N, H+K1-1, W+K1-1, C0)  f32 padded-input scratch
    acc1_ref  : (N*H*W, C1)              f32 conv1 accumulator
    patch1_ref: (N*H*W, K1*C0)           bf16 conv1 im2col slab (per kh)
    h2p_ref   : (N, H+K3-1, W+K3-1, C2)  bf16 padded conv2-output scratch
    patch3_ref: (N*H*W, K3*K3*C2)        bf16 conv3 im2col buffer
    """
    N, H, W, C0 = x_ref.shape
    C1 = w1_ref.shape[2]
    C2 = w2_ref.shape[1]
    C3 = w3_ref.shape[1]
    M = N * H * W
    P1 = (K1 - 1) // 2
    P3 = (K3 - 1) // 2
    Wp1 = W + K1 - 1
    kh = pl.program_id(0)

    # ---- one-time init: pad input into VMEM (halo-only zero), zero acc ----
    @pl.when(kh == 0)
    def _init():
        if P1 > 0:
            xp_ref[:, :P1, :, :] = jnp.zeros((N, P1, Wp1, C0), jnp.float32)
            xp_ref[:, P1 + H:, :, :] = jnp.zeros((N, P1, Wp1, C0), jnp.float32)
            xp_ref[:, P1:P1 + H, :P1, :] = jnp.zeros((N, H, P1, C0), jnp.float32)
            xp_ref[:, P1:P1 + H, P1 + W:, :] = jnp.zeros((N, H, P1, C0), jnp.float32)
        xp_ref[:, P1:P1 + H, P1:P1 + W, :] = x_ref[...]
        acc1_ref[...] = jnp.zeros_like(acc1_ref)

    # ---- conv1, one kh row per grid step: im2col over kw, one long-K matmul
    for kw in range(K1):
        patch1_ref[:, kw * C0:(kw + 1) * C0] = (
            xp_ref[:, pl.ds(kh, H), kw:kw + W, :]
            .reshape(M, C0).astype(jnp.bfloat16))
    acc1_ref[...] += jnp.dot(patch1_ref[...], w1_ref[0],
                             preferred_element_type=jnp.float32)

    # ---- epilogue (last step): ReLU -> conv2 1x1 -> ReLU -> conv3 5x5 ----
    @pl.when(kh == K1 - 1)
    def _epilogue():
        h1 = jnp.maximum(acc1_ref[...] + b1_ref[...], 0.0).astype(jnp.bfloat16)

        h2 = jnp.dot(h1, w2_ref[...], preferred_element_type=jnp.float32)
        h2 = jnp.maximum(h2 + b2_ref[...], 0.0).astype(jnp.bfloat16)

        Wp3 = W + K3 - 1
        if P3 > 0:
            h2p_ref[:, :P3, :, :] = jnp.zeros((N, P3, Wp3, C2), jnp.bfloat16)
            h2p_ref[:, P3 + H:, :, :] = jnp.zeros((N, P3, Wp3, C2), jnp.bfloat16)
            h2p_ref[:, P3:P3 + H, :P3, :] = jnp.zeros((N, H, P3, C2), jnp.bfloat16)
            h2p_ref[:, P3:P3 + H, P3 + W:, :] = jnp.zeros((N, H, P3, C2), jnp.bfloat16)
        h2p_ref[:, P3:P3 + H, P3:P3 + W, :] = h2.reshape(N, H, W, C2)

        # im2col for conv3: (M, K3*K3*C2) bf16, then a single matmul.
        for i in range(K3):
            for j in range(K3):
                col = (i * K3 + j) * C2
                patch3_ref[:, col:col + C2] = (
                    h2p_ref[:, i:i + H, j:j + W, :].reshape(M, C2))
        out = jnp.dot(patch3_ref[...], w3_ref[...],
                      preferred_element_type=jnp.float32)
        # lane-dense (C3 = 256) store of the only HBM output
        o_ref[...] = (out + b3_ref[...]).reshape(N, H, W, C3)


def super_resolution_fused(x_nhwc, params):
    """Single fused pallas_call.  x: (N,H,W,256) f32 -> (N,H,W,256) f32."""
    N, H, W, C0 = x_nhwc.shape
    w1 = params["w1"]   # (9, 9, 256, 64)  HWIO
    w2 = params["w2"]   # (1, 1, 64, 32)
    w3 = params["w3"]   # (5, 5, 32, 256)
    K1, C1 = w1.shape[0], w1.shape[3]
    C2 = w2.shape[3]
    K3, C3 = w3.shape[0], w3.shape[3]

    # Host-side reshapes so the kernel never reshapes weights.
    w1r = w1.reshape(K1, K1 * C0, C1).astype(jnp.bfloat16)      # (9, 2304, 64)
    w2r = w2.reshape(C1, C2).astype(jnp.bfloat16)                # (64, 32)
    w3r = w3.reshape(K3 * K3 * C2, C3).astype(jnp.bfloat16)      # (800, 256)
    b1 = params["b1"].reshape(1, C1).astype(jnp.float32)
    b2 = params["b2"].reshape(1, C2).astype(jnp.float32)
    b3 = params["b3"].reshape(1, C3).astype(jnp.float32)

    kern = functools.partial(_fused_sr_kernel, K1=K1, K3=K3)

    return pl.pallas_call(
        kern,
        out_shape=jax.ShapeDtypeStruct((N, H, W, C3), jnp.float32),
        grid_spec=pltpu.PrefetchScalarGridSpec(
            num_scalar_prefetch=0,
            grid=(K1,),
            in_specs=[
                pl.BlockSpec((N, H, W, C0), lambda k: (0, 0, 0, 0)),
                pl.BlockSpec((1, K1 * C0, C1), lambda k: (k, 0, 0)),
                pl.BlockSpec((1, C1), lambda k: (0, 0)),
                pl.BlockSpec((C1, C2), lambda k: (0, 0)),
                pl.BlockSpec((1, C2), lambda k: (0, 0)),
                pl.BlockSpec((K3 * K3 * C2, C3), lambda k: (0, 0)),
                pl.BlockSpec((1, C3), lambda k: (0, 0)),
            ],
            out_specs=pl.BlockSpec((N, H, W, C3), lambda k: (0, 0, 0, 0)),
            scratch_shapes=[
                pltpu.VMEM((N, H + K1 - 1, W + K1 - 1, C0), jnp.float32),
                pltpu.VMEM((N * H * W, C1), jnp.float32),
                pltpu.VMEM((N * H * W, K1 * C0), jnp.bfloat16),
                pltpu.VMEM((N, H + K3 - 1, W + K3 - 1, C2), jnp.bfloat16),
                pltpu.VMEM((N * H * W, K3 * K3 * C2), jnp.bfloat16),
            ],
        ),
        compiler_params=pltpu.CompilerParams(
            dimension_semantics=("arbitrary",),
            vmem_limit_bytes=32 * 1024 * 1024,
        ),
    )(x_nhwc, w1r, b1, w2r, b2, w3r, b3)


def init_params(key):
    """Deterministic parameters with the shapes implied by the nn.Module."""
    ks = jax.random.split(key, 6)

    def conv_w(k, K, cin, cout):
        s = 1.0 / float(K * K * cin) ** 0.5
        return jax.random.uniform(k, (K, K, cin, cout), jnp.float32, -s, s)

    def conv_b(k, cout):
        return jax.random.uniform(k, (cout,), jnp.float32, -0.05, 0.05)

    return {
        "w1": conv_w(ks[0], 9, 256, 64), "b1": conv_b(ks[1], 64),
        "w2": conv_w(ks[2], 1, 64, 32), "b2": conv_b(ks[3], 32),
        "w3": conv_w(ks[4], 5, 32, 256), "b3": conv_b(ks[5], 256),
    }


@jax.jit
def super_resolution_forward(x_nchw, params):
    """Matches SuperResolutionNet.forward: NCHW in -> NCHW out."""
    x = jnp.transpose(x_nchw, (0, 2, 3, 1))          # NCHW -> NHWC
    y = super_resolution_fused(x, params)            # fused conv1/2/3
    return jnp.transpose(y, (0, 3, 1, 2))            # NHWC -> NCHW


def reference_forward(x_nchw, params):
    """Pure-XLA f32 reference for validation."""
    def conv(x, w, b, relu):
        y = jax.lax.conv_general_dilated(
            x, w, window_strides=(1, 1), padding="SAME",
            dimension_numbers=("NHWC", "HWIO", "NHWC"))
        y = y + b
        return jnp.maximum(y, 0.0) if relu else y

    x = jnp.transpose(x_nchw, (0, 2, 3, 1))
    x = conv(x, params["w1"], params["b1"], True)
    x = conv(x, params["w2"], params["b2"], True)
    x = conv(x, params["w3"], params["b3"], False)
    return jnp.transpose(x, (0, 3, 1, 2))


if __name__ == "__main__":
    key = jax.random.PRNGKey(0)
    pkey, xkey = jax.random.split(key)
    params = init_params(pkey)

    # Small spatial size (in/out channels fixed at 256 by the module).
    x = jax.random.normal(xkey, (2, 256, 8, 8), jnp.float32)  # NCHW like PyTorch

    out = super_resolution_forward(x, params)
    out = jax.block_until_ready(out)
    assert out.shape == (2, 256, 8, 8), out.shape
    assert out.dtype == jnp.float32

    ref = jax.block_until_ready(reference_forward(x, params))
    rel_err = float(jnp.max(jnp.abs(out - ref)) / (jnp.max(jnp.abs(ref)) + 1e-6))
    assert rel_err < 5e-2, f"relative error too large: {rel_err}"

    print("KERNEL_OK")
</pallas_src>

<mosaic_0001>
module attributes {stable_mosaic.version = 11 : i64} {
  func.func @_fused_sr_kernel(%arg0: i32, %arg1: memref<2x8x8x256xf32, #tpu.memory_space<vmem>>, %arg2: memref<1x2304x64xbf16, #tpu.memory_space<vmem>>, %arg3: memref<1x64xf32, #tpu.memory_space<vmem>>, %arg4: memref<64x32xbf16, #tpu.memory_space<vmem>>, %arg5: memref<1x32xf32, #tpu.memory_space<vmem>>, %arg6: memref<800x256xbf16, #tpu.memory_space<vmem>>, %arg7: memref<1x256xf32, #tpu.memory_space<vmem>>, %arg8: memref<2x8x8x256xf32, #tpu.memory_space<vmem>>, %arg9: memref<2x16x16x256xf32, #tpu.memory_space<vmem>>, %arg10: memref<128x64xf32, #tpu.memory_space<vmem>>, %arg11: memref<128x2304xbf16, #tpu.memory_space<vmem>>, %arg12: memref<2x12x12x32xbf16, #tpu.memory_space<vmem>>, %arg13: memref<128x800xbf16, #tpu.memory_space<vmem>>) attributes {dimension_semantics = [#tpu.dimension_semantics<arbitrary>], iteration_bounds = array<i64: 9>, scalar_prefetch = 0 : i64, scratch_operands = 5 : i64, tpu.core_type = #tpu.core_type<tc>, window_params = [{pipeline_mode = #tpu.pipeline_mode<synchronous>, transform_indices = @transform_0, window_bounds = array<i64: 2, 8, 8, 256>}, {transform_indices = @transform_1, window_bounds = array<i64: 1, 2304, 64>}, {pipeline_mode = #tpu.pipeline_mode<synchronous>, transform_indices = @transform_2, window_bounds = array<i64: 1, 64>}, {pipeline_mode = #tpu.pipeline_mode<synchronous>, transform_indices = @transform_3, window_bounds = array<i64: 64, 32>}, {pipeline_mode = #tpu.pipeline_mode<synchronous>, transform_indices = @transform_4, window_bounds = array<i64: 1, 32>}, {pipeline_mode = #tpu.pipeline_mode<synchronous>, transform_indices = @transform_5, window_bounds = array<i64: 800, 256>}, {pipeline_mode = #tpu.pipeline_mode<synchronous>, transform_indices = @transform_6, window_bounds = array<i64: 1, 256>}, {pipeline_mode = #tpu.pipeline_mode<synchronous>, transform_indices = @transform_7, window_bounds = array<i64: 2, 8, 8, 256>}]} {
    %c0_i32 = arith.constant 0 : i32
    %0 = arith.cmpi eq, %arg0, %c0_i32 : i32
    %1 = arith.extui %0 : i1 to i32
    %c0_i32_0 = arith.constant 0 : i32
    %2 = arith.cmpi ne, %1, %c0_i32_0 : i32
    scf.if %2 {
      %cst_39 = arith.constant 0.000000e+00 : f32
      %58 = vector.broadcast %cst_39 : f32 to vector<2x4x16x256xf32>
      %c0_40 = arith.constant 0 : index
      %c0_41 = arith.constant 0 : index
      %c0_42 = arith.constant 0 : index
      %c0_43 = arith.constant 0 : index
      %59 = vector.load %arg9[%c0_40, %c0_41, %c0_42, %c0_43] : memref<2x16x16x256xf32, #tpu.memory_space<vmem>>, vector<2x4x16x256xf32>
      tpu.vector_store %arg9[%c0_40, %c0_41, %c0_42, %c0_43], %58 {strides = array<i32>} : memref<2x16x16x256xf32, #tpu.memory_space<vmem>>, vector<2x4x16x256xf32>,
      %cst_44 = arith.constant 0.000000e+00 : f32
      %60 = vector.broadcast %cst_44 : f32 to vector<2x4x16x256xf32>
      %c0_45 = arith.constant 0 : index
      %c12 = arith.constant 12 : index
      %c0_46 = arith.constant 0 : index
      %c0_47 = arith.constant 0 : index
      %61 = vector.load %arg9[%c0_45, %c12, %c0_46, %c0_47] : memref<2x16x16x256xf32, #tpu.memory_space<vmem>>, vector<2x4x16x256xf32>
      tpu.vector_store %arg9[%c0_45, %c12, %c0_46, %c0_47], %60 {strides = array<i32>} : memref<2x16x16x256xf32, #tpu.memory_space<vmem>>, vector<2x4x16x256xf32>,
      %cst_48 = arith.constant 0.000000e+00 : f32
      %62 = vector.broadcast %cst_48 : f32 to vector<2x8x4x256xf32>
      %c0_49 = arith.constant 0 : index
      %c4_50 = arith.constant 4 : index
      %c0_51 = arith.constant 0 : index
      %c0_52 = arith.constant 0 : index
      %63 = vector.load %arg9[%c0_49, %c4_50, %c0_51, %c0_52] : memref<2x16x16x256xf32, #tpu.memory_space<vmem>>, vector<2x8x4x256xf32>
      tpu.vector_store %arg9[%c0_49, %c4_50, %c0_51, %c0_52], %62 {strides = array<i32>} : memref<2x16x16x256xf32, #tpu.memory_space<vmem>>, vector<2x8x4x256xf32>,
      %cst_53 = arith.constant 0.000000e+00 : f32
      %64 = vector.broadcast %cst_53 : f32 to vector<2x8x4x256xf32>
      %c0_54 = arith.constant 0 : index
      %c4_55 = arith.constant 4 : index
      %c12_56 = arith.constant 12 : index
      %c0_57 = arith.constant 0 : index
      %65 = vector.load %arg9[%c0_54, %c4_55, %c12_56, %c0_57] : memref<2x16x16x256xf32, #tpu.memory_space<vmem>>, vector<2x8x4x256xf32>
      tpu.vector_store %arg9[%c0_54, %c4_55, %c12_56, %c0_57], %64 {strides = array<i32>} : memref<2x16x16x256xf32, #tpu.memory_space<vmem>>, vector<2x8x4x256xf32>,
      %c0_58 = arith.constant 0 : index
      %c0_59 = arith.constant 0 : index
      %c0_60 = arith.constant 0 : index
      %c0_61 = arith.constant 0 : index
      %66 = vector.load %arg1[%c0_58, %c0_59, %c0_60, %c0_61] : memref<2x8x8x256xf32, #tpu.memory_space<vmem>>, vector<2x8x8x256xf32>
      %c0_62 = arith.constant 0 : index
      %c4_63 = arith.constant 4 : index
      %c4_64 = arith.constant 4 : index
      %c0_65 = arith.constant 0 : index
      %67 = vector.load %arg9[%c0_62, %c4_63, %c4_64, %c0_65] : memref<2x16x16x256xf32, #tpu.memory_space<vmem>>, vector<2x8x8x256xf32>
      tpu.vector_store %arg9[%c0_62, %c4_63, %c4_64, %c0_65], %66 {strides = array<i32>} : memref<2x16x16x256xf32, #tpu.memory_space<vmem>>, vector<2x8x8x256xf32>,
      %cst_66 = arith.constant 0.000000e+00 : f32
      %68 = vector.broadcast %cst_66 : f32 to vector<128x64xf32>
      %c0_67 = arith.constant 0 : index
      %c0_68 = arith.constant 0 : index
      %69 = vector.load %arg10[%c0_67, %c0_68] : memref<128x64xf32, #tpu.memory_space<vmem>>, vector<128x64xf32>
      tpu.vector_store %arg10[%c0_67, %c0_68], %68 {strides = array<i32>} : memref<128x64xf32, #tpu.memory_space<vmem>>, vector<128x64xf32>,
    } else {
    }
    %c0 = arith.constant 0 : index
    %3 = arith.index_cast %arg0 : i32 to index
    %c0_1 = arith.constant 0 : index
    %c0_2 = arith.constant 0 : index
    %4 = vector.load %arg9[%c0, %3, %c0_1, %c0_2] : memref<2x16x16x256xf32, #tpu.memory_space<vmem>>, vector<2x8x8x256xf32>
    %5 = vector.shape_cast %4 : vector<2x8x8x256xf32> to vector<128x256xf32>
    %6 = arith.truncf %5 : vector<128x256xf32> to vector<128x256xbf16>
    %c0_3 = arith.constant 0 : index
    %c0_4 = arith.constant 0 : index
    %7 = vector.load %arg11[%c0_3, %c0_4] : memref<128x2304xbf16, #tpu.memory_space<vmem>>, vector<128x256xbf16>
    tpu.vector_store %arg11[%c0_3, %c0_4], %6 {strides = array<i32>} : memref<128x2304xbf16, #tpu.memory_space<vmem>>, vector<128x256xbf16>,
    %c0_5 = arith.constant 0 : index
    %8 = arith.index_cast %arg0 : i32 to index
    %c1 = arith.constant 1 : index
    %c0_6 = arith.constant 0 : index
    %9 = vector.load %arg9[%c0_5, %8, %c1, %c0_6] : memref<2x16x16x256xf32, #tpu.memory_space<vmem>>, vector<2x8x8x256xf32>
    %10 = vector.shape_cast %9 : vector<2x8x8x256xf32> to vector<128x256xf32>
    %11 = arith.truncf %10 : vector<128x256xf32> to vector<128x256xbf16>
    %c0_7 = arith.constant 0 : index
    %c256 = arith.constant 256 : index
    %12 = vector.load %arg11[%c0_7, %c256] : memref<128x2304xbf16, #tpu.memory_space<vmem>>, vector<128x256xbf16>
    tpu.vector_store %arg11[%c0_7, %c256], %11 {strides = array<i32>} : memref<128x2304xbf16, #tpu.memory_space<vmem>>, vector<128x256xbf16>,
    %c0_8 = arith.constant 0 : index
    %13 = arith.index_cast %arg0 : i32 to index
    %c2 = arith.constant 2 : index
    %c0_9 = arith.constant 0 : index
    %14 = vector.load %arg9[%c0_8, %13, %c2, %c0_9] : memref<2x16x16x256xf32, #tpu.memory_space<vmem>>, vector<2x8x8x256xf32>
    %15 = vector.shape_cast %14 : vector<2x8x8x256xf32> to vector<128x256xf32>
    %16 = arith.truncf %15 : vector<128x256xf32> to vector<128x256xbf16>
    %c0_10 = arith.constant 0 : index
    %c512 = arith.constant 512 : index
    %17 = vector.load %arg11[%c0_10, %c512] : memref<128x2304xbf16, #tpu.memory_space<vmem>>, vector<128x256xbf16>
    tpu.vector_store %arg11[%c0_10, %c512], %16 {strides = array<i32>} : memref<128x2304xbf16, #tpu.memory_space<vmem>>, vector<128x256xbf16>,
    %c0_11 = arith.constant 0 : index
    %18 = arith.index_cast %arg0 : i32 to index
    %c3 = arith.constant 3 : index
    %c0_12 = arith.constant 0 : index
    %19 = vector.load %arg9[%c0_11, %18, %c3, %c0_12] : memref<2x16x16x256xf32, #tpu.memory_space<vmem>>, vector<2x8x8x256xf32>
    %20 = vector.shape_cast %19 : vector<2x8x8x256xf32> to vector<128x256xf32>
    %21 = arith.truncf %20 : vector<128x256xf32> to vector<128x256xbf16>
    %c0_13 = arith.constant 0 : index
    %c768 = arith.constant 768 : index
    %22 = vector.load %arg11[%c0_13, %c768] : memref<128x2304xbf16, #tpu.memory_space<vmem>>, vector<128x256xbf16>
    tpu.vector_store %arg11[%c0_13, %c768], %21 {strides = array<i32>} : memref<128x2304xbf16, #tpu.memory_space<vmem>>, vector<128x256xbf16>,
    %c0_14 = arith.constant 0 : index
    %23 = arith.index_cast %arg0 : i32 to index
    %c4 = arith.constant 4 : index
    %c0_15 = arith.constant 0 : index
    %24 = vector.load %arg9[%c0_14, %23, %c4, %c0_15] : memref<2x16x16x256xf32, #tpu.memory_space<vmem>>, vector<2x8x8x256xf32>
    %25 = vector.shape_cast %24 : vector<2x8x8x256xf32> to vector<128x256xf32>
    %26 = arith.truncf %25 : vector<128x256xf32> to vector<128x256xbf16>
    %c0_16 = arith.constant 0 : index
    %c1024 = arith.constant 1024 : index
    %27 = vector.load %arg11[%c0_16, %c1024] : memref<128x2304xbf16, #tpu.memory_space<vmem>>, vector<128x256xbf16>
    tpu.vector_store %arg11[%c0_16, %c1024], %26 {strides = array<i32>} : memref<128x2304xbf16, #tpu.memory_space<vmem>>, vector<128x256xbf16>,
    %c0_17 = arith.constant 0 : index
    %28 = arith.index_cast %arg0 : i32 to index
    %c5 = arith.constant 5 : index
    %c0_18 = arith.constant 0 : index
    %29 = vector.load %arg9[%c0_17, %28, %c5, %c0_18] : memref<2x16x16x256xf32, #tpu.memory_space<vmem>>, vector<2x8x8x256xf32>
    %30 = vector.shape_cast %29 : vector<2x8x8x256xf32> to vector<128x256xf32>
    %31 = arith.truncf %30 : vector<128x256xf32> to vector<128x256xbf16>
    %c0_19 = arith.constant 0 : index
    %c1280 = arith.constant 1280 : index
    %32 = vector.load %arg11[%c0_19, %c1280] : memref<128x2304xbf16, #tpu.memory_space<vmem>>, vector<128x256xbf16>
    tpu.vector_store %arg11[%c0_19, %c1280], %31 {strides = array<i32>} : memref<128x2304xbf16, #tpu.memory_space<vmem>>, vector<128x256xbf16>,
    %c0_20 = arith.constant 0 : index
    %33 = arith.index_cast %arg0 : i32 to index
    %c6 = arith.constant 6 : index
    %c0_21 = arith.constant 0 : index
    %34 = vector.load %arg9[%c0_20, %33, %c6, %c0_21] : memref<2x16x16x256xf32, #tpu.memory_space<vmem>>, vector<2x8x8x256xf32>
    %35 = vector.shape_cast %34 : vector<2x8x8x256xf32> to vector<128x256xf32>
    %36 = arith.truncf %35 : vector<128x256xf32> to vector<128x256xbf16>
    %c0_22 = arith.constant 0 : index
    %c1536 = arith.constant 1536 : index
    %37 = vector.load %arg11[%c0_22, %c1536] : memref<128x2304xbf16, #tpu.memory_space<vmem>>, vector<128x256xbf16>
    tpu.vector_store %arg11[%c0_22, %c1536], %36 {strides = array<i32>} : memref<128x2304xbf16, #tpu.memory_space<vmem>>, vector<128x256xbf16>,
    %c0_23 = arith.constant 0 : index
    %38 = arith.index_cast %arg0 : i32 to index
    %c7 = arith.constant 7 : index
    %c0_24 = arith.constant 0 : index
    %39 = vector.load %arg9[%c0_23, %38, %c7, %c0_24] : memref<2x16x16x256xf32, #tpu.memory_space<vmem>>, vector<2x8x8x256xf32>
    %40 = vector.shape_cast %39 : vector<2x8x8x256xf32> to vector<128x256xf32>
    %41 = arith.truncf %40 : vector<128x256xf32> to vector<128x256xbf16>
    %c0_25 = arith.constant 0 : index
    %c1792 = arith.constant 1792 : index
    %42 = vector.load %arg11[%c0_25, %c1792] : memref<128x2304xbf16, #tpu.memory_space<vmem>>, vector<128x256xbf16>
    tpu.vector_store %arg11[%c0_25, %c1792], %41 {strides = array<i32>} : memref<128x2304xbf16, #tpu.memory_space<vmem>>, vector<128x256xbf16>,
    %c0_26 = arith.constant 0 : index
    %43 = arith.index_cast %arg0 : i32 to index
    %c8 = arith.constant 8 : index
    %c0_27 = arith.constant 0 : index
    %44 = vector.load %arg9[%c0_26, %43, %c8, %c0_27] : memref<2x16x16x256xf32, #tpu.memory_space<vmem>>, vector<2x8x8x256xf32>
    %45 = vector.shape_cast %44 : vector<2x8x8x256xf32> to vector<128x256xf32>
    %46 = arith.truncf %45 : vector<128x256xf32> to vector<128x256xbf16>
    %c0_28 = arith.constant 0 : index
    %c2048 = arith.constant 2048 : index
    %47 = vector.load %arg11[%c0_28, %c2048] : memref<128x2304xbf16, #tpu.memory_space<vmem>>, vector<128x256xbf16>
    tpu.vector_store %arg11[%c0_28, %c2048], %46 {strides = array<i32>} : memref<128x2304xbf16, #tpu.memory_space<vmem>>, vector<128x256xbf16>,
    %c0_29 = arith.constant 0 : index
    %c0_30 = arith.constant 0 : index
    %48 = vector.load %arg10[%c0_29, %c0_30] : memref<128x64xf32, #tpu.memory_space<vmem>>, vector<128x64xf32>
    %c0_31 = arith.constant 0 : index
    %c0_32 = arith.constant 0 : index
    %49 = vector.load %arg11[%c0_31, %c0_32] : memref<128x2304xbf16, #tpu.memory_space<vmem>>, vector<128x2304xbf16>
    %c0_33 = arith.constant 0 : index
    %c0_34 = arith.constant 0 : index
    %c0_35 = arith.constant 0 : index
    %50 = vector.load %arg2[%c0_33, %c0_34, %c0_35] : memref<1x2304x64xbf16, #tpu.memory_space<vmem>>, vector<1x2304x64xbf16>
    %51 = vector.shape_cast %50 : vector<1x2304x64xbf16> to vector<2304x64xbf16>
    %cst = arith.constant dense<0.000000e+00> : vector<128x64xf32>
    %52 = tpu.matmul %49, %51, %cst {dimension_numbers = #tpu.dot_dimension_numbers<[1], [0], [0], [1], [0, 0, 1, 1], [], []>} : vector<128x2304xbf16>, vector<2304x64xbf16>, vector<128x64xf32> -> vector<128x64xf32>
    %53 = arith.addf %48, %52 : vector<128x64xf32>
    %c0_36 = arith.constant 0 : index
    %c0_37 = arith.constant 0 : index
    %54 = vector.load %arg10[%c0_36, %c0_37] : memref<128x64xf32, #tpu.memory_space<vmem>>, vector<128x64xf32>
    tpu.vector_store %arg10[%c0_36, %c0_37], %53 {strides = array<i32>} : memref<128x64xf32, #tpu.memory_space<vmem>>, vector<128x64xf32>,
    %c8_i32 = arith.constant 8 : i32
    %55 = arith.cmpi eq, %arg0, %c8_i32 : i32
    %56 = arith.extui %55 : i1 to i32
    %c0_i32_38 = arith.constant 0 : i32
    %57 = arith.cmpi ne, %56, %c0_i32_38 : i32
    scf.if %57 {
      %c0_39 = arith.constant 0 : index
      %c0_40 = arith.constant 0 : index
      %58 = vector.load %arg10[%c0_39, %c0_40] : memref<128x64xf32, #tpu.memory_space<vmem>>, vector<128x64xf32>
      %c0_41 = arith.constant 0 : index
      %c0_42 = arith.constant 0 : index
      %59 = vector.load %arg3[%c0_41, %c0_42] : memref<1x64xf32, #tpu.memory_space<vmem>>, vector<1x64xf32>
      %60 = vector.broadcast %59 : vector<1x64xf32> to vector<128x64xf32>
      %61 = arith.addf %58, %60 : vector<128x64xf32>
      %cst_43 = arith.constant 0.000000e+00 : f32
      %62 = vector.broadcast %cst_43 : f32 to vector<128x64xf32>
      %63 = arith.maximumf %61, %62 : vector<128x64xf32>
      %64 = arith.truncf %63 : vector<128x64xf32> to vector<128x64xbf16>
      %c0_44 = arith.constant 0 : index
      %c0_45 = arith.constant 0 : index
      %65 = vector.load %arg4[%c0_44, %c0_45] : memref<64x32xbf16, #tpu.memory_space<vmem>>, vector<64x32xbf16>
      %cst_46 = arith.constant dense<0.000000e+00> : vector<128x32xf32>
      %66 = tpu.matmul %64, %65, %cst_46 {dimension_numbers = #tpu.dot_dimension_numbers<[1], [0], [0], [1], [0, 0, 1, 1], [], []>} : vector<128x64xbf16>, vector<64x32xbf16>, vector<128x32xf32> -> vector<128x32xf32>
      %c0_47 = arith.constant 0 : index
      %c0_48 = arith.constant 0 : index
      %67 = vector.load %arg5[%c0_47, %c0_48] : memref<1x32xf32, #tpu.memory_space<vmem>>, vector<1x32xf32>
      %68 = vector.broadcast %67 : vector<1x32xf32> to vector<128x32xf32>
      %69 = arith.addf %66, %68 : vector<128x32xf32>
      %cst_49 = arith.constant 0.000000e+00 : f32
      %70 = vector.broadcast %cst_49 : f32 to vector<128x32xf32>
      %71 = arith.maximumf %69, %70 : vector<128x32xf32>
      %72 = arith.truncf %71 : vector<128x32xf32> to vector<128x32xbf16>
      %cst_50 = arith.constant 0.000000e+00 : bf16
      %73 = vector.broadcast %cst_50 : bf16 to vector<2x2x12x32xbf16>
      %c0_51 = arith.constant 0 : index
      %c0_52 = arith.constant 0 : index
      %c0_53 = arith.constant 0 : index
      %c0_54 = arith.constant 0 : index
      %74 = vector.load %arg12[%c0_51, %c0_52, %c0_53, %c0_54] : memref<2x12x12x32xbf16, #tpu.memory_space<vmem>>, vector<2x2x12x32xbf16>
      tpu.vector_store %arg12[%c0_51, %c0_52, %c0_53, %c0_54], %73 {strides = array<i32>} : memref<2x12x12x32xbf16, #tpu.memory_space<vmem>>, vector<2x2x12x32xbf16>,
      %cst_55 = arith.constant 0.000000e+00 : bf16
      %75 = vector.broadcast %cst_55 : bf16 to vector<2x2x12x32xbf16>
      %c0_56 = arith.constant 0 : index
      %c10 = arith.constant 10 : index
      %c0_57 = arith.constant 0 : index
      %c0_58 = arith.constant 0 : index
      %76 = vector.load %arg12[%c0_56, %c10, %c0_57, %c0_58] : memref<2x12x12x32xbf16, #tpu.memory_space<vmem>>, vector<2x2x12x32xbf16>
      tpu.vector_store %arg12[%c0_56, %c10, %c0_57, %c0_58], %75 {strides = array<i32>} : memref<2x12x12x32xbf16, #tpu.memory_space<vmem>>, vector<2x2x12x32xbf16>,
      %cst_59 = arith.constant 0.000000e+00 : bf16
      %77 = vector.broadcast %cst_59 : bf16 to vector<2x8x2x32xbf16>
      %c0_60 = arith.constant 0 : index
      %c2_61 = arith.constant 2 : index
      %c0_62 = arith.constant 0 : index
      %c0_63 = arith.constant 0 : index
      %78 = vector.load %arg12[%c0_60, %c2_61, %c0_62, %c0_63] : memref<2x12x12x32xbf16, #tpu.memory_space<vmem>>, vector<2x8x2x32xbf16>
      tpu.vector_store %arg12[%c0_60, %c2_61, %c0_62, %c0_63], %77 {strides = array<i32>} : memref<2x12x12x32xbf16, #tpu.memory_space<vmem>>, vector<2x8x2x32xbf16>,
      %cst_64 = arith.constant 0.000000e+00 : bf16
      %79 = vector.broadcast %cst_64 : bf16 to vector<2x8x2x32xbf16>
      %c0_65 = arith.constant 0 : index
      %c2_66 = arith.constant 2 : index
      %c10_67 = arith.constant 10 : index
      %c0_68 = arith.constant 0 : index
      %80 = vector.load %arg12[%c0_65, %c2_66, %c10_67, %c0_68] : memref<2x12x12x32xbf16, #tpu.memory_space<vmem>>, vector<2x8x2x32xbf16>
      tpu.vector_store %arg12[%c0_65, %c2_66, %c10_67, %c0_68], %79 {strides = array<i32>} : memref<2x12x12x32xbf16, #tpu.memory_space<vmem>>, vector<2x8x2x32xbf16>,
      %81 = vector.shape_cast %72 : vector<128x32xbf16> to vector<2x8x8x32xbf16>
      %c0_69 = arith.constant 0 : index
      %c2_70 = arith.constant 2 : index
      %c2_71 = arith.constant 2 : index
      %c0_72 = arith.constant 0 : index
      %82 = vector.load %arg12[%c0_69, %c2_70, %c2_71, %c0_72] : memref<2x12x12x32xbf16, #tpu.memory_space<vmem>>, vector<2x8x8x32xbf16>
      tpu.vector_store %arg12[%c0_69, %c2_70, %c2_71, %c0_72], %81 {strides = array<i32>} : memref<2x12x12x32xbf16, #tpu.memory_space<vmem>>, vector<2x8x8x32xbf16>,
      %c0_73 = arith.constant 0 : index
      %c0_74 = arith.constant 0 : index
      %c0_75 = arith.constant 0 : index
      %c0_76 = arith.constant 0 : index
      %83 = vector.load %arg12[%c0_73, %c0_74, %c0_75, %c0_76] : memref<2x12x12x32xbf16, #tpu.memory_space<vmem>>, vector<2x8x8x32xbf16>
      %84 = vector.shape_cast %83 : vector<2x8x8x32xbf16> to vector<128x32xbf16>
      %c0_77 = arith.constant 0 : index
      %c0_78 = arith.constant 0 : index
      %85 = vector.load %arg13[%c0_77, %c0_78] : memref<128x800xbf16, #tpu.memory_space<vmem>>, vector<128x32xbf16>
      tpu.vector_store %arg13[%c0_77, %c0_78], %84 {strides = array<i32>} : memref<128x800xbf16, #tpu.memory_space<vmem>>, vector<128x32xbf16>,
      %c0_79 = arith.constant 0 : index
      %c0_80 = arith.constant 0 : index
      %c1_81 = arith.constant 1 : index
      %c0_82 = arith.constant 0 : index
      %86 = vector.load %arg12[%c0_79, %c0_80, %c1_81, %c0_82] : memref<2x12x12x32xbf16, #tpu.memory_space<vmem>>, vector<2x8x8x32xbf16>
      %87 = vector.shape_cast %86 : vector<2x8x8x32xbf16> to vector<128x32xbf16>
      %c0_83 = arith.constant 0 : index
      %c32 = arith.constant 32 : index
      %88 = vector.load %arg13[%c0_83, %c32] : memref<128x800xbf16, #tpu.memory_space<vmem>>, vector<128x32xbf16>
      tpu.vector_store %arg13[%c0_83, %c32], %87 {strides = array<i32>} : memref<128x800xbf16, #tpu.memory_space<vmem>>, vector<128x32xbf16>,
      %c0_84 = arith.constant 0 : index
      %c0_85 = arith.constant 0 : index
      %c2_86 = arith.constant 2 : index
      %c0_87 = arith.constant 0 : index
      %89 = vector.load %arg12[%c0_84, %c0_85, %c2_86, %c0_87] : memref<2x12x12x32xbf16, #tpu.memory_space<vmem>>, vector<2x8x8x32xbf16>
      %90 = vector.shape_cast %89 : vector<2x8x8x32xbf16> to vector<128x32xbf16>
      %c0_88 = arith.constant 0 : index
      %c64 = arith.constant 64 : index
      %91 = vector.load %arg13[%c0_88, %c64] : memref<128x800xbf16, #tpu.memory_space<vmem>>, vector<128x32xbf16>
      tpu.vector_store %arg13[%c0_88, %c64], %90 {strides = array<i32>} : memref<128x800xbf16, #tpu.memory_space<vmem>>, vector<128x32xbf16>,
      %c0_89 = arith.constant 0 : index
      %c0_90 = arith.constant 0 : index
      %c3_91 = arith.constant 3 : index
      %c0_92 = arith.constant 0 : index
      %92 = vector.load %arg12[%c0_89, %c0_90, %c3_91, %c0_92] : memref<2x12x12x32xbf16, #tpu.memory_space<vmem>>, vector<2x8x8x32xbf16>
      %93 = vector.shape_cast %92 : vector<2x8x8x32xbf16> to vector<128x32xbf16>
      %c0_93 = arith.constant 0 : index
      %c96 = arith.constant 96 : index
      %94 = vector.load %arg13[%c0_93, %c96] : memref<128x800xbf16, #tpu.memory_space<vmem>>, vector<128x32xbf16>
      tpu.vector_store %arg13[%c0_93, %c96], %93 {strides = array<i32>} : memref<128x800xbf16, #tpu.memory_space<vmem>>, vector<128x32xbf16>,
      %c0_94 = arith.constant 0 : index
      %c0_95 = arith.constant 0 : index
      %c4_96 = arith.constant 4 : index
      %c0_97 = arith.constant 0 : index
      %95 = vector.load %arg12[%c0_94, %c0_95, %c4_96, %c0_97] : memref<2x12x12x32xbf16, #tpu.memory_space<vmem>>, vector<2x8x8x32xbf16>
      %96 = vector.shape_cast %95 : vector<2x8x8x32xbf16> to vector<128x32xbf16>
      %c0_98 = arith.constant 0 : index
      %c128 = arith.constant 128 : index
      %97 = vector.load %arg13[%c0_98, %c128] : memref<128x800xbf16, #tpu.memory_space<vmem>>, vector<128x32xbf16>
      tpu.vector_store %arg13[%c0_98, %c128], %96 {strides = array<i32>} : memref<128x800xbf16, #tpu.memory_space<vmem>>, vector<128x32xbf16>,
      %c0_99 = arith.constant 0 : index
      %c1_100 = arith.constant 1 : index
      %c0_101 = arith.constant 0 : index
      %c0_102 = arith.constant 0 : index
      %98 = vector.load %arg12[%c0_99, %c1_100, %c0_101, %c0_102] : memref<2x12x12x32xbf16, #tpu.memory_space<vmem>>, vector<2x8x8x32xbf16>
      %99 = vector.shape_cast %98 : vector<2x8x8x32xbf16> to vector<128x32xbf16>
      %c0_103 = arith.constant 0 : index
      %c160 = arith.constant 160 : index
      %100 = vector.load %arg13[%c0_103, %c160] : memref<128x800xbf16, #tpu.memory_space<vmem>>, vector<128x32xbf16>
      tpu.vector_store %arg13[%c0_103, %c160], %99 {strides = array<i32>} : memref<128x800xbf16, #tpu.memory_space<vmem>>, vector<128x32xbf16>,
      %c0_104 = arith.constant 0 : index
      %c1_105 = arith.constant 1 : index
      %c1_106 = arith.constant 1 : index
      %c0_107 = arith.constant 0 : index
      %101 = vector.load %arg12[%c0_104, %c1_105, %c1_106, %c0_107] : memref<2x12x12x32xbf16, #tpu.memory_space<vmem>>, vector<2x8x8x32xbf16>
      %102 = vector.shape_cast %101 : vector<2x8x8x32xbf16> to vector<128x32xbf16>
      %c0_108 = arith.constant 0 : index
      %c192 = arith.constant 192 : index
      %103 = vector.load %arg13[%c0_108, %c192] : memref<128x800xbf16, #tpu.memory_space<vmem>>, vector<128x32xbf16>
      tpu.vector_store %arg13[%c0_108, %c192], %102 {strides = array<i32>} : memref<128x800xbf16, #tpu.memory_space<vmem>>, vector<128x32xbf16>,
      %c0_109 = arith.constant 0 : index
      %c1_110 = arith.constant 1 : index
      %c2_111 = arith.constant 2 : index
      %c0_112 = arith.constant 0 : index
      %104 = vector.load %arg12[%c0_109, %c1_110, %c2_111, %c0_112] : memref<2x12x12x32xbf16, #tpu.memory_space<vmem>>, vector<2x8x8x32xbf16>
      %105 = vector.shape_cast %104 : vector<2x8x8x32xbf16> to vector<128x32xbf16>
      %c0_113 = arith.constant 0 : index
      %c224 = arith.constant 224 : index
      %106 = vector.load %arg13[%c0_113, %c224] : memref<128x800xbf16, #tpu.memory_space<vmem>>, vector<128x32xbf16>
      tpu.vector_store %arg13[%c0_113, %c224], %105 {strides = array<i32>} : memref<128x800xbf16, #tpu.memory_space<vmem>>, vector<128x32xbf16>,
      %c0_114 = arith.constant 0 : index
      %c1_115 = arith.constant 1 : index
      %c3_116 = arith.constant 3 : index
      %c0_117 = arith.constant 0 : index
      %107 = vector.load %arg12[%c0_114, %c1_115, %c3_116, %c0_117] : memref<2x12x12x32xbf16, #tpu.memory_space<vmem>>, vector<2x8x8x32xbf16>
      %108 = vector.shape_cast %107 : vector<2x8x8x32xbf16> to vector<128x32xbf16>
      %c0_118 = arith.constant 0 : index
      %c256_119 = arith.constant 256 : index
      %109 = vector.load %arg13[%c0_118, %c256_119] : memref<128x800xbf16, #tpu.memory_space<vmem>>, vector<128x32xbf16>
      tpu.vector_store %arg13[%c0_118, %c256_119], %108 {strides = array<i32>} : memref<128x800xbf16, #tpu.memory_space<vmem>>, vector<128x32xbf16>,
      %c0_120 = arith.constant 0 : index
      %c1_121 = arith.constant 1 : index
      %c4_122 = arith.constant 4 : index
      %c0_123 = arith.constant 0 : index
      %110 = vector.load %arg12[%c0_120, %c1_121, %c4_122, %c0_123] : memref<2x12x12x32xbf16, #tpu.memory_space<vmem>>, vector<2x8x8x32xbf16>
      %111 = vector.shape_cast %110 : vector<2x8x8x32xbf16> to vector<128x32xbf16>
      %c0_124 = arith.constant 0 : index
      %c288 = arith.constant 288 : index
      %112 = vector.load %arg13[%c0_124, %c288] : memref<128x800xbf16, #tpu.memory_space<vmem>>, vector<128x32xbf16>
      tpu.vector_store %arg13[%c0_124, %c288], %111 {strides = array<i32>} : memref<128x800xbf16, #tpu.memory_space<vmem>>, vector<128x32xbf16>,
      %c0_125 = arith.constant 0 : index
      %c2_126 = arith.constant 2 : index
      %c0_127 = arith.constant 0 : index
      %c0_128 = arith.constant 0 : index
      %113 = vector.load %arg12[%c0_125, %c2_126, %c0_127, %c0_128] : memref<2x12x12x32xbf16, #tpu.memory_space<vmem>>, vector<2x8x8x32xbf16>
      %114 = vector.shape_cast %113 : vector<2x8x8x32xbf16> to vector<128x32xbf16>
      %c0_129 = arith.constant 0 : index
      %c320 = arith.constant 320 : index
      %115 = vector.load %arg13[%c0_129, %c320] : memref<128x800xbf16, #tpu.memory_space<vmem>>, vector<128x32xbf16>
      tpu.vector_store %arg13[%c0_129, %c320], %114 {strides = array<i32>} : memref<128x800xbf16, #tpu.memory_space<vmem>>, vector<128x32xbf16>,
      %c0_130 = arith.constant 0 : index
      %c2_131 = arith.constant 2 : index
      %c1_132 = arith.constant 1 : index
      %c0_133 = arith.constant 0 : index
      %116 = vector.load %arg12[%c0_130, %c2_131, %c1_132, %c0_133] : memref<2x12x12x32xbf16, #tpu.memory_space<vmem>>, vector<2x8x8x32xbf16>
      %117 = vector.shape_cast %116 : vector<2x8x8x32xbf16> to vector<128x32xbf16>
      %c0_134 = arith.constant 0 : index
      %c352 = arith.constant 352 : index
      %118 = vector.load %arg13[%c0_134, %c352] : memref<128x800xbf16, #tpu.memory_space<vmem>>, vector<128x32xbf16>
      tpu.vector_store %arg13[%c0_134, %c352], %117 {strides = array<i32>} : memref<128x800xbf16, #tpu.memory_space<vmem>>, vector<128x32xbf16>,
      %c0_135 = arith.constant 0 : index
      %c2_136 = arith.constant 2 : index
      %c2_137 = arith.constant 2 : index
      %c0_138 = arith.constant 0 : index
      %119 = vector.load %arg12[%c0_135, %c2_136, %c2_137, %c0_138] : memref<2x12x12x32xbf16, #tpu.memory_space<vmem>>, vector<2x8x8x32xbf16>
      %120 = vector.shape_cast %119 : vector<2x8x8x32xbf16> to vector<128x32xbf16>
      %c0_139 = arith.constant 0 : index
      %c384 = arith.constant 384 : index
      %121 = vector.load %arg13[%c0_139, %c384] : memref<128x800xbf16, #tpu.memory_space<vmem>>, vector<128x32xbf16>
      tpu.vector_store %arg13[%c0_139, %c384], %120 {strides = array<i32>} : memref<128x800xbf16, #tpu.memory_space<vmem>>, vector<128x32xbf16>,
      %c0_140 = arith.constant 0 : index
      %c2_141 = arith.constant 2 : index
      %c3_142 = arith.constant 3 : index
      %c0_143 = arith.constant 0 : index
      %122 = vector.load %arg12[%c0_140, %c2_141, %c3_142, %c0_143] : memref<2x12x12x32xbf16, #tpu.memory_space<vmem>>, vector<2x8x8x32xbf16>
      %123 = vector.shape_cast %122 : vector<2x8x8x32xbf16> to vector<128x32xbf16>
      %c0_144 = arith.constant 0 : index
      %c416 = arith.constant 416 : index
      %124 = vector.load %arg13[%c0_144, %c416] : memref<128x800xbf16, #tpu.memory_space<vmem>>, vector<128x32xbf16>
      tpu.vector_store %arg13[%c0_144, %c416], %123 {strides = array<i32>} : memref<128x800xbf16, #tpu.memory_space<vmem>>, vector<128x32xbf16>,
      %c0_145 = arith.constant 0 : index
      %c2_146 = arith.constant 2 : index
      %c4_147 = arith.constant 4 : index
      %c0_148 = arith.constant 0 : index
      %125 = vector.load %arg12[%c0_145, %c2_146, %c4_147, %c0_148] : memref<2x12x12x32xbf16, #tpu.memory_space<vmem>>, vector<2x8x8x32xbf16>
      %126 = vector.shape_cast %125 : vector<2x8x8x32xbf16> to vector<128x32xbf16>
      %c0_149 = arith.constant 0 : index
      %c448 = arith.constant 448 : index
      %127 = vector.load %arg13[%c0_149, %c448] : memref<128x800xbf16, #tpu.memory_space<vmem>>, vector<128x32xbf16>
      tpu.vector_store %arg13[%c0_149, %c448], %126 {strides = array<i32>} : memref<128x800xbf16, #tpu.memory_space<vmem>>, vector<128x32xbf16>,
      %c0_150 = arith.constant 0 : index
      %c3_151 = arith.constant 3 : index
      %c0_152 = arith.constant 0 : index
      %c0_153 = arith.constant 0 : index
      %128 = vector.load %arg12[%c0_150, %c3_151, %c0_152, %c0_153] : memref<2x12x12x32xbf16, #tpu.memory_space<vmem>>, vector<2x8x8x32xbf16>
      %129 = vector.shape_cast %128 : vector<2x8x8x32xbf16> to vector<128x32xbf16>
      %c0_154 = arith.constant 0 : index
      %c480 = arith.constant 480 : index
      %130 = vector.load %arg13[%c0_154, %c480] : memref<128x800xbf16, #tpu.memory_space<vmem>>, vector<128x32xbf16>
      tpu.vector_store %arg13[%c0_154, %c480], %129 {strides = array<i32>} : memref<128x800xbf16, #tpu.memory_space<vmem>>, vector<128x32xbf16>,
      %c0_155 = arith.constant 0 : index
      %c3_156 = arith.constant 3 : index
      %c1_157 = arith.constant 1 : index
      %c0_158 = arith.constant 0 : index
      %131 = vector.load %arg12[%c0_155, %c3_156, %c1_157, %c0_158] : memref<2x12x12x32xbf16, #tpu.memory_space<vmem>>, vector<2x8x8x32xbf16>
      %132 = vector.shape_cast %131 : vector<2x8x8x32xbf16> to vector<128x32xbf16>
      %c0_159 = arith.constant 0 : index
      %c512_160 = arith.constant 512 : index
      %133 = vector.load %arg13[%c0_159, %c512_160] : memref<128x800xbf16, #tpu.memory_space<vmem>>, vector<128x32xbf16>
      tpu.vector_store %arg13[%c0_159, %c512_160], %132 {strides = array<i32>} : memref<128x800xbf16, #tpu.memory_space<vmem>>, vector<128x32xbf16>,
      %c0_161 = arith.constant 0 : index
      %c3_162 = arith.constant 3 : index
      %c2_163 = arith.constant 2 : index
      %c0_164 = arith.constant 0 : index
      %134 = vector.load %arg12[%c0_161, %c3_162, %c2_163, %c0_164] : memref<2x12x12x32xbf16, #tpu.memory_space<vmem>>, vector<2x8x8x32xbf16>
      %135 = vector.shape_cast %134 : vector<2x8x8x32xbf16> to vector<128x32xbf16>
      %c0_165 = arith.constant 0 : index
      %c544 = arith.constant 544 : index
      %136 = vector.load %arg13[%c0_165, %c544] : memref<128x800xbf16, #tpu.memory_space<vmem>>, vector<128x32xbf16>
      tpu.vector_store %arg13[%c0_165, %c544], %135 {strides = array<i32>} : memref<128x800xbf16, #tpu.memory_space<vmem>>, vector<128x32xbf16>,
      %c0_166 = arith.constant 0 : index
      %c3_167 = arith.constant 3 : index
      %c3_168 = arith.constant 3 : index
      %c0_169 = arith.constant 0 : index
      %137 = vector.load %arg12[%c0_166, %c3_167, %c3_168, %c0_169] : memref<2x12x12x32xbf16, #tpu.memory_space<vmem>>, vector<2x8x8x32xbf16>
      %138 = vector.shape_cast %137 : vector<2x8x8x32xbf16> to vector<128x32xbf16>
      %c0_170 = arith.constant 0 : index
      %c576 = arith.constant 576 : index
      %139 = vector.load %arg13[%c0_170, %c576] : memref<128x800xbf16, #tpu.memory_space<vmem>>, vector<128x32xbf16>
      tpu.vector_store %arg13[%c0_170, %c576], %138 {strides = array<i32>} : memref<128x800xbf16, #tpu.memory_space<vmem>>, vector<128x32xbf16>,
      %c0_171 = arith.constant 0 : index
      %c3_172 = arith.constant 3 : index
      %c4_173 = arith.constant 4 : index
      %c0_174 = arith.constant 0 : index
      %140 = vector.load %arg12[%c0_171, %c3_172, %c4_173, %c0_174] : memref<2x12x12x32xbf16, #tpu.memory_space<vmem>>, vector<2x8x8x32xbf16>
      %141 = vector.shape_cast %140 : vector<2x8x8x32xbf16> to vector<128x32xbf16>
      %c0_175 = arith.constant 0 : index
      %c608 = arith.constant 608 : index
      %142 = vector.load %arg13[%c0_175, %c608] : memref<128x800xbf16, #tpu.memory_space<vmem>>, vector<128x32xbf16>
      tpu.vector_store %arg13[%c0_175, %c608], %141 {strides = array<i32>} : memref<128x800xbf16, #tpu.memory_space<vmem>>, vector<128x32xbf16>,
      %c0_176 = arith.constant 0 : index
      %c4_177 = arith.constant 4 : index
      %c0_178 = arith.constant 0 : index
      %c0_179 = arith.constant 0 : index
      %143 = vector.load %arg12[%c0_176, %c4_177, %c0_178, %c0_179] : memref<2x12x12x32xbf16, #tpu.memory_space<vmem>>, vector<2x8x8x32xbf16>
      %144 = vector.shape_cast %143 : vector<2x8x8x32xbf16> to vector<128x32xbf16>
      %c0_180 = arith.constant 0 : index
      %c640 = arith.constant 640 : index
      %145 = vector.load %arg13[%c0_180, %c640] : memref<128x800xbf16, #tpu.memory_space<vmem>>, vector<128x32xbf16>
      tpu.vector_store %arg13[%c0_180, %c640], %144 {strides = array<i32>} : memref<128x800xbf16, #tpu.memory_space<vmem>>, vector<128x32xbf16>,
      %c0_181 = arith.constant 0 : index
      %c4_182 = arith.constant 4 : index
      %c1_183 = arith.constant 1 : index
      %c0_184 = arith.constant 0 : index
      %146 = vector.load %arg12[%c0_181, %c4_182, %c1_183, %c0_184] : memref<2x12x12x32xbf16, #tpu.memory_space<vmem>>, vector<2x8x8x32xbf16>
      %147 = vector.shape_cast %146 : vector<2x8x8x32xbf16> to vector<128x32xbf16>
      %c0_185 = arith.constant 0 : index
      %c672 = arith.constant 672 : index
      %148 = vector.load %arg13[%c0_185, %c672] : memref<128x800xbf16, #tpu.memory_space<vmem>>, vector<128x32xbf16>
      tpu.vector_store %arg13[%c0_185, %c672], %147 {strides = array<i32>} : memref<128x800xbf16, #tpu.memory_space<vmem>>, vector<128x32xbf16>,
      %c0_186 = arith.constant 0 : index
      %c4_187 = arith.constant 4 : index
      %c2_188 = arith.constant 2 : index
      %c0_189 = arith.constant 0 : index
      %149 = vector.load %arg12[%c0_186, %c4_187, %c2_188, %c0_189] : memref<2x12x12x32xbf16, #tpu.memory_space<vmem>>, vector<2x8x8x32xbf16>
      %150 = vector.shape_cast %149 : vector<2x8x8x32xbf16> to vector<128x32xbf16>
      %c0_190 = arith.constant 0 : index
      %c704 = arith.constant 704 : index
      %151 = vector.load %arg13[%c0_190, %c704] : memref<128x800xbf16, #tpu.memory_space<vmem>>, vector<128x32xbf16>
      tpu.vector_store %arg13[%c0_190, %c704], %150 {strides = array<i32>} : memref<128x800xbf16, #tpu.memory_space<vmem>>, vector<128x32xbf16>,
      %c0_191 = arith.constant 0 : index
      %c4_192 = arith.constant 4 : index
      %c3_193 = arith.constant 3 : index
      %c0_194 = arith.constant 0 : index
      %152 = vector.load %arg12[%c0_191, %c4_192, %c3_193, %c0_194] : memref<2x12x12x32xbf16, #tpu.memory_space<vmem>>, vector<2x8x8x32xbf16>
      %153 = vector.shape_cast %152 : vector<2x8x8x32xbf16> to vector<128x32xbf16>
      %c0_195 = arith.constant 0 : index
      %c736 = arith.constant 736 : index
      %154 = vector.load %arg13[%c0_195, %c736] : memref<128x800xbf16, #tpu.memory_space<vmem>>, vector<128x32xbf16>
      tpu.vector_store %arg13[%c0_195, %c736], %153 {strides = array<i32>} : memref<128x800xbf16, #tpu.memory_space<vmem>>, vector<128x32xbf16>,
      %c0_196 = arith.constant 0 : index
      %c4_197 = arith.constant 4 : index
      %c4_198 = arith.constant 4 : index
      %c0_199 = arith.constant 0 : index
      %155 = vector.load %arg12[%c0_196, %c4_197, %c4_198, %c0_199] : memref<2x12x12x32xbf16, #tpu.memory_space<vmem>>, vector<2x8x8x32xbf16>
      %156 = vector.shape_cast %155 : vector<2x8x8x32xbf16> to vector<128x32xbf16>
      %c0_200 = arith.constant 0 : index
      %c768_201 = arith.constant 768 : index
      %157 = vector.load %arg13[%c0_200, %c768_201] : memref<128x800xbf16, #tpu.memory_space<vmem>>, vector<128x32xbf16>
      tpu.vector_store %arg13[%c0_200, %c768_201], %156 {strides = array<i32>} : memref<128x800xbf16, #tpu.memory_space<vmem>>, vector<128x32xbf16>,
      %c0_202 = arith.constant 0 : index
      %c0_203 = arith.constant 0 : index
      %158 = vector.load %arg13[%c0_202, %c0_203] : memref<128x800xbf16, #tpu.memory_space<vmem>>, vector<128x800xbf16>
      %c0_204 = arith.constant 0 : index
      %c0_205 = arith.constant 0 : index
      %159 = vector.load %arg6[%c0_204, %c0_205] : memref<800x256xbf16, #tpu.memory_space<vmem>>, vector<800x256xbf16>
      %cst_206 = arith.constant dense<0.000000e+00> : vector<128x256xf32>
      %160 = tpu.matmul %158, %159, %cst_206 {dimension_numbers = #tpu.dot_dimension_numbers<[1], [0], [0], [1], [0, 0, 1, 1], [], []>} : vector<128x800xbf16>, vector<800x256xbf16>, vector<128x256xf32> -> vector<128x256xf32>
      %c0_207 = arith.constant 0 : index
      %c0_208 = arith.constant 0 : index
      %161 = vector.load %arg7[%c0_207, %c0_208] : memref<1x256xf32, #tpu.memory_space<vmem>>, vector<1x256xf32>
      %162 = vector.broadcast %161 : vector<1x256xf32> to vector<128x256xf32>
      %163 = arith.addf %160, %162 : vector<128x256xf32>
      %164 = vector.shape_cast %163 : vector<128x256xf32> to vector<2x8x8x256xf32>
      %c0_209 = arith.constant 0 : index
      %c0_210 = arith.constant 0 : index
      %c0_211 = arith.constant 0 : index
      %c0_212 = arith.constant 0 : index
      %165 = vector.load %arg8[%c0_209, %c0_210, %c0_211, %c0_212] : memref<2x8x8x256xf32, #tpu.memory_space<vmem>>, vector<2x8x8x256xf32>
      tpu.vector_store %arg8[%c0_209, %c0_210, %c0_211, %c0_212], %164 {strides = array<i32>} : memref<2x8x8x256xf32, #tpu.memory_space<vmem>>, vector<2x8x8x256xf32>,
    } else {
    }
    return
  }
  func.func @transform_0(%arg0: i32) -> (i32, i32, i32, i32) {
    %c0_i32 = arith.constant 0 : i32
    %c0_i32_0 = arith.constant 0 : i32
    %c0_i32_1 = arith.constant 0 : i32
    %c0_i32_2 = arith.constant 0 : i32
    %c0_i32_3 = arith.constant 0 : i32
    return %c0_i32, %c0_i32_0, %c0_i32_1, %c0_i32_2 : i32, i32, i32, i32
  }
  func.func @transform_1(%arg0: i32) -> (i32, i32, i32) {
    %c0_i32 = arith.constant 0 : i32
    %c0_i32_0 = arith.constant 0 : i32
    %c0_i32_1 = arith.constant 0 : i32
    return %arg0, %c0_i32, %c0_i32_0 : i32, i32, i32
  }
  func.func @transform_2(%arg0: i32) -> (i32, i32) {
    %c0_i32 = arith.constant 0 : i32
    %c0_i32_0 = arith.constant 0 : i32
    %c0_i32_1 = arith.constant 0 : i32
    return %c0_i32, %c0_i32_0 : i32, i32
  }
  func.func @transform_3(%arg0: i32) -> (i32, i32) {
    %c0_i32 = arith.constant 0 : i32
    %c0_i32_0 = arith.constant 0 : i32
    %c0_i32_1 = arith.constant 0 : i32
    return %c0_i32, %c0_i32_0 : i32, i32
  }
  func.func @transform_4(%arg0: i32) -> (i32, i32) {
    %c0_i32 = arith.constant 0 : i32
    %c0_i32_0 = arith.constant 0 : i32
    %c0_i32_1 = arith.constant 0 : i32
    return %c0_i32, %c0_i32_0 : i32, i32
  }
  func.func @transform_5(%arg0: i32) -> (i32, i32) {
    %c0_i32 = arith.constant 0 : i32
    %c0_i32_0 = arith.constant 0 : i32
    %c0_i32_1 = arith.constant 0 : i32
    return %c0_i32, %c0_i32_0 : i32, i32
  }
  func.func @transform_6(%arg0: i32) -> (i32, i32) {
    %c0_i32 = arith.constant 0 : i32
    %c0_i32_0 = arith.constant 0 : i32
    %c0_i32_1 = arith.constant 0 : i32
    return %c0_i32, %c0_i32_0 : i32, i32
  }
  func.func @transform_7(%arg0: i32) -> (i32, i32, i32, i32) {
    %c0_i32 = arith.constant 0 : i32
    %c0_i32_0 = arith.constant 0 : i32
    %c0_i32_1 = arith.constant 0 : i32
    %c0_i32_2 = arith.constant 0 : i32
    %c0_i32_3 = arith.constant 0 : i32
    return %c0_i32, %c0_i32_0, %c0_i32_1, %c0_i32_2 : i32, i32, i32, i32
  }
}

</mosaic_0001>

<llo_original>
// kernel: super_resolution_forward.1
$region0: #{super_resolution_forward.1}
  #allocation0 [shape = 'u32[]', space=smem, size = 0x4, offset = 0x4, fixed_abs, tag = 'smem constant byte address 0x4 - core index']
  #allocation1 [shape = 'u32[144,128]{1,0:T(1,128)}', space=vmem, size = 0x12000, scoped, tag = 'internal scratch']
  #allocation2 [shape = 'f32[2,16,16,256]{3,2,1,0:T(8,128)}', space=vmem, size = 0x80000, scoped, tag = 'scratch operand']
  #allocation3 [shape = 'f32[128,64]{1,0:T(8,128)}', space=vmem, size = 0x10000, scoped, tag = 'scratch operand']
  #allocation4 [shape = 'bf16[128,2304]{1,0:T(16,128)(2,1)}', space=vmem, size = 0x90000, scoped, tag = 'scratch operand']
  #allocation5 [shape = 'bf16[2,12,12,32]{3,2,1,0:T(8,128)(2,1)}', space=vmem, size = 0x18000, scoped, tag = 'scratch operand']
  #allocation6 [shape = 'bf16[128,800]{1,0:T(16,128)(2,1)}', space=vmem, size = 0x38000, scoped, tag = 'scratch operand']
  %s0 = inlined_call_operand.vmem [shape: f32[2,8,8,256], index: 0, kind: input, shape index: {}]
  %s1 = inlined_call_operand.vmem [shape: bf16[9,2304,64], index: 1, kind: input, shape index: {}]
  %s2 = inlined_call_operand.vmem [shape: f32[1,64], index: 2, kind: input, shape index: {}]
  %s3 = inlined_call_operand.vmem [shape: bf16[64,32], index: 3, kind: input, shape index: {}]
  %s4 = inlined_call_operand.vmem [shape: f32[1,32], index: 4, kind: input, shape index: {}]
  %s5 = inlined_call_operand.vmem [shape: bf16[800,256], index: 5, kind: input, shape index: {}]
  %s6 = inlined_call_operand.vmem [shape: f32[1,256], index: 6, kind: input, shape index: {}]
  %s7 = inlined_call_operand.hbm [shape: f32[2,8,8,256], index: 7, kind: output, shape index: {}]
  %s8 = sld [smem:[#allocation0]]
  $region69: #{super_resolution_forward.1} parent=0
    _
  %s10 = ssub.s32 1, %s8
  %s11 = scalar_select 0, %s10, %s8
  $region1: #{super_resolution_forward.1} parent=0
    #allocation7 [shape = 'u8[131072]{0}', space=vmem, size = 0x20000, scoped, tag = 'output window, operand 0, single buffered']
    #allocation8 [shape = 's32[2]{0}', space=sflag, size = 0x8, scoped, tag = 'scoped memory for super_resolution_forward.1']
    %12 = vsyncpa [#allocation8], 0
    loop: start=0, step=1, limit=11
    $region2: #{super_resolution_forward.1} parent=1 // loop_pre_header
      _
    $region3: #{super_resolution_forward.1} parent=1 // loop_header
      %s14 = sphi 0, %s18
      %p15 = scmp.ge.s32.totalorder %s14, 11
      %s22 = sphi 0, %s22
      %s24 = sphi 0, %s22
      %s25 = sphi 0, %s24
      %s39 = sphi 0, %s25
      %s45 = sphi 0, %s47
      %s48 = sphi 0, %s45
      %s49 = sphi 0, %s48
      %s65 = sphi 0, %s49
      %s69 = sphi 0, %s69
      %s71 = sphi 0, %s69
      %s72 = sphi 0, %s71
      %s86 = sphi 0, %s72
      %s90 = sphi 0, %s90
      %s92 = sphi 0, %s90
      %s93 = sphi 0, %s92
      %s107 = sphi 0, %s93
      %s111 = sphi 0, %s111
      %s113 = sphi 0, %s111
      %s114 = sphi 0, %s113
      %s128 = sphi 0, %s114
      %s132 = sphi 0, %s132
      %s134 = sphi 0, %s132
      %s135 = sphi 0, %s134
      %s149 = sphi 0, %s135
      %s153 = sphi 0, %s153
      %s155 = sphi 0, %s153
      %s156 = sphi 0, %s155
      %s170 = sphi 0, %s156
      %s174 = sphi 0, %s174
      %s176 = sphi 0, %s174
      %s177 = sphi 0, %s176
      %s191 = sphi 0, %s177
    $region4: #{super_resolution_forward.1} parent=1 // loop_header_branch
      %17 = sbr.rel (%p15) target = $region8
    $region5: #{super_resolution_forward.1} parent=1 // loop_body
      %s19 = ssub.s32 %s14, 1
      %s20 = ssub.s32 %s14, 2
      %s21 = sadd.s32 %s14, 1
      %s23 = sadd.s32 %s22, 1
      %p26 = scmp.eq.s32.totalorder %s14, 8
      %p27 = scmp.ne.s32.totalorder %s22, %s24
      %p28 = scmp.eq.s32.totalorder %s14, 0
      %p29 = por %p27, %p28
      %p30 = scmp.ne.s32.totalorder %s22, %s24
      %p31 = scmp.eq.s32.totalorder %s19, 8
      %p32 = por %p30, %p31
      %p33 = scmp.ne.s32.totalorder %s24, %s25
      %p34 = scmp.eq.s32.totalorder %s19, 0
      %p35 = por %p33, %p34
      %p36 = scmp.ne.s32.totalorder %s24, %s25
      %p37 = scmp.eq.s32.totalorder %s20, 8
      %p38 = por %p36, %p37
      %p40 = scmp.ne.s32.totalorder %s25, %s39
      %p41 = scmp.eq.s32.totalorder %s20, 0
      %p42 = por %p40, %p41
      %s43 = ssub.s32 %s14, %s21
      %p44 = scmp.eq.s32.totalorder %s43, 0
      %s46 = sadd.s32 %s45, 1
      %s47 = scalar_select %p44, %s45, %s46
      %p50 = pneg %p44
      %p51 = scmp.eq.s32.totalorder %s14, 8
      %p52 = por %p50, %p51
      %p53 = scmp.ne.s32.totalorder %s45, %s48
      %p54 = scmp.eq.s32.totalorder %s14, 0
      %p55 = por %p53, %p54
      %p56 = scmp.ne.s32.totalorder %s45, %s48
      %p57 = scmp.eq.s32.totalorder %s19, 8
      %p58 = por %p56, %p57
      %p59 = scmp.ne.s32.totalorder %s48, %s49
      %p60 = scmp.eq.s32.totalorder %s19, 0
      %p61 = por %p59, %p60
      %p62 = scmp.ne.s32.totalorder %s48, %s49
      %p63 = scmp.eq.s32.totalorder %s20, 8
      %p64 = por %p62, %p63
      %p66 = scmp.ne.s32.totalorder %s49, %s65
      %p67 = scmp.eq.s32.totalorder %s20, 0
      %p68 = por %p66, %p67
      %s70 = sadd.s32 %s69, 1
      %p73 = scmp.eq.s32.totalorder %s14, 8
      %p74 = scmp.ne.s32.totalorder %s69, %s71
      %p75 = scmp.eq.s32.totalorder %s14, 0
      %p76 = por %p74, %p75
      %p77 = scmp.ne.s32.totalorder %s69, %s71
      %p78 = scmp.eq.s32.totalorder %s19, 8
      %p79 = por %p77, %p78
      %p80 = scmp.ne.s32.totalorder %s71, %s72
      %p81 = scmp.eq.s32.totalorder %s19, 0
      %p82 = por %p80, %p81
      %p83 = scmp.ne.s32.totalorder %s71, %s72
      %p84 = scmp.eq.s32.totalorder %s20, 8
      %p85 = por %p83, %p84
      %p87 = scmp.ne.s32.totalorder %s72, %s86
      %p88 = scmp.eq.s32.totalorder %s20, 0
      %p89 = por %p87, %p88
      %s91 = sadd.s32 %s90, 1
      %p94 = scmp.eq.s32.totalorder %s14, 8
      %p95 = scmp.ne.s32.totalorder %s90, %s92
      %p96 = scmp.eq.s32.totalorder %s14, 0
      %p97 = por %p95, %p96
      %p98 = scmp.ne.s32.totalorder %s90, %s92
      %p99 = scmp.eq.s32.totalorder %s19, 8
      %p100 = por %p98, %p99
      %p101 = scmp.ne.s32.totalorder %s92, %s93
      %p102 = scmp.eq.s32.totalorder %s19, 0
      %p103 = por %p101, %p102
      %p104 = scmp.ne.s32.totalorder %s92, %s93
      %p105 = scmp.eq.s32.totalorder %s20, 8
      %p106 = por %p104, %p105
      %p108 = scmp.ne.s32.totalorder %s93, %s107
      %p109 = scmp.eq.s32.totalorder %s20, 0
      %p110 = por %p108, %p109
      %s112 = sadd.s32 %s111, 1
      %p115 = scmp.eq.s32.totalorder %s14, 8
      %p116 = scmp.ne.s32.totalorder %s111, %s113
      %p117 = scmp.eq.s32.totalorder %s14, 0
      %p118 = por %p116, %p117
      %p119 = scmp.ne.s32.totalorder %s111, %s113
      %p120 = scmp.eq.s32.totalorder %s19, 8
      %p121 = por %p119, %p120
      %p122 = scmp.ne.s32.totalorder %s113, %s114
      %p123 = scmp.eq.s32.totalorder %s19, 0
      %p124 = por %p122, %p123
      %p125 = scmp.ne.s32.totalorder %s113, %s114
      %p126 = scmp.eq.s32.totalorder %s20, 8
      %p127 = por %p125, %p126
      %p129 = scmp.ne.s32.totalorder %s114, %s128
      %p130 = scmp.eq.s32.totalorder %s20, 0
      %p131 = por %p129, %p130
      %s133 = sadd.s32 %s132, 1
      %p136 = scmp.eq.s32.totalorder %s14, 8
      %p137 = scmp.ne.s32.totalorder %s132, %s134
      %p138 = scmp.eq.s32.totalorder %s14, 0
      %p139 = por %p137, %p138
      %p140 = scmp.ne.s32.totalorder %s132, %s134
      %p141 = scmp.eq.s32.totalorder %s19, 8
      %p142 = por %p140, %p141
      %p143 = scmp.ne.s32.totalorder %s134, %s135
      %p144 = scmp.eq.s32.totalorder %s19, 0
      %p145 = por %p143, %p144
      %p146 = scmp.ne.s32.totalorder %s134, %s135
      %p147 = scmp.eq.s32.totalorder %s20, 8
      %p148 = por %p146, %p147
      %p150 = scmp.ne.s32.totalorder %s135, %s149
      %p151 = scmp.eq.s32.totalorder %s20, 0
      %p152 = por %p150, %p151
      %s154 = sadd.s32 %s153, 1
      %p157 = scmp.eq.s32.totalorder %s14, 8
      %p158 = scmp.ne.s32.totalorder %s153, %s155
      %p159 = scmp.eq.s32.totalorder %s14, 0
      %p160 = por %p158, %p159
      %p161 = scmp.ne.s32.totalorder %s153, %s155
      %p162 = scmp.eq.s32.totalorder %s19, 8
      %p163 = por %p161, %p162
      %p164 = scmp.ne.s32.totalorder %s155, %s156
      %p165 = scmp.eq.s32.totalorder %s19, 0
      %p166 = por %p164, %p165
      %p167 = scmp.ne.s32.totalorder %s155, %s156
      %p168 = scmp.eq.s32.totalorder %s20, 8
      %p169 = por %p167, %p168
      %p171 = scmp.ne.s32.totalorder %s156, %s170
      %p172 = scmp.eq.s32.totalorder %s20, 0
      %p173 = por %p171, %p172
      %s175 = sadd.s32 %s174, 1
      %p178 = scmp.eq.s32.totalorder %s14, 8
      %p179 = scmp.ne.s32.totalorder %s174, %s176
      %p180 = scmp.eq.s32.totalorder %s14, 0
      %p181 = por %p179, %p180
      %p182 = scmp.ne.s32.totalorder %s174, %s176
      %p183 = scmp.eq.s32.totalorder %s19, 8
      %p184 = por %p182, %p183
      %p185 = scmp.ne.s32.totalorder %s176, %s177
      %p186 = scmp.eq.s32.totalorder %s19, 0
      %p187 = por %p185, %p186
      %p188 = scmp.ne.s32.totalorder %s176, %s177
      %p189 = scmp.eq.s32.totalorder %s20, 8
      %p190 = por %p188, %p189
      %p192 = scmp.ne.s32.totalorder %s177, %s191
      %p193 = scmp.eq.s32.totalorder %s20, 0
      %p194 = por %p192, %p193
      %p195 = scmp.le.s32.totalorder 1, %s14
      %p196 = scmp.lt.s32.totalorder %s14, 10
      %p197 = pnand %p195, %p196
      %p198 = pneg %p197
      // Predicated region
      $region9: #{super_resolution_forward.1} parent=5 // pred_check
        _
      $region10: #{super_resolution_forward.1} parent=5 // pred_check_branch
        %200 = sbr.rel (%p197) target = $region12
      $region11: #{super_resolution_forward.1} parent=5 // pred_region
        %s201 = ssub.s32 %s14, 1
        // Predicated region
        $region13: #{super_resolution_forward.1} parent=11 // pred_check
          %p202 = pneg %p35
        $region14: #{super_resolution_forward.1} parent=11 // pred_check_branch
          %204 = sbr.rel (%p202) target = $region16
        $region15: #{super_resolution_forward.1} parent=11 // pred_region
          _
        $region16: #{super_resolution_forward.1} parent=11 // pred_fallthru
          _
        // Predicated region
        $region17: #{super_resolution_forward.1} parent=11 // pred_check
          %p205 = pneg %p82
        $region18: #{super_resolution_forward.1} parent=11 // pred_check_branch
          %207 = sbr.rel (%p205) target = $region20
        $region19: #{super_resolution_forward.1} parent=11 // pred_region
          _
        $region20: #{super_resolution_forward.1} parent=11 // pred_fallthru
          _
        // Predicated region
        $region21: #{super_resolution_forward.1} parent=11 // pred_check
          %p208 = pneg %p103
        $region22: #{super_resolution_forward.1} parent=11 // pred_check_branch
          %210 = sbr.rel (%p208) target = $region24
        $region23: #{super_resolution_forward.1} parent=11 // pred_region
          _
        $region24: #{super_resolution_forward.1} parent=11 // pred_fallthru
          _
        // Predicated region
        $region25: #{super_resolution_forward.1} parent=11 // pred_check
          %p211 = pneg %p124
        $region26: #{super_resolution_forward.1} parent=11 // pred_check_branch
          %213 = sbr.rel (%p211) target = $region28
        $region27: #{super_resolution_forward.1} parent=11 // pred_region
          _
        $region28: #{super_resolution_forward.1} parent=11 // pred_fallthru
          _
        // Predicated region
        $region29: #{super_resolution_forward.1} parent=11 // pred_check
          %p214 = pneg %p145
        $region30: #{super_resolution_forward.1} parent=11 // pred_check_branch
          %216 = sbr.rel (%p214) target = $region32
        $region31: #{super_resolution_forward.1} parent=11 // pred_region
          _
        $region32: #{super_resolution_forward.1} parent=11 // pred_fallthru
          _
        // Predicated region
        $region33: #{super_resolution_forward.1} parent=11 // pred_check
          %p217 = pneg %p166
        $region34: #{super_resolution_forward.1} parent=11 // pred_check_branch
          %219 = sbr.rel (%p217) target = $region36
        $region35: #{super_resolution_forward.1} parent=11 // pred_region
          _
        $region36: #{super_resolution_forward.1} parent=11 // pred_fallthru
          _
      $region12: #{super_resolution_forward.1} parent=5 // pred_fallthru
        _
      %p220 = scmp.lt.s32.totalorder %s14, 9
      // Predicated region
      $region37: #{super_resolution_forward.1} parent=5 // pred_check
        %p221 = pneg %p220
      $region38: #{super_resolution_forward.1} parent=5 // pred_check_branch
        %223 = sbr.rel (%p221) target = $region40
      $region39: #{super_resolution_forward.1} parent=5 // pred_region
        // Predicated region
        $region41: #{super_resolution_forward.1} parent=39 // pred_check
          %p224 = pneg %p55
        $region42: #{super_resolution_forward.1} parent=39 // pred_check_branch
          %226 = sbr.rel (%p224) target = $region44
        $region43: #{super_resolution_forward.1} parent=39 // pred_region
          %p227 = scmp.lt.s32.totalorder %s14, 8
          %s228 = scalar_select %p227, %s14, 8
          %s229 = smul.addr %s228, 288
          %s230 = smul.addr %s229, 4
          %s231 = scalar_lea.vmem %s1, %s230
        $region44: #{super_resolution_forward.1} parent=39 // pred_fallthru
          _
      $region40: #{super_resolution_forward.1} parent=5 // pred_fallthru
        _
      %p232 = scmp.le.s32.totalorder 1, %s14
      %p233 = scmp.lt.s32.totalorder %s14, 10
      %p234 = pnand %p232, %p233
      %p235 = pneg %p234
      // Predicated region
      $region45: #{super_resolution_forward.1} parent=5 // pred_check
        _
      $region46: #{super_resolution_forward.1} parent=5 // pred_check_branch
        %237 = sbr.rel (%p234) target = $region48
      $region47: #{super_resolution_forward.1} parent=5 // pred_region
        %s238 = ssub.s32 %s14, 1
        %p239 = pneg %p35
        %p240 = pneg %p32
        %p241 = scmp.lt.s32.totalorder %s19, 8
        %s242 = scalar_select %p241, %s19, 8
        %s243 = smul.addr %s242, 288
        %s244 = smul.addr %s243, 4
        %s245 = scalar_lea.vmem %s1, %s244
        %p246 = pneg %p61
        %p247 = pneg %p58
        %p248 = pneg %p82
        %p249 = pneg %p79
        %p250 = pneg %p103
        %p251 = pneg %p100
        %p252 = pneg %p124
        %p253 = pneg %p121
        %p254 = pneg %p145
        %p255 = pneg %p142
        %p256 = pneg %p166
        %p257 = pneg %p163
        %p258 = pneg %p187
        %p259 = pneg %p184
        %p260 = scmp.lt.s32.totalorder %s19, 8
        %s261 = scalar_select %p260, %s19, 8
        %s262 = smul.addr %s261, 288
        %s263 = smul.addr %s262, 4
        %s264 = scalar_lea.vmem %s1, %s263
        %p266 = scmp.eq.s32.totalorder %s19, 0
        // Predicated region
        $region49: #{super_resolution_forward.1} parent=47 // pred_check
          %p267 = pneg %p266
        $region50: #{super_resolution_forward.1} parent=47 // pred_check_branch
          %269 = sbr.rel (%p267) target = $region52
        $region51: #{super_resolution_forward.1} parent=47 // pred_region
          %270 = vst [vmem:[#allocation2] sm:$0xff] 0.0
          %271 = vst [vmem:[#allocation2 + $0x8] sm:$0xff] 0.0
          %272 = vst [vmem:[#allocation2 + $0x10] sm:$0xff] 0.0
          %273 = vst [vmem:[#allocation2 + $0x18] sm:$0xff] 0.0
          %274 = vst [vmem:[#allocation2 + $0x20] sm:$0xff] 0.0
          %275 = vst [vmem:[#allocation2 + $0x28] sm:$0xff] 0.0
          %276 = vst [vmem:[#allocation2 + $0x30] sm:$0xff] 0.0
          %277 = vst [vmem:[#allocation2 + $0x38] sm:$0xff] 0.0
          %278 = vst [vmem:[#allocation2 + $0x40] sm:$0xff] 0.0
          %279 = vst [vmem:[#allocation2 + $0x48] sm:$0xff] 0.0
          %280 = vst [vmem:[#allocation2 + $0x50] sm:$0xff] 0.0
          %281 = vst [vmem:[#allocation2 + $0x58] sm:$0xff] 0.0
          %282 = vst [vmem:[#allocation2 + $0x60] sm:$0xff] 0.0
          %283 = vst [vmem:[#allocation2 + $0x68] sm:$0xff] 0.0
          %284 = vst [vmem:[#allocation2 + $0x70] sm:$0xff] 0.0
          %285 = vst [vmem:[#allocation2 + $0x78] sm:$0xff] 0.0
          %286 = vst [vmem:[#allocation2 + $0x200] sm:$0xff] 0.0
          %287 = vst [vmem:[#allocation2 + $0x208] sm:$0xff] 0.0
          %288 = vst [vmem:[#allocation2 + $0x210] sm:$0xff] 0.0
          %289 = vst [vmem:[#allocation2 + $0x218] sm:$0xff] 0.0
          %290 = vst [vmem:[#allocation2 + $0x220] sm:$0xff] 0.0
          %291 = vst [vmem:[#allocation2 + $0x228] sm:$0xff] 0.0
          %292 = vst [vmem:[#allocation2 + $0x230] sm:$0xff] 0.0
          %293 = vst [vmem:[#allocation2 + $0x238] sm:$0xff] 0.0
          %294 = vst [vmem:[#allocation2 + $0x240] sm:$0xff] 0.0
          %295 = vst [vmem:[#allocation2 + $0x248] sm:$0xff] 0.0
          %296 = vst [vmem:[#allocation2 + $0x250] sm:$0xff] 0.0
          %297 = vst [vmem:[#allocation2 + $0x258] sm:$0xff] 0.0
          %298 = vst [vmem:[#allocation2 + $0x260] sm:$0xff] 0.0
          %299 = vst [vmem:[#allocation2 + $0x268] sm:$0xff] 0.0
          %300 = vst [vmem:[#allocation2 + $0x270] sm:$0xff] 0.0
          %301 = vst [vmem:[#allocation2 + $0x278] sm:$0xff] 0.0
          %s302 = scalar_lea.vmem [#allocation2], 384
          %303 = vst [vmem:[%s302] sm:$0xff] 0.0
          %304 = vst [vmem:[%s302 + $0x8] sm:$0xff] 0.0
          %305 = vst [vmem:[%s302 + $0x10] sm:$0xff] 0.0
          %306 = vst [vmem:[%s302 + $0x18] sm:$0xff] 0.0
          %307 = vst [vmem:[%s302 + $0x20] sm:$0xff] 0.0
          %308 = vst [vmem:[%s302 + $0x28] sm:$0xff] 0.0
          %309 = vst [vmem:[%s302 + $0x30] sm:$0xff] 0.0
          %310 = vst [vmem:[%s302 + $0x38] sm:$0xff] 0.0
          %311 = vst [vmem:[%s302 + $0x40] sm:$0xff] 0.0
          %312 = vst [vmem:[%s302 + $0x48] sm:$0xff] 0.0
          %313 = vst [vmem:[%s302 + $0x50] sm:$0xff] 0.0
          %314 = vst [vmem:[%s302 + $0x58] sm:$0xff] 0.0
          %315 = vst [vmem:[%s302 + $0x60] sm:$0xff] 0.0
          %316 = vst [vmem:[%s302 + $0x68] sm:$0xff] 0.0
          %317 = vst [vmem:[%s302 + $0x70] sm:$0xff] 0.0
          %318 = vst [vmem:[%s302 + $0x78] sm:$0xff] 0.0
          %319 = vst [vmem:[%s302 + $0x200] sm:$0xff] 0.0
          %320 = vst [vmem:[%s302 + $0x208] sm:$0xff] 0.0
          %321 = vst [vmem:[%s302 + $0x210] sm:$0xff] 0.0
          %322 = vst [vmem:[%s302 + $0x218] sm:$0xff] 0.0
          %323 = vst [vmem:[%s302 + $0x220] sm:$0xff] 0.0
          %324 = vst [vmem:[%s302 + $0x228] sm:$0xff] 0.0
          %325 = vst [vmem:[%s302 + $0x230] sm:$0xff] 0.0
          %326 = vst [vmem:[%s302 + $0x238] sm:$0xff] 0.0
          %327 = vst [vmem:[%s302 + $0x240] sm:$0xff] 0.0
          %328 = vst [vmem:[%s302 + $0x248] sm:$0xff] 0.0
          %329 = vst [vmem:[%s302 + $0x250] sm:$0xff] 0.0
          %330 = vst [vmem:[%s302 + $0x258] sm:$0xff] 0.0
          %331 = vst [vmem:[%s302 + $0x260] sm:$0xff] 0.0
          %332 = vst [vmem:[%s302 + $0x268] sm:$0xff] 0.0
          %333 = vst [vmem:[%s302 + $0x270] sm:$0xff] 0.0
          %334 = vst [vmem:[%s302 + $0x278] sm:$0xff] 0.0
          %s335 = scalar_lea.vmem [#allocation2], 128
          %336 = vst [vmem:[%s335] sm:$0xf] 0.0
          %337 = vst [vmem:[%s335 + $0x8] sm:$0xf] 0.0
          %338 = vst [vmem:[%s335 + $0x20] sm:$0xf] 0.0
          %339 = vst [vmem:[%s335 + $0x28] sm:$0xf] 0.0
          %340 = vst [vmem:[%s335 + $0x40] sm:$0xf] 0.0
          %341 = vst [vmem:[%s335 + $0x48] sm:$0xf] 0.0
          %342 = vst [vmem:[%s335 + $0x60] sm:$0xf] 0.0
          %343 = vst [vmem:[%s335 + $0x68] sm:$0xf] 0.0
          %344 = vst [vmem:[%s335 + $0x80] sm:$0xf] 0.0
          %345 = vst [vmem:[%s335 + $0x88] sm:$0xf] 0.0
          %346 = vst [vmem:[%s335 + $0xa0] sm:$0xf] 0.0
          %347 = vst [vmem:[%s335 + $0xa8] sm:$0xf] 0.0
          %348 = vst [vmem:[%s335 + $0xc0] sm:$0xf] 0.0
          %349 = vst [vmem:[%s335 + $0xc8] sm:$0xf] 0.0
          %350 = vst [vmem:[%s335 + $0xe0] sm:$0xf] 0.0
          %351 = vst [vmem:[%s335 + $0xe8] sm:$0xf] 0.0
          %352 = vst [vmem:[%s335 + $0x200] sm:$0xf] 0.0
          %353 = vst [vmem:[%s335 + $0x208] sm:$0xf] 0.0
          %354 = vst [vmem:[%s335 + $0x220] sm:$0xf] 0.0
          %355 = vst [vmem:[%s335 + $0x228] sm:$0xf] 0.0
          %356 = vst [vmem:[%s335 + $0x240] sm:$0xf] 0.0
          %357 = vst [vmem:[%s335 + $0x248] sm:$0xf] 0.0
          %358 = vst [vmem:[%s335 + $0x260] sm:$0xf] 0.0
          %359 = vst [vmem:[%s335 + $0x268] sm:$0xf] 0.0
          %360 = vst [vmem:[%s335 + $0x280] sm:$0xf] 0.0
          %361 = vst [vmem:[%s335 + $0x288] sm:$0xf] 0.0
          %362 = vst [vmem:[%s335 + $0x2a0] sm:$0xf] 0.0
          %363 = vst [vmem:[%s335 + $0x2a8] sm:$0xf] 0.0
          %364 = vst [vmem:[%s335 + $0x2c0] sm:$0xf] 0.0
          %365 = vst [vmem:[%s335 + $0x2c8] sm:$0xf] 0.0
          %366 = vst [vmem:[%s335 + $0x2e0] sm:$0xf] 0.0
          %367 = vst [vmem:[%s335 + $0x2e8] sm:$0xf] 0.0
          %368 = vst [vmem:[%s335 + $0x10] sm:$0xf0] 0.0
          %369 = vst [vmem:[%s335 + $0x18] sm:$0xf0] 0.0
          %370 = vst [vmem:[%s335 + $0x30] sm:$0xf0] 0.0
          %371 = vst [vmem:[%s335 + $0x38] sm:$0xf0] 0.0
          %372 = vst [vmem:[%s335 + $0x50] sm:$0xf0] 0.0
          %373 = vst [vmem:[%s335 + $0x58] sm:$0xf0] 0.0
          %374 = vst [vmem:[%s335 + $0x70] sm:$0xf0] 0.0
          %375 = vst [vmem:[%s335 + $0x78] sm:$0xf0] 0.0
          %376 = vst [vmem:[%s335 + $0x90] sm:$0xf0] 0.0
          %377 = vst [vmem:[%s335 + $0x98] sm:$0xf0] 0.0
          %378 = vst [vmem:[%s335 + $0xb0] sm:$0xf0] 0.0
          %379 = vst [vmem:[%s335 + $0xb8] sm:$0xf0] 0.0
          %380 = vst [vmem:[%s335 + $0xd0] sm:$0xf0] 0.0
          %381 = vst [vmem:[%s335 + $0xd8] sm:$0xf0] 0.0
          %382 = vst [vmem:[%s335 + $0xf0] sm:$0xf0] 0.0
          %383 = vst [vmem:[%s335 + $0xf8] sm:$0xf0] 0.0
          %384 = vst [vmem:[%s335 + $0x210] sm:$0xf0] 0.0
          %385 = vst [vmem:[%s335 + $0x218] sm:$0xf0] 0.0
          %386 = vst [vmem:[%s335 + $0x230] sm:$0xf0] 0.0
          %387 = vst [vmem:[%s335 + $0x238] sm:$0xf0] 0.0
          %388 = vst [vmem:[%s335 + $0x250] sm:$0xf0] 0.0
          %389 = vst [vmem:[%s335 + $0x258] sm:$0xf0] 0.0
          %390 = vst [vmem:[%s335 + $0x270] sm:$0xf0] 0.0
          %391 = vst [vmem:[%s335 + $0x278] sm:$0xf0] 0.0
          %392 = vst [vmem:[%s335 + $0x290] sm:$0xf0] 0.0
          %393 = vst [vmem:[%s335 + $0x298] sm:$0xf0] 0.0
          %394 = vst [vmem:[%s335 + $0x2b0] sm:$0xf0] 0.0
          %395 = vst [vmem:[%s335 + $0x2b8] sm:$0xf0] 0.0
          %396 = vst [vmem:[%s335 + $0x2d0] sm:$0xf0] 0.0
          %397 = vst [vmem:[%s335 + $0x2d8] sm:$0xf0] 0.0
          %398 = vst [vmem:[%s335 + $0x2f0] sm:$0xf0] 0.0
          %399 = vst [vmem:[%s335 + $0x2f8] sm:$0xf0] 0.0
          %v400 = vld [vmem:[%s0] sm:$0xff]
          %v401 = vld [vmem:[%s0 + $0x8] sm:$0xff]
          %v402 = vld [vmem:[%s0 + $0x10] sm:$0xff]
          %v403 = vld [vmem:[%s0 + $0x18] sm:$0xff]
          %v404 = vld [vmem:[%s0 + $0x20] sm:$0xff]
          %v405 = vld [vmem:[%s0 + $0x28] sm:$0xff]
          %v406 = vld [vmem:[%s0 + $0x30] sm:$0xff]
          %v407 = vld [vmem:[%s0 + $0x38] sm:$0xff]
          %v408 = vld [vmem:[%s0 + $0x40] sm:$0xff]
          %v409 = vld [vmem:[%s0 + $0x48] sm:$0xff]
          %v410 = vld [vmem:[%s0 + $0x50] sm:$0xff]
          %v411 = vld [vmem:[%s0 + $0x58] sm:$0xff]
          %v412 = vld [vmem:[%s0 + $0x60] sm:$0xff]
          %v413 = vld [vmem:[%s0 + $0x68] sm:$0xff]
          %v414 = vld [vmem:[%s0 + $0x70] sm:$0xff]
          %v415 = vld [vmem:[%s0 + $0x78] sm:$0xff]
          %v416 = vld [vmem:[%s0 + $0x80] sm:$0xff]
          %v417 = vld [vmem:[%s0 + $0x88] sm:$0xff]
          %v418 = vld [vmem:[%s0 + $0x90] sm:$0xff]
          %v419 = vld [vmem:[%s0 + $0x98] sm:$0xff]
          %v420 = vld [vmem:[%s0 + $0xa0] sm:$0xff]
          %v421 = vld [vmem:[%s0 + $0xa8] sm:$0xff]
          %v422 = vld [vmem:[%s0 + $0xb0] sm:$0xff]
          %v423 = vld [vmem:[%s0 + $0xb8] sm:$0xff]
          %v424 = vld [vmem:[%s0 + $0xc0] sm:$0xff]
          %v425 = vld [vmem:[%s0 + $0xc8] sm:$0xff]
          %v426 = vld [vmem:[%s0 + $0xd0] sm:$0xff]
          %v427 = vld [vmem:[%s0 + $0xd8] sm:$0xff]
          %v428 = vld [vmem:[%s0 + $0xe0] sm:$0xff]
          %v429 = vld [vmem:[%s0 + $0xe8] sm:$0xff]
          %v430 = vld [vmem:[%s0 + $0xf0] sm:$0xff]
          %v431 = vld [vmem:[%s0 + $0xf8] sm:$0xff]
          %v464 = vrot.slane %v400, 4
          %v465 = vrot.slane %v401, 4
          %v466 = vrot.slane %v402, 4
          %v467 = vrot.slane %v403, 4
          %v468 = vrot.slane %v404, 4
          %v469 = vrot.slane %v405, 4
          %v470 = vrot.slane %v406, 4
          %v471 = vrot.slane %v407, 4
          %v472 = vrot.slane %v408, 4
          %v473 = vrot.slane %v409, 4
          %v474 = vrot.slane %v410, 4
          %v475 = vrot.slane %v411, 4
          %v476 = vrot.slane %v412, 4
          %v477 = vrot.slane %v413, 4
          %v478 = vrot.slane %v414, 4
          %v479 = vrot.slane %v415, 4
          %v480 = vrot.slane %v416, 4
          %v481 = vrot.slane %v417, 4
          %v482 = vrot.slane %v418, 4
          %v483 = vrot.slane %v419, 4
          %v484 = vrot.slane %v420, 4
          %v485 = vrot.slane %v421, 4
          %v486 = vrot.slane %v422, 4
          %v487 = vrot.slane %v423, 4
          %v488 = vrot.slane %v424, 4
          %v489 = vrot.slane %v425, 4
          %v490 = vrot.slane %v426, 4
          %v491 = vrot.slane %v427, 4
          %v492 = vrot.slane %v428, 4
          %v493 = vrot.slane %v429, 4
          %v494 = vrot.slane %v430, 4
          %v495 = vrot.slane %v431, 4
          %528 = vst [vmem:[%s335] sm:$0xf0] %v464
          %529 = vst [vmem:[%s335 + $0x8] sm:$0xf0] %v465
          %530 = vst [vmem:[%s335 + $0x10] sm:$0xf] %v464
          %531 = vst [vmem:[%s335 + $0x18] sm:$0xf] %v465
          %532 = vst [vmem:[%s335 + $0x20] sm:$0xf0] %v466
          %533 = vst [vmem:[%s335 + $0x28] sm:$0xf0] %v467
          %534 = vst [vmem:[%s335 + $0x30] sm:$0xf] %v466
          %535 = vst [vmem:[%s335 + $0x38] sm:$0xf] %v467
          %536 = vst [vmem:[%s335 + $0x40] sm:$0xf0] %v468
          %537 = vst [vmem:[%s335 + $0x48] sm:$0xf0] %v469
          %538 = vst [vmem:[%s335 + $0x50] sm:$0xf] %v468
          %539 = vst [vmem:[%s335 + $0x58] sm:$0xf] %v469
          %540 = vst [vmem:[%s335 + $0x60] sm:$0xf0] %v470
          %541 = vst [vmem:[%s335 + $0x68] sm:$0xf0] %v471
          %542 = vst [vmem:[%s335 + $0x70] sm:$0xf] %v470
          %543 = vst [vmem:[%s335 + $0x78] sm:$0xf] %v471
          %544 = vst [vmem:[%s335 + $0x80] sm:$0xf0] %v472
          %545 = vst [vmem:[%s335 + $0x88] sm:$0xf0] %v473
          %546 = vst [vmem:[%s335 + $0x90] sm:$0xf] %v472
          %547 = vst [vmem:[%s335 + $0x98] sm:$0xf] %v473
          %548 = vst [vmem:[%s335 + $0xa0] sm:$0xf0] %v474
          %549 = vst [vmem:[%s335 + $0xa8] sm:$0xf0] %v475
          %550 = vst [vmem:[%s335 + $0xb0] sm:$0xf] %v474
          %551 = vst [vmem:[%s335 + $0xb8] sm:$0xf] %v475
          %552 = vst [vmem:[%s335 + $0xc0] sm:$0xf0] %v476
          %553 = vst [vmem:[%s335 + $0xc8] sm:$0xf0] %v477
          %554 = vst [vmem:[%s335 + $0xd0] sm:$0xf] %v476
          %555 = vst [vmem:[%s335 + $0xd8] sm:$0xf] %v477
          %556 = vst [vmem:[%s335 + $0xe0] sm:$0xf0] %v478
          %557 = vst [vmem:[%s335 + $0xe8] sm:$0xf0] %v479
          %558 = vst [vmem:[%s335 + $0xf0] sm:$0xf] %v478
          %559 = vst [vmem:[%s335 + $0xf8] sm:$0xf] %v479
          %560 = vst [vmem:[%s335 + $0x200] sm:$0xf0] %v480
          %561 = vst [vmem:[%s335 + $0x208] sm:$0xf0] %v481
          %562 = vst [vmem:[%s335 + $0x210] sm:$0xf] %v480
          %563 = vst [vmem:[%s335 + $0x218] sm:$0xf] %v481
          %564 = vst [vmem:[%s335 + $0x220] sm:$0xf0] %v482
          %565 = vst [vmem:[%s335 + $0x228] sm:$0xf0] %v483
          %566 = vst [vmem:[%s335 + $0x230] sm:$0xf] %v482
          %567 = vst [vmem:[%s335 + $0x238] sm:$0xf] %v483
          %568 = vst [vmem:[%s335 + $0x240] sm:$0xf0] %v484
          %569 = vst [vmem:[%s335 + $0x248] sm:$0xf0] %v485
          %570 = vst [vmem:[%s335 + $0x250] sm:$0xf] %v484
          %571 = vst [vmem:[%s335 + $0x258] sm:$0xf] %v485
          %572 = vst [vmem:[%s335 + $0x260] sm:$0xf0] %v486
          %573 = vst [vmem:[%s335 + $0x268] sm:$0xf0] %v487
          %574 = vst [vmem:[%s335 + $0x270] sm:$0xf] %v486
          %575 = vst [vmem:[%s335 + $0x278] sm:$0xf] %v487
          %576 = vst [vmem:[%s335 + $0x280] sm:$0xf0] %v488
          %577 = vst [vmem:[%s335 + $0x288] sm:$0xf0] %v489
          %578 = vst [vmem:[%s335 + $0x290] sm:$0xf] %v488
          %579 = vst [vmem:[%s335 + $0x298] sm:$0xf] %v489
          %580 = vst [vmem:[%s335 + $0x2a0] sm:$0xf0] %v490
          %581 = vst [vmem:[%s335 + $0x2a8] sm:$0xf0] %v491
          %582 = vst [vmem:[%s335 + $0x2b0] sm:$0xf] %v490
          %583 = vst [vmem:[%s335 + $0x2b8] sm:$0xf] %v491
          %584 = vst [vmem:[%s335 + $0x2c0] sm:$0xf0] %v492
          %585 = vst [vmem:[%s335 + $0x2c8] sm:$0xf0] %v493
          %586 = vst [vmem:[%s335 + $0x2d0] sm:$0xf] %v492
          %587 = vst [vmem:[%s335 + $0x2d8] sm:$0xf] %v493
          %588 = vst [vmem:[%s335 + $0x2e0] sm:$0xf0] %v494
          %589 = vst [vmem:[%s335 + $0x2e8] sm:$0xf0] %v495
          %590 = vst [vmem:[%s335 + $0x2f0] sm:$0xf] %v494
          %591 = vst [vmem:[%s335 + $0x2f8] sm:$0xf] %v495
          %vm592 = vcmask 523264
          %593 = vst.msk [vmem:[#allocation3] sm:$0xff] %vm592, 0.0
          %594 = vst.msk [vmem:[#allocation3 + $0x8] sm:$0xff] %vm592, 0.0
          %595 = vst.msk [vmem:[#allocation3 + $0x10] sm:$0xff] %vm592, 0.0
          %596 = vst.msk [vmem:[#allocation3 + $0x18] sm:$0xff] %vm592, 0.0
          %597 = vst.msk [vmem:[#allocation3 + $0x20] sm:$0xff] %vm592, 0.0
          %598 = vst.msk [vmem:[#allocation3 + $0x28] sm:$0xff] %vm592, 0.0
          %599 = vst.msk [vmem:[#allocation3 + $0x30] sm:$0xff] %vm592, 0.0
          %600 = vst.msk [vmem:[#allocation3 + $0x38] sm:$0xff] %vm592, 0.0
          %601 = vst.msk [vmem:[#allocation3 + $0x40] sm:$0xff] %vm592, 0.0
          %602 = vst.msk [vmem:[#allocation3 + $0x48] sm:$0xff] %vm592, 0.0
          %603 = vst.msk [vmem:[#allocation3 + $0x50] sm:$0xff] %vm592, 0.0
          %604 = vst.msk [vmem:[#allocation3 + $0x58] sm:$0xff] %vm592, 0.0
          %605 = vst.msk [vmem:[#allocation3 + $0x60] sm:$0xff] %vm592, 0.0
          %606 = vst.msk [vmem:[#allocation3 + $0x68] sm:$0xff] %vm592, 0.0
          %607 = vst.msk [vmem:[#allocation3 + $0x70] sm:$0xff] %vm592, 0.0
          %608 = vst.msk [vmem:[#allocation3 + $0x78] sm:$0xff] %vm592, 0.0
        $region52: #{super_resolution_forward.1} parent=47 // pred_fallthru
          _
        %s609 = smul.u32 %s19, 4
        %s610 = smul.addr %s609, 8
        %s611 = scalar_lea.vmem [#allocation2], %s610
        %v612 = vld [vmem:[%s611] sm:$0xff]
        %v613 = vld [vmem:[%s611 + $0x8] sm:$0xff]
        %v614 = vld [vmem:[%s611 + $0x20] sm:$0xff]
        %v615 = vld [vmem:[%s611 + $0x28] sm:$0xff]
        %v616 = vld [vmem:[%s611 + $0x40] sm:$0xff]
        %v617 = vld [vmem:[%s611 + $0x48] sm:$0xff]
        %v618 = vld [vmem:[%s611 + $0x60] sm:$0xff]
        %v619 = vld [vmem:[%s611 + $0x68] sm:$0xff]
        %v620 = vld [vmem:[%s611 + $0x80] sm:$0xff]
        %v621 = vld [vmem:[%s611 + $0x88] sm:$0xff]
        %v622 = vld [vmem:[%s611 + $0xa0] sm:$0xff]
        %v623 = vld [vmem:[%s611 + $0xa8] sm:$0xff]
        %v624 = vld [vmem:[%s611 + $0xc0] sm:$0xff]
        %v625 = vld [vmem:[%s611 + $0xc8] sm:$0xff]
        %v626 = vld [vmem:[%s611 + $0xe0] sm:$0xff]
        %v627 = vld [vmem:[%s611 + $0xe8] sm:$0xff]
        %v628 = vld [vmem:[%s611 + $0x200] sm:$0xff]
        %v629 = vld [vmem:[%s611 + $0x208] sm:$0xff]
        %v630 = vld [vmem:[%s611 + $0x220] sm:$0xff]
        %v631 = vld [vmem:[%s611 + $0x228] sm:$0xff]
        %v632 = vld [vmem:[%s611 + $0x240] sm:$0xff]
        %v633 = vld [vmem:[%s611 + $0x248] sm:$0xff]
        %v634 = vld [vmem:[%s611 + $0x260] sm:$0xff]
        %v635 = vld [vmem:[%s611 + $0x268] sm:$0xff]
        %v636 = vld [vmem:[%s611 + $0x280] sm:$0xff]
        %v637 = vld [vmem:[%s611 + $0x288] sm:$0xff]
        %v638 = vld [vmem:[%s611 + $0x2a0] sm:$0xff]
        %v639 = vld [vmem:[%s611 + $0x2a8] sm:$0xff]
        %v640 = vld [vmem:[%s611 + $0x2c0] sm:$0xff]
        %v641 = vld [vmem:[%s611 + $0x2c8] sm:$0xff]
        %v642 = vld [vmem:[%s611 + $0x2e0] sm:$0xff]
        %v643 = vld [vmem:[%s611 + $0x2e8] sm:$0xff]
        %v644 = vpack.c.bf16 %v614, %v612
        %v645 = vpack.c.bf16 %v615, %v613
        %v646 = vpack.c.bf16 %v618, %v616
        %v647 = vpack.c.bf16 %v619, %v617
        %v648 = vpack.c.bf16 %v622, %v620
        %v649 = vpack.c.bf16 %v623, %v621
        %v650 = vpack.c.bf16 %v626, %v624
        %v651 = vpack.c.bf16 %v627, %v625
        %v652 = vpack.c.bf16 %v630, %v628
        %v653 = vpack.c.bf16 %v631, %v629
        %v654 = vpack.c.bf16 %v634, %v632
        %v655 = vpack.c.bf16 %v635, %v633
        %v656 = vpack.c.bf16 %v638, %v636
        %v657 = vpack.c.bf16 %v639, %v637
        %v658 = vpack.c.bf16 %v642, %v640
        %v659 = vpack.c.bf16 %v643, %v641
        %660 = vst [vmem:[#allocation4] sm:$0xff] %v644
        %661 = vst [vmem:[#allocation4 + $0x8] sm:$0xff] %v645
        %662 = vst [vmem:[#allocation4 + $0x90] sm:$0xff] %v646
        %663 = vst [vmem:[#allocation4 + $0x98] sm:$0xff] %v647
        %664 = vst [vmem:[#allocation4 + $0x120] sm:$0xff] %v648
        %665 = vst [vmem:[#allocation4 + $0x128] sm:$0xff] %v649
        %666 = vst [vmem:[#allocation4 + $0x1b0] sm:$0xff] %v650
        %667 = vst [vmem:[#allocation4 + $0x1b8] sm:$0xff] %v651
        %668 = vst [vmem:[#allocation4 + $0x240] sm:$0xff] %v652
        %669 = vst [vmem:[#allocation4 + $0x248] sm:$0xff] %v653
        %670 = vst [vmem:[#allocation4 + $0x2d0] sm:$0xff] %v654
        %671 = vst [vmem:[#allocation4 + $0x2d8] sm:$0xff] %v655
        %672 = vst [vmem:[#allocation4 + $0x360] sm:$0xff] %v656
        %673 = vst [vmem:[#allocation4 + $0x368] sm:$0xff] %v657
        %674 = vst [vmem:[#allocation4 + $0x3f0] sm:$0xff] %v658
        %675 = vst [vmem:[#allocation4 + $0x3f8] sm:$0xff] %v659
        %v676 = vld [vmem:[%s611] sm:$0xfe]
        %v677 = vld [vmem:[%s611 + $0x8] sm:$0xfe]
        %v678 = vld [vmem:[%s611 + $0x10] sm:$0x1]
        %v679 = vld [vmem:[%s611 + $0x18] sm:$0x1]
        %v680 = vld [vmem:[%s611 + $0x20] sm:$0xfe]
        %v681 = vld [vmem:[%s611 + $0x28] sm:$0xfe]
        %v682 = vld [vmem:[%s611 + $0x30] sm:$0x1]
        %v683 = vld [vmem:[%s611 + $0x38] sm:$0x1]
        %v684 = vld [vmem:[%s611 + $0x40] sm:$0xfe]
        %v685 = vld [vmem:[%s611 + $0x48] sm:$0xfe]
        %v686 = vld [vmem:[%s611 + $0x50] sm:$0x1]
        %v687 = vld [vmem:[%s611 + $0x58] sm:$0x1]
        %v688 = vld [vmem:[%s611 + $0x60] sm:$0xfe]
        %v689 = vld [vmem:[%s611 + $0x68] sm:$0xfe]
        %v690 = vld [vmem:[%s611 + $0x70] sm:$0x1]
        %v691 = vld [vmem:[%s611 + $0x78] sm:$0x1]
        %v692 = vld [vmem:[%s611 + $0x80] sm:$0xfe]
        %v693 = vld [vmem:[%s611 + $0x88] sm:$0xfe]
        %v694 = vld [vmem:[%s611 + $0x90] sm:$0x1]
        %v695 = vld [vmem:[%s611 + $0x98] sm:$0x1]
        %v696 = vld [vmem:[%s611 + $0xa0] sm:$0xfe]
        %v697 = vld [vmem:[%s611 + $0xa8] sm:$0xfe]
        %v698 = vld [vmem:[%s611 + $0xb0] sm:$0x1]
        %v699 = vld [vmem:[%s611 + $0xb8] sm:$0x1]
        %v700 = vld [vmem:[%s611 + $0xc0] sm:$0xfe]
        %v701 = vld [vmem:[%s611 + $0xc8] sm:$0xfe]
        %v702 = vld [vmem:[%s611 + $0xd0] sm:$0x1]
        %v703 = vld [vmem:[%s611 + $0xd8] sm:$0x1]
        %v704 = vld [vmem:[%s611 + $0xe0] sm:$0xfe]
        %v705 = vld [vmem:[%s611 + $0xe8] sm:$0xfe]
        %v706 = vld [vmem:[%s611 + $0xf0] sm:$0x1]
        %v707 = vld [vmem:[%s611 + $0xf8] sm:$0x1]
        %v708 = vld [vmem:[%s611 + $0x200] sm:$0xfe]
        %v709 = vld [vmem:[%s611 + $0x208] sm:$0xfe]
        %v710 = vld [vmem:[%s611 + $0x210] sm:$0x1]
        %v711 = vld [vmem:[%s611 + $0x218] sm:$0x1]
        %v712 = vld [vmem:[%s611 + $0x220] sm:$0xfe]
        %v713 = vld [vmem:[%s611 + $0x228] sm:$0xfe]
        %v714 = vld [vmem:[%s611 + $0x230] sm:$0x1]
        %v715 = vld [vmem:[%s611 + $0x238] sm:$0x1]
        %v716 = vld [vmem:[%s611 + $0x240] sm:$0xfe]
        %v717 = vld [vmem:[%s611 + $0x248] sm:$0xfe]
        %v718 = vld [vmem:[%s611 + $0x250] sm:$0x1]
        %v719 = vld [vmem:[%s611 + $0x258] sm:$0x1]
        %v720 = vld [vmem:[%s611 + $0x260] sm:$0xfe]
        %v721 = vld [vmem:[%s611 + $0x268] sm:$0xfe]
        %v722 = vld [vmem:[%s611 + $0x270] sm:$0x1]
        %v723 = vld [vmem:[%s611 + $0x278] sm:$0x1]
        %v724 = vld [vmem:[%s611 + $0x280] sm:$0xfe]
        %v725 = vld [vmem:[%s611 + $0x288] sm:$0xfe]
        %v726 = vld [vmem:[%s611 + $0x290] sm:$0x1]
        %v727 = vld [vmem:[%s611 + $0x298] sm:$0x1]
        %v728 = vld [vmem:[%s611 + $0x2a0] sm:$0xfe]
        %v729 = vld [vmem:[%s611 + $0x2a8] sm:$0xfe]
        %v730 = vld [vmem:[%s611 + $0x2b0] sm:$0x1]
        %v731 = vld [vmem:[%s611 + $0x2b8] sm:$0x1]
        %v732 = vld [vmem:[%s611 + $0x2c0] sm:$0xfe]
        %v733 = vld [vmem:[%s611 + $0x2c8] sm:$0xfe]
        %v734 = vld [vmem:[%s611 + $0x2d0] sm:$0x1]
        %v735 = vld [vmem:[%s611 + $0x2d8] sm:$0x1]
        %v736 = vld [vmem:[%s611 + $0x2e0] sm:$0xfe]
        %v737 = vld [vmem:[%s611 + $0x2e8] sm:$0xfe]
        %v738 = vld [vmem:[%s611 + $0x2f0] sm:$0x1]
        %v739 = vld [vmem:[%s611 + $0x2f8] sm:$0x1]
        %vm804 = vcmask 1046528
        %v805 = vrot.slane %v676, 1
        %v806 = vrot.slane %v678, 1
        %v807 = vsel %vm804, %v805, %v806
        %v808 = vrot.slane %v677, 1
        %v809 = vrot.slane %v679, 1
        %v810 = vsel %vm804, %v808, %v809
        %v811 = vrot.slane %v680, 1
        %v812 = vrot.slane %v682, 1
        %v813 = vsel %vm804, %v811, %v812
        %v814 = vrot.slane %v681, 1
        %v815 = vrot.slane %v683, 1
        %v816 = vsel %vm804, %v814, %v815
        %v817 = vrot.slane %v684, 1
        %v818 = vrot.slane %v686, 1
        %v819 = vsel %vm804, %v817, %v818
        %v820 = vrot.slane %v685, 1
        %v821 = vrot.slane %v687, 1
        %v822 = vsel %vm804, %v820, %v821
        %v823 = vrot.slane %v688, 1
        %v824 = vrot.slane %v690, 1
        %v825 = vsel %vm804, %v823, %v824
        %v826 = vrot.slane %v689, 1
        %v827 = vrot.slane %v691, 1
        %v828 = vsel %vm804, %v826, %v827
        %v829 = vrot.slane %v692, 1
        %v830 = vrot.slane %v694, 1
        %v831 = vsel %vm804, %v829, %v830
        %v832 = vrot.slane %v693, 1
        %v833 = vrot.slane %v695, 1
        %v834 = vsel %vm804, %v832, %v833
        %v835 = vrot.slane %v696, 1
        %v836 = vrot.slane %v698, 1
        %v837 = vsel %vm804, %v835, %v836
        %v838 = vrot.slane %v697, 1
        %v839 = vrot.slane %v699, 1
        %v840 = vsel %vm804, %v838, %v839
        %v841 = vrot.slane %v700, 1
        %v842 = vrot.slane %v702, 1
        %v843 = vsel %vm804, %v841, %v842
        %v844 = vrot.slane %v701, 1
        %v845 = vrot.slane %v703, 1
        %v846 = vsel %vm804, %v844, %v845
        %v847 = vrot.slane %v704, 1
        %v848 = vrot.slane %v706, 1
        %v849 = vsel %vm804, %v847, %v848
        %v850 = vrot.slane %v705, 1
        %v851 = vrot.slane %v707, 1
        %v852 = vsel %vm804, %v850, %v851
        %v853 = vrot.slane %v708, 1
        %v854 = vrot.slane %v710, 1
        %v855 = vsel %vm804, %v853, %v854
        %v856 = vrot.slane %v709, 1
        %v857 = vrot.slane %v711, 1
        %v858 = vsel %vm804, %v856, %v857
        %v859 = vrot.slane %v712, 1
        %v860 = vrot.slane %v714, 1
        %v861 = vsel %vm804, %v859, %v860
        %v862 = vrot.slane %v713, 1
        %v863 = vrot.slane %v715, 1
        %v864 = vsel %vm804, %v862, %v863
        %v865 = vrot.slane %v716, 1
        %v866 = vrot.slane %v718, 1
        %v867 = vsel %vm804, %v865, %v866
        %v868 = vrot.slane %v717, 1
        %v869 = vrot.slane %v719, 1
        %v870 = vsel %vm804, %v868, %v869
        %v871 = vrot.slane %v720, 1
        %v872 = vrot.slane %v722, 1
        %v873 = vsel %vm804, %v871, %v872
        %v874 = vrot.slane %v721, 1
        %v875 = vrot.slane %v723, 1
        %v876 = vsel %vm804, %v874, %v875
        %v877 = vrot.slane %v724, 1
        %v878 = vrot.slane %v726, 1
        %v879 = vsel %vm804, %v877, %v878
        %v880 = vrot.slane %v725, 1
        %v881 = vrot.slane %v727, 1
        %v882 = vsel %vm804, %v880, %v881
        %v883 = vrot.slane %v728, 1
        %v884 = vrot.slane %v730, 1
        %v885 = vsel %vm804, %v883, %v884
        %v886 = vrot.slane %v729, 1
        %v887 = vrot.slane %v731, 1
        %v888 = vsel %vm804, %v886, %v887
        %v889 = vrot.slane %v732, 1
        %v890 = vrot.slane %v734, 1
        %v891 = vsel %vm804, %v889, %v890
        %v892 = vrot.slane %v733, 1
        %v893 = vrot.slane %v735, 1
        %v894 = vsel %vm804, %v892, %v893
        %v895 = vrot.slane %v736, 1
        %v896 = vrot.slane %v738, 1
        %v897 = vsel %vm804, %v895, %v896
        %v898 = vrot.slane %v737, 1
        %v899 = vrot.slane %v739, 1
        %v900 = vsel %vm804, %v898, %v899
        %v933 = vpack.c.bf16 %v813, %v807
        %v934 = vpack.c.bf16 %v816, %v810
        %v935 = vpack.c.bf16 %v825, %v819
        %v936 = vpack.c.bf16 %v828, %v822
        %v937 = vpack.c.bf16 %v837, %v831
        %v938 = vpack.c.bf16 %v840, %v834
        %v939 = vpack.c.bf16 %v849, %v843
        %v940 = vpack.c.bf16 %v852, %v846
        %v941 = vpack.c.bf16 %v861, %v855
        %v942 = vpack.c.bf16 %v864, %v858
        %v943 = vpack.c.bf16 %v873, %v867
        %v944 = vpack.c.bf16 %v876, %v870
        %v945 = vpack.c.bf16 %v885, %v879
        %v946 = vpack.c.bf16 %v888, %v882
        %v947 = vpack.c.bf16 %v897, %v891
        %v948 = vpack.c.bf16 %v900, %v894
        %949 = vst [vmem:[#allocation4 + $0x10] sm:$0xff] %v933
        %950 = vst [vmem:[#allocation4 + $0x18] sm:$0xff] %v934
        %951 = vst [vmem:[#allocation4 + $0xa0] sm:$0xff] %v935
        %952 = vst [vmem:[#allocation4 + $0xa8] sm:$0xff] %v936
        %953 = vst [vmem:[#allocation4 + $0x130] sm:$0xff] %v937
        %954 = vst [vmem:[#allocation4 + $0x138] sm:$0xff] %v938
        %955 = vst [vmem:[#allocation4 + $0x1c0] sm:$0xff] %v939
        %956 = vst [vmem:[#allocation4 + $0x1c8] sm:$0xff] %v940
        %957 = vst [vmem:[#allocation4 + $0x250] sm:$0xff] %v941
        %958 = vst [vmem:[#allocation4 + $0x258] sm:$0xff] %v942
        %959 = vst [vmem:[#allocation4 + $0x2e0] sm:$0xff] %v943
        %960 = vst [vmem:[#allocation4 + $0x2e8] sm:$0xff] %v944
        %961 = vst [vmem:[#allocation4 + $0x370] sm:$0xff] %v945
        %962 = vst [vmem:[#allocation4 + $0x378] sm:$0xff] %v946
        %963 = vst [vmem:[#allocation4 + $0x400] sm:$0xff] %v947
        %964 = vst [vmem:[#allocation4 + $0x408] sm:$0xff] %v948
        %v965 = vld [vmem:[%s611] sm:$0xfc]
        %v966 = vld [vmem:[%s611 + $0x8] sm:$0xfc]
        %v967 = vld [vmem:[%s611 + $0x10] sm:$0x3]
        %v968 = vld [vmem:[%s611 + $0x18] sm:$0x3]
        %v969 = vld [vmem:[%s611 + $0x20] sm:$0xfc]
        %v970 = vld [vmem:[%s611 + $0x28] sm:$0xfc]
        %v971 = vld [vmem:[%s611 + $0x30] sm:$0x3]
        %v972 = vld [vmem:[%s611 + $0x38] sm:$0x3]
        %v973 = vld [vmem:[%s611 + $0x40] sm:$0xfc]
        %v974 = vld [vmem:[%s611 + $0x48] sm:$0xfc]
        %v975 = vld [vmem:[%s611 + $0x50] sm:$0x3]
        %v976 = vld [vmem:[%s611 + $0x58] sm:$0x3]
        %v977 = vld [vmem:[%s611 + $0x60] sm:$0xfc]
        %v978 = vld [vmem:[%s611 + $0x68] sm:$0xfc]
        %v979 = vld [vmem:[%s611 + $0x70] sm:$0x3]
        %v980 = vld [vmem:[%s611 + $0x78] sm:$0x3]
        %v981 = vld [vmem:[%s611 + $0x80] sm:$0xfc]
        %v982 = vld [vmem:[%s611 + $0x88] sm:$0xfc]
        %v983 = vld [vmem:[%s611 + $0x90] sm:$0x3]
        %v984 = vld [vmem:[%s611 + $0x98] sm:$0x3]
        %v985 = vld [vmem:[%s611 + $0xa0] sm:$0xfc]
        %v986 = vld [vmem:[%s611 + $0xa8] sm:$0xfc]
        %v987 = vld [vmem:[%s611 + $0xb0] sm:$0x3]
        %v988 = vld [vmem:[%s611 + $0xb8] sm:$0x3]
        %v989 = vld [vmem:[%s611 + $0xc0] sm:$0xfc]
        %v990 = vld [vmem:[%s611 + $0xc8] sm:$0xfc]
        %v991 = vld [vmem:[%s611 + $0xd0] sm:$0x3]
        %v992 = vld [vmem:[%s611 + $0xd8] sm:$0x3]
        %v993 = vld [vmem:[%s611 + $0xe0] sm:$0xfc]
        %v994 = vld [vmem:[%s611 + $0xe8] sm:$0xfc]
        %v995 = vld [vmem:[%s611 + $0xf0] sm:$0x3]
        %v996 = vld [vmem:[%s611 + $0xf8] sm:$0x3]
        %v997 = vld [vmem:[%s611 + $0x200] sm:$0xfc]
        %v998 = vld [vmem:[%s611 + $0x208] sm:$0xfc]
        %v999 = vld [vmem:[%s611 + $0x210] sm:$0x3]
        %v1000 = vld [vmem:[%s611 + $0x218] sm:$0x3]
        %v1001 = vld [vmem:[%s611 + $0x220] sm:$0xfc]
        %v1002 = vld [vmem:[%s611 + $0x228] sm:$0xfc]
        %v1003 = vld [vmem:[%s611 + $0x230] sm:$0x3]
        %v1004 = vld [vmem:[%s611 + $0x238] sm:$0x3]
        %v1005 = vld [vmem:[%s611 + $0x240] sm:$0xfc]
        %v1006 = vld [vmem:[%s611 + $0x248] sm:$0xfc]
        %v1007 = vld [vmem:[%s611 + $0x250] sm:$0x3]
        %v1008 = vld [vmem:[%s611 + $0x258] sm:$0x3]
        %v1009 = vld [vmem:[%s611 + $0x260] sm:$0xfc]
        %v1010 = vld [vmem:[%s611 + $0x268] sm:$0xfc]
        %v1011 = vld [vmem:[%s611 + $0x270] sm:$0x3]
        %v1012 = vld [vmem:[%s611 + $0x278] sm:$0x3]
        %v1013 = vld [vmem:[%s611 + $0x280] sm:$0xfc]
        %v1014 = vld [vmem:[%s611 + $0x288] sm:$0xfc]
        %v1015 = vld [vmem:[%s611 + $0x290] sm:$0x3]
        %v1016 = vld [vmem:[%s611 + $0x298] sm:$0x3]
        %v1017 = vld [vmem:[%s611 + $0x2a0] sm:$0xfc]
        %v1018 = vld [vmem:[%s611 + $0x2a8] sm:$0xfc]
        %v1019 = vld [vmem:[%s611 + $0x2b0] sm:$0x3]
        %v1020 = vld [vmem:[%s611 + $0x2b8] sm:$0x3]
        %v1021 = vld [vmem:[%s611 + $0x2c0] sm:$0xfc]
        %v1022 = vld [vmem:[%s611 + $0x2c8] sm:$0xfc]
        %v1023 = vld [vmem:[%s611 + $0x2d0] sm:$0x3]
        %v1024 = vld [vmem:[%s611 + $0x2d8] sm:$0x3]
        %v1025 = vld [vmem:[%s611 + $0x2e0] sm:$0xfc]
        %v1026 = vld [vmem:[%s611 + $0x2e8] sm:$0xfc]
        %v1027 = vld [vmem:[%s611 + $0x2f0] sm:$0x3]
        %v1028 = vld [vmem:[%s611 + $0x2f8] sm:$0x3]
        %vm1093 = vcmask 1045504
        %v1094 = vrot.slane %v965, 2
        %v1095 = vrot.slane %v967, 2
        %v1096 = vsel %vm1093, %v1094, %v1095
        %v1097 = vrot.slane %v966, 2
        %v1098 = vrot.slane %v968, 2
        %v1099 = vsel %vm1093, %v1097, %v1098
        %v1100 = vrot.slane %v969, 2
        %v1101 = vrot.slane %v971, 2
        %v1102 = vsel %vm1093, %v1100, %v1101
        %v1103 = vrot.slane %v970, 2
        %v1104 = vrot.slane %v972, 2
        %v1105 = vsel %vm1093, %v1103, %v1104
        %v1106 = vrot.slane %v973, 2
        %v1107 = vrot.slane %v975, 2
        %v1108 = vsel %vm1093, %v1106, %v1107
        %v1109 = vrot.slane %v974, 2
        %v1110 = vrot.slane %v976, 2
        %v1111 = vsel %vm1093, %v1109, %v1110
        %v1112 = vrot.slane %v977, 2
        %v1113 = vrot.slane %v979, 2
        %v1114 = vsel %vm1093, %v1112, %v1113
        %v1115 = vrot.slane %v978, 2
        %v1116 = vrot.slane %v980, 2
        %v1117 = vsel %vm1093, %v1115, %v1116
        %v1118 = vrot.slane %v981, 2
        %v1119 = vrot.slane %v983, 2
        %v1120 = vsel %vm1093, %v1118, %v1119
        %v1121 = vrot.slane %v982, 2
        %v1122 = vrot.slane %v984, 2
        %v1123 = vsel %vm1093, %v1121, %v1122
        %v1124 = vrot.slane %v985, 2
        %v1125 = vrot.slane %v987, 2
        %v1126 = vsel %vm1093, %v1124, %v1125
        %v1127 = vrot.slane %v986, 2
        %v1128 = vrot.slane %v988, 2
        %v1129 = vsel %vm1093, %v1127, %v1128
        %v1130 = vrot.slane %v989, 2
        %v1131 = vrot.slane %v991, 2
        %v1132 = vsel %vm1093, %v1130, %v1131
        %v1133 = vrot.slane %v990, 2
        %v1134 = vrot.slane %v992, 2
        %v1135 = vsel %vm1093, %v1133, %v1134
        %v1136 = vrot.slane %v993, 2
        %v1137 = vrot.slane %v995, 2
        %v1138 = vsel %vm1093, %v1136, %v1137
        %v1139 = vrot.slane %v994, 2
        %v1140 = vrot.slane %v996, 2
        %v1141 = vsel %vm1093, %v1139, %v1140
        %v1142 = vrot.slane %v997, 2
        %v1143 = vrot.slane %v999, 2
        %v1144 = vsel %vm1093, %v1142, %v1143
        %v1145 = vrot.slane %v998, 2
        %v1146 = vrot.slane %v1000, 2
        %v1147 = vsel %vm1093, %v1145, %v1146
        %v1148 = vrot.slane %v1001, 2
        %v1149 = vrot.slane %v1003, 2
        %v1150 = vsel %vm1093, %v1148, %v1149
        %v1151 = vrot.slane %v1002, 2
        %v1152 = vrot.slane %v1004, 2
        %v1153 = vsel %vm1093, %v1151, %v1152
        %v1154 = vrot.slane %v1005, 2
        %v1155 = vrot.slane %v1007, 2
        %v1156 = vsel %vm1093, %v1154, %v1155
        %v1157 = vrot.slane %v1006, 2
        %v1158 = vrot.slane %v1008, 2
        %v1159 = vsel %vm1093, %v1157, %v1158
        %v1160 = vrot.slane %v1009, 2
        %v1161 = vrot.slane %v1011, 2
        %v1162 = vsel %vm1093, %v1160, %v1161
        %v1163 = vrot.slane %v1010, 2
        %v1164 = vrot.slane %v1012, 2
        %v1165 = vsel %vm1093, %v1163, %v1164
        %v1166 = vrot.slane %v1013, 2
        %v1167 = vrot.slane %v1015, 2
        %v1168 = vsel %vm1093, %v1166, %v1167
        %v1169 = vrot.slane %v1014, 2
        %v1170 = vrot.slane %v1016, 2
        %v1171 = vsel %vm1093, %v1169, %v1170
        %v1172 = vrot.slane %v1017, 2
        %v1173 = vrot.slane %v1019, 2
        %v1174 = vsel %vm1093, %v1172, %v1173
        %v1175 = vrot.slane %v1018, 2
        %v1176 = vrot.slane %v1020, 2
        %v1177 = vsel %vm1093, %v1175, %v1176
        %v1178 = vrot.slane %v1021, 2
        %v1179 = vrot.slane %v1023, 2
        %v1180 = vsel %vm1093, %v1178, %v1179
        %v1181 = vrot.slane %v1022, 2
        %v1182 = vrot.slane %v1024, 2
        %v1183 = vsel %vm1093, %v1181, %v1182
        %v1184 = vrot.slane %v1025, 2
        %v1185 = vrot.slane %v1027, 2
        %v1186 = vsel %vm1093, %v1184, %v1185
        %v1187 = vrot.slane %v1026, 2
        %v1188 = vrot.slane %v1028, 2
        %v1189 = vsel %vm1093, %v1187, %v1188
        %v1222 = vpack.c.bf16 %v1102, %v1096
        %v1223 = vpack.c.bf16 %v1105, %v1099
        %v1224 = vpack.c.bf16 %v1114, %v1108
        %v1225 = vpack.c.bf16 %v1117, %v1111
        %v1226 = vpack.c.bf16 %v1126, %v1120
        %v1227 = vpack.c.bf16 %v1129, %v1123
        %v1228 = vpack.c.bf16 %v1138, %v1132
        %v1229 = vpack.c.bf16 %v1141, %v1135
        %v1230 = vpack.c.bf16 %v1150, %v1144
        %v1231 = vpack.c.bf16 %v1153, %v1147
        %v1232 = vpack.c.bf16 %v1162, %v1156
        %v1233 = vpack.c.bf16 %v1165, %v1159
        %v1234 = vpack.c.bf16 %v1174, %v1168
        %v1235 = vpack.c.bf16 %v1177, %v1171
        %v1236 = vpack.c.bf16 %v1186, %v1180
        %v1237 = vpack.c.bf16 %v1189, %v1183
        %1238 = vst [vmem:[#allocation4 + $0x20] sm:$0xff] %v1222
        %1239 = vst [vmem:[#allocation4 + $0x28] sm:$0xff] %v1223
        %1240 = vst [vmem:[#allocation4 + $0xb0] sm:$0xff] %v1224
        %1241 = vst [vmem:[#allocation4 + $0xb8] sm:$0xff] %v1225
        %1242 = vst [vmem:[#allocation4 + $0x140] sm:$0xff] %v1226
        %1243 = vst [vmem:[#allocation4 + $0x148] sm:$0xff] %v1227
        %1244 = vst [vmem:[#allocation4 + $0x1d0] sm:$0xff] %v1228
        %1245 = vst [vmem:[#allocation4 + $0x1d8] sm:$0xff] %v1229
        %1246 = vst [vmem:[#allocation4 + $0x260] sm:$0xff] %v1230
        %1247 = vst [vmem:[#allocation4 + $0x268] sm:$0xff] %v1231
        %1248 = vst [vmem:[#allocation4 + $0x2f0] sm:$0xff] %v1232
        %1249 = vst [vmem:[#allocation4 + $0x2f8] sm:$0xff] %v1233
        %1250 = vst [vmem:[#allocation4 + $0x380] sm:$0xff] %v1234
        %1251 = vst [vmem:[#allocation4 + $0x388] sm:$0xff] %v1235
        %1252 = vst [vmem:[#allocation4 + $0x410] sm:$0xff] %v1236
        %1253 = vst [vmem:[#allocation4 + $0x418] sm:$0xff] %v1237
        %v1254 = vld [vmem:[%s611] sm:$0xf8]
        %v1255 = vld [vmem:[%s611 + $0x8] sm:$0xf8]
        %v1256 = vld [vmem:[%s611 + $0x10] sm:$0x7]
        %v1257 = vld [vmem:[%s611 + $0x18] sm:$0x7]
        %v1258 = vld [vmem:[%s611 + $0x20] sm:$0xf8]
        %v1259 = vld [vmem:[%s611 + $0x28] sm:$0xf8]
        %v1260 = vld [vmem:[%s611 + $0x30] sm:$0x7]
        %v1261 = vld [vmem:[%s611 + $0x38] sm:$0x7]
        %v1262 = vld [vmem:[%s611 + $0x40] sm:$0xf8]
        %v1263 = vld [vmem:[%s611 + $0x48] sm:$0xf8]
        %v1264 = vld [vmem:[%s611 + $0x50] sm:$0x7]
        %v1265 = vld [vmem:[%s611 + $0x58] sm:$0x7]
        %v1266 = vld [vmem:[%s611 + $0x60] sm:$0xf8]
        %v1267 = vld [vmem:[%s611 + $0x68] sm:$0xf8]
        %v1268 = vld [vmem:[%s611 + $0x70] sm:$0x7]
        %v1269 = vld [vmem:[%s611 + $0x78] sm:$0x7]
        %v1270 = vld [vmem:[%s611 + $0x80] sm:$0xf8]
        %v1271 = vld [vmem:[%s611 + $0x88] sm:$0xf8]
        %v1272 = vld [vmem:[%s611 + $0x90] sm:$0x7]
        %v1273 = vld [vmem:[%s611 + $0x98] sm:$0x7]
        %v1274 = vld [vmem:[%s611 + $0xa0] sm:$0xf8]
        %v1275 = vld [vmem:[%s611 + $0xa8] sm:$0xf8]
        %v1276 = vld [vmem:[%s611 + $0xb0] sm:$0x7]
        %v1277 = vld [vmem:[%s611 + $0xb8] sm:$0x7]
        %v1278 = vld [vmem:[%s611 + $0xc0] sm:$0xf8]
        %v1279 = vld [vmem:[%s611 + $0xc8] sm:$0xf8]
        %v1280 = vld [vmem:[%s611 + $0xd0] sm:$0x7]
        %v1281 = vld [vmem:[%s611 + $0xd8] sm:$0x7]
        %v1282 = vld [vmem:[%s611 + $0xe0] sm:$0xf8]
        %v1283 = vld [vmem:[%s611 + $0xe8] sm:$0xf8]
        %v1284 = vld [vmem:[%s611 + $0xf0] sm:$0x7]
        %v1285 = vld [vmem:[%s611 + $0xf8] sm:$0x7]
        %v1286 = vld [vmem:[%s611 + $0x200] sm:$0xf8]
        %v1287 = vld [vmem:[%s611 + $0x208] sm:$0xf8]
        %v1288 = vld [vmem:[%s611 + $0x210] sm:$0x7]
        %v1289 = vld [vmem:[%s611 + $0x218] sm:$0x7]
        %v1290 = vld [vmem:[%s611 + $0x220] sm:$0xf8]
        %v1291 = vld [vmem:[%s611 + $0x228] sm:$0xf8]
        %v1292 = vld [vmem:[%s611 + $0x230] sm:$0x7]
        %v1293 = vld [vmem:[%s611 + $0x238] sm:$0x7]
        %v1294 = vld [vmem:[%s611 + $0x240] sm:$0xf8]
        %v1295 = vld [vmem:[%s611 + $0x248] sm:$0xf8]
        %v1296 = vld [vmem:[%s611 + $0x250] sm:$0x7]
        %v1297 = vld [vmem:[%s611 + $0x258] sm:$0x7]
        %v1298 = vld [vmem:[%s611 + $0x260] sm:$0xf8]
        %v1299 = vld [vmem:[%s611 + $0x268] sm:$0xf8]
        %v1300 = vld [vmem:[%s611 + $0x270] sm:$0x7]
        %v1301 = vld [vmem:[%s611 + $0x278] sm:$0x7]
        %v1302 = vld [vmem:[%s611 + $0x280] sm:$0xf8]
        %v1303 = vld [vmem:[%s611 + $0x288] sm:$0xf8]
        %v1304 = vld [vmem:[%s611 + $0x290] sm:$0x7]
        %v1305 = vld [vmem:[%s611 + $0x298] sm:$0x7]
        %v1306 = vld [vmem:[%s611 + $0x2a0] sm:$0xf8]
        %v1307 = vld [vmem:[%s611 + $0x2a8] sm:$0xf8]
        %v1308 = vld [vmem:[%s611 + $0x2b0] sm:$0x7]
        %v1309 = vld [vmem:[%s611 + $0x2b8] sm:$0x7]
        %v1310 = vld [vmem:[%s611 + $0x2c0] sm:$0xf8]
        %v1311 = vld [vmem:[%s611 + $0x2c8] sm:$0xf8]
        %v1312 = vld [vmem:[%s611 + $0x2d0] sm:$0x7]
        %v1313 = vld [vmem:[%s611 + $0x2d8] sm:$0x7]
        %v1314 = vld [vmem:[%s611 + $0x2e0] sm:$0xf8]
        %v1315 = vld [vmem:[%s611 + $0x2e8] sm:$0xf8]
        %v1316 = vld [vmem:[%s611 + $0x2f0] sm:$0x7]
        %v1317 = vld [vmem:[%s611 + $0x2f8] sm:$0x7]
        %vm1382 = vcmask 1044480
        %v1383 = vrot.slane %v1254, 3
        %v1384 = vrot.slane %v1256, 3
        %v1385 = vsel %vm1382, %v1383, %v1384
        %v1386 = vrot.slane %v1255, 3
        %v1387 = vrot.slane %v1257, 3
        %v1388 = vsel %vm1382, %v1386, %v1387
        %v1389 = vrot.slane %v1258, 3
        %v1390 = vrot.slane %v1260, 3
        %v1391 = vsel %vm1382, %v1389, %v1390
        %v1392 = vrot.slane %v1259, 3
        %v1393 = vrot.slane %v1261, 3
        %v1394 = vsel %vm1382, %v1392, %v1393
        %v1395 = vrot.slane %v1262, 3
        %v1396 = vrot.slane %v1264, 3
        %v1397 = vsel %vm1382, %v1395, %v1396
        %v1398 = vrot.slane %v1263, 3
        %v1399 = vrot.slane %v1265, 3
        %v1400 = vsel %vm1382, %v1398, %v1399
        %v1401 = vrot.slane %v1266, 3
        %v1402 = vrot.slane %v1268, 3
        %v1403 = vsel %vm1382, %v1401, %v1402
        %v1404 = vrot.slane %v1267, 3
        %v1405 = vrot.slane %v1269, 3
        %v1406 = vsel %vm1382, %v1404, %v1405
        %v1407 = vrot.slane %v1270, 3
        %v1408 = vrot.slane %v1272, 3
        %v1409 = vsel %vm1382, %v1407, %v1408
        %v1410 = vrot.slane %v1271, 3
        %v1411 = vrot.slane %v1273, 3
        %v1412 = vsel %vm1382, %v1410, %v1411
        %v1413 = vrot.slane %v1274, 3
        %v1414 = vrot.slane %v1276, 3
        %v1415 = vsel %vm1382, %v1413, %v1414
        %v1416 = vrot.slane %v1275, 3
        %v1417 = vrot.slane %v1277, 3
        %v1418 = vsel %vm1382, %v1416, %v1417
        %v1419 = vrot.slane %v1278, 3
        %v1420 = vrot.slane %v1280, 3
        %v1421 = vsel %vm1382, %v1419, %v1420
        %v1422 = vrot.slane %v1279, 3
        %v1423 = vrot.slane %v1281, 3
        %v1424 = vsel %vm1382, %v1422, %v1423
        %v1425 = vrot.slane %v1282, 3
        %v1426 = vrot.slane %v1284, 3
        %v1427 = vsel %vm1382, %v1425, %v1426
        %v1428 = vrot.slane %v1283, 3
        %v1429 = vrot.slane %v1285, 3
        %v1430 = vsel %vm1382, %v1428, %v1429
        %v1431 = vrot.slane %v1286, 3
        %v1432 = vrot.slane %v1288, 3
        %v1433 = vsel %vm1382, %v1431, %v1432
        %v1434 = vrot.slane %v1287, 3
        %v1435 = vrot.slane %v1289, 3
        %v1436 = vsel %vm1382, %v1434, %v1435
        %v1437 = vrot.slane %v1290, 3
        %v1438 = vrot.slane %v1292, 3
        %v1439 = vsel %vm1382, %v1437, %v1438
        %v1440 = vrot.slane %v1291, 3
        %v1441 = vrot.slane %v1293, 3
        %v1442 = vsel %vm1382, %v1440, %v1441
        %v1443 = vrot.slane %v1294, 3
        %v1444 = vrot.slane %v1296, 3
        %v1445 = vsel %vm1382, %v1443, %v1444
        %v1446 = vrot.slane %v1295, 3
        %v1447 = vrot.slane %v1297, 3
        %v1448 = vsel %vm1382, %v1446, %v1447
        %v1449 = vrot.slane %v1298, 3
        %v1450 = vrot.slane %v1300, 3
        %v1451 = vsel %vm1382, %v1449, %v1450
        %v1452 = vrot.slane %v1299, 3
        %v1453 = vrot.slane %v1301, 3
        %v1454 = vsel %vm1382, %v1452, %v1453
        %v1455 = vrot.slane %v1302, 3
        %v1456 = vrot.slane %v1304, 3
        %v1457 = vsel %vm1382, %v1455, %v1456
        %v1458 = vrot.slane %v1303, 3
        %v1459 = vrot.slane %v1305, 3
        %v1460 = vsel %vm1382, %v1458, %v1459
        %v1461 = vrot.slane %v1306, 3
        %v1462 = vrot.slane %v1308, 3
        %v1463 = vsel %vm1382, %v1461, %v1462
        %v1464 = vrot.slane %v1307, 3
        %v1465 = vrot.slane %v1309, 3
        %v1466 = vsel %vm1382, %v1464, %v1465
        %v1467 = vrot.slane %v1310, 3
        %v1468 = vrot.slane %v1312, 3
        %v1469 = vsel %vm1382, %v1467, %v1468
        %v1470 = vrot.slane %v1311, 3
        %v1471 = vrot.slane %v1313, 3
        %v1472 = vsel %vm1382, %v1470, %v1471
        %v1473 = vrot.slane %v1314, 3
        %v1474 = vrot.slane %v1316, 3
        %v1475 = vsel %vm1382, %v1473, %v1474
        %v1476 = vrot.slane %v1315, 3
        %v1477 = vrot.slane %v1317, 3
        %v1478 = vsel %vm1382, %v1476, %v1477
        %v1511 = vpack.c.bf16 %v1391, %v1385
        %v1512 = vpack.c.bf16 %v1394, %v1388
        %v1513 = vpack.c.bf16 %v1403, %v1397
        %v1514 = vpack.c.bf16 %v1406, %v1400
        %v1515 = vpack.c.bf16 %v1415, %v1409
        %v1516 = vpack.c.bf16 %v1418, %v1412
        %v1517 = vpack.c.bf16 %v1427, %v1421
        %v1518 = vpack.c.bf16 %v1430, %v1424
        %v1519 = vpack.c.bf16 %v1439, %v1433
        %v1520 = vpack.c.bf16 %v1442, %v1436
        %v1521 = vpack.c.bf16 %v1451, %v1445
        %v1522 = vpack.c.bf16 %v1454, %v1448
        %v1523 = vpack.c.bf16 %v1463, %v1457
        %v1524 = vpack.c.bf16 %v1466, %v1460
        %v1525 = vpack.c.bf16 %v1475, %v1469
        %v1526 = vpack.c.bf16 %v1478, %v1472
        %1527 = vst [vmem:[#allocation4 + $0x30] sm:$0xff] %v1511
        %1528 = vst [vmem:[#allocation4 + $0x38] sm:$0xff] %v1512
        %1529 = vst [vmem:[#allocation4 + $0xc0] sm:$0xff] %v1513
        %1530 = vst [vmem:[#allocation4 + $0xc8] sm:$0xff] %v1514
        %1531 = vst [vmem:[#allocation4 + $0x150] sm:$0xff] %v1515
        %1532 = vst [vmem:[#allocation4 + $0x158] sm:$0xff] %v1516
        %1533 = vst [vmem:[#allocation4 + $0x1e0] sm:$0xff] %v1517
        %1534 = vst [vmem:[#allocation4 + $0x1e8] sm:$0xff] %v1518
        %1535 = vst [vmem:[#allocation4 + $0x270] sm:$0xff] %v1519
        %1536 = vst [vmem:[#allocation4 + $0x278] sm:$0xff] %v1520
        %1537 = vst [vmem:[#allocation4 + $0x300] sm:$0xff] %v1521
        %1538 = vst [vmem:[#allocation4 + $0x308] sm:$0xff] %v1522
        %1539 = vst [vmem:[#allocation4 + $0x390] sm:$0xff] %v1523
        %1540 = vst [vmem:[#allocation4 + $0x398] sm:$0xff] %v1524
        %1541 = vst [vmem:[#allocation4 + $0x420] sm:$0xff] %v1525
        %1542 = vst [vmem:[#allocation4 + $0x428] sm:$0xff] %v1526
        %v1543 = vld [vmem:[%s611] sm:$0xf0]
        %v1544 = vld [vmem:[%s611 + $0x8] sm:$0xf0]
        %v1545 = vld [vmem:[%s611 + $0x10] sm:$0xf]
        %v1546 = vld [vmem:[%s611 + $0x18] sm:$0xf]
        %v1547 = vld [vmem:[%s611 + $0x20] sm:$0xf0]
        %v1548 = vld [vmem:[%s611 + $0x28] sm:$0xf0]
        %v1549 = vld [vmem:[%s611 + $0x30] sm:$0xf]
        %v1550 = vld [vmem:[%s611 + $0x38] sm:$0xf]
        %v1551 = vld [vmem:[%s611 + $0x40] sm:$0xf0]
        %v1552 = vld [vmem:[%s611 + $0x48] sm:$0xf0]
        %v1553 = vld [vmem:[%s611 + $0x50] sm:$0xf]
        %v1554 = vld [vmem:[%s611 + $0x58] sm:$0xf]
        %v1555 = vld [vmem:[%s611 + $0x60] sm:$0xf0]
        %v1556 = vld [vmem:[%s611 + $0x68] sm:$0xf0]
        %v1557 = vld [vmem:[%s611 + $0x70] sm:$0xf]
        %v1558 = vld [vmem:[%s611 + $0x78] sm:$0xf]
        %v1559 = vld [vmem:[%s611 + $0x80] sm:$0xf0]
        %v1560 = vld [vmem:[%s611 + $0x88] sm:$0xf0]
        %v1561 = vld [vmem:[%s611 + $0x90] sm:$0xf]
        %v1562 = vld [vmem:[%s611 + $0x98] sm:$0xf]
        %v1563 = vld [vmem:[%s611 + $0xa0] sm:$0xf0]
        %v1564 = vld [vmem:[%s611 + $0xa8] sm:$0xf0]
        %v1565 = vld [vmem:[%s611 + $0xb0] sm:$0xf]
        %v1566 = vld [vmem:[%s611 + $0xb8] sm:$0xf]
        %v1567 = vld [vmem:[%s611 + $0xc0] sm:$0xf0]
        %v1568 = vld [vmem:[%s611 + $0xc8] sm:$0xf0]
        %v1569 = vld [vmem:[%s611 + $0xd0] sm:$0xf]
        %v1570 = vld [vmem:[%s611 + $0xd8] sm:$0xf]
        %v1571 = vld [vmem:[%s611 + $0xe0] sm:$0xf0]
        %v1572 = vld [vmem:[%s611 + $0xe8] sm:$0xf0]
        %v1573 = vld [vmem:[%s611 + $0xf0] sm:$0xf]
        %v1574 = vld [vmem:[%s611 + $0xf8] sm:$0xf]
        %v1575 = vld [vmem:[%s611 + $0x200] sm:$0xf0]
        %v1576 = vld [vmem:[%s611 + $0x208] sm:$0xf0]
        %v1577 = vld [vmem:[%s611 + $0x210] sm:$0xf]
        %v1578 = vld [vmem:[%s611 + $0x218] sm:$0xf]
        %v1579 = vld [vmem:[%s611 + $0x220] sm:$0xf0]
        %v1580 = vld [vmem:[%s611 + $0x228] sm:$0xf0]
        %v1581 = vld [vmem:[%s611 + $0x230] sm:$0xf]
        %v1582 = vld [vmem:[%s611 + $0x238] sm:$0xf]
        %v1583 = vld [vmem:[%s611 + $0x240] sm:$0xf0]
        %v1584 = vld [vmem:[%s611 + $0x248] sm:$0xf0]
        %v1585 = vld [vmem:[%s611 + $0x250] sm:$0xf]
        %v1586 = vld [vmem:[%s611 + $0x258] sm:$0xf]
        %v1587 = vld [vmem:[%s611 + $0x260] sm:$0xf0]
        %v1588 = vld [vmem:[%s611 + $0x268] sm:$0xf0]
        %v1589 = vld [vmem:[%s611 + $0x270] sm:$0xf]
        %v1590 = vld [vmem:[%s611 + $0x278] sm:$0xf]
        %v1591 = vld [vmem:[%s611 + $0x280] sm:$0xf0]
        %v1592 = vld [vmem:[%s611 + $0x288] sm:$0xf0]
        %v1593 = vld [vmem:[%s611 + $0x290] sm:$0xf]
        %v1594 = vld [vmem:[%s611 + $0x298] sm:$0xf]
        %v1595 = vld [vmem:[%s611 + $0x2a0] sm:$0xf0]
        %v1596 = vld [vmem:[%s611 + $0x2a8] sm:$0xf0]
        %v1597 = vld [vmem:[%s611 + $0x2b0] sm:$0xf]
        %v1598 = vld [vmem:[%s611 + $0x2b8] sm:$0xf]
        %v1599 = vld [vmem:[%s611 + $0x2c0] sm:$0xf0]
        %v1600 = vld [vmem:[%s611 + $0x2c8] sm:$0xf0]
        %v1601 = vld [vmem:[%s611 + $0x2d0] sm:$0xf]
        %v1602 = vld [vmem:[%s611 + $0x2d8] sm:$0xf]
        %v1603 = vld [vmem:[%s611 + $0x2e0] sm:$0xf0]
        %v1604 = vld [vmem:[%s611 + $0x2e8] sm:$0xf0]
        %v1605 = vld [vmem:[%s611 + $0x2f0] sm:$0xf]
        %v1606 = vld [vmem:[%s611 + $0x2f8] sm:$0xf]
        %vm1671 = vcmask 1043456
        %v1672 = vrot.slane %v1543, 4
        %v1673 = vrot.slane %v1545, 4
        %v1674 = vsel %vm1671, %v1672, %v1673
        %v1675 = vrot.slane %v1544, 4
        %v1676 = vrot.slane %v1546, 4
        %v1677 = vsel %vm1671, %v1675, %v1676
        %v1678 = vrot.slane %v1547, 4
        %v1679 = vrot.slane %v1549, 4
        %v1680 = vsel %vm1671, %v1678, %v1679
        %v1681 = vrot.slane %v1548, 4
        %v1682 = vrot.slane %v1550, 4
        %v1683 = vsel %vm1671, %v1681, %v1682
        %v1684 = vrot.slane %v1551, 4
        %v1685 = vrot.slane %v1553, 4
        %v1686 = vsel %vm1671, %v1684, %v1685
        %v1687 = vrot.slane %v1552, 4
        %v1688 = vrot.slane %v1554, 4
        %v1689 = vsel %vm1671, %v1687, %v1688
        %v1690 = vrot.slane %v1555, 4
        %v1691 = vrot.slane %v1557, 4
        %v1692 = vsel %vm1671, %v1690, %v1691
        %v1693 = vrot.slane %v1556, 4
        %v1694 = vrot.slane %v1558, 4
        %v1695 = vsel %vm1671, %v1693, %v1694
        %v1696 = vrot.slane %v1559, 4
        %v1697 = vrot.slane %v1561, 4
        %v1698 = vsel %vm1671, %v1696, %v1697
        %v1699 = vrot.slane %v1560, 4
        %v1700 = vrot.slane %v1562, 4
        %v1701 = vsel %vm1671, %v1699, %v1700
        %v1702 = vrot.slane %v1563, 4
        %v1703 = vrot.slane %v1565, 4
        %v1704 = vsel %vm1671, %v1702, %v1703
        %v1705 = vrot.slane %v1564, 4
        %v1706 = vrot.slane %v1566, 4
        %v1707 = vsel %vm1671, %v1705, %v1706
        %v1708 = vrot.slane %v1567, 4
        %v1709 = vrot.slane %v1569, 4
        %v1710 = vsel %vm1671, %v1708, %v1709
        %v1711 = vrot.slane %v1568, 4
        %v1712 = vrot.slane %v1570, 4
        %v1713 = vsel %vm1671, %v1711, %v1712
        %v1714 = vrot.slane %v1571, 4
        %v1715 = vrot.slane %v1573, 4
        %v1716 = vsel %vm1671, %v1714, %v1715
        %v1717 = vrot.slane %v1572, 4
        %v1718 = vrot.slane %v1574, 4
        %v1719 = vsel %vm1671, %v1717, %v1718
        %v1720 = vrot.slane %v1575, 4
        %v1721 = vrot.slane %v1577, 4
        %v1722 = vsel %vm1671, %v1720, %v1721
        %v1723 = vrot.slane %v1576, 4
        %v1724 = vrot.slane %v1578, 4
        %v1725 = vsel %vm1671, %v1723, %v1724
        %v1726 = vrot.slane %v1579, 4
        %v1727 = vrot.slane %v1581, 4
        %v1728 = vsel %vm1671, %v1726, %v1727
        %v1729 = vrot.slane %v1580, 4
        %v1730 = vrot.slane %v1582, 4
        %v1731 = vsel %vm1671, %v1729, %v1730
        %v1732 = vrot.slane %v1583, 4
        %v1733 = vrot.slane %v1585, 4
        %v1734 = vsel %vm1671, %v1732, %v1733
        %v1735 = vrot.slane %v1584, 4
        %v1736 = vrot.slane %v1586, 4
        %v1737 = vsel %vm1671, %v1735, %v1736
        %v1738 = vrot.slane %v1587, 4
        %v1739 = vrot.slane %v1589, 4
        %v1740 = vsel %vm1671, %v1738, %v1739
        %v1741 = vrot.slane %v1588, 4
        %v1742 = vrot.slane %v1590, 4
        %v1743 = vsel %vm1671, %v1741, %v1742
        %v1744 = vrot.slane %v1591, 4
        %v1745 = vrot.slane %v1593, 4
        %v1746 = vsel %vm1671, %v1744, %v1745
        %v1747 = vrot.slane %v1592, 4
        %v1748 = vrot.slane %v1594, 4
        %v1749 = vsel %vm1671, %v1747, %v1748
        %v1750 = vrot.slane %v1595, 4
        %v1751 = vrot.slane %v1597, 4
        %v1752 = vsel %vm1671, %v1750, %v1751
        %v1753 = vrot.slane %v1596, 4
        %v1754 = vrot.slane %v1598, 4
        %v1755 = vsel %vm1671, %v1753, %v1754
        %v1756 = vrot.slane %v1599, 4
        %v1757 = vrot.slane %v1601, 4
        %v1758 = vsel %vm1671, %v1756, %v1757
        %v1759 = vrot.slane %v1600, 4
        %v1760 = vrot.slane %v1602, 4
        %v1761 = vsel %vm1671, %v1759, %v1760
        %v1762 = vrot.slane %v1603, 4
        %v1763 = vrot.slane %v1605, 4
        %v1764 = vsel %vm1671, %v1762, %v1763
        %v1765 = vrot.slane %v1604, 4
        %v1766 = vrot.slane %v1606, 4
        %v1767 = vsel %vm1671, %v1765, %v1766
        %v1800 = vpack.c.bf16 %v1680, %v1674
        %v1801 = vpack.c.bf16 %v1683, %v1677
        %v1802 = vpack.c.bf16 %v1692, %v1686
        %v1803 = vpack.c.bf16 %v1695, %v1689
        %v1804 = vpack.c.bf16 %v1704, %v1698
        %v1805 = vpack.c.bf16 %v1707, %v1701
        %v1806 = vpack.c.bf16 %v1716, %v1710
        %v1807 = vpack.c.bf16 %v1719, %v1713
        %v1808 = vpack.c.bf16 %v1728, %v1722
        %v1809 = vpack.c.bf16 %v1731, %v1725
        %v1810 = vpack.c.bf16 %v1740, %v1734
        %v1811 = vpack.c.bf16 %v1743, %v1737
        %v1812 = vpack.c.bf16 %v1752, %v1746
        %v1813 = vpack.c.bf16 %v1755, %v1749
        %v1814 = vpack.c.bf16 %v1764, %v1758
        %v1815 = vpack.c.bf16 %v1767, %v1761
        %1816 = vst [vmem:[#allocation4 + $0x40] sm:$0xff] %v1800
        %1817 = vst [vmem:[#allocation4 + $0x48] sm:$0xff] %v1801
        %1818 = vst [vmem:[#allocation4 + $0xd0] sm:$0xff] %v1802
        %1819 = vst [vmem:[#allocation4 + $0xd8] sm:$0xff] %v1803
        %1820 = vst [vmem:[#allocation4 + $0x160] sm:$0xff] %v1804
        %1821 = vst [vmem:[#allocation4 + $0x168] sm:$0xff] %v1805
        %1822 = vst [vmem:[#allocation4 + $0x1f0] sm:$0xff] %v1806
        %1823 = vst [vmem:[#allocation4 + $0x1f8] sm:$0xff] %v1807
        %1824 = vst [vmem:[#allocation4 + $0x280] sm:$0xff] %v1808
        %1825 = vst [vmem:[#allocation4 + $0x288] sm:$0xff] %v1809
        %1826 = vst [vmem:[#allocation4 + $0x310] sm:$0xff] %v1810
        %1827 = vst [vmem:[#allocation4 + $0x318] sm:$0xff] %v1811
        %1828 = vst [vmem:[#allocation4 + $0x3a0] sm:$0xff] %v1812
        %1829 = vst [vmem:[#allocation4 + $0x3a8] sm:$0xff] %v1813
        %1830 = vst [vmem:[#allocation4 + $0x430] sm:$0xff] %v1814
        %1831 = vst [vmem:[#allocation4 + $0x438] sm:$0xff] %v1815
        %v1832 = vld [vmem:[%s611] sm:$0xe0]
        %v1833 = vld [vmem:[%s611 + $0x8] sm:$0xe0]
        %v1834 = vld [vmem:[%s611 + $0x10] sm:$0x1f]
        %v1835 = vld [vmem:[%s611 + $0x18] sm:$0x1f]
        %v1836 = vld [vmem:[%s611 + $0x20] sm:$0xe0]
        %v1837 = vld [vmem:[%s611 + $0x28] sm:$0xe0]
        %v1838 = vld [vmem:[%s611 + $0x30] sm:$0x1f]
        %v1839 = vld [vmem:[%s611 + $0x38] sm:$0x1f]
        %v1840 = vld [vmem:[%s611 + $0x40] sm:$0xe0]
        %v1841 = vld [vmem:[%s611 + $0x48] sm:$0xe0]
        %v1842 = vld [vmem:[%s611 + $0x50] sm:$0x1f]
        %v1843 = vld [vmem:[%s611 + $0x58] sm:$0x1f]
        %v1844 = vld [vmem:[%s611 + $0x60] sm:$0xe0]
        %v1845 = vld [vmem:[%s611 + $0x68] sm:$0xe0]
        %v1846 = vld [vmem:[%s611 + $0x70] sm:$0x1f]
        %v1847 = vld [vmem:[%s611 + $0x78] sm:$0x1f]
        %v1848 = vld [vmem:[%s611 + $0x80] sm:$0xe0]
        %v1849 = vld [vmem:[%s611 + $0x88] sm:$0xe0]
        %v1850 = vld [vmem:[%s611 + $0x90] sm:$0x1f]
        %v1851 = vld [vmem:[%s611 + $0x98] sm:$0x1f]
        %v1852 = vld [vmem:[%s611 + $0xa0] sm:$0xe0]
        %v1853 = vld [vmem:[%s611 + $0xa8] sm:$0xe0]
        %v1854 = vld [vmem:[%s611 + $0xb0] sm:$0x1f]
        %v1855 = vld [vmem:[%s611 + $0xb8] sm:$0x1f]
        %v1856 = vld [vmem:[%s611 + $0xc0] sm:$0xe0]
        %v1857 = vld [vmem:[%s611 + $0xc8] sm:$0xe0]
        %v1858 = vld [vmem:[%s611 + $0xd0] sm:$0x1f]
        %v1859 = vld [vmem:[%s611 + $0xd8] sm:$0x1f]
        %v1860 = vld [vmem:[%s611 + $0xe0] sm:$0xe0]
        %v1861 = vld [vmem:[%s611 + $0xe8] sm:$0xe0]
        %v1862 = vld [vmem:[%s611 + $0xf0] sm:$0x1f]
        %v1863 = vld [vmem:[%s611 + $0xf8] sm:$0x1f]
        %v1864 = vld [vmem:[%s611 + $0x200] sm:$0xe0]
        %v1865 = vld [vmem:[%s611 + $0x208] sm:$0xe0]
        %v1866 = vld [vmem:[%s611 + $0x210] sm:$0x1f]
        %v1867 = vld [vmem:[%s611 + $0x218] sm:$0x1f]
        %v1868 = vld [vmem:[%s611 + $0x220] sm:$0xe0]
        %v1869 = vld [vmem:[%s611 + $0x228] sm:$0xe0]
        %v1870 = vld [vmem:[%s611 + $0x230] sm:$0x1f]
        %v1871 = vld [vmem:[%s611 + $0x238] sm:$0x1f]
        %v1872 = vld [vmem:[%s611 + $0x240] sm:$0xe0]
        %v1873 = vld [vmem:[%s611 + $0x248] sm:$0xe0]
        %v1874 = vld [vmem:[%s611 + $0x250] sm:$0x1f]
        %v1875 = vld [vmem:[%s611 + $0x258] sm:$0x1f]
        %v1876 = vld [vmem:[%s611 + $0x260] sm:$0xe0]
        %v1877 = vld [vmem:[%s611 + $0x268] sm:$0xe0]
        %v1878 = vld [vmem:[%s611 + $0x270] sm:$0x1f]
        %v1879 = vld [vmem:[%s611 + $0x278] sm:$0x1f]
        %v1880 = vld [vmem:[%s611 + $0x280] sm:$0xe0]
        %v1881 = vld [vmem:[%s611 + $0x288] sm:$0xe0]
        %v1882 = vld [vmem:[%s611 + $0x290] sm:$0x1f]
        %v1883 = vld [vmem:[%s611 + $0x298] sm:$0x1f]
        %v1884 = vld [vmem:[%s611 + $0x2a0] sm:$0xe0]
        %v1885 = vld [vmem:[%s611 + $0x2a8] sm:$0xe0]
        %v1886 = vld [vmem:[%s611 + $0x2b0] sm:$0x1f]
        %v1887 = vld [vmem:[%s611 + $0x2b8] sm:$0x1f]
        %v1888 = vld [vmem:[%s611 + $0x2c0] sm:$0xe0]
        %v1889 = vld [vmem:[%s611 + $0x2c8] sm:$0xe0]
        %v1890 = vld [vmem:[%s611 + $0x2d0] sm:$0x1f]
        %v1891 = vld [vmem:[%s611 + $0x2d8] sm:$0x1f]
        %v1892 = vld [vmem:[%s611 + $0x2e0] sm:$0xe0]
        %v1893 = vld [vmem:[%s611 + $0x2e8] sm:$0xe0]
        %v1894 = vld [vmem:[%s611 + $0x2f0] sm:$0x1f]
        %v1895 = vld [vmem:[%s611 + $0x2f8] sm:$0x1f]
        %vm1960 = vcmask 1042432
        %v1961 = vrot.slane %v1832, 5
        %v1962 = vrot.slane %v1834, 5
        %v1963 = vsel %vm1960, %v1961, %v1962
        %v1964 = vrot.slane %v1833, 5
        %v1965 = vrot.slane %v1835, 5
        %v1966 = vsel %vm1960, %v1964, %v1965
        %v1967 = vrot.slane %v1836, 5
        %v1968 = vrot.slane %v1838, 5
        %v1969 = vsel %vm1960, %v1967, %v1968
        %v1970 = vrot.slane %v1837, 5
        %v1971 = vrot.slane %v1839, 5
        %v1972 = vsel %vm1960, %v1970, %v1971
        %v1973 = vrot.slane %v1840, 5
        %v1974 = vrot.slane %v1842, 5
        %v1975 = vsel %vm1960, %v1973, %v1974
        %v1976 = vrot.slane %v1841, 5
        %v1977 = vrot.slane %v1843, 5
        %v1978 = vsel %vm1960, %v1976, %v1977
        %v1979 = vrot.slane %v1844, 5
        %v1980 = vrot.slane %v1846, 5
        %v1981 = vsel %vm1960, %v1979, %v1980
        %v1982 = vrot.slane %v1845, 5
        %v1983 = vrot.slane %v1847, 5
        %v1984 = vsel %vm1960, %v1982, %v1983
        %v1985 = vrot.slane %v1848, 5
        %v1986 = vrot.slane %v1850, 5
        %v1987 = vsel %vm1960, %v1985, %v1986
        %v1988 = vrot.slane %v1849, 5
        %v1989 = vrot.slane %v1851, 5
        %v1990 = vsel %vm1960, %v1988, %v1989
        %v1991 = vrot.slane %v1852, 5
        %v1992 = vrot.slane %v1854, 5
        %v1993 = vsel %vm1960, %v1991, %v1992
        %v1994 = vrot.slane %v1853, 5
        %v1995 = vrot.slane %v1855, 5
        %v1996 = vsel %vm1960, %v1994, %v1995
        %v1997 = vrot.slane %v1856, 5
        %v1998 = vrot.slane %v1858, 5
        %v1999 = vsel %vm1960, %v1997, %v1998
        %v2000 = vrot.slane %v1857, 5
        %v2001 = vrot.slane %v1859, 5
        %v2002 = vsel %vm1960, %v2000, %v2001
        %v2003 = vrot.slane %v1860, 5
        %v2004 = vrot.slane %v1862, 5
        %v2005 = vsel %vm1960, %v2003, %v2004
        %v2006 = vrot.slane %v1861, 5
        %v2007 = vrot.slane %v1863, 5
        %v2008 = vsel %vm1960, %v2006, %v2007
        %v2009 = vrot.slane %v1864, 5
        %v2010 = vrot.slane %v1866, 5
        %v2011 = vsel %vm1960, %v2009, %v2010
        %v2012 = vrot.slane %v1865, 5
        %v2013 = vrot.slane %v1867, 5
        %v2014 = vsel %vm1960, %v2012, %v2013
        %v2015 = vrot.slane %v1868, 5
        %v2016 = vrot.slane %v1870, 5
        %v2017 = vsel %vm1960, %v2015, %v2016
        %v2018 = vrot.slane %v1869, 5
        %v2019 = vrot.slane %v1871, 5
        %v2020 = vsel %vm1960, %v2018, %v2019
        %v2021 = vrot.slane %v1872, 5
        %v2022 = vrot.slane %v1874, 5
        %v2023 = vsel %vm1960, %v2021, %v2022
        %v2024 = vrot.slane %v1873, 5
        %v2025 = vrot.slane %v1875, 5
        %v2026 = vsel %vm1960, %v2024, %v2025
        %v2027 = vrot.slane %v1876, 5
        %v2028 = vrot.slane %v1878, 5
        %v2029 = vsel %vm1960, %v2027, %v2028
        %v2030 = vrot.slane %v1877, 5
        %v2031 = vrot.slane %v1879, 5
        %v2032 = vsel %vm1960, %v2030, %v2031
        %v2033 = vrot.slane %v1880, 5
        %v2034 = vrot.slane %v1882, 5
        %v2035 = vsel %vm1960, %v2033, %v2034
        %v2036 = vrot.slane %v1881, 5
        %v2037 = vrot.slane %v1883, 5
        %v2038 = vsel %vm1960, %v2036, %v2037
        %v2039 = vrot.slane %v1884, 5
        %v2040 = vrot.slane %v1886, 5
        %v2041 = vsel %vm1960, %v2039, %v2040
        %v2042 = vrot.slane %v1885, 5
        %v2043 = vrot.slane %v1887, 5
        %v2044 = vsel %vm1960, %v2042, %v2043
        %v2045 = vrot.slane %v1888, 5
        %v2046 = vrot.slane %v1890, 5
        %v2047 = vsel %vm1960, %v2045, %v2046
        %v2048 = vrot.slane %v1889, 5
        %v2049 = vrot.slane %v1891, 5
        %v2050 = vsel %vm1960, %v2048, %v2049
        %v2051 = vrot.slane %v1892, 5
        %v2052 = vrot.slane %v1894, 5
        %v2053 = vsel %vm1960, %v2051, %v2052
        %v2054 = vrot.slane %v1893, 5
        %v2055 = vrot.slane %v1895, 5
        %v2056 = vsel %vm1960, %v2054, %v2055
        %v2089 = vpack.c.bf16 %v1969, %v1963
        %v2090 = vpack.c.bf16 %v1972, %v1966
        %v2091 = vpack.c.bf16 %v1981, %v1975
        %v2092 = vpack.c.bf16 %v1984, %v1978
        %v2093 = vpack.c.bf16 %v1993, %v1987
        %v2094 = vpack.c.bf16 %v1996, %v1990
        %v2095 = vpack.c.bf16 %v2005, %v1999
        %v2096 = vpack.c.bf16 %v2008, %v2002
        %v2097 = vpack.c.bf16 %v2017, %v2011
        %v2098 = vpack.c.bf16 %v2020, %v2014
        %v2099 = vpack.c.bf16 %v2029, %v2023
        %v2100 = vpack.c.bf16 %v2032, %v2026
        %v2101 = vpack.c.bf16 %v2041, %v2035
        %v2102 = vpack.c.bf16 %v2044, %v2038
        %v2103 = vpack.c.bf16 %v2053, %v2047
        %v2104 = vpack.c.bf16 %v2056, %v2050
        %2105 = vst [vmem:[#allocation4 + $0x50] sm:$0xff] %v2089
        %2106 = vst [vmem:[#allocation4 + $0x58] sm:$0xff] %v2090
        %2107 = vst [vmem:[#allocation4 + $0xe0] sm:$0xff] %v2091
        %2108 = vst [vmem:[#allocation4 + $0xe8] sm:$0xff] %v2092
        %2109 = vst [vmem:[#allocation4 + $0x170] sm:$0xff] %v2093
        %2110 = vst [vmem:[#allocation4 + $0x178] sm:$0xff] %v2094
        %2111 = vst [vmem:[#allocation4 + $0x200] sm:$0xff] %v2095
        %2112 = vst [vmem:[#allocation4 + $0x208] sm:$0xff] %v2096
        %2113 = vst [vmem:[#allocation4 + $0x290] sm:$0xff] %v2097
        %2114 = vst [vmem:[#allocation4 + $0x298] sm:$0xff] %v2098
        %2115 = vst [vmem:[#allocation4 + $0x320] sm:$0xff] %v2099
        %2116 = vst [vmem:[#allocation4 + $0x328] sm:$0xff] %v2100
        %2117 = vst [vmem:[#allocation4 + $0x3b0] sm:$0xff] %v2101
        %2118 = vst [vmem:[#allocation4 + $0x3b8] sm:$0xff] %v2102
        %2119 = vst [vmem:[#allocation4 + $0x440] sm:$0xff] %v2103
        %2120 = vst [vmem:[#allocation4 + $0x448] sm:$0xff] %v2104
        %v2121 = vld [vmem:[%s611] sm:$0xc0]
        %v2122 = vld [vmem:[%s611 + $0x8] sm:$0xc0]
        %v2123 = vld [vmem:[%s611 + $0x10] sm:$0x3f]
        %v2124 = vld [vmem:[%s611 + $0x18] sm:$0x3f]
        %v2125 = vld [vmem:[%s611 + $0x20] sm:$0xc0]
        %v2126 = vld [vmem:[%s611 + $0x28] sm:$0xc0]
        %v2127 = vld [vmem:[%s611 + $0x30] sm:$0x3f]
        %v2128 = vld [vmem:[%s611 + $0x38] sm:$0x3f]
        %v2129 = vld [vmem:[%s611 + $0x40] sm:$0xc0]
        %v2130 = vld [vmem:[%s611 + $0x48] sm:$0xc0]
        %v2131 = vld [vmem:[%s611 + $0x50] sm:$0x3f]
        %v2132 = vld [vmem:[%s611 + $0x58] sm:$0x3f]
        %v2133 = vld [vmem:[%s611 + $0x60] sm:$0xc0]
        %v2134 = vld [vmem:[%s611 + $0x68] sm:$0xc0]
        %v2135 = vld [vmem:[%s611 + $0x70] sm:$0x3f]
        %v2136 = vld [vmem:[%s611 + $0x78] sm:$0x3f]
        %v2137 = vld [vmem:[%s611 + $0x80] sm:$0xc0]
        %v2138 = vld [vmem:[%s611 + $0x88] sm:$0xc0]
        %v2139 = vld [vmem:[%s611 + $0x90] sm:$0x3f]
        %v2140 = vld [vmem:[%s611 + $0x98] sm:$0x3f]
        %v2141 = vld [vmem:[%s611 + $0xa0] sm:$0xc0]
        %v2142 = vld [vmem:[%s611 + $0xa8] sm:$0xc0]
        %v2143 = vld [vmem:[%s611 + $0xb0] sm:$0x3f]
        %v2144 = vld [vmem:[%s611 + $0xb8] sm:$0x3f]
        %v2145 = vld [vmem:[%s611 + $0xc0] sm:$0xc0]
        %v2146 = vld [vmem:[%s611 + $0xc8] sm:$0xc0]
        %v2147 = vld [vmem:[%s611 + $0xd0] sm:$0x3f]
        %v2148 = vld [vmem:[%s611 + $0xd8] sm:$0x3f]
        %v2149 = vld [vmem:[%s611 + $0xe0] sm:$0xc0]
        %v2150 = vld [vmem:[%s611 + $0xe8] sm:$0xc0]
        %v2151 = vld [vmem:[%s611 + $0xf0] sm:$0x3f]
        %v2152 = vld [vmem:[%s611 + $0xf8] sm:$0x3f]
        %v2153 = vld [vmem:[%s611 + $0x200] sm:$0xc0]
        %v2154 = vld [vmem:[%s611 + $0x208] sm:$0xc0]
        %v2155 = vld [vmem:[%s611 + $0x210] sm:$0x3f]
        %v2156 = vld [vmem:[%s611 + $0x218] sm:$0x3f]
        %v2157 = vld [vmem:[%s611 + $0x220] sm:$0xc0]
        %v2158 = vld [vmem:[%s611 + $0x228] sm:$0xc0]
        %v2159 = vld [vmem:[%s611 + $0x230] sm:$0x3f]
        %v2160 = vld [vmem:[%s611 + $0x238] sm:$0x3f]
        %v2161 = vld [vmem:[%s611 + $0x240] sm:$0xc0]
        %v2162 = vld [vmem:[%s611 + $0x248] sm:$0xc0]
        %v2163 = vld [vmem:[%s611 + $0x250] sm:$0x3f]
        %v2164 = vld [vmem:[%s611 + $0x258] sm:$0x3f]
        %v2165 = vld [vmem:[%s611 + $0x260] sm:$0xc0]
        %v2166 = vld [vmem:[%s611 + $0x268] sm:$0xc0]
        %v2167 = vld [vmem:[%s611 + $0x270] sm:$0x3f]
        %v2168 = vld [vmem:[%s611 + $0x278] sm:$0x3f]
        %v2169 = vld [vmem:[%s611 + $0x280] sm:$0xc0]
        %v2170 = vld [vmem:[%s611 + $0x288] sm:$0xc0]
        %v2171 = vld [vmem:[%s611 + $0x290] sm:$0x3f]
        %v2172 = vld [vmem:[%s611 + $0x298] sm:$0x3f]
        %v2173 = vld [vmem:[%s611 + $0x2a0] sm:$0xc0]
        %v2174 = vld [vmem:[%s611 + $0x2a8] sm:$0xc0]
        %v2175 = vld [vmem:[%s611 + $0x2b0] sm:$0x3f]
        %v2176 = vld [vmem:[%s611 + $0x2b8] sm:$0x3f]
        %v2177 = vld [vmem:[%s611 + $0x2c0] sm:$0xc0]
        %v2178 = vld [vmem:[%s611 + $0x2c8] sm:$0xc0]
        %v2179 = vld [vmem:[%s611 + $0x2d0] sm:$0x3f]
        %v2180 = vld [vmem:[%s611 + $0x2d8] sm:$0x3f]
        %v2181 = vld [vmem:[%s611 + $0x2e0] sm:$0xc0]
        %v2182 = vld [vmem:[%s611 + $0x2e8] sm:$0xc0]
        %v2183 = vld [vmem:[%s611 + $0x2f0] sm:$0x3f]
        %v2184 = vld [vmem:[%s611 + $0x2f8] sm:$0x3f]
        %vm2249 = vcmask 1041408
        %v2250 = vrot.slane %v2121, 6
        %v2251 = vrot.slane %v2123, 6
        %v2252 = vsel %vm2249, %v2250, %v2251
        %v2253 = vrot.slane %v2122, 6
        %v2254 = vrot.slane %v2124, 6
        %v2255 = vsel %vm2249, %v2253, %v2254
        %v2256 = vrot.slane %v2125, 6
        %v2257 = vrot.slane %v2127, 6
        %v2258 = vsel %vm2249, %v2256, %v2257
        %v2259 = vrot.slane %v2126, 6
        %v2260 = vrot.slane %v2128, 6
        %v2261 = vsel %vm2249, %v2259, %v2260
        %v2262 = vrot.slane %v2129, 6
        %v2263 = vrot.slane %v2131, 6
        %v2264 = vsel %vm2249, %v2262, %v2263
        %v2265 = vrot.slane %v2130, 6
        %v2266 = vrot.slane %v2132, 6
        %v2267 = vsel %vm2249, %v2265, %v2266
        %v2268 = vrot.slane %v2133, 6
        %v2269 = vrot.slane %v2135, 6
        %v2270 = vsel %vm2249, %v2268, %v2269
        %v2271 = vrot.slane %v2134, 6
        %v2272 = vrot.slane %v2136, 6
        %v2273 = vsel %vm2249, %v2271, %v2272
        %v2274 = vrot.slane %v2137, 6
        %v2275 = vrot.slane %v2139, 6
        %v2276 = vsel %vm2249, %v2274, %v2275
        %v2277 = vrot.slane %v2138, 6
        %v2278 = vrot.slane %v2140, 6
        %v2279 = vsel %vm2249, %v2277, %v2278
        %v2280 = vrot.slane %v2141, 6
        %v2281 = vrot.slane %v2143, 6
        %v2282 = vsel %vm2249, %v2280, %v2281
        %v2283 = vrot.slane %v2142, 6
        %v2284 = vrot.slane %v2144, 6
        %v2285 = vsel %vm2249, %v2283, %v2284
        %v2286 = vrot.slane %v2145, 6
        %v2287 = vrot.slane %v2147, 6
        %v2288 = vsel %vm2249, %v2286, %v2287
        %v2289 = vrot.slane %v2146, 6
        %v2290 = vrot.slane %v2148, 6
        %v2291 = vsel %vm2249, %v2289, %v2290
        %v2292 = vrot.slane %v2149, 6
        %v2293 = vrot.slane %v2151, 6
        %v2294 = vsel %vm2249, %v2292, %v2293
        %v2295 = vrot.slane %v2150, 6
        %v2296 = vrot.slane %v2152, 6
        %v2297 = vsel %vm2249, %v2295, %v2296
        %v2298 = vrot.slane %v2153, 6
        %v2299 = vrot.slane %v2155, 6
        %v2300 = vsel %vm2249, %v2298, %v2299
        %v2301 = vrot.slane %v2154, 6
        %v2302 = vrot.slane %v2156, 6
        %v2303 = vsel %vm2249, %v2301, %v2302
        %v2304 = vrot.slane %v2157, 6
        %v2305 = vrot.slane %v2159, 6
        %v2306 = vsel %vm2249, %v2304, %v2305
        %v2307 = vrot.slane %v2158, 6
        %v2308 = vrot.slane %v2160, 6
        %v2309 = vsel %vm2249, %v2307, %v2308
        %v2310 = vrot.slane %v2161, 6
        %v2311 = vrot.slane %v2163, 6
        %v2312 = vsel %vm2249, %v2310, %v2311
        %v2313 = vrot.slane %v2162, 6
        %v2314 = vrot.slane %v2164, 6
        %v2315 = vsel %vm2249, %v2313, %v2314
        %v2316 = vrot.slane %v2165, 6
        %v2317 = vrot.slane %v2167, 6
        %v2318 = vsel %vm2249, %v2316, %v2317
        %v2319 = vrot.slane %v2166, 6
        %v2320 = vrot.slane %v2168, 6
        %v2321 = vsel %vm2249, %v2319, %v2320
        %v2322 = vrot.slane %v2169, 6
        %v2323 = vrot.slane %v2171, 6
        %v2324 = vsel %vm2249, %v2322, %v2323
        %v2325 = vrot.slane %v2170, 6
        %v2326 = vrot.slane %v2172, 6
        %v2327 = vsel %vm2249, %v2325, %v2326
        %v2328 = vrot.slane %v2173, 6
        %v2329 = vrot.slane %v2175, 6
        %v2330 = vsel %vm2249, %v2328, %v2329
        %v2331 = vrot.slane %v2174, 6
        %v2332 = vrot.slane %v2176, 6
        %v2333 = vsel %vm2249, %v2331, %v2332
        %v2334 = vrot.slane %v2177, 6
        %v2335 = vrot.slane %v2179, 6
        %v2336 = vsel %vm2249, %v2334, %v2335
        %v2337 = vrot.slane %v2178, 6
        %v2338 = vrot.slane %v2180, 6
        %v2339 = vsel %vm2249, %v2337, %v2338
        %v2340 = vrot.slane %v2181, 6
        %v2341 = vrot.slane %v2183, 6
        %v2342 = vsel %vm2249, %v2340, %v2341
        %v2343 = vrot.slane %v2182, 6
        %v2344 = vrot.slane %v2184, 6
        %v2345 = vsel %vm2249, %v2343, %v2344
        %v2378 = vpack.c.bf16 %v2258, %v2252
        %v2379 = vpack.c.bf16 %v2261, %v2255
        %v2380 = vpack.c.bf16 %v2270, %v2264
        %v2381 = vpack.c.bf16 %v2273, %v2267
        %v2382 = vpack.c.bf16 %v2282, %v2276
        %v2383 = vpack.c.bf16 %v2285, %v2279
        %v2384 = vpack.c.bf16 %v2294, %v2288
        %v2385 = vpack.c.bf16 %v2297, %v2291
        %v2386 = vpack.c.bf16 %v2306, %v2300
        %v2387 = vpack.c.bf16 %v2309, %v2303
        %v2388 = vpack.c.bf16 %v2318, %v2312
        %v2389 = vpack.c.bf16 %v2321, %v2315
        %v2390 = vpack.c.bf16 %v2330, %v2324
        %v2391 = vpack.c.bf16 %v2333, %v2327
        %v2392 = vpack.c.bf16 %v2342, %v2336
        %v2393 = vpack.c.bf16 %v2345, %v2339
        %2394 = vst [vmem:[#allocation4 + $0x60] sm:$0xff] %v2378
        %2395 = vst [vmem:[#allocation4 + $0x68] sm:$0xff] %v2379
        %2396 = vst [vmem:[#allocation4 + $0xf0] sm:$0xff] %v2380
        %2397 = vst [vmem:[#allocation4 + $0xf8] sm:$0xff] %v2381
        %2398 = vst [vmem:[#allocation4 + $0x180] sm:$0xff] %v2382
        %2399 = vst [vmem:[#allocation4 + $0x188] sm:$0xff] %v2383
        %2400 = vst [vmem:[#allocation4 + $0x210] sm:$0xff] %v2384
        %2401 = vst [vmem:[#allocation4 + $0x218] sm:$0xff] %v2385
        %2402 = vst [vmem:[#allocation4 + $0x2a0] sm:$0xff] %v2386
        %2403 = vst [vmem:[#allocation4 + $0x2a8] sm:$0xff] %v2387
        %2404 = vst [vmem:[#allocation4 + $0x330] sm:$0xff] %v2388
        %2405 = vst [vmem:[#allocation4 + $0x338] sm:$0xff] %v2389
        %2406 = vst [vmem:[#allocation4 + $0x3c0] sm:$0xff] %v2390
        %2407 = vst [vmem:[#allocation4 + $0x3c8] sm:$0xff] %v2391
        %2408 = vst [vmem:[#allocation4 + $0x450] sm:$0xff] %v2392
        %2409 = vst [vmem:[#allocation4 + $0x458] sm:$0xff] %v2393
        %v2410 = vld [vmem:[%s611] sm:$0x80]
        %v2411 = vld [vmem:[%s611 + $0x8] sm:$0x80]
        %v2412 = vld [vmem:[%s611 + $0x10] sm:$0x7f]
        %v2413 = vld [vmem:[%s611 + $0x18] sm:$0x7f]
        %v2414 = vld [vmem:[%s611 + $0x20] sm:$0x80]
        %v2415 = vld [vmem:[%s611 + $0x28] sm:$0x80]
        %v2416 = vld [vmem:[%s611 + $0x30] sm:$0x7f]
        %v2417 = vld [vmem:[%s611 + $0x38] sm:$0x7f]
        %v2418 = vld [vmem:[%s611 + $0x40] sm:$0x80]
        %v2419 = vld [vmem:[%s611 + $0x48] sm:$0x80]
        %v2420 = vld [vmem:[%s611 + $0x50] sm:$0x7f]
        %v2421 = vld [vmem:[%s611 + $0x58] sm:$0x7f]
        %v2422 = vld [vmem:[%s611 + $0x60] sm:$0x80]
        %v2423 = vld [vmem:[%s611 + $0x68] sm:$0x80]
        %v2424 = vld [vmem:[%s611 + $0x70] sm:$0x7f]
        %v2425 = vld [vmem:[%s611 + $0x78] sm:$0x7f]
        %v2426 = vld [vmem:[%s611 + $0x80] sm:$0x80]
        %v2427 = vld [vmem:[%s611 + $0x88] sm:$0x80]
        %v2428 = vld [vmem:[%s611 + $0x90] sm:$0x7f]
        %v2429 = vld [vmem:[%s611 + $0x98] sm:$0x7f]
        %v2430 = vld [vmem:[%s611 + $0xa0] sm:$0x80]
        %v2431 = vld [vmem:[%s611 + $0xa8] sm:$0x80]
        %v2432 = vld [vmem:[%s611 + $0xb0] sm:$0x7f]
        %v2433 = vld [vmem:[%s611 + $0xb8] sm:$0x7f]
        %v2434 = vld [vmem:[%s611 + $0xc0] sm:$0x80]
        %v2435 = vld [vmem:[%s611 + $0xc8] sm:$0x80]
        %v2436 = vld [vmem:[%s611 + $0xd0] sm:$0x7f]
        %v2437 = vld [vmem:[%s611 + $0xd8] sm:$0x7f]
        %v2438 = vld [vmem:[%s611 + $0xe0] sm:$0x80]
        %v2439 = vld [vmem:[%s611 + $0xe8] sm:$0x80]
        %v2440 = vld [vmem:[%s611 + $0xf0] sm:$0x7f]
        %v2441 = vld [vmem:[%s611 + $0xf8] sm:$0x7f]
        %v2442 = vld [vmem:[%s611 + $0x200] sm:$0x80]
        %v2443 = vld [vmem:[%s611 + $0x208] sm:$0x80]
        %v2444 = vld [vmem:[%s611 + $0x210] sm:$0x7f]
        %v2445 = vld [vmem:[%s611 + $0x218] sm:$0x7f]
        %v2446 = vld [vmem:[%s611 + $0x220] sm:$0x80]
        %v2447 = vld [vmem:[%s611 + $0x228] sm:$0x80]
        %v2448 = vld [vmem:[%s611 + $0x230] sm:$0x7f]
        %v2449 = vld [vmem:[%s611 + $0x238] sm:$0x7f]
        %v2450 = vld [vmem:[%s611 + $0x240] sm:$0x80]
        %v2451 = vld [vmem:[%s611 + $0x248] sm:$0x80]
        %v2452 = vld [vmem:[%s611 + $0x250] sm:$0x7f]
        %v2453 = vld [vmem:[%s611 + $0x258] sm:$0x7f]
        %v2454 = vld [vmem:[%s611 + $0x260] sm:$0x80]
        %v2455 = vld [vmem:[%s611 + $0x268] sm:$0x80]
        %v2456 = vld [vmem:[%s611 + $0x270] sm:$0x7f]
        %v2457 = vld [vmem:[%s611 + $0x278] sm:$0x7f]
        %v2458 = vld [vmem:[%s611 + $0x280] sm:$0x80]
        %v2459 = vld [vmem:[%s611 + $0x288] sm:$0x80]
        %v2460 = vld [vmem:[%s611 + $0x290] sm:$0x7f]
        %v2461 = vld [vmem:[%s611 + $0x298] sm:$0x7f]
        %v2462 = vld [vmem:[%s611 + $0x2a0] sm:$0x80]
        %v2463 = vld [vmem:[%s611 + $0x2a8] sm:$0x80]
        %v2464 = vld [vmem:[%s611 + $0x2b0] sm:$0x7f]
        %v2465 = vld [vmem:[%s611 + $0x2b8] sm:$0x7f]
        %v2466 = vld [vmem:[%s611 + $0x2c0] sm:$0x80]
        %v2467 = vld [vmem:[%s611 + $0x2c8] sm:$0x80]
        %v2468 = vld [vmem:[%s611 + $0x2d0] sm:$0x7f]
        %v2469 = vld [vmem:[%s611 + $0x2d8] sm:$0x7f]
        %v2470 = vld [vmem:[%s611 + $0x2e0] sm:$0x80]
        %v2471 = vld [vmem:[%s611 + $0x2e8] sm:$0x80]
        %v2472 = vld [vmem:[%s611 + $0x2f0] sm:$0x7f]
        %v2473 = vld [vmem:[%s611 + $0x2f8] sm:$0x7f]
        %vm2538 = vcmask 1040384
        %v2539 = vrot.slane %v2410, 7
        %v2540 = vrot.slane %v2412, 7
        %v2541 = vsel %vm2538, %v2539, %v2540
        %v2542 = vrot.slane %v2411, 7
        %v2543 = vrot.slane %v2413, 7
        %v2544 = vsel %vm2538, %v2542, %v2543
        %v2545 = vrot.slane %v2414, 7
        %v2546 = vrot.slane %v2416, 7
        %v2547 = vsel %vm2538, %v2545, %v2546
        %v2548 = vrot.slane %v2415, 7
        %v2549 = vrot.slane %v2417, 7
        %v2550 = vsel %vm2538, %v2548, %v2549
        %v2551 = vrot.slane %v2418, 7
        %v2552 = vrot.slane %v2420, 7
        %v2553 = vsel %vm2538, %v2551, %v2552
        %v2554 = vrot.slane %v2419, 7
        %v2555 = vrot.slane %v2421, 7
        %v2556 = vsel %vm2538, %v2554, %v2555
        %v2557 = vrot.slane %v2422, 7
        %v2558 = vrot.slane %v2424, 7
        %v2559 = vsel %vm2538, %v2557, %v2558
        %v2560 = vrot.slane %v2423, 7
        %v2561 = vrot.slane %v2425, 7
        %v2562 = vsel %vm2538, %v2560, %v2561
        %v2563 = vrot.slane %v2426, 7
        %v2564 = vrot.slane %v2428, 7
        %v2565 = vsel %vm2538, %v2563, %v2564
        %v2566 = vrot.slane %v2427, 7
        %v2567 = vrot.slane %v2429, 7
        %v2568 = vsel %vm2538, %v2566, %v2567
        %v2569 = vrot.slane %v2430, 7
        %v2570 = vrot.slane %v2432, 7
        %v2571 = vsel %vm2538, %v2569, %v2570
        %v2572 = vrot.slane %v2431, 7
        %v2573 = vrot.slane %v2433, 7
        %v2574 = vsel %vm2538, %v2572, %v2573
        %v2575 = vrot.slane %v2434, 7
        %v2576 = vrot.slane %v2436, 7
        %v2577 = vsel %vm2538, %v2575, %v2576
        %v2578 = vrot.slane %v2435, 7
        %v2579 = vrot.slane %v2437, 7
        %v2580 = vsel %vm2538, %v2578, %v2579
        %v2581 = vrot.slane %v2438, 7
        %v2582 = vrot.slane %v2440, 7
        %v2583 = vsel %vm2538, %v2581, %v2582
        %v2584 = vrot.slane %v2439, 7
        %v2585 = vrot.slane %v2441, 7
        %v2586 = vsel %vm2538, %v2584, %v2585
        %v2587 = vrot.slane %v2442, 7
        %v2588 = vrot.slane %v2444, 7
        %v2589 = vsel %vm2538, %v2587, %v2588
        %v2590 = vrot.slane %v2443, 7
        %v2591 = vrot.slane %v2445, 7
        %v2592 = vsel %vm2538, %v2590, %v2591
        %v2593 = vrot.slane %v2446, 7
        %v2594 = vrot.slane %v2448, 7
        %v2595 = vsel %vm2538, %v2593, %v2594
        %v2596 = vrot.slane %v2447, 7
        %v2597 = vrot.slane %v2449, 7
        %v2598 = vsel %vm2538, %v2596, %v2597
        %v2599 = vrot.slane %v2450, 7
        %v2600 = vrot.slane %v2452, 7
        %v2601 = vsel %vm2538, %v2599, %v2600
        %v2602 = vrot.slane %v2451, 7
        %v2603 = vrot.slane %v2453, 7
        %v2604 = vsel %vm2538, %v2602, %v2603
        %v2605 = vrot.slane %v2454, 7
        %v2606 = vrot.slane %v2456, 7
        %v2607 = vsel %vm2538, %v2605, %v2606
        %v2608 = vrot.slane %v2455, 7
        %v2609 = vrot.slane %v2457, 7
        %v2610 = vsel %vm2538, %v2608, %v2609
        %v2611 = vrot.slane %v2458, 7
        %v2612 = vrot.slane %v2460, 7
        %v2613 = vsel %vm2538, %v2611, %v2612
        %v2614 = vrot.slane %v2459, 7
        %v2615 = vrot.slane %v2461, 7
        %v2616 = vsel %vm2538, %v2614, %v2615
        %v2617 = vrot.slane %v2462, 7
        %v2618 = vrot.slane %v2464, 7
        %v2619 = vsel %vm2538, %v2617, %v2618
        %v2620 = vrot.slane %v2463, 7
        %v2621 = vrot.slane %v2465, 7
        %v2622 = vsel %vm2538, %v2620, %v2621
        %v2623 = vrot.slane %v2466, 7
        %v2624 = vrot.slane %v2468, 7
        %v2625 = vsel %vm2538, %v2623, %v2624
        %v2626 = vrot.slane %v2467, 7
        %v2627 = vrot.slane %v2469, 7
        %v2628 = vsel %vm2538, %v2626, %v2627
        %v2629 = vrot.slane %v2470, 7
        %v2630 = vrot.slane %v2472, 7
        %v2631 = vsel %vm2538, %v2629, %v2630
        %v2632 = vrot.slane %v2471, 7
        %v2633 = vrot.slane %v2473, 7
        %v2634 = vsel %vm2538, %v2632, %v2633
        %v2667 = vpack.c.bf16 %v2547, %v2541
        %v2668 = vpack.c.bf16 %v2550, %v2544
        %v2669 = vpack.c.bf16 %v2559, %v2553
        %v2670 = vpack.c.bf16 %v2562, %v2556
        %v2671 = vpack.c.bf16 %v2571, %v2565
        %v2672 = vpack.c.bf16 %v2574, %v2568
        %v2673 = vpack.c.bf16 %v2583, %v2577
        %v2674 = vpack.c.bf16 %v2586, %v2580
        %v2675 = vpack.c.bf16 %v2595, %v2589
        %v2676 = vpack.c.bf16 %v2598, %v2592
        %v2677 = vpack.c.bf16 %v2607, %v2601
        %v2678 = vpack.c.bf16 %v2610, %v2604
        %v2679 = vpack.c.bf16 %v2619, %v2613
        %v2680 = vpack.c.bf16 %v2622, %v2616
        %v2681 = vpack.c.bf16 %v2631, %v2625
        %v2682 = vpack.c.bf16 %v2634, %v2628
        %2683 = vst [vmem:[#allocation4 + $0x70] sm:$0xff] %v2667
        %2684 = vst [vmem:[#allocation4 + $0x78] sm:$0xff] %v2668
        %2685 = vst [vmem:[#allocation4 + $0x100] sm:$0xff] %v2669
        %2686 = vst [vmem:[#allocation4 + $0x108] sm:$0xff] %v2670
        %2687 = vst [vmem:[#allocation4 + $0x190] sm:$0xff] %v2671
        %2688 = vst [vmem:[#allocation4 + $0x198] sm:$0xff] %v2672
        %2689 = vst [vmem:[#allocation4 + $0x220] sm:$0xff] %v2673
        %2690 = vst [vmem:[#allocation4 + $0x228] sm:$0xff] %v2674
        %2691 = vst [vmem:[#allocation4 + $0x2b0] sm:$0xff] %v2675
        %2692 = vst [vmem:[#allocation4 + $0x2b8] sm:$0xff] %v2676
        %2693 = vst [vmem:[#allocation4 + $0x340] sm:$0xff] %v2677
        %2694 = vst [vmem:[#allocation4 + $0x348] sm:$0xff] %v2678
        %2695 = vst [vmem:[#allocation4 + $0x3d0] sm:$0xff] %v2679
        %2696 = vst [vmem:[#allocation4 + $0x3d8] sm:$0xff] %v2680
        %2697 = vst [vmem:[#allocation4 + $0x460] sm:$0xff] %v2681
        %2698 = vst [vmem:[#allocation4 + $0x468] sm:$0xff] %v2682
        %v2699 = vld [vmem:[%s611 + $0x10] sm:$0xff]
        %v2700 = vld [vmem:[%s611 + $0x18] sm:$0xff]
        %v2701 = vld [vmem:[%s611 + $0x30] sm:$0xff]
        %v2702 = vld [vmem:[%s611 + $0x38] sm:$0xff]
        %v2703 = vld [vmem:[%s611 + $0x50] sm:$0xff]
        %v2704 = vld [vmem:[%s611 + $0x58] sm:$0xff]
        %v2705 = vld [vmem:[%s611 + $0x70] sm:$0xff]
        %v2706 = vld [vmem:[%s611 + $0x78] sm:$0xff]
        %v2707 = vld [vmem:[%s611 + $0x90] sm:$0xff]
        %v2708 = vld [vmem:[%s611 + $0x98] sm:$0xff]
        %v2709 = vld [vmem:[%s611 + $0xb0] sm:$0xff]
        %v2710 = vld [vmem:[%s611 + $0xb8] sm:$0xff]
        %v2711 = vld [vmem:[%s611 + $0xd0] sm:$0xff]
        %v2712 = vld [vmem:[%s611 + $0xd8] sm:$0xff]
        %v2713 = vld [vmem:[%s611 + $0xf0] sm:$0xff]
        %v2714 = vld [vmem:[%s611 + $0xf8] sm:$0xff]
        %v2715 = vld [vmem:[%s611 + $0x210] sm:$0xff]
        %v2716 = vld [vmem:[%s611 + $0x218] sm:$0xff]
        %v2717 = vld [vmem:[%s611 + $0x230] sm:$0xff]
        %v2718 = vld [vmem:[%s611 + $0x238] sm:$0xff]
        %v2719 = vld [vmem:[%s611 + $0x250] sm:$0xff]
        %v2720 = vld [vmem:[%s611 + $0x258] sm:$0xff]
        %v2721 = vld [vmem:[%s611 + $0x270] sm:$0xff]
        %v2722 = vld [vmem:[%s611 + $0x278] sm:$0xff]
        %v2723 = vld [vmem:[%s611 + $0x290] sm:$0xff]
        %v2724 = vld [vmem:[%s611 + $0x298] sm:$0xff]
        %v2725 = vld [vmem:[%s611 + $0x2b0] sm:$0xff]
        %v2726 = vld [vmem:[%s611 + $0x2b8] sm:$0xff]
        %v2727 = vld [vmem:[%s611 + $0x2d0] sm:$0xff]
        %v2728 = vld [vmem:[%s611 + $0x2d8] sm:$0xff]
        %v2729 = vld [vmem:[%s611 + $0x2f0] sm:$0xff]
        %v2730 = vld [vmem:[%s611 + $0x2f8] sm:$0xff]
        %v2731 = vpack.c.bf16 %v2701, %v2699
        %v2732 = vpack.c.bf16 %v2702, %v2700
        %v2733 = vpack.c.bf16 %v2705, %v2703
        %v2734 = vpack.c.bf16 %v2706, %v2704
        %v2735 = vpack.c.bf16 %v2709, %v2707
        %v2736 = vpack.c.bf16 %v2710, %v2708
        %v2737 = vpack.c.bf16 %v2713, %v2711
        %v2738 = vpack.c.bf16 %v2714, %v2712
        %v2739 = vpack.c.bf16 %v2717, %v2715
        %v2740 = vpack.c.bf16 %v2718, %v2716
        %v2741 = vpack.c.bf16 %v2721, %v2719
        %v2742 = vpack.c.bf16 %v2722, %v2720
        %v2743 = vpack.c.bf16 %v2725, %v2723
        %v2744 = vpack.c.bf16 %v2726, %v2724
        %v2745 = vpack.c.bf16 %v2729, %v2727
        %v2746 = vpack.c.bf16 %v2730, %v2728
        %2747 = vst [vmem:[#allocation4 + $0x80] sm:$0xff] %v2731
        %2748 = vst [vmem:[#allocation4 + $0x88] sm:$0xff] %v2732
        %2749 = vst [vmem:[#allocation4 + $0x110] sm:$0xff] %v2733
        %2750 = vst [vmem:[#allocation4 + $0x118] sm:$0xff] %v2734
        %2751 = vst [vmem:[#allocation4 + $0x1a0] sm:$0xff] %v2735
        %2752 = vst [vmem:[#allocation4 + $0x1a8] sm:$0xff] %v2736
        %2753 = vst [vmem:[#allocation4 + $0x230] sm:$0xff] %v2737
        %2754 = vst [vmem:[#allocation4 + $0x238] sm:$0xff] %v2738
        %2755 = vst [vmem:[#allocation4 + $0x2c0] sm:$0xff] %v2739
        %2756 = vst [vmem:[#allocation4 + $0x2c8] sm:$0xff] %v2740
        %2757 = vst [vmem:[#allocation4 + $0x350] sm:$0xff] %v2741
        %2758 = vst [vmem:[#allocation4 + $0x358] sm:$0xff] %v2742
        %2759 = vst [vmem:[#allocation4 + $0x3e0] sm:$0xff] %v2743
        %2760 = vst [vmem:[#allocation4 + $0x3e8] sm:$0xff] %v2744
        %2761 = vst [vmem:[#allocation4 + $0x470] sm:$0xff] %v2745
        %2762 = vst [vmem:[#allocation4 + $0x478] sm:$0xff] %v2746
        %v2763 = vld [vmem:[#allocation3] sm:$0xff]
        %v2764 = vld [vmem:[#allocation3 + $0x8] sm:$0xff]
        %v2765 = vld [vmem:[#allocation3 + $0x10] sm:$0xff]
        %v2766 = vld [vmem:[#allocation3 + $0x18] sm:$0xff]
        %v2767 = vld [vmem:[#allocation3 + $0x20] sm:$0xff]
        %v2768 = vld [vmem:[#allocation3 + $0x28] sm:$0xff]
        %v2769 = vld [vmem:[#allocation3 + $0x30] sm:$0xff]
        %v2770 = vld [vmem:[#allocation3 + $0x38] sm:$0xff]
        %v2771 = vld [vmem:[#allocation3 + $0x40] sm:$0xff]
        %v2772 = vld [vmem:[#allocation3 + $0x48] sm:$0xff]
        %v2773 = vld [vmem:[#allocation3 + $0x50] sm:$0xff]
        %v2774 = vld [vmem:[#allocation3 + $0x58] sm:$0xff]
        %v2775 = vld [vmem:[#allocation3 + $0x60] sm:$0xff]
        %v2776 = vld [vmem:[#allocation3 + $0x68] sm:$0xff]
        %v2777 = vld [vmem:[#allocation3 + $0x70] sm:$0xff]
        %v2778 = vld [vmem:[#allocation3 + $0x78] sm:$0xff]
        %v2779 = vld [vmem:[#allocation4] sm:$0xff]
        %v2780 = vld [vmem:[#allocation4 + $0x8] sm:$0xff]
        %v2781 = vld [vmem:[#allocation4 + $0x10] sm:$0xff]
        %v2782 = vld [vmem:[#allocation4 + $0x18] sm:$0xff]
        %v2783 = vld [vmem:[#allocation4 + $0x20] sm:$0xff]
        %v2784 = vld [vmem:[#allocation4 + $0x28] sm:$0xff]
        %v2785 = vld [vmem:[#allocation4 + $0x30] sm:$0xff]
        %v2786 = vld [vmem:[#allocation4 + $0x38] sm:$0xff]
        %v2787 = vld [vmem:[#allocation4 + $0x40] sm:$0xff]
        %v2788 = vld [vmem:[#allocation4 + $0x48] sm:$0xff]
        %v2789 = vld [vmem:[#allocation4 + $0x50] sm:$0xff]
        %v2790 = vld [vmem:[#allocation4 + $0x58] sm:$0xff]
        %v2791 = vld [vmem:[#allocation4 + $0x60] sm:$0xff]
        %v2792 = vld [vmem:[#allocation4 + $0x68] sm:$0xff]
        %v2793 = vld [vmem:[#allocation4 + $0x70] sm:$0xff]
        %v2794 = vld [vmem:[#allocation4 + $0x78] sm:$0xff]
        %v2795 = vld [vmem:[#allocation4 + $0x80] sm:$0xff]
        %v2796 = vld [vmem:[#allocation4 + $0x88] sm:$0xff]
        %v2797 = vld [vmem:[#allocation4 + $0x90] sm:$0xff]
        %v2798 = vld [vmem:[#allocation4 + $0x98] sm:$0xff]
        %v2799 = vld [vmem:[#allocation4 + $0xa0] sm:$0xff]
        %v2800 = vld [vmem:[#allocation4 + $0xa8] sm:$0xff]
        %v2801 = vld [vmem:[#allocation4 + $0xb0] sm:$0xff]
        %v2802 = vld [vmem:[#allocation4 + $0xb8] sm:$0xff]
        %v2803 = vld [vmem:[#allocation4 + $0xc0] sm:$0xff]
        %v2804 = vld [vmem:[#allocation4 + $0xc8] sm:$0xff]
        %v2805 = vld [vmem:[#allocation4 + $0xd0] sm:$0xff]
        %v2806 = vld [vmem:[#allocation4 + $0xd8] sm:$0xff]
        %v2807 = vld [vmem:[#allocation4 + $0xe0] sm:$0xff]
        %v2808 = vld [vmem:[#allocation4 + $0xe8] sm:$0xff]
        %v2809 = vld [vmem:[#allocation4 + $0xf0] sm:$0xff]
        %v2810 = vld [vmem:[#allocation4 + $0xf8] sm:$0xff]
        %v2811 = vld [vmem:[#allocation4 + $0x100] sm:$0xff]
        %v2812 = vld [vmem:[#allocation4 + $0x108] sm:$0xff]
        %v2813 = vld [vmem:[#allocation4 + $0x110] sm:$0xff]
        %v2814 = vld [vmem:[#allocation4 + $0x118] sm:$0xff]
        %v2815 = vld [vmem:[#allocation4 + $0x120] sm:$0xff]
        %v2816 = vld [vmem:[#allocation4 + $0x128] sm:$0xff]
        %v2817 = vld [vmem:[#allocation4 + $0x130] sm:$0xff]
        %v2818 = vld [vmem:[#allocation4 + $0x138] sm:$0xff]
        %v2819 = vld [vmem:[#allocation4 + $0x140] sm:$0xff]
        %v2820 = vld [vmem:[#allocation4 + $0x148] sm:$0xff]
        %v2821 = vld [vmem:[#allocation4 + $0x150] sm:$0xff]
        %v2822 = vld [vmem:[#allocation4 + $0x158] sm:$0xff]
        %v2823 = vld [vmem:[#allocation4 + $0x160] sm:$0xff]
        %v2824 = vld [vmem:[#allocation4 + $0x168] sm:$0xff]
        %v2825 = vld [vmem:[#allocation4 + $0x170] sm:$0xff]
        %v2826 = vld [vmem:[#allocation4 + $0x178] sm:$0xff]
        %v2827 = vld [vmem:[#allocation4 + $0x180] sm:$0xff]
        %v2828 = vld [vmem:[#allocation4 + $0x188] sm:$0xff]
        %v2829 = vld [vmem:[#allocation4 + $0x190] sm:$0xff]
        %v2830 = vld [vmem:[#allocation4 + $0x198] sm:$0xff]
        %v2831 = vld [vmem:[#allocation4 + $0x1a0] sm:$0xff]
        %v2832 = vld [vmem:[#allocation4 + $0x1a8] sm:$0xff]
        %v2833 = vld [vmem:[#allocation4 + $0x1b0] sm:$0xff]
        %v2834 = vld [vmem:[#allocation4 + $0x1b8] sm:$0xff]
        %v2835 = vld [vmem:[#allocation4 + $0x1c0] sm:$0xff]
        %v2836 = vld [vmem:[#allocation4 + $0x1c8] sm:$0xff]
        %v2837 = vld [vmem:[#allocation4 + $0x1d0] sm:$0xff]
        %v2838 = vld [vmem:[#allocation4 + $0x1d8] sm:$0xff]
        %v2839 = vld [vmem:[#allocation4 + $0x1e0] sm:$0xff]
        %v2840 = vld [vmem:[#allocation4 + $0x1e8] sm:$0xff]
        %v2841 = vld [vmem:[#allocation4 + $0x1f0] sm:$0xff]
        %v2842 = vld [vmem:[#allocation4 + $0x1f8] sm:$0xff]
        %v2843 = vld [vmem:[#allocation4 + $0x200] sm:$0xff]
        %v2844 = vld [vmem:[#allocation4 + $0x208] sm:$0xff]
        %v2845 = vld [vmem:[#allocation4 + $0x210] sm:$0xff]
        %v2846 = vld [vmem:[#allocation4 + $0x218] sm:$0xff]
        %v2847 = vld [vmem:[#allocation4 + $0x220] sm:$0xff]
        %v2848 = vld [vmem:[#allocation4 + $0x228] sm:$0xff]
        %v2849 = vld [vmem:[#allocation4 + $0x230] sm:$0xff]
        %v2850 = vld [vmem:[#allocation4 + $0x238] sm:$0xff]
        %v2851 = vld [vmem:[#allocation4 + $0x240] sm:$0xff]
        %v2852 = vld [vmem:[#allocation4 + $0x248] sm:$0xff]
        %v2853 = vld [vmem:[#allocation4 + $0x250] sm:$0xff]
        %v2854 = vld [vmem:[#allocation4 + $0x258] sm:$0xff]
        %v2855 = vld [vmem:[#allocation4 + $0x260] sm:$0xff]
        %v2856 = vld [vmem:[#allocation4 + $0x268] sm:$0xff]
        %v2857 = vld [vmem:[#allocation4 + $0x270] sm:$0xff]
        %v2858 = vld [vmem:[#allocation4 + $0x278] sm:$0xff]
        %v2859 = vld [vmem:[#allocation4 + $0x280] sm:$0xff]
        %v2860 = vld [vmem:[#allocation4 + $0x288] sm:$0xff]
        %v2861 = vld [vmem:[#allocation4 + $0x290] sm:$0xff]
        %v2862 = vld [vmem:[#allocation4 + $0x298] sm:$0xff]
        %v2863 = vld [vmem:[#allocation4 + $0x2a0] sm:$0xff]
        %v2864 = vld [vmem:[#allocation4 + $0x2a8] sm:$0xff]
        %v2865 = vld [vmem:[#allocation4 + $0x2b0] sm:$0xff]
        %v2866 = vld [vmem:[#allocation4 + $0x2b8] sm:$0xff]
        %v2867 = vld [vmem:[#allocation4 + $0x2c0] sm:$0xff]
        %v2868 = vld [vmem:[#allocation4 + $0x2c8] sm:$0xff]
        %v2869 = vld [vmem:[#allocation4 + $0x2d0] sm:$0xff]
        %v2870 = vld [vmem:[#allocation4 + $0x2d8] sm:$0xff]
        %v2871 = vld [vmem:[#allocation4 + $0x2e0] sm:$0xff]
        %v2872 = vld [vmem:[#allocation4 + $0x2e8] sm:$0xff]
        %v2873 = vld [vmem:[#allocation4 + $0x2f0] sm:$0xff]
        %v2874 = vld [vmem:[#allocation4 + $0x2f8] sm:$0xff]
        %v2875 = vld [vmem:[#allocation4 + $0x300] sm:$0xff]
        %v2876 = vld [vmem:[#allocation4 + $0x308] sm:$0xff]
        %v2877 = vld [vmem:[#allocation4 + $0x310] sm:$0xff]
        %v2878 = vld [vmem:[#allocation4 + $0x318] sm:$0xff]
        %v2879 = vld [vmem:[#allocation4 + $0x320] sm:$0xff]
        %v2880 = vld [vmem:[#allocation4 + $0x328] sm:$0xff]
        %v2881 = vld [vmem:[#allocation4 + $0x330] sm:$0xff]
        %v2882 = vld [vmem:[#allocation4 + $0x338] sm:$0xff]
        %v2883 = vld [vmem:[#allocation4 + $0x340] sm:$0xff]
        %v2884 = vld [vmem:[#allocation4 + $0x348] sm:$0xff]
        %v2885 = vld [vmem:[#allocation4 + $0x350] sm:$0xff]
        %v2886 = vld [vmem:[#allocation4 + $0x358] sm:$0xff]
        %v2887 = vld [vmem:[#allocation4 + $0x360] sm:$0xff]
        %v2888 = vld [vmem:[#allocation4 + $0x368] sm:$0xff]
        %v2889 = vld [vmem:[#allocation4 + $0x370] sm:$0xff]
        %v2890 = vld [vmem:[#allocation4 + $0x378] sm:$0xff]
        %v2891 = vld [vmem:[#allocation4 + $0x380] sm:$0xff]
        %v2892 = vld [vmem:[#allocation4 + $0x388] sm:$0xff]
        %v2893 = vld [vmem:[#allocation4 + $0x390] sm:$0xff]
        %v2894 = vld [vmem:[#allocation4 + $0x398] sm:$0xff]
        %v2895 = vld [vmem:[#allocation4 + $0x3a0] sm:$0xff]
        %v2896 = vld [vmem:[#allocation4 + $0x3a8] sm:$0xff]
        %v2897 = vld [vmem:[#allocation4 + $0x3b0] sm:$0xff]
        %v2898 = vld [vmem:[#allocation4 + $0x3b8] sm:$0xff]
        %v2899 = vld [vmem:[#allocation4 + $0x3c0] sm:$0xff]
        %v2900 = vld [vmem:[#allocation4 + $0x3c8] sm:$0xff]
        %v2901 = vld [vmem:[#allocation4 + $0x3d0] sm:$0xff]
        %v2902 = vld [vmem:[#allocation4 + $0x3d8] sm:$0xff]
        %v2903 = vld [vmem:[#allocation4 + $0x3e0] sm:$0xff]
        %v2904 = vld [vmem:[#allocation4 + $0x3e8] sm:$0xff]
        %v2905 = vld [vmem:[#allocation4 + $0x3f0] sm:$0xff]
        %v2906 = vld [vmem:[#allocation4 + $0x3f8] sm:$0xff]
        %v2907 = vld [vmem:[#allocation4 + $0x400] sm:$0xff]
        %v2908 = vld [vmem:[#allocation4 + $0x408] sm:$0xff]
        %v2909 = vld [vmem:[#allocation4 + $0x410] sm:$0xff]
        %v2910 = vld [vmem:[#allocation4 + $0x418] sm:$0xff]
        %v2911 = vld [vmem:[#allocation4 + $0x420] sm:$0xff]
        %v2912 = vld [vmem:[#allocation4 + $0x428] sm:$0xff]
        %v2913 = vld [vmem:[#allocation4 + $0x430] sm:$0xff]
        %v2914 = vld [vmem:[#allocation4 + $0x438] sm:$0xff]
        %v2915 = vld [vmem:[#allocation4 + $0x440] sm:$0xff]
        %v2916 = vld [vmem:[#allocation4 + $0x448] sm:$0xff]
        %v2917 = vld [vmem:[#allocation4 + $0x450] sm:$0xff]
        %v2918 = vld [vmem:[#allocation4 + $0x458] sm:$0xff]
        %v2919 = vld [vmem:[#allocation4 + $0x460] sm:$0xff]
        %v2920 = vld [vmem:[#allocation4 + $0x468] sm:$0xff]
        %v2921 = vld [vmem:[#allocation4 + $0x470] sm:$0xff]
        %v2922 = vld [vmem:[#allocation4 + $0x478] sm:$0xff]
        %v2923 = vld [vmem:[%s264] sm:$0xf]
        %v2924 = vld [vmem:[%s264 + $0x4] sm:$0xf]
        %v2925 = vld [vmem:[%s264 + $0x8] sm:$0xf]
        %v2926 = vld [vmem:[%s264 + $0xc] sm:$0xf]
        %v2927 = vld [vmem:[%s264 + $0x10] sm:$0xf]
        %v2928 = vld [vmem:[%s264 + $0x14] sm:$0xf]
        %v2929 = vld [vmem:[%s264 + $0x18] sm:$0xf]
        %v2930 = vld [vmem:[%s264 + $0x1c] sm:$0xf]
        %v2931 = vld [vmem:[%s264 + $0x20] sm:$0xf]
        %v2932 = vld [vmem:[%s264 + $0x24] sm:$0xf]
        %v2933 = vld [vmem:[%s264 + $0x28] sm:$0xf]
        %v2934 = vld [vmem:[%s264 + $0x2c] sm:$0xf]
        %v2935 = vld [vmem:[%s264 + $0x30] sm:$0xf]
        %v2936 = vld [vmem:[%s264 + $0x34] sm:$0xf]
        %v2937 = vld [vmem:[%s264 + $0x38] sm:$0xf]
        %v2938 = vld [vmem:[%s264 + $0x3c] sm:$0xf]
        %v2939 = vld [vmem:[%s264 + $0x40] sm:$0xf]
        %v2940 = vld [vmem:[%s264 + $0x44] sm:$0xf]
        %v2941 = vld [vmem:[%s264 + $0x48] sm:$0xf]
        %v2942 = vld [vmem:[%s264 + $0x4c] sm:$0xf]
        %v2943 = vld [vmem:[%s264 + $0x50] sm:$0xf]
        %v2944 = vld [vmem:[%s264 + $0x54] sm:$0xf]
        %v2945 = vld [vmem:[%s264 + $0x58] sm:$0xf]
        %v2946 = vld [vmem:[%s264 + $0x5c] sm:$0xf]
        %v2947 = vld [vmem:[%s264 + $0x60] sm:$0xf]
        %v2948 = vld [vmem:[%s264 + $0x64] sm:$0xf]
        %v2949 = vld [vmem:[%s264 + $0x68] sm:$0xf]
        %v2950 = vld [vmem:[%s264 + $0x6c] sm:$0xf]
        %v2951 = vld [vmem:[%s264 + $0x70] sm:$0xf]
        %v2952 = vld [vmem:[%s264 + $0x74] sm:$0xf]
        %v2953 = vld [vmem:[%s264 + $0x78] sm:$0xf]
        %v2954 = vld [vmem:[%s264 + $0x7c] sm:$0xf]
        %v2955 = vld [vmem:[%s264 + $0x80] sm:$0xf]
        %v2956 = vld [vmem:[%s264 + $0x84] sm:$0xf]
        %v2957 = vld [vmem:[%s264 + $0x88] sm:$0xf]
        %v2958 = vld [vmem:[%s264 + $0x8c] sm:$0xf]
        %v2959 = vld [vmem:[%s264 + $0x90] sm:$0xf]
        %v2960 = vld [vmem:[%s264 + $0x94] sm:$0xf]
        %v2961 = vld [vmem:[%s264 + $0x98] sm:$0xf]
        %v2962 = vld [vmem:[%s264 + $0x9c] sm:$0xf]
        %v2963 = vld [vmem:[%s264 + $0xa0] sm:$0xf]
        %v2964 = vld [vmem:[%s264 + $0xa4] sm:$0xf]
        %v2965 = vld [vmem:[%s264 + $0xa8] sm:$0xf]
        %v2966 = vld [vmem:[%s264 + $0xac] sm:$0xf]
        %v2967 = vld [vmem:[%s264 + $0xb0] sm:$0xf]
        %v2968 = vld [vmem:[%s264 + $0xb4] sm:$0xf]
        %v2969 = vld [vmem:[%s264 + $0xb8] sm:$0xf]
        %v2970 = vld [vmem:[%s264 + $0xbc] sm:$0xf]
        %v2971 = vld [vmem:[%s264 + $0xc0] sm:$0xf]
        %v2972 = vld [vmem:[%s264 + $0xc4] sm:$0xf]
        %v2973 = vld [vmem:[%s264 + $0xc8] sm:$0xf]
        %v2974 = vld [vmem:[%s264 + $0xcc] sm:$0xf]
        %v2975 = vld [vmem:[%s264 + $0xd0] sm:$0xf]
        %v2976 = vld [vmem:[%s264 + $0xd4] sm:$0xf]
        %v2977 = vld [vmem:[%s264 + $0xd8] sm:$0xf]
        %v2978 = vld [vmem:[%s264 + $0xdc] sm:$0xf]
        %v2979 = vld [vmem:[%s264 + $0xe0] sm:$0xf]
        %v2980 = vld [vmem:[%s264 + $0xe4] sm:$0xf]
        %v2981 = vld [vmem:[%s264 + $0xe8] sm:$0xf]
        %v2982 = vld [vmem:[%s264 + $0xec] sm:$0xf]
        %v2983 = vld [vmem:[%s264 + $0xf0] sm:$0xf]
        %v2984 = vld [vmem:[%s264 + $0xf4] sm:$0xf]
        %v2985 = vld [vmem:[%s264 + $0xf8] sm:$0xf]
        %v2986 = vld [vmem:[%s264 + $0xfc] sm:$0xf]
        %v2987 = vld [vmem:[%s264 + $0x100] sm:$0xf]
        %v2988 = vld [vmem:[%s264 + $0x104] sm:$0xf]
        %v2989 = vld [vmem:[%s264 + $0x108] sm:$0xf]
        %v2990 = vld [vmem:[%s264 + $0x10c] sm:$0xf]
        %v2991 = vld [vmem:[%s264 + $0x110] sm:$0xf]
        %v2992 = vld [vmem:[%s264 + $0x114] sm:$0xf]
        %v2993 = vld [vmem:[%s264 + $0x118] sm:$0xf]
        %v2994 = vld [vmem:[%s264 + $0x11c] sm:$0xf]
        %v2995 = vld [vmem:[%s264 + $0x120] sm:$0xf]
        %v2996 = vld [vmem:[%s264 + $0x124] sm:$0xf]
        %v2997 = vld [vmem:[%s264 + $0x128] sm:$0xf]
        %v2998 = vld [vmem:[%s264 + $0x12c] sm:$0xf]
        %v2999 = vld [vmem:[%s264 + $0x130] sm:$0xf]
        %v3000 = vld [vmem:[%s264 + $0x134] sm:$0xf]
        %v3001 = vld [vmem:[%s264 + $0x138] sm:$0xf]
        %v3002 = vld [vmem:[%s264 + $0x13c] sm:$0xf]
        %v3003 = vld [vmem:[%s264 + $0x140] sm:$0xf]
        %v3004 = vld [vmem:[%s264 + $0x144] sm:$0xf]
        %v3005 = vld [vmem:[%s264 + $0x148] sm:$0xf]
        %v3006 = vld [vmem:[%s264 + $0x14c] sm:$0xf]
        %v3007 = vld [vmem:[%s264 + $0x150] sm:$0xf]
        %v3008 = vld [vmem:[%s264 + $0x154] sm:$0xf]
        %v3009 = vld [vmem:[%s264 + $0x158] sm:$0xf]
        %v3010 = vld [vmem:[%s264 + $0x15c] sm:$0xf]
        %v3011 = vld [vmem:[%s264 + $0x160] sm:$0xf]
        %v3012 = vld [vmem:[%s264 + $0x164] sm:$0xf]
        %v3013 = vld [vmem:[%s264 + $0x168] sm:$0xf]
        %v3014 = vld [vmem:[%s264 + $0x16c] sm:$0xf]
        %v3015 = vld [vmem:[%s264 + $0x170] sm:$0xf]
        %v3016 = vld [vmem:[%s264 + $0x174] sm:$0xf]
        %v3017 = vld [vmem:[%s264 + $0x178] sm:$0xf]
        %v3018 = vld [vmem:[%s264 + $0x17c] sm:$0xf]
        %v3019 = vld [vmem:[%s264 + $0x180] sm:$0xf]
        %v3020 = vld [vmem:[%s264 + $0x184] sm:$0xf]
        %v3021 = vld [vmem:[%s264 + $0x188] sm:$0xf]
        %v3022 = vld [vmem:[%s264 + $0x18c] sm:$0xf]
        %v3023 = vld [vmem:[%s264 + $0x190] sm:$0xf]
        %v3024 = vld [vmem:[%s264 + $0x194] sm:$0xf]
        %v3025 = vld [vmem:[%s264 + $0x198] sm:$0xf]
        %v3026 = vld [vmem:[%s264 + $0x19c] sm:$0xf]
        %v3027 = vld [vmem:[%s264 + $0x1a0] sm:$0xf]
        %v3028 = vld [vmem:[%s264 + $0x1a4] sm:$0xf]
        %v3029 = vld [vmem:[%s264 + $0x1a8] sm:$0xf]
        %v3030 = vld [vmem:[%s264 + $0x1ac] sm:$0xf]
        %v3031 = vld [vmem:[%s264 + $0x1b0] sm:$0xf]
        %v3032 = vld [vmem:[%s264 + $0x1b4] sm:$0xf]
        %v3033 = vld [vmem:[%s264 + $0x1b8] sm:$0xf]
        %v3034 = vld [vmem:[%s264 + $0x1bc] sm:$0xf]
        %v3035 = vld [vmem:[%s264 + $0x1c0] sm:$0xf]
        %v3036 = vld [vmem:[%s264 + $0x1c4] sm:$0xf]
        %v3037 = vld [vmem:[%s264 + $0x1c8] sm:$0xf]
        %v3038 = vld [vmem:[%s264 + $0x1cc] sm:$0xf]
        %v3039 = vld [vmem:[%s264 + $0x1d0] sm:$0xf]
        %v3040 = vld [vmem:[%s264 + $0x1d4] sm:$0xf]
        %v3041 = vld [vmem:[%s264 + $0x1d8] sm:$0xf]
        %v3042 = vld [vmem:[%s264 + $0x1dc] sm:$0xf]
        %v3043 = vld [vmem:[%s264 + $0x1e0] sm:$0xf]
        %v3044 = vld [vmem:[%s264 + $0x1e4] sm:$0xf]
        %v3045 = vld [vmem:[%s264 + $0x1e8] sm:$0xf]
        %v3046 = vld [vmem:[%s264 + $0x1ec] sm:$0xf]
        %v3047 = vld [vmem:[%s264 + $0x1f0] sm:$0xf]
        %v3048 = vld [vmem:[%s264 + $0x1f4] sm:$0xf]
        %v3049 = vld [vmem:[%s264 + $0x1f8] sm:$0xf]
        %v3050 = vld [vmem:[%s264 + $0x1fc] sm:$0xf]
        %v3051 = vld [vmem:[%s264 + $0x200] sm:$0xf]
        %v3052 = vld [vmem:[%s264 + $0x204] sm:$0xf]
        %v3053 = vld [vmem:[%s264 + $0x208] sm:$0xf]
        %v3054 = vld [vmem:[%s264 + $0x20c] sm:$0xf]
        %v3055 = vld [vmem:[%s264 + $0x210] sm:$0xf]
        %v3056 = vld [vmem:[%s264 + $0x214] sm:$0xf]
        %v3057 = vld [vmem:[%s264 + $0x218] sm:$0xf]
        %v3058 = vld [vmem:[%s264 + $0x21c] sm:$0xf]
        %v3059 = vld [vmem:[%s264 + $0x220] sm:$0xf]
        %v3060 = vld [vmem:[%s264 + $0x224] sm:$0xf]
        %v3061 = vld [vmem:[%s264 + $0x228] sm:$0xf]
        %v3062 = vld [vmem:[%s264 + $0x22c] sm:$0xf]
        %v3063 = vld [vmem:[%s264 + $0x230] sm:$0xf]
        %v3064 = vld [vmem:[%s264 + $0x234] sm:$0xf]
        %v3065 = vld [vmem:[%s264 + $0x238] sm:$0xf]
        %v3066 = vld [vmem:[%s264 + $0x23c] sm:$0xf]
        %v3067 = vld [vmem:[%s264 + $0x240] sm:$0xf]
        %v3068 = vld [vmem:[%s264 + $0x244] sm:$0xf]
        %v3069 = vld [vmem:[%s264 + $0x248] sm:$0xf]
        %v3070 = vld [vmem:[%s264 + $0x24c] sm:$0xf]
        %v3071 = vld [vmem:[%s264 + $0x250] sm:$0xf]
        %v3072 = vld [vmem:[%s264 + $0x254] sm:$0xf]
        %v3073 = vld [vmem:[%s264 + $0x258] sm:$0xf]
        %v3074 = vld [vmem:[%s264 + $0x25c] sm:$0xf]
        %v3075 = vld [vmem:[%s264 + $0x260] sm:$0xf]
        %v3076 = vld [vmem:[%s264 + $0x264] sm:$0xf]
        %v3077 = vld [vmem:[%s264 + $0x268] sm:$0xf]
        %v3078 = vld [vmem:[%s264 + $0x26c] sm:$0xf]
        %v3079 = vld [vmem:[%s264 + $0x270] sm:$0xf]
        %v3080 = vld [vmem:[%s264 + $0x274] sm:$0xf]
        %v3081 = vld [vmem:[%s264 + $0x278] sm:$0xf]
        %v3082 = vld [vmem:[%s264 + $0x27c] sm:$0xf]
        %v3083 = vld [vmem:[%s264 + $0x280] sm:$0xf]
        %v3084 = vld [vmem:[%s264 + $0x284] sm:$0xf]
        %v3085 = vld [vmem:[%s264 + $0x288] sm:$0xf]
        %v3086 = vld [vmem:[%s264 + $0x28c] sm:$0xf]
        %v3087 = vld [vmem:[%s264 + $0x290] sm:$0xf]
        %v3088 = vld [vmem:[%s264 + $0x294] sm:$0xf]
        %v3089 = vld [vmem:[%s264 + $0x298] sm:$0xf]
        %v3090 = vld [vmem:[%s264 + $0x29c] sm:$0xf]
        %v3091 = vld [vmem:[%s264 + $0x2a0] sm:$0xf]
        %v3092 = vld [vmem:[%s264 + $0x2a4] sm:$0xf]
        %v3093 = vld [vmem:[%s264 + $0x2a8] sm:$0xf]
        %v3094 = vld [vmem:[%s264 + $0x2ac] sm:$0xf]
        %v3095 = vld [vmem:[%s264 + $0x2b0] sm:$0xf]
        %v3096 = vld [vmem:[%s264 + $0x2b4] sm:$0xf]
        %v3097 = vld [vmem:[%s264 + $0x2b8] sm:$0xf]
        %v3098 = vld [vmem:[%s264 + $0x2bc] sm:$0xf]
        %v3099 = vld [vmem:[%s264 + $0x2c0] sm:$0xf]
        %v3100 = vld [vmem:[%s264 + $0x2c4] sm:$0xf]
        %v3101 = vld [vmem:[%s264 + $0x2c8] sm:$0xf]
        %v3102 = vld [vmem:[%s264 + $0x2cc] sm:$0xf]
        %v3103 = vld [vmem:[%s264 + $0x2d0] sm:$0xf]
        %v3104 = vld [vmem:[%s264 + $0x2d4] sm:$0xf]
        %v3105 = vld [vmem:[%s264 + $0x2d8] sm:$0xf]
        %v3106 = vld [vmem:[%s264 + $0x2dc] sm:$0xf]
        %v3107 = vld [vmem:[%s264 + $0x2e0] sm:$0xf]
        %v3108 = vld [vmem:[%s264 + $0x2e4] sm:$0xf]
        %v3109 = vld [vmem:[%s264 + $0x2e8] sm:$0xf]
        %v3110 = vld [vmem:[%s264 + $0x2ec] sm:$0xf]
        %v3111 = vld [vmem:[%s264 + $0x2f0] sm:$0xf]
        %v3112 = vld [vmem:[%s264 + $0x2f4] sm:$0xf]
        %v3113 = vld [vmem:[%s264 + $0x2f8] sm:$0xf]
        %v3114 = vld [vmem:[%s264 + $0x2fc] sm:$0xf]
        %v3115 = vld [vmem:[%s264 + $0x300] sm:$0xf]
        %v3116 = vld [vmem:[%s264 + $0x304] sm:$0xf]
        %v3117 = vld [vmem:[%s264 + $0x308] sm:$0xf]
        %v3118 = vld [vmem:[%s264 + $0x30c] sm:$0xf]
        %v3119 = vld [vmem:[%s264 + $0x310] sm:$0xf]
        %v3120 = vld [vmem:[%s264 + $0x314] sm:$0xf]
        %v3121 = vld [vmem:[%s264 + $0x318] sm:$0xf]
        %v3122 = vld [vmem:[%s264 + $0x31c] sm:$0xf]
        %v3123 = vld [vmem:[%s264 + $0x320] sm:$0xf]
        %v3124 = vld [vmem:[%s264 + $0x324] sm:$0xf]
        %v3125 = vld [vmem:[%s264 + $0x328] sm:$0xf]
        %v3126 = vld [vmem:[%s264 + $0x32c] sm:$0xf]
        %v3127 = vld [vmem:[%s264 + $0x330] sm:$0xf]
        %v3128 = vld [vmem:[%s264 + $0x334] sm:$0xf]
        %v3129 = vld [vmem:[%s264 + $0x338] sm:$0xf]
        %v3130 = vld [vmem:[%s264 + $0x33c] sm:$0xf]
        %v3131 = vld [vmem:[%s264 + $0x340] sm:$0xf]
        %v3132 = vld [vmem:[%s264 + $0x344] sm:$0xf]
        %v3133 = vld [vmem:[%s264 + $0x348] sm:$0xf]
        %v3134 = vld [vmem:[%s264 + $0x34c] sm:$0xf]
        %v3135 = vld [vmem:[%s264 + $0x350] sm:$0xf]
        %v3136 = vld [vmem:[%s264 + $0x354] sm:$0xf]
        %v3137 = vld [vmem:[%s264 + $0x358] sm:$0xf]
        %v3138 = vld [vmem:[%s264 + $0x35c] sm:$0xf]
        %v3139 = vld [vmem:[%s264 + $0x360] sm:$0xf]
        %v3140 = vld [vmem:[%s264 + $0x364] sm:$0xf]
        %v3141 = vld [vmem:[%s264 + $0x368] sm:$0xf]
        %v3142 = vld [vmem:[%s264 + $0x36c] sm:$0xf]
        %v3143 = vld [vmem:[%s264 + $0x370] sm:$0xf]
        %v3144 = vld [vmem:[%s264 + $0x374] sm:$0xf]
        %v3145 = vld [vmem:[%s264 + $0x378] sm:$0xf]
        %v3146 = vld [vmem:[%s264 + $0x37c] sm:$0xf]
        %v3147 = vld [vmem:[%s264 + $0x380] sm:$0xf]
        %v3148 = vld [vmem:[%s264 + $0x384] sm:$0xf]
        %v3149 = vld [vmem:[%s264 + $0x388] sm:$0xf]
        %v3150 = vld [vmem:[%s264 + $0x38c] sm:$0xf]
        %v3151 = vld [vmem:[%s264 + $0x390] sm:$0xf]
        %v3152 = vld [vmem:[%s264 + $0x394] sm:$0xf]
        %v3153 = vld [vmem:[%s264 + $0x398] sm:$0xf]
        %v3154 = vld [vmem:[%s264 + $0x39c] sm:$0xf]
        %v3155 = vld [vmem:[%s264 + $0x3a0] sm:$0xf]
        %v3156 = vld [vmem:[%s264 + $0x3a4] sm:$0xf]
        %v3157 = vld [vmem:[%s264 + $0x3a8] sm:$0xf]
        %v3158 = vld [vmem:[%s264 + $0x3ac] sm:$0xf]
        %v3159 = vld [vmem:[%s264 + $0x3b0] sm:$0xf]
        %v3160 = vld [vmem:[%s264 + $0x3b4] sm:$0xf]
        %v3161 = vld [vmem:[%s264 + $0x3b8] sm:$0xf]
        %v3162 = vld [vmem:[%s264 + $0x3bc] sm:$0xf]
        %v3163 = vld [vmem:[%s264 + $0x3c0] sm:$0xf]
        %v3164 = vld [vmem:[%s264 + $0x3c4] sm:$0xf]
        %v3165 = vld [vmem:[%s264 + $0x3c8] sm:$0xf]
        %v3166 = vld [vmem:[%s264 + $0x3cc] sm:$0xf]
        %v3167 = vld [vmem:[%s264 + $0x3d0] sm:$0xf]
        %v3168 = vld [vmem:[%s264 + $0x3d4] sm:$0xf]
        %v3169 = vld [vmem:[%s264 + $0x3d8] sm:$0xf]
        %v3170 = vld [vmem:[%s264 + $0x3dc] sm:$0xf]
        %v3171 = vld [vmem:[%s264 + $0x3e0] sm:$0xf]
        %v3172 = vld [vmem:[%s264 + $0x3e4] sm:$0xf]
        %v3173 = vld [vmem:[%s264 + $0x3e8] sm:$0xf]
        %v3174 = vld [vmem:[%s264 + $0x3ec] sm:$0xf]
        %v3175 = vld [vmem:[%s264 + $0x3f0] sm:$0xf]
        %v3176 = vld [vmem:[%s264 + $0x3f4] sm:$0xf]
        %v3177 = vld [vmem:[%s264 + $0x3f8] sm:$0xf]
        %v3178 = vld [vmem:[%s264 + $0x3fc] sm:$0xf]
        %v3179 = vld [vmem:[%s264 + $0x400] sm:$0xf]
        %v3180 = vld [vmem:[%s264 + $0x404] sm:$0xf]
        %v3181 = vld [vmem:[%s264 + $0x408] sm:$0xf]
        %v3182 = vld [vmem:[%s264 + $0x40c] sm:$0xf]
        %v3183 = vld [vmem:[%s264 + $0x410] sm:$0xf]
        %v3184 = vld [vmem:[%s264 + $0x414] sm:$0xf]
        %v3185 = vld [vmem:[%s264 + $0x418] sm:$0xf]
        %v3186 = vld [vmem:[%s264 + $0x41c] sm:$0xf]
        %v3187 = vld [vmem:[%s264 + $0x420] sm:$0xf]
        %v3188 = vld [vmem:[%s264 + $0x424] sm:$0xf]
        %v3189 = vld [vmem:[%s264 + $0x428] sm:$0xf]
        %v3190 = vld [vmem:[%s264 + $0x42c] sm:$0xf]
        %v3191 = vld [vmem:[%s264 + $0x430] sm:$0xf]
        %v3192 = vld [vmem:[%s264 + $0x434] sm:$0xf]
        %v3193 = vld [vmem:[%s264 + $0x438] sm:$0xf]
        %v3194 = vld [vmem:[%s264 + $0x43c] sm:$0xf]
        %v3195 = vld [vmem:[%s264 + $0x440] sm:$0xf]
        %v3196 = vld [vmem:[%s264 + $0x444] sm:$0xf]
        %v3197 = vld [vmem:[%s264 + $0x448] sm:$0xf]
        %v3198 = vld [vmem:[%s264 + $0x44c] sm:$0xf]
        %v3199 = vld [vmem:[%s264 + $0x450] sm:$0xf]
        %v3200 = vld [vmem:[%s264 + $0x454] sm:$0xf]
        %v3201 = vld [vmem:[%s264 + $0x458] sm:$0xf]
        %v3202 = vld [vmem:[%s264 + $0x45c] sm:$0xf]
        %v3203 = vld [vmem:[%s264 + $0x460] sm:$0xf]
        %v3204 = vld [vmem:[%s264 + $0x464] sm:$0xf]
        %v3205 = vld [vmem:[%s264 + $0x468] sm:$0xf]
        %v3206 = vld [vmem:[%s264 + $0x46c] sm:$0xf]
        %v3207 = vld [vmem:[%s264 + $0x470] sm:$0xf]
        %v3208 = vld [vmem:[%s264 + $0x474] sm:$0xf]
        %v3209 = vld [vmem:[%s264 + $0x478] sm:$0xf]
        %v3210 = vld [vmem:[%s264 + $0x47c] sm:$0xf]
        %v3499 = vunpack.c.l.b16 %v2923
        %v3500 = vunpack.c.l.b16 %v2924
        %v3501 = vunpack.c.l.b16 %v2925
        %v3502 = vunpack.c.l.b16 %v2926
        %v3503 = vunpack.c.l.b16 %v2927
        %v3504 = vunpack.c.l.b16 %v2928
        %v3505 = vunpack.c.l.b16 %v2929
        %v3506 = vunpack.c.l.b16 %v2930
        %v3507 = vunpack.c.l.b16 %v2931
        %v3508 = vunpack.c.l.b16 %v2932
        %v3509 = vunpack.c.l.b16 %v2933
        %v3510 = vunpack.c.l.b16 %v2934
        %v3511 = vunpack.c.l.b16 %v2935
        %v3512 = vunpack.c.l.b16 %v2936
        %v3513 = vunpack.c.l.b16 %v2937
        %v3514 = vunpack.c.l.b16 %v2938
        %v3515 = vunpack.c.l.b16 %v2939
        %v3516 = vunpack.c.l.b16 %v2940
        %v3517 = vunpack.c.l.b16 %v2941
        %v3518 = vunpack.c.l.b16 %v2942
        %v3519 = vunpack.c.l.b16 %v2943
        %v3520 = vunpack.c.l.b16 %v2944
        %v3521 = vunpack.c.l.b16 %v2945
        %v3522 = vunpack.c.l.b16 %v2946
        %v3523 = vunpack.c.l.b16 %v2947
        %v3524 = vunpack.c.l.b16 %v2948
        %v3525 = vunpack.c.l.b16 %v2949
        %v3526 = vunpack.c.l.b16 %v2950
        %v3527 = vunpack.c.l.b16 %v2951
        %v3528 = vunpack.c.l.b16 %v2952
        %v3529 = vunpack.c.l.b16 %v2953
        %v3530 = vunpack.c.l.b16 %v2954
        %v3531 = vunpack.c.l.b16 %v2955
        %v3532 = vunpack.c.l.b16 %v2956
        %v3533 = vunpack.c.l.b16 %v2957
        %v3534 = vunpack.c.l.b16 %v2958
        %v3535 = vunpack.c.l.b16 %v2959
        %v3536 = vunpack.c.l.b16 %v2960
        %v3537 = vunpack.c.l.b16 %v2961
        %v3538 = vunpack.c.l.b16 %v2962
        %v3539 = vunpack.c.l.b16 %v2963
        %v3540 = vunpack.c.l.b16 %v2964
        %v3541 = vunpack.c.l.b16 %v2965
        %v3542 = vunpack.c.l.b16 %v2966
        %v3543 = vunpack.c.l.b16 %v2967
        %v3544 = vunpack.c.l.b16 %v2968
        %v3545 = vunpack.c.l.b16 %v2969
        %v3546 = vunpack.c.l.b16 %v2970
        %v3547 = vunpack.c.l.b16 %v2971
        %v3548 = vunpack.c.l.b16 %v2972
        %v3549 = vunpack.c.l.b16 %v2973
        %v3550 = vunpack.c.l.b16 %v2974
        %v3551 = vunpack.c.l.b16 %v2975
        %v3552 = vunpack.c.l.b16 %v2976
        %v3553 = vunpack.c.l.b16 %v2977
        %v3554 = vunpack.c.l.b16 %v2978
        %v3555 = vunpack.c.l.b16 %v2979
        %v3556 = vunpack.c.l.b16 %v2980
        %v3557 = vunpack.c.l.b16 %v2981
        %v3558 = vunpack.c.l.b16 %v2982
        %v3559 = vunpack.c.l.b16 %v2983
        %v3560 = vunpack.c.l.b16 %v2984
        %v3561 = vunpack.c.l.b16 %v2985
        %v3562 = vunpack.c.l.b16 %v2986
        %v3563 = vunpack.c.l.b16 %v2987
        %v3564 = vunpack.c.l.b16 %v2988
        %v3565 = vunpack.c.l.b16 %v2989
        %v3566 = vunpack.c.l.b16 %v2990
        %v3567 = vunpack.c.l.b16 %v2991
        %v3568 = vunpack.c.l.b16 %v2992
        %v3569 = vunpack.c.l.b16 %v2993
        %v3570 = vunpack.c.l.b16 %v2994
        %v3571 = vunpack.c.l.b16 %v2995
        %v3572 = vunpack.c.l.b16 %v2996
        %v3573 = vunpack.c.l.b16 %v2997
        %v3574 = vunpack.c.l.b16 %v2998
        %v3575 = vunpack.c.l.b16 %v2999
        %v3576 = vunpack.c.l.b16 %v3000
        %v3577 = vunpack.c.l.b16 %v3001
        %v3578 = vunpack.c.l.b16 %v3002
        %v3579 = vunpack.c.l.b16 %v3003
        %v3580 = vunpack.c.l.b16 %v3004
        %v3581 = vunpack.c.l.b16 %v3005
        %v3582 = vunpack.c.l.b16 %v3006
        %v3583 = vunpack.c.l.b16 %v3007
        %v3584 = vunpack.c.l.b16 %v3008
        %v3585 = vunpack.c.l.b16 %v3009
        %v3586 = vunpack.c.l.b16 %v3010
        %v3587 = vunpack.c.l.b16 %v3011
        %v3588 = vunpack.c.l.b16 %v3012
        %v3589 = vunpack.c.l.b16 %v3013
        %v3590 = vunpack.c.l.b16 %v3014
        %v3591 = vunpack.c.l.b16 %v3015
        %v3592 = vunpack.c.l.b16 %v3016
        %v3593 = vunpack.c.l.b16 %v3017
        %v3594 = vunpack.c.l.b16 %v3018
        %v3595 = vunpack.c.l.b16 %v3019
        %v3596 = vunpack.c.l.b16 %v3020
        %v3597 = vunpack.c.l.b16 %v3021
        %v3598 = vunpack.c.l.b16 %v3022
        %v3599 = vunpack.c.l.b16 %v3023
        %v3600 = vunpack.c.l.b16 %v3024
        %v3601 = vunpack.c.l.b16 %v3025
        %v3602 = vunpack.c.l.b16 %v3026
        %v3603 = vunpack.c.l.b16 %v3027
        %v3604 = vunpack.c.l.b16 %v3028
        %v3605 = vunpack.c.l.b16 %v3029
        %v3606 = vunpack.c.l.b16 %v3030
        %v3607 = vunpack.c.l.b16 %v3031
        %v3608 = vunpack.c.l.b16 %v3032
        %v3609 = vunpack.c.l.b16 %v3033
        %v3610 = vunpack.c.l.b16 %v3034
        %v3611 = vunpack.c.l.b16 %v3035
        %v3612 = vunpack.c.l.b16 %v3036
        %v3613 = vunpack.c.l.b16 %v3037
        %v3614 = vunpack.c.l.b16 %v3038
        %v3615 = vunpack.c.l.b16 %v3039
        %v3616 = vunpack.c.l.b16 %v3040
        %v3617 = vunpack.c.l.b16 %v3041
        %v3618 = vunpack.c.l.b16 %v3042
        %v3619 = vunpack.c.l.b16 %v3043
        %v3620 = vunpack.c.l.b16 %v3044
        %v3621 = vunpack.c.l.b16 %v3045
        %v3622 = vunpack.c.l.b16 %v3046
        %v3623 = vunpack.c.l.b16 %v3047
        %v3624 = vunpack.c.l.b16 %v3048
        %v3625 = vunpack.c.l.b16 %v3049
        %v3626 = vunpack.c.l.b16 %v3050
        %v3627 = vunpack.c.l.b16 %v3051
        %v3628 = vunpack.c.l.b16 %v3052
        %v3629 = vunpack.c.l.b16 %v3053
        %v3630 = vunpack.c.l.b16 %v3054
        %v3631 = vunpack.c.l.b16 %v3055
        %v3632 = vunpack.c.l.b16 %v3056
        %v3633 = vunpack.c.l.b16 %v3057
        %v3634 = vunpack.c.l.b16 %v3058
        %v3635 = vunpack.c.l.b16 %v3059
        %v3636 = vunpack.c.l.b16 %v3060
        %v3637 = vunpack.c.l.b16 %v3061
        %v3638 = vunpack.c.l.b16 %v3062
        %v3639 = vunpack.c.l.b16 %v3063
        %v3640 = vunpack.c.l.b16 %v3064
        %v3641 = vunpack.c.l.b16 %v3065
        %v3642 = vunpack.c.l.b16 %v3066
        %v3643 = vunpack.c.l.b16 %v3067
        %v3644 = vunpack.c.l.b16 %v3068
        %v3645 = vunpack.c.l.b16 %v3069
        %v3646 = vunpack.c.l.b16 %v3070
        %v3647 = vunpack.c.l.b16 %v3071
        %v3648 = vunpack.c.l.b16 %v3072
        %v3649 = vunpack.c.l.b16 %v3073
        %v3650 = vunpack.c.l.b16 %v3074
        %v3651 = vunpack.c.l.b16 %v3075
        %v3652 = vunpack.c.l.b16 %v3076
        %v3653 = vunpack.c.l.b16 %v3077
        %v3654 = vunpack.c.l.b16 %v3078
        %v3655 = vunpack.c.l.b16 %v3079
        %v3656 = vunpack.c.l.b16 %v3080
        %v3657 = vunpack.c.l.b16 %v3081
        %v3658 = vunpack.c.l.b16 %v3082
        %v3659 = vunpack.c.l.b16 %v3083
        %v3660 = vunpack.c.l.b16 %v3084
        %v3661 = vunpack.c.l.b16 %v3085
        %v3662 = vunpack.c.l.b16 %v3086
        %v3663 = vunpack.c.l.b16 %v3087
        %v3664 = vunpack.c.l.b16 %v3088
        %v3665 = vunpack.c.l.b16 %v3089
        %v3666 = vunpack.c.l.b16 %v3090
        %v3667 = vunpack.c.l.b16 %v3091
        %v3668 = vunpack.c.l.b16 %v3092
        %v3669 = vunpack.c.l.b16 %v3093
        %v3670 = vunpack.c.l.b16 %v3094
        %v3671 = vunpack.c.l.b16 %v3095
        %v3672 = vunpack.c.l.b16 %v3096
        %v3673 = vunpack.c.l.b16 %v3097
        %v3674 = vunpack.c.l.b16 %v3098
        %v3675 = vunpack.c.l.b16 %v3099
        %v3676 = vunpack.c.l.b16 %v3100
        %v3677 = vunpack.c.l.b16 %v3101
        %v3678 = vunpack.c.l.b16 %v3102
        %v3679 = vunpack.c.l.b16 %v3103
        %v3680 = vunpack.c.l.b16 %v3104
        %v3681 = vunpack.c.l.b16 %v3105
        %v3682 = vunpack.c.l.b16 %v3106
        %v3683 = vunpack.c.l.b16 %v3107
        %v3684 = vunpack.c.l.b16 %v3108
        %v3685 = vunpack.c.l.b16 %v3109
        %v3686 = vunpack.c.l.b16 %v3110
        %v3687 = vunpack.c.l.b16 %v3111
        %v3688 = vunpack.c.l.b16 %v3112
        %v3689 = vunpack.c.l.b16 %v3113
        %v3690 = vunpack.c.l.b16 %v3114
        %v3691 = vunpack.c.l.b16 %v3115
        %v3692 = vunpack.c.l.b16 %v3116
        %v3693 = vunpack.c.l.b16 %v3117
        %v3694 = vunpack.c.l.b16 %v3118
        %v3695 = vunpack.c.l.b16 %v3119
        %v3696 = vunpack.c.l.b16 %v3120
        %v3697 = vunpack.c.l.b16 %v3121
        %v3698 = vunpack.c.l.b16 %v3122
        %v3699 = vunpack.c.l.b16 %v3123
        %v3700 = vunpack.c.l.b16 %v3124
        %v3701 = vunpack.c.l.b16 %v3125
        %v3702 = vunpack.c.l.b16 %v3126
        %v3703 = vunpack.c.l.b16 %v3127
        %v3704 = vunpack.c.l.b16 %v3128
        %v3705 = vunpack.c.l.b16 %v3129
        %v3706 = vunpack.c.l.b16 %v3130
        %v3707 = vunpack.c.l.b16 %v3131
        %v3708 = vunpack.c.l.b16 %v3132
        %v3709 = vunpack.c.l.b16 %v3133
        %v3710 = vunpack.c.l.b16 %v3134
        %v3711 = vunpack.c.l.b16 %v3135
        %v3712 = vunpack.c.l.b16 %v3136
        %v3713 = vunpack.c.l.b16 %v3137
        %v3714 = vunpack.c.l.b16 %v3138
        %v3715 = vunpack.c.l.b16 %v3139
        %v3716 = vunpack.c.l.b16 %v3140
        %v3717 = vunpack.c.l.b16 %v3141
        %v3718 = vunpack.c.l.b16 %v3142
        %v3719 = vunpack.c.l.b16 %v3143
        %v3720 = vunpack.c.l.b16 %v3144
        %v3721 = vunpack.c.l.b16 %v3145
        %v3722 = vunpack.c.l.b16 %v3146
        %v3723 = vunpack.c.l.b16 %v3147
        %v3724 = vunpack.c.l.b16 %v3148
        %v3725 = vunpack.c.l.b16 %v3149
        %v3726 = vunpack.c.l.b16 %v3150
        %v3727 = vunpack.c.l.b16 %v3151
        %v3728 = vunpack.c.l.b16 %v3152
        %v3729 = vunpack.c.l.b16 %v3153
        %v3730 = vunpack.c.l.b16 %v3154
        %v3731 = vunpack.c.l.b16 %v3155
        %v3732 = vunpack.c.l.b16 %v3156
        %v3733 = vunpack.c.l.b16 %v3157
        %v3734 = vunpack.c.l.b16 %v3158
        %v3735 = vunpack.c.l.b16 %v3159
        %v3736 = vunpack.c.l.b16 %v3160
        %v3737 = vunpack.c.l.b16 %v3161
        %v3738 = vunpack.c.l.b16 %v3162
        %v3739 = vunpack.c.l.b16 %v3163
        %v3740 = vunpack.c.l.b16 %v3164
        %v3741 = vunpack.c.l.b16 %v3165
        %v3742 = vunpack.c.l.b16 %v3166
        %v3743 = vunpack.c.l.b16 %v3167
        %v3744 = vunpack.c.l.b16 %v3168
        %v3745 = vunpack.c.l.b16 %v3169
        %v3746 = vunpack.c.l.b16 %v3170
        %v3747 = vunpack.c.l.b16 %v3171
        %v3748 = vunpack.c.l.b16 %v3172
        %v3749 = vunpack.c.l.b16 %v3173
        %v3750 = vunpack.c.l.b16 %v3174
        %v3751 = vunpack.c.l.b16 %v3175
        %v3752 = vunpack.c.l.b16 %v3176
        %v3753 = vunpack.c.l.b16 %v3177
        %v3754 = vunpack.c.l.b16 %v3178
        %v3755 = vunpack.c.l.b16 %v3179
        %v3756 = vunpack.c.l.b16 %v3180
        %v3757 = vunpack.c.l.b16 %v3181
        %v3758 = vunpack.c.l.b16 %v3182
        %v3759 = vunpack.c.l.b16 %v3183
        %v3760 = vunpack.c.l.b16 %v3184
        %v3761 = vunpack.c.l.b16 %v3185
        %v3762 = vunpack.c.l.b16 %v3186
        %v3763 = vunpack.c.l.b16 %v3187
        %v3764 = vunpack.c.l.b16 %v3188
        %v3765 = vunpack.c.l.b16 %v3189
        %v3766 = vunpack.c.l.b16 %v3190
        %v3767 = vunpack.c.l.b16 %v3191
        %v3768 = vunpack.c.l.b16 %v3192
        %v3769 = vunpack.c.l.b16 %v3193
        %v3770 = vunpack.c.l.b16 %v3194
        %v3771 = vunpack.c.l.b16 %v3195
        %v3772 = vunpack.c.l.b16 %v3196
        %v3773 = vunpack.c.l.b16 %v3197
        %v3774 = vunpack.c.l.b16 %v3198
        %v3775 = vunpack.c.l.b16 %v3199
        %v3776 = vunpack.c.l.b16 %v3200
        %v3777 = vunpack.c.l.b16 %v3201
        %v3778 = vunpack.c.l.b16 %v3202
        %v3779 = vunpack.c.l.b16 %v3203
        %v3780 = vunpack.c.l.b16 %v3204
        %v3781 = vunpack.c.l.b16 %v3205
        %v3782 = vunpack.c.l.b16 %v3206
        %v3783 = vunpack.c.l.b16 %v3207
        %v3784 = vunpack.c.l.b16 %v3208
        %v3785 = vunpack.c.l.b16 %v3209
        %v3786 = vunpack.c.l.b16 %v3210
        %v3787 = vpack.c.b16 %v3500, %v3499
        %v3788 = vpack.c.b16 %v3502, %v3501
        %v3789 = vpack.c.b16 %v3504, %v3503
        %v3790 = vpack.c.b16 %v3506, %v3505
        %v3791 = vpack.c.b16 %v3508, %v3507
        %v3792 = vpack.c.b16 %v3510, %v3509
        %v3793 = vpack.c.b16 %v3512, %v3511
        %v3794 = vpack.c.b16 %v3514, %v3513
        %v3795 = vpack.c.b16 %v3516, %v3515
        %v3796 = vpack.c.b16 %v3518, %v3517
        %v3797 = vpack.c.b16 %v3520, %v3519
        %v3798 = vpack.c.b16 %v3522, %v3521
        %v3799 = vpack.c.b16 %v3524, %v3523
        %v3800 = vpack.c.b16 %v3526, %v3525
        %v3801 = vpack.c.b16 %v3528, %v3527
        %v3802 = vpack.c.b16 %v3530, %v3529
        %v3803 = vpack.c.b16 %v3532, %v3531
        %v3804 = vpack.c.b16 %v3534, %v3533
        %v3805 = vpack.c.b16 %v3536, %v3535
        %v3806 = vpack.c.b16 %v3538, %v3537
        %v3807 = vpack.c.b16 %v3540, %v3539
        %v3808 = vpack.c.b16 %v3542, %v3541
        %v3809 = vpack.c.b16 %v3544, %v3543
        %v3810 = vpack.c.b16 %v3546, %v3545
        %v3811 = vpack.c.b16 %v3548, %v3547
        %v3812 = vpack.c.b16 %v3550, %v3549
        %v3813 = vpack.c.b16 %v3552, %v3551
        %v3814 = vpack.c.b16 %v3554, %v3553
        %v3815 = vpack.c.b16 %v3556, %v3555
        %v3816 = vpack.c.b16 %v3558, %v3557
        %v3817 = vpack.c.b16 %v3560, %v3559
        %v3818 = vpack.c.b16 %v3562, %v3561
        %v3819 = vpack.c.b16 %v3564, %v3563
        %v3820 = vpack.c.b16 %v3566, %v3565
        %v3821 = vpack.c.b16 %v3568, %v3567
        %v3822 = vpack.c.b16 %v3570, %v3569
        %v3823 = vpack.c.b16 %v3572, %v3571
        %v3824 = vpack.c.b16 %v3574, %v3573
        %v3825 = vpack.c.b16 %v3576, %v3575
        %v3826 = vpack.c.b16 %v3578, %v3577
        %v3827 = vpack.c.b16 %v3580, %v3579
        %v3828 = vpack.c.b16 %v3582, %v3581
        %v3829 = vpack.c.b16 %v3584, %v3583
        %v3830 = vpack.c.b16 %v3586, %v3585
        %v3831 = vpack.c.b16 %v3588, %v3587
        %v3832 = vpack.c.b16 %v3590, %v3589
        %v3833 = vpack.c.b16 %v3592, %v3591
        %v3834 = vpack.c.b16 %v3594, %v3593
        %v3835 = vpack.c.b16 %v3596, %v3595
        %v3836 = vpack.c.b16 %v3598, %v3597
        %v3837 = vpack.c.b16 %v3600, %v3599
        %v3838 = vpack.c.b16 %v3602, %v3601
        %v3839 = vpack.c.b16 %v3604, %v3603
        %v3840 = vpack.c.b16 %v3606, %v3605
        %v3841 = vpack.c.b16 %v3608, %v3607
        %v3842 = vpack.c.b16 %v3610, %v3609
        %v3843 = vpack.c.b16 %v3612, %v3611
        %v3844 = vpack.c.b16 %v3614, %v3613
        %v3845 = vpack.c.b16 %v3616, %v3615
        %v3846 = vpack.c.b16 %v3618, %v3617
        %v3847 = vpack.c.b16 %v3620, %v3619
        %v3848 = vpack.c.b16 %v3622, %v3621
        %v3849 = vpack.c.b16 %v3624, %v3623
        %v3850 = vpack.c.b16 %v3626, %v3625
        %v3851 = vpack.c.b16 %v3628, %v3627
        %v3852 = vpack.c.b16 %v3630, %v3629
        %v3853 = vpack.c.b16 %v3632, %v3631
        %v3854 = vpack.c.b16 %v3634, %v3633
        %v3855 = vpack.c.b16 %v3636, %v3635
        %v3856 = vpack.c.b16 %v3638, %v3637
        %v3857 = vpack.c.b16 %v3640, %v3639
        %v3858 = vpack.c.b16 %v3642, %v3641
        %v3859 = vpack.c.b16 %v3644, %v3643
        %v3860 = vpack.c.b16 %v3646, %v3645
        %v3861 = vpack.c.b16 %v3648, %v3647
        %v3862 = vpack.c.b16 %v3650, %v3649
        %v3863 = vpack.c.b16 %v3652, %v3651
        %v3864 = vpack.c.b16 %v3654, %v3653
        %v3865 = vpack.c.b16 %v3656, %v3655
        %v3866 = vpack.c.b16 %v3658, %v3657
        %v3867 = vpack.c.b16 %v3660, %v3659
        %v3868 = vpack.c.b16 %v3662, %v3661
        %v3869 = vpack.c.b16 %v3664, %v3663
        %v3870 = vpack.c.b16 %v3666, %v3665
        %v3871 = vpack.c.b16 %v3668, %v3667
        %v3872 = vpack.c.b16 %v3670, %v3669
        %v3873 = vpack.c.b16 %v3672, %v3671
        %v3874 = vpack.c.b16 %v3674, %v3673
        %v3875 = vpack.c.b16 %v3676, %v3675
        %v3876 = vpack.c.b16 %v3678, %v3677
        %v3877 = vpack.c.b16 %v3680, %v3679
        %v3878 = vpack.c.b16 %v3682, %v3681
        %v3879 = vpack.c.b16 %v3684, %v3683
        %v3880 = vpack.c.b16 %v3686, %v3685
        %v3881 = vpack.c.b16 %v3688, %v3687
        %v3882 = vpack.c.b16 %v3690, %v3689
        %v3883 = vpack.c.b16 %v3692, %v3691
        %v3884 = vpack.c.b16 %v3694, %v3693
        %v3885 = vpack.c.b16 %v3696, %v3695
        %v3886 = vpack.c.b16 %v3698, %v3697
        %v3887 = vpack.c.b16 %v3700, %v3699
        %v3888 = vpack.c.b16 %v3702, %v3701
        %v3889 = vpack.c.b16 %v3704, %v3703
        %v3890 = vpack.c.b16 %v3706, %v3705
        %v3891 = vpack.c.b16 %v3708, %v3707
        %v3892 = vpack.c.b16 %v3710, %v3709
        %v3893 = vpack.c.b16 %v3712, %v3711
        %v3894 = vpack.c.b16 %v3714, %v3713
        %v3895 = vpack.c.b16 %v3716, %v3715
        %v3896 = vpack.c.b16 %v3718, %v3717
        %v3897 = vpack.c.b16 %v3720, %v3719
        %v3898 = vpack.c.b16 %v3722, %v3721
        %v3899 = vpack.c.b16 %v3724, %v3723
        %v3900 = vpack.c.b16 %v3726, %v3725
        %v3901 = vpack.c.b16 %v3728, %v3727
        %v3902 = vpack.c.b16 %v3730, %v3729
        %v3903 = vpack.c.b16 %v3732, %v3731
        %v3904 = vpack.c.b16 %v3734, %v3733
        %v3905 = vpack.c.b16 %v3736, %v3735
        %v3906 = vpack.c.b16 %v3738, %v3737
        %v3907 = vpack.c.b16 %v3740, %v3739
        %v3908 = vpack.c.b16 %v3742, %v3741
        %v3909 = vpack.c.b16 %v3744, %v3743
        %v3910 = vpack.c.b16 %v3746, %v3745
        %v3911 = vpack.c.b16 %v3748, %v3747
        %v3912 = vpack.c.b16 %v3750, %v3749
        %v3913 = vpack.c.b16 %v3752, %v3751
        %v3914 = vpack.c.b16 %v3754, %v3753
        %v3915 = vpack.c.b16 %v3756, %v3755
        %v3916 = vpack.c.b16 %v3758, %v3757
        %v3917 = vpack.c.b16 %v3760, %v3759
        %v3918 = vpack.c.b16 %v3762, %v3761
        %v3919 = vpack.c.b16 %v3764, %v3763
        %v3920 = vpack.c.b16 %v3766, %v3765
        %v3921 = vpack.c.b16 %v3768, %v3767
        %v3922 = vpack.c.b16 %v3770, %v3769
        %v3923 = vpack.c.b16 %v3772, %v3771
        %v3924 = vpack.c.b16 %v3774, %v3773
        %v3925 = vpack.c.b16 %v3776, %v3775
        %v3926 = vpack.c.b16 %v3778, %v3777
        %v3927 = vpack.c.b16 %v3780, %v3779
        %v3928 = vpack.c.b16 %v3782, %v3781
        %v3929 = vpack.c.b16 %v3784, %v3783
        %v3930 = vpack.c.b16 %v3786, %v3785
        %4075 = vmatprep.subr.bf16.mxu0 0
        %4076 = vmatpush1.bf16.msra.mxu0 %v3787
        %4077 = vmatprep.subr.bf16.mxu0 0
        %4078 = vmatpush1.bf16.msra.mxu0 %v3788
        %4079 = vmatprep.subr.bf16.mxu0 0
        %4080 = vmatpush1.bf16.msra.mxu0 %v3789
        %4081 = vmatprep.subr.bf16.mxu0 0
        %4082 = vmatpush1.bf16.msra.mxu0 %v3790
        %4083 = vmatprep.subr.bf16.mxu0 0
        %4084 = vmatpush1.bf16.msra.mxu0 %v3791
        %4085 = vmatprep.subr.bf16.mxu0 0
        %4086 = vmatpush1.bf16.msra.mxu0 %v3792
        %4087 = vmatprep.subr.bf16.mxu0 0
        %4088 = vmatpush1.bf16.msra.mxu0 %v3793
        %4089 = vmatprep.subr.bf16.mxu0 0
        %4090 = vmatpush1.bf16.msra.mxu0 %v3794
        %4091 = vmatprep.subr.bf16.mxu0 0
        %4092 = vmatpush1.bf16.msra.mxu0 %v3795
        %4093 = vmatprep.subr.bf16.mxu0 0
        %4094 = vmatpush1.bf16.msra.mxu0 %v3796
        %4095 = vmatprep.subr.bf16.mxu0 0
        %4096 = vmatpush1.bf16.msra.mxu0 %v3797
        %4097 = vmatprep.subr.bf16.mxu0 0
        %4098 = vmatpush1.bf16.msra.mxu0 %v3798
        %4099 = vmatprep.subr.bf16.mxu0 0
        %4100 = vmatpush1.bf16.msra.mxu0 %v3799
        %4101 = vmatprep.subr.bf16.mxu0 0
        %4102 = vmatpush1.bf16.msra.mxu0 %v3800
        %4103 = vmatprep.subr.bf16.mxu0 0
        %4104 = vmatpush1.bf16.msra.mxu0 %v3801
        %4105 = vmatprep.subr.bf16.mxu0 0
        %4106 = vmatpush1.bf16.msra.mxu0 %v3802
        %4107 = vmatprep.mubr.bf16.mxu0 %v2780
        %4108 = vmatmul.mubr.bf16.gmra.mrb[0].mxu0 %v2779
        %v4109 = vpop.f32.mrb[0].mxu0
        %v4110 = vadd.f32 0.0, %v4109
        %v4111 = vpop.f32.mrb[0].mxu0
        %v4112 = vpop.f32.mrb[0].mxu0
        %v4113 = vadd.f32 0.0, %v4112
        %v4114 = vpop.f32.mrb[0].mxu0
        %4115 = vmatprep.mubr.bf16.mxu0 %v2798
        %4116 = vmatmul.mubr.bf16.gmra.mrb[0].mxu0 %v2797
        %v4117 = vpop.f32.mrb[0].mxu0
        %v4118 = vadd.f32 0.0, %v4117
        %v4119 = vpop.f32.mrb[0].mxu0
        %v4120 = vpop.f32.mrb[0].mxu0
        %v4121 = vadd.f32 0.0, %v4120
        %v4122 = vpop.f32.mrb[0].mxu0
        %4123 = vmatprep.mubr.bf16.mxu0 %v2816
        %4124 = vmatmul.mubr.bf16.gmra.mrb[0].mxu0 %v2815
        %v4125 = vpop.f32.mrb[0].mxu0
        %v4126 = vadd.f32 0.0, %v4125
        %v4127 = vpop.f32.mrb[0].mxu0
        %v4128 = vpop.f32.mrb[0].mxu0
        %v4129 = vadd.f32 0.0, %v4128
        %v4130 = vpop.f32.mrb[0].mxu0
        %4131 = vmatprep.mubr.bf16.mxu0 %v2834
        %4132 = vmatmul.mubr.bf16.gmra.mrb[0].mxu0 %v2833
        %v4133 = vpop.f32.mrb[0].mxu0
        %v4134 = vadd.f32 0.0, %v4133
        %v4135 = vpop.f32.mrb[0].mxu0
        %v4136 = vpop.f32.mrb[0].mxu0
        %v4137 = vadd.f32 0.0, %v4136
        %v4138 = vpop.f32.mrb[0].mxu0
        %4139 = vmatprep.mubr.bf16.mxu0 %v2852
        %4140 = vmatmul.mubr.bf16.gmra.mrb[0].mxu0 %v2851
        %v4141 = vpop.f32.mrb[0].mxu0
        %v4142 = vadd.f32 0.0, %v4141
        %v4143 = vpop.f32.mrb[0].mxu0
        %v4144 = vpop.f32.mrb[0].mxu0
        %v4145 = vadd.f32 0.0, %v4144
        %v4146 = vpop.f32.mrb[0].mxu0
        %4147 = vmatprep.mubr.bf16.mxu0 %v2870
        %4148 = vmatmul.mubr.bf16.gmra.mrb[0].mxu0 %v2869
        %v4149 = vpop.f32.mrb[0].mxu0
        %v4150 = vadd.f32 0.0, %v4149
        %v4151 = vpop.f32.mrb[0].mxu0
        %v4152 = vpop.f32.mrb[0].mxu0
        %v4153 = vadd.f32 0.0, %v4152
        %v4154 = vpop.f32.mrb[0].mxu0
        %4155 = vmatprep.mubr.bf16.mxu0 %v2888
        %4156 = vmatmul.mubr.bf16.gmra.mrb[0].mxu0 %v2887
        %v4157 = vpop.f32.mrb[0].mxu0
        %v4158 = vadd.f32 0.0, %v4157
        %v4159 = vpop.f32.mrb[0].mxu0
        %v4160 = vpop.f32.mrb[0].mxu0
        %v4161 = vadd.f32 0.0, %v4160
        %v4162 = vpop.f32.mrb[0].mxu0
        %4163 = vmatprep.mubr.bf16.mxu0 %v2906
        %4164 = vmatmul.mubr.bf16.gmra.mrb[0].mxu0 %v2905
        %v4165 = vpop.f32.mrb[0].mxu0
        %v4166 = vadd.f32 0.0, %v4165
        %v4167 = vpop.f32.mrb[0].mxu0
        %v4168 = vpop.f32.mrb[0].mxu0
        %v4169 = vadd.f32 0.0, %v4168
        %v4170 = vpop.f32.mrb[0].mxu0
        %4171 = vdwg.mxu0
        %4172 = vmatprep.subr.bf16.mxu0 0
        %4173 = vmatpush1.bf16.msra.mxu0 %v3803
        %4174 = vmatprep.subr.bf16.mxu0 0
        %4175 = vmatpush1.bf16.msra.mxu0 %v3804
        %4176 = vmatprep.subr.bf16.mxu0 0
        %4177 = vmatpush1.bf16.msra.mxu0 %v3805
        %4178 = vmatprep.subr.bf16.mxu0 0
        %4179 = vmatpush1.bf16.msra.mxu0 %v3806
        %4180 = vmatprep.subr.bf16.mxu0 0
        %4181 = vmatpush1.bf16.msra.mxu0 %v3807
        %4182 = vmatprep.subr.bf16.mxu0 0
        %4183 = vmatpush1.bf16.msra.mxu0 %v3808
        %4184 = vmatprep.subr.bf16.mxu0 0
        %4185 = vmatpush1.bf16.msra.mxu0 %v3809
        %4186 = vmatprep.subr.bf16.mxu0 0
        %4187 = vmatpush1.bf16.msra.mxu0 %v3810
        %4188 = vmatprep.subr.bf16.mxu0 0
        %4189 = vmatpush1.bf16.msra.mxu0 %v3811
        %4190 = vmatprep.subr.bf16.mxu0 0
        %4191 = vmatpush1.bf16.msra.mxu0 %v3812
        %4192 = vmatprep.subr.bf16.mxu0 0
        %4193 = vmatpush1.bf16.msra.mxu0 %v3813
        %4194 = vmatprep.subr.bf16.mxu0 0
        %4195 = vmatpush1.bf16.msra.mxu0 %v3814
        %4196 = vmatprep.subr.bf16.mxu0 0
        %4197 = vmatpush1.bf16.msra.mxu0 %v3815
        %4198 = vmatprep.subr.bf16.mxu0 0
        %4199 = vmatpush1.bf16.msra.mxu0 %v3816
        %4200 = vmatprep.subr.bf16.mxu0 0
        %4201 = vmatpush1.bf16.msra.mxu0 %v3817
        %4202 = vmatprep.subr.bf16.mxu0 0
        %4203 = vmatpush1.bf16.msra.mxu0 %v3818
        %4204 = vmatprep.mubr.bf16.mxu0 %v2782
        %4205 = vmatmul.mubr.bf16.gmra.mrb[0].mxu0 %v2781
        %v4206 = vpop.f32.mrb[0].mxu0
        %v4207 = vadd.f32 %v4110, %v4206
        %v4208 = vpop.f32.mrb[0].mxu0
        %v4209 = vpop.f32.mrb[0].mxu0
        %v4210 = vadd.f32 %v4113, %v4209
        %v4211 = vpop.f32.mrb[0].mxu0
        %4212 = vmatprep.mubr.bf16.mxu0 %v2800
        %4213 = vmatmul.mubr.bf16.gmra.mrb[0].mxu0 %v2799
        %v4214 = vpop.f32.mrb[0].mxu0
        %v4215 = vadd.f32 %v4118, %v4214
        %v4216 = vpop.f32.mrb[0].mxu0
        %v4217 = vpop.f32.mrb[0].mxu0
        %v4218 = vadd.f32 %v4121, %v4217
        %v4219 = vpop.f32.mrb[0].mxu0
        %4220 = vmatprep.mubr.bf16.mxu0 %v2818
        %4221 = vmatmul.mubr.bf16.gmra.mrb[0].mxu0 %v2817
        %v4222 = vpop.f32.mrb[0].mxu0
        %v4223 = vadd.f32 %v4126, %v4222
        %v4224 = vpop.f32.mrb[0].mxu0
        %v4225 = vpop.f32.mrb[0].mxu0
        %v4226 = vadd.f32 %v4129, %v4225
        %v4227 = vpop.f32.mrb[0].mxu0
        %4228 = vmatprep.mubr.bf16.mxu0 %v2836
        %4229 = vmatmul.mubr.bf16.gmra.mrb[0].mxu0 %v2835
        %v4230 = vpop.f32.mrb[0].mxu0
        %v4231 = vadd.f32 %v4134, %v4230
        %v4232 = vpop.f32.mrb[0].mxu0
        %v4233 = vpop.f32.mrb[0].mxu0
        %v4234 = vadd.f32 %v4137, %v4233
        %v4235 = vpop.f32.mrb[0].mxu0
        %4236 = vmatprep.mubr.bf16.mxu0 %v2854
        %4237 = vmatmul.mubr.bf16.gmra.mrb[0].mxu0 %v2853
        %v4238 = vpop.f32.mrb[0].mxu0
        %v4239 = vadd.f32 %v4142, %v4238
        %v4240 = vpop.f32.mrb[0].mxu0
        %v4241 = vpop.f32.mrb[0].mxu0
        %v4242 = vadd.f32 %v4145, %v4241
        %v4243 = vpop.f32.mrb[0].mxu0
        %4244 = vmatprep.mubr.bf16.mxu0 %v2872
        %4245 = vmatmul.mubr.bf16.gmra.mrb[0].mxu0 %v2871
        %v4246 = vpop.f32.mrb[0].mxu0
        %v4247 = vadd.f32 %v4150, %v4246
        %v4248 = vpop.f32.mrb[0].mxu0
        %v4249 = vpop.f32.mrb[0].mxu0
        %v4250 = vadd.f32 %v4153, %v4249
        %v4251 = vpop.f32.mrb[0].mxu0
        %4252 = vmatprep.mubr.bf16.mxu0 %v2890
        %4253 = vmatmul.mubr.bf16.gmra.mrb[0].mxu0 %v2889
        %v4254 = vpop.f32.mrb[0].mxu0
        %v4255 = vadd.f32 %v4158, %v4254
        %v4256 = vpop.f32.mrb[0].mxu0
        %v4257 = vpop.f32.mrb[0].mxu0
        %v4258 = vadd.f32 %v4161, %v4257
        %v4259 = vpop.f32.mrb[0].mxu0
        %4260 = vmatprep.mubr.bf16.mxu0 %v2908
        %4261 = vmatmul.mubr.bf16.gmra.mrb[0].mxu0 %v2907
        %v4262 = vpop.f32.mrb[0].mxu0
        %v4263 = vadd.f32 %v4166, %v4262
        %v4264 = vpop.f32.mrb[0].mxu0
        %v4265 = vpop.f32.mrb[0].mxu0
        %v4266 = vadd.f32 %v4169, %v4265
        %v4267 = vpop.f32.mrb[0].mxu0
        %4268 = vdwg.mxu0
        %4269 = vmatprep.subr.bf16.mxu0 0
        %4270 = vmatpush1.bf16.msra.mxu0 %v3819
        %4271 = vmatprep.subr.bf16.mxu0 0
        %4272 = vmatpush1.bf16.msra.mxu0 %v3820
        %4273 = vmatprep.subr.bf16.mxu0 0
        %4274 = vmatpush1.bf16.msra.mxu0 %v3821
        %4275 = vmatprep.subr.bf16.mxu0 0
        %4276 = vmatpush1.bf16.msra.mxu0 %v3822
        %4277 = vmatprep.subr.bf16.mxu0 0
        %4278 = vmatpush1.bf16.msra.mxu0 %v3823
        %4279 = vmatprep.subr.bf16.mxu0 0
        %4280 = vmatpush1.bf16.msra.mxu0 %v3824
        %4281 = vmatprep.subr.bf16.mxu0 0
        %4282 = vmatpush1.bf16.msra.mxu0 %v3825
        %4283 = vmatprep.subr.bf16.mxu0 0
        %4284 = vmatpush1.bf16.msra.mxu0 %v3826
        %4285 = vmatprep.subr.bf16.mxu0 0
        %4286 = vmatpush1.bf16.msra.mxu0 %v3827
        %4287 = vmatprep.subr.bf16.mxu0 0
        %4288 = vmatpush1.bf16.msra.mxu0 %v3828
        %4289 = vmatprep.subr.bf16.mxu0 0
        %4290 = vmatpush1.bf16.msra.mxu0 %v3829
        %4291 = vmatprep.subr.bf16.mxu0 0
        %4292 = vmatpush1.bf16.msra.mxu0 %v3830
        %4293 = vmatprep.subr.bf16.mxu0 0
        %4294 = vmatpush1.bf16.msra.mxu0 %v3831
        %4295 = vmatprep.subr.bf16.mxu0 0
        %4296 = vmatpush1.bf16.msra.mxu0 %v3832
        %4297 = vmatprep.subr.bf16.mxu0 0
        %4298 = vmatpush1.bf16.msra.mxu0 %v3833
        %4299 = vmatprep.subr.bf16.mxu0 0
        %4300 = vmatpush1.bf16.msra.mxu0 %v3834
        %4301 = vmatprep.mubr.bf16.mxu0 %v2784
        %4302 = vmatmul.mubr.bf16.gmra.mrb[0].mxu0 %v2783
        %v4303 = vpop.f32.mrb[0].mxu0
        %v4304 = vadd.f32 %v4207, %v4303
        %v4305 = vpop.f32.mrb[0].mxu0
        %v4306 = vpop.f32.mrb[0].mxu0
        %v4307 = vadd.f32 %v4210, %v4306
        %v4308 = vpop.f32.mrb[0].mxu0
        %4309 = vmatprep.mubr.bf16.mxu0 %v2802
        %4310 = vmatmul.mubr.bf16.gmra.mrb[0].mxu0 %v2801
        %v4311 = vpop.f32.mrb[0].mxu0
        %v4312 = vadd.f32 %v4215, %v4311
        %v4313 = vpop.f32.mrb[0].mxu0
        %v4314 = vpop.f32.mrb[0].mxu0
        %v4315 = vadd.f32 %v4218, %v4314
        %v4316 = vpop.f32.mrb[0].mxu0
        %4317 = vmatprep.mubr.bf16.mxu0 %v2820
        %4318 = vmatmul.mubr.bf16.gmra.mrb[0].mxu0 %v2819
        %v4319 = vpop.f32.mrb[0].mxu0
        %v4320 = vadd.f32 %v4223, %v4319
        %v4321 = vpop.f32.mrb[0].mxu0
        %v4322 = vpop.f32.mrb[0].mxu0
        %v4323 = vadd.f32 %v4226, %v4322
        %v4324 = vpop.f32.mrb[0].mxu0
        %4325 = vmatprep.mubr.bf16.mxu0 %v2838
        %4326 = vmatmul.mubr.bf16.gmra.mrb[0].mxu0 %v2837
        %v4327 = vpop.f32.mrb[0].mxu0
        %v4328 = vadd.f32 %v4231, %v4327
        %v4329 = vpop.f32.mrb[0].mxu0
        %v4330 = vpop.f32.mrb[0].mxu0
        %v4331 = vadd.f32 %v4234, %v4330
        %v4332 = vpop.f32.mrb[0].mxu0
        %4333 = vmatprep.mubr.bf16.mxu0 %v2856
        %4334 = vmatmul.mubr.bf16.gmra.mrb[0].mxu0 %v2855
        %v4335 = vpop.f32.mrb[0].mxu0
        %v4336 = vadd.f32 %v4239, %v4335
        %v4337 = vpop.f32.mrb[0].mxu0
        %v4338 = vpop.f32.mrb[0].mxu0
        %v4339 = vadd.f32 %v4242, %v4338
        %v4340 = vpop.f32.mrb[0].mxu0
        %4341 = vmatprep.mubr.bf16.mxu0 %v2874
        %4342 = vmatmul.mubr.bf16.gmra.mrb[0].mxu0 %v2873
        %v4343 = vpop.f32.mrb[0].mxu0
        %v4344 = vadd.f32 %v4247, %v4343
        %v4345 = vpop.f32.mrb[0].mxu0
        %v4346 = vpop.f32.mrb[0].mxu0
        %v4347 = vadd.f32 %v4250, %v4346
        %v4348 = vpop.f32.mrb[0].mxu0
        %4349 = vmatprep.mubr.bf16.mxu0 %v2892
        %4350 = vmatmul.mubr.bf16.gmra.mrb[0].mxu0 %v2891
        %v4351 = vpop.f32.mrb[0].mxu0
        %v4352 = vadd.f32 %v4255, %v4351
        %v4353 = vpop.f32.mrb[0].mxu0
        %v4354 = vpop.f32.mrb[0].mxu0
        %v4355 = vadd.f32 %v4258, %v4354
        %v4356 = vpop.f32.mrb[0].mxu0
        %4357 = vmatprep.mubr.bf16.mxu0 %v2910
        %4358 = vmatmul.mubr.bf16.gmra.mrb[0].mxu0 %v2909
        %v4359 = vpop.f32.mrb[0].mxu0
        %v4360 = vadd.f32 %v4263, %v4359
        %v4361 = vpop.f32.mrb[0].mxu0
        %v4362 = vpop.f32.mrb[0].mxu0
        %v4363 = vadd.f32 %v4266, %v4362
        %v4364 = vpop.f32.mrb[0].mxu0
        %4365 = vdwg.mxu0
        %4366 = vmatprep.subr.bf16.mxu0 0
        %4367 = vmatpush1.bf16.msra.mxu0 %v3835
        %4368 = vmatprep.subr.bf16.mxu0 0
        %4369 = vmatpush1.bf16.msra.mxu0 %v3836
        %4370 = vmatprep.subr.bf16.mxu0 0
        %4371 = vmatpush1.bf16.msra.mxu0 %v3837
        %4372 = vmatprep.subr.bf16.mxu0 0
        %4373 = vmatpush1.bf16.msra.mxu0 %v3838
        %4374 = vmatprep.subr.bf16.mxu0 0
        %4375 = vmatpush1.bf16.msra.mxu0 %v3839
        %4376 = vmatprep.subr.bf16.mxu0 0
        %4377 = vmatpush1.bf16.msra.mxu0 %v3840
        %4378 = vmatprep.subr.bf16.mxu0 0
        %4379 = vmatpush1.bf16.msra.mxu0 %v3841
        %4380 = vmatprep.subr.bf16.mxu0 0
        %4381 = vmatpush1.bf16.msra.mxu0 %v3842
        %4382 = vmatprep.subr.bf16.mxu0 0
        %4383 = vmatpush1.bf16.msra.mxu0 %v3843
        %4384 = vmatprep.subr.bf16.mxu0 0
        %4385 = vmatpush1.bf16.msra.mxu0 %v3844
        %4386 = vmatprep.subr.bf16.mxu0 0
        %4387 = vmatpush1.bf16.msra.mxu0 %v3845
        %4388 = vmatprep.subr.bf16.mxu0 0
        %4389 = vmatpush1.bf16.msra.mxu0 %v3846
        %4390 = vmatprep.subr.bf16.mxu0 0
        %4391 = vmatpush1.bf16.msra.mxu0 %v3847
        %4392 = vmatprep.subr.bf16.mxu0 0
        %4393 = vmatpush1.bf16.msra.mxu0 %v3848
        %4394 = vmatprep.subr.bf16.mxu0 0
        %4395 = vmatpush1.bf16.msra.mxu0 %v3849
        %4396 = vmatprep.subr.bf16.mxu0 0
        %4397 = vmatpush1.bf16.msra.mxu0 %v3850
        %4398 = vmatprep.mubr.bf16.mxu0 %v2786
        %4399 = vmatmul.mubr.bf16.gmra.mrb[0].mxu0 %v2785
        %v4400 = vpop.f32.mrb[0].mxu0
        %v4401 = vadd.f32 %v4304, %v4400
        %v4402 = vpop.f32.mrb[0].mxu0
        %v4403 = vpop.f32.mrb[0].mxu0
        %v4404 = vadd.f32 %v4307, %v4403
        %v4405 = vpop.f32.mrb[0].mxu0
        %4406 = vmatprep.mubr.bf16.mxu0 %v2804
        %4407 = vmatmul.mubr.bf16.gmra.mrb[0].mxu0 %v2803
        %v4408 = vpop.f32.mrb[0].mxu0
        %v4409 = vadd.f32 %v4312, %v4408
        %v4410 = vpop.f32.mrb[0].mxu0
        %v4411 = vpop.f32.mrb[0].mxu0
        %v4412 = vadd.f32 %v4315, %v4411
        %v4413 = vpop.f32.mrb[0].mxu0
        %4414 = vmatprep.mubr.bf16.mxu0 %v2822
        %4415 = vmatmul.mubr.bf16.gmra.mrb[0].mxu0 %v2821
        %v4416 = vpop.f32.mrb[0].mxu0
        %v4417 = vadd.f32 %v4320, %v4416
        %v4418 = vpop.f32.mrb[0].mxu0
        %v4419 = vpop.f32.mrb[0].mxu0
        %v4420 = vadd.f32 %v4323, %v4419
        %v4421 = vpop.f32.mrb[0].mxu0
        %4422 = vmatprep.mubr.bf16.mxu0 %v2840
        %4423 = vmatmul.mubr.bf16.gmra.mrb[0].mxu0 %v2839
        %v4424 = vpop.f32.mrb[0].mxu0
        %v4425 = vadd.f32 %v4328, %v4424
        %v4426 = vpop.f32.mrb[0].mxu0
        %v4427 = vpop.f32.mrb[0].mxu0
        %v4428 = vadd.f32 %v4331, %v4427
        %v4429 = vpop.f32.mrb[0].mxu0
        %4430 = vmatprep.mubr.bf16.mxu0 %v2858
        %4431 = vmatmul.mubr.bf16.gmra.mrb[0].mxu0 %v2857
        %v4432 = vpop.f32.mrb[0].mxu0
        %v4433 = vadd.f32 %v4336, %v4432
        %v4434 = vpop.f32.mrb[0].mxu0
        %v4435 = vpop.f32.mrb[0].mxu0
        %v4436 = vadd.f32 %v4339, %v4435
        %v4437 = vpop.f32.mrb[0].mxu0
        %4438 = vmatprep.mubr.bf16.mxu0 %v2876
        %4439 = vmatmul.mubr.bf16.gmra.mrb[0].mxu0 %v2875
        %v4440 = vpop.f32.mrb[0].mxu0
        %v4441 = vadd.f32 %v4344, %v4440
        %v4442 = vpop.f32.mrb[0].mxu0
        %v4443 = vpop.f32.mrb[0].mxu0
        %v4444 = vadd.f32 %v4347, %v4443
        %v4445 = vpop.f32.mrb[0].mxu0
        %4446 = vmatprep.mubr.bf16.mxu0 %v2894
        %4447 = vmatmul.mubr.bf16.gmra.mrb[0].mxu0 %v2893
        %v4448 = vpop.f32.mrb[0].mxu0
        %v4449 = vadd.f32 %v4352, %v4448
        %v4450 = vpop.f32.mrb[0].mxu0
        %v4451 = vpop.f32.mrb[0].mxu0
        %v4452 = vadd.f32 %v4355, %v4451
        %v4453 = vpop.f32.mrb[0].mxu0
        %4454 = vmatprep.mubr.bf16.mxu0 %v2912
        %4455 = vmatmul.mubr.bf16.gmra.mrb[0].mxu0 %v2911
        %v4456 = vpop.f32.mrb[0].mxu0
        %v4457 = vadd.f32 %v4360, %v4456
        %v4458 = vpop.f32.mrb[0].mxu0
        %v4459 = vpop.f32.mrb[0].mxu0
        %v4460 = vadd.f32 %v4363, %v4459
        %v4461 = vpop.f32.mrb[0].mxu0
        %4462 = vdwg.mxu0
        %4463 = vmatprep.subr.bf16.mxu0 0
        %4464 = vmatpush1.bf16.msra.mxu0 %v3851
        %4465 = vmatprep.subr.bf16.mxu0 0
        %4466 = vmatpush1.bf16.msra.mxu0 %v3852
        %4467 = vmatprep.subr.bf16.mxu0 0
        %4468 = vmatpush1.bf16.msra.mxu0 %v3853
        %4469 = vmatprep.subr.bf16.mxu0 0
        %4470 = vmatpush1.bf16.msra.mxu0 %v3854
        %4471 = vmatprep.subr.bf16.mxu0 0
        %4472 = vmatpush1.bf16.msra.mxu0 %v3855
        %4473 = vmatprep.subr.bf16.mxu0 0
        %4474 = vmatpush1.bf16.msra.mxu0 %v3856
        %4475 = vmatprep.subr.bf16.mxu0 0
        %4476 = vmatpush1.bf16.msra.mxu0 %v3857
        %4477 = vmatprep.subr.bf16.mxu0 0
        %4478 = vmatpush1.bf16.msra.mxu0 %v3858
        %4479 = vmatprep.subr.bf16.mxu0 0
        %4480 = vmatpush1.bf16.msra.mxu0 %v3859
        %4481 = vmatprep.subr.bf16.mxu0 0
        %4482 = vmatpush1.bf16.msra.mxu0 %v3860
        %4483 = vmatprep.subr.bf16.mxu0 0
        %4484 = vmatpush1.bf16.msra.mxu0 %v3861
        %4485 = vmatprep.subr.bf16.mxu0 0
        %4486 = vmatpush1.bf16.msra.mxu0 %v3862
        %4487 = vmatprep.subr.bf16.mxu0 0
        %4488 = vmatpush1.bf16.msra.mxu0 %v3863
        %4489 = vmatprep.subr.bf16.mxu0 0
        %4490 = vmatpush1.bf16.msra.mxu0 %v3864
        %4491 = vmatprep.subr.bf16.mxu0 0
        %4492 = vmatpush1.bf16.msra.mxu0 %v3865
        %4493 = vmatprep.subr.bf16.mxu0 0
        %4494 = vmatpush1.bf16.msra.mxu0 %v3866
        %4495 = vmatprep.mubr.bf16.mxu0 %v2788
        %4496 = vmatmul.mubr.bf16.gmra.mrb[0].mxu0 %v2787
        %v4497 = vpop.f32.mrb[0].mxu0
        %v4498 = vadd.f32 %v4401, %v4497
        %v4499 = vpop.f32.mrb[0].mxu0
        %v4500 = vpop.f32.mrb[0].mxu0
        %v4501 = vadd.f32 %v4404, %v4500
        %v4502 = vpop.f32.mrb[0].mxu0
        %4503 = vmatprep.mubr.bf16.mxu0 %v2806
        %4504 = vmatmul.mubr.bf16.gmra.mrb[0].mxu0 %v2805
        %v4505 = vpop.f32.mrb[0].mxu0
        %v4506 = vadd.f32 %v4409, %v4505
        %v4507 = vpop.f32.mrb[0].mxu0
        %v4508 = vpop.f32.mrb[0].mxu0
        %v4509 = vadd.f32 %v4412, %v4508
        %v4510 = vpop.f32.mrb[0].mxu0
        %4511 = vmatprep.mubr.bf16.mxu0 %v2824
        %4512 = vmatmul.mubr.bf16.gmra.mrb[0].mxu0 %v2823
        %v4513 = vpop.f32.mrb[0].mxu0
        %v4514 = vadd.f32 %v4417, %v4513
        %v4515 = vpop.f32.mrb[0].mxu0
        %v4516 = vpop.f32.mrb[0].mxu0
        %v4517 = vadd.f32 %v4420, %v4516
        %v4518 = vpop.f32.mrb[0].mxu0
        %4519 = vmatprep.mubr.bf16.mxu0 %v2842
        %4520 = vmatmul.mubr.bf16.gmra.mrb[0].mxu0 %v2841
        %v4521 = vpop.f32.mrb[0].mxu0
        %v4522 = vadd.f32 %v4425, %v4521
        %v4523 = vpop.f32.mrb[0].mxu0
        %v4524 = vpop.f32.mrb[0].mxu0
        %v4525 = vadd.f32 %v4428, %v4524
        %v4526 = vpop.f32.mrb[0].mxu0
        %4527 = vmatprep.mubr.bf16.mxu0 %v2860
        %4528 = vmatmul.mubr.bf16.gmra.mrb[0].mxu0 %v2859
        %v4529 = vpop.f32.mrb[0].mxu0
        %v4530 = vadd.f32 %v4433, %v4529
        %v4531 = vpop.f32.mrb[0].mxu0
        %v4532 = vpop.f32.mrb[0].mxu0
        %v4533 = vadd.f32 %v4436, %v4532
        %v4534 = vpop.f32.mrb[0].mxu0
        %4535 = vmatprep.mubr.bf16.mxu0 %v2878
        %4536 = vmatmul.mubr.bf16.gmra.mrb[0].mxu0 %v2877
        %v4537 = vpop.f32.mrb[0].mxu0
        %v4538 = vadd.f32 %v4441, %v4537
        %v4539 = vpop.f32.mrb[0].mxu0
        %v4540 = vpop.f32.mrb[0].mxu0
        %v4541 = vadd.f32 %v4444, %v4540
        %v4542 = vpop.f32.mrb[0].mxu0
        %4543 = vmatprep.mubr.bf16.mxu0 %v2896
        %4544 = vmatmul.mubr.bf16.gmra.mrb[0].mxu0 %v2895
        %v4545 = vpop.f32.mrb[0].mxu0
        %v4546 = vadd.f32 %v4449, %v4545
        %v4547 = vpop.f32.mrb[0].mxu0
        %v4548 = vpop.f32.mrb[0].mxu0
        %v4549 = vadd.f32 %v4452, %v4548
        %v4550 = vpop.f32.mrb[0].mxu0
        %4551 = vmatprep.mubr.bf16.mxu0 %v2914
        %4552 = vmatmul.mubr.bf16.gmra.mrb[0].mxu0 %v2913
        %v4553 = vpop.f32.mrb[0].mxu0
        %v4554 = vadd.f32 %v4457, %v4553
        %v4555 = vpop.f32.mrb[0].mxu0
        %v4556 = vpop.f32.mrb[0].mxu0
        %v4557 = vadd.f32 %v4460, %v4556
        %v4558 = vpop.f32.mrb[0].mxu0
        %4559 = vdwg.mxu0
        %4560 = vmatprep.subr.bf16.mxu0 0
        %4561 = vmatpush1.bf16.msra.mxu0 %v3867
        %4562 = vmatprep.subr.bf16.mxu0 0
        %4563 = vmatpush1.bf16.msra.mxu0 %v3868
        %4564 = vmatprep.subr.bf16.mxu0 0
        %4565 = vmatpush1.bf16.msra.mxu0 %v3869
        %4566 = vmatprep.subr.bf16.mxu0 0
        %4567 = vmatpush1.bf16.msra.mxu0 %v3870
        %4568 = vmatprep.subr.bf16.mxu0 0
        %4569 = vmatpush1.bf16.msra.mxu0 %v3871
        %4570 = vmatprep.subr.bf16.mxu0 0
        %4571 = vmatpush1.bf16.msra.mxu0 %v3872
        %4572 = vmatprep.subr.bf16.mxu0 0
        %4573 = vmatpush1.bf16.msra.mxu0 %v3873
        %4574 = vmatprep.subr.bf16.mxu0 0
        %4575 = vmatpush1.bf16.msra.mxu0 %v3874
        %4576 = vmatprep.subr.bf16.mxu0 0
        %4577 = vmatpush1.bf16.msra.mxu0 %v3875
        %4578 = vmatprep.subr.bf16.mxu0 0
        %4579 = vmatpush1.bf16.msra.mxu0 %v3876
        %4580 = vmatprep.subr.bf16.mxu0 0
        %4581 = vmatpush1.bf16.msra.mxu0 %v3877
        %4582 = vmatprep.subr.bf16.mxu0 0
        %4583 = vmatpush1.bf16.msra.mxu0 %v3878
        %4584 = vmatprep.subr.bf16.mxu0 0
        %4585 = vmatpush1.bf16.msra.mxu0 %v3879
        %4586 = vmatprep.subr.bf16.mxu0 0
        %4587 = vmatpush1.bf16.msra.mxu0 %v3880
        %4588 = vmatprep.subr.bf16.mxu0 0
        %4589 = vmatpush1.bf16.msra.mxu0 %v3881
        %4590 = vmatprep.subr.bf16.mxu0 0
        %4591 = vmatpush1.bf16.msra.mxu0 %v3882
        %4592 = vmatprep.mubr.bf16.mxu0 %v2790
        %4593 = vmatmul.mubr.bf16.gmra.mrb[0].mxu0 %v2789
        %v4594 = vpop.f32.mrb[0].mxu0
        %v4595 = vadd.f32 %v4498, %v4594
        %v4596 = vpop.f32.mrb[0].mxu0
        %v4597 = vpop.f32.mrb[0].mxu0
        %v4598 = vadd.f32 %v4501, %v4597
        %v4599 = vpop.f32.mrb[0].mxu0
        %4600 = vmatprep.mubr.bf16.mxu0 %v2808
        %4601 = vmatmul.mubr.bf16.gmra.mrb[0].mxu0 %v2807
        %v4602 = vpop.f32.mrb[0].mxu0
        %v4603 = vadd.f32 %v4506, %v4602
        %v4604 = vpop.f32.mrb[0].mxu0
        %v4605 = vpop.f32.mrb[0].mxu0
        %v4606 = vadd.f32 %v4509, %v4605
        %v4607 = vpop.f32.mrb[0].mxu0
        %4608 = vmatprep.mubr.bf16.mxu0 %v2826
        %4609 = vmatmul.mubr.bf16.gmra.mrb[0].mxu0 %v2825
        %v4610 = vpop.f32.mrb[0].mxu0
        %v4611 = vadd.f32 %v4514, %v4610
        %v4612 = vpop.f32.mrb[0].mxu0
        %v4613 = vpop.f32.mrb[0].mxu0
        %v4614 = vadd.f32 %v4517, %v4613
        %v4615 = vpop.f32.mrb[0].mxu0
        %4616 = vmatprep.mubr.bf16.mxu0 %v2844
        %4617 = vmatmul.mubr.bf16.gmra.mrb[0].mxu0 %v2843
        %v4618 = vpop.f32.mrb[0].mxu0
        %v4619 = vadd.f32 %v4522, %v4618
        %v4620 = vpop.f32.mrb[0].mxu0
        %v4621 = vpop.f32.mrb[0].mxu0
        %v4622 = vadd.f32 %v4525, %v4621
        %v4623 = vpop.f32.mrb[0].mxu0
        %4624 = vmatprep.mubr.bf16.mxu0 %v2862
        %4625 = vmatmul.mubr.bf16.gmra.mrb[0].mxu0 %v2861
        %v4626 = vpop.f32.mrb[0].mxu0
        %v4627 = vadd.f32 %v4530, %v4626
        %v4628 = vpop.f32.mrb[0].mxu0
        %v4629 = vpop.f32.mrb[0].mxu0
        %v4630 = vadd.f32 %v4533, %v4629
        %v4631 = vpop.f32.mrb[0].mxu0
        %4632 = vmatprep.mubr.bf16.mxu0 %v2880
        %4633 = vmatmul.mubr.bf16.gmra.mrb[0].mxu0 %v2879
        %v4634 = vpop.f32.mrb[0].mxu0
        %v4635 = vadd.f32 %v4538, %v4634
        %v4636 = vpop.f32.mrb[0].mxu0
        %v4637 = vpop.f32.mrb[0].mxu0
        %v4638 = vadd.f32 %v4541, %v4637
        %v4639 = vpop.f32.mrb[0].mxu0
        %4640 = vmatprep.mubr.bf16.mxu0 %v2898
        %4641 = vmatmul.mubr.bf16.gmra.mrb[0].mxu0 %v2897
        %v4642 = vpop.f32.mrb[0].mxu0
        %v4643 = vadd.f32 %v4546, %v4642
        %v4644 = vpop.f32.mrb[0].mxu0
        %v4645 = vpop.f32.mrb[0].mxu0
        %v4646 = vadd.f32 %v4549, %v4645
        %v4647 = vpop.f32.mrb[0].mxu0
        %4648 = vmatprep.mubr.bf16.mxu0 %v2916
        %4649 = vmatmul.mubr.bf16.gmra.mrb[0].mxu0 %v2915
        %v4650 = vpop.f32.mrb[0].mxu0
        %v4651 = vadd.f32 %v4554, %v4650
        %v4652 = vpop.f32.mrb[0].mxu0
        %v4653 = vpop.f32.mrb[0].mxu0
        %v4654 = vadd.f32 %v4557, %v4653
        %v4655 = vpop.f32.mrb[0].mxu0
        %4656 = vdwg.mxu0
        %4657 = vmatprep.subr.bf16.mxu0 0
        %4658 = vmatpush1.bf16.msra.mxu0 %v3883
        %4659 = vmatprep.subr.bf16.mxu0 0
        %4660 = vmatpush1.bf16.msra.mxu0 %v3884
        %4661 = vmatprep.subr.bf16.mxu0 0
        %4662 = vmatpush1.bf16.msra.mxu0 %v3885
        %4663 = vmatprep.subr.bf16.mxu0 0
        %4664 = vmatpush1.bf16.msra.mxu0 %v3886
        %4665 = vmatprep.subr.bf16.mxu0 0
        %4666 = vmatpush1.bf16.msra.mxu0 %v3887
        %4667 = vmatprep.subr.bf16.mxu0 0
        %4668 = vmatpush1.bf16.msra.mxu0 %v3888
        %4669 = vmatprep.subr.bf16.mxu0 0
        %4670 = vmatpush1.bf16.msra.mxu0 %v3889
        %4671 = vmatprep.subr.bf16.mxu0 0
        %4672 = vmatpush1.bf16.msra.mxu0 %v3890
        %4673 = vmatprep.subr.bf16.mxu0 0
        %4674 = vmatpush1.bf16.msra.mxu0 %v3891
        %4675 = vmatprep.subr.bf16.mxu0 0
        %4676 = vmatpush1.bf16.msra.mxu0 %v3892
        %4677 = vmatprep.subr.bf16.mxu0 0
        %4678 = vmatpush1.bf16.msra.mxu0 %v3893
        %4679 = vmatprep.subr.bf16.mxu0 0
        %4680 = vmatpush1.bf16.msra.mxu0 %v3894
        %4681 = vmatprep.subr.bf16.mxu0 0
        %4682 = vmatpush1.bf16.msra.mxu0 %v3895
        %4683 = vmatprep.subr.bf16.mxu0 0
        %4684 = vmatpush1.bf16.msra.mxu0 %v3896
        %4685 = vmatprep.subr.bf16.mxu0 0
        %4686 = vmatpush1.bf16.msra.mxu0 %v3897
        %4687 = vmatprep.subr.bf16.mxu0 0
        %4688 = vmatpush1.bf16.msra.mxu0 %v3898
        %4689 = vmatprep.mubr.bf16.mxu0 %v2792
        %4690 = vmatmul.mubr.bf16.gmra.mrb[0].mxu0 %v2791
        %v4691 = vpop.f32.mrb[0].mxu0
        %v4692 = vadd.f32 %v4595, %v4691
        %v4693 = vpop.f32.mrb[0].mxu0
        %v4694 = vpop.f32.mrb[0].mxu0
        %v4695 = vadd.f32 %v4598, %v4694
        %v4696 = vpop.f32.mrb[0].mxu0
        %4697 = vmatprep.mubr.bf16.mxu0 %v2810
        %4698 = vmatmul.mubr.bf16.gmra.mrb[0].mxu0 %v2809
        %v4699 = vpop.f32.mrb[0].mxu0
        %v4700 = vadd.f32 %v4603, %v4699
        %v4701 = vpop.f32.mrb[0].mxu0
        %v4702 = vpop.f32.mrb[0].mxu0
        %v4703 = vadd.f32 %v4606, %v4702
        %v4704 = vpop.f32.mrb[0].mxu0
        %4705 = vmatprep.mubr.bf16.mxu0 %v2828
        %4706 = vmatmul.mubr.bf16.gmra.mrb[0].mxu0 %v2827
        %v4707 = vpop.f32.mrb[0].mxu0
        %v4708 = vadd.f32 %v4611, %v4707
        %v4709 = vpop.f32.mrb[0].mxu0
        %v4710 = vpop.f32.mrb[0].mxu0
        %v4711 = vadd.f32 %v4614, %v4710
        %v4712 = vpop.f32.mrb[0].mxu0
        %4713 = vmatprep.mubr.bf16.mxu0 %v2846
        %4714 = vmatmul.mubr.bf16.gmra.mrb[0].mxu0 %v2845
        %v4715 = vpop.f32.mrb[0].mxu0
        %v4716 = vadd.f32 %v4619, %v4715
        %v4717 = vpop.f32.mrb[0].mxu0
        %v4718 = vpop.f32.mrb[0].mxu0
        %v4719 = vadd.f32 %v4622, %v4718
        %v4720 = vpop.f32.mrb[0].mxu0
        %4721 = vmatprep.mubr.bf16.mxu0 %v2864
        %4722 = vmatmul.mubr.bf16.gmra.mrb[0].mxu0 %v2863
        %v4723 = vpop.f32.mrb[0].mxu0
        %v4724 = vadd.f32 %v4627, %v4723
        %v4725 = vpop.f32.mrb[0].mxu0
        %v4726 = vpop.f32.mrb[0].mxu0
        %v4727 = vadd.f32 %v4630, %v4726
        %v4728 = vpop.f32.mrb[0].mxu0
        %4729 = vmatprep.mubr.bf16.mxu0 %v2882
        %4730 = vmatmul.mubr.bf16.gmra.mrb[0].mxu0 %v2881
        %v4731 = vpop.f32.mrb[0].mxu0
        %v4732 = vadd.f32 %v4635, %v4731
        %v4733 = vpop.f32.mrb[0].mxu0
        %v4734 = vpop.f32.mrb[0].mxu0
        %v4735 = vadd.f32 %v4638, %v4734
        %v4736 = vpop.f32.mrb[0].mxu0
        %4737 = vmatprep.mubr.bf16.mxu0 %v2900
        %4738 = vmatmul.mubr.bf16.gmra.mrb[0].mxu0 %v2899
        %v4739 = vpop.f32.mrb[0].mxu0
        %v4740 = vadd.f32 %v4643, %v4739
        %v4741 = vpop.f32.mrb[0].mxu0
        %v4742 = vpop.f32.mrb[0].mxu0
        %v4743 = vadd.f32 %v4646, %v4742
        %v4744 = vpop.f32.mrb[0].mxu0
        %4745 = vmatprep.mubr.bf16.mxu0 %v2918
        %4746 = vmatmul.mubr.bf16.gmra.mrb[0].mxu0 %v2917
        %v4747 = vpop.f32.mrb[0].mxu0
        %v4748 = vadd.f32 %v4651, %v4747
        %v4749 = vpop.f32.mrb[0].mxu0
        %v4750 = vpop.f32.mrb[0].mxu0
        %v4751 = vadd.f32 %v4654, %v4750
        %v4752 = vpop.f32.mrb[0].mxu0
        %4753 = vdwg.mxu0
        %4754 = vmatprep.subr.bf16.mxu0 0
        %4755 = vmatpush1.bf16.msra.mxu0 %v3899
        %4756 = vmatprep.subr.bf16.mxu0 0
        %4757 = vmatpush1.bf16.msra.mxu0 %v3900
        %4758 = vmatprep.subr.bf16.mxu0 0
        %4759 = vmatpush1.bf16.msra.mxu0 %v3901
        %4760 = vmatprep.subr.bf16.mxu0 0
        %4761 = vmatpush1.bf16.msra.mxu0 %v3902
        %4762 = vmatprep.subr.bf16.mxu0 0
        %4763 = vmatpush1.bf16.msra.mxu0 %v3903
        %4764 = vmatprep.subr.bf16.mxu0 0
        %4765 = vmatpush1.bf16.msra.mxu0 %v3904
        %4766 = vmatprep.subr.bf16.mxu0 0
        %4767 = vmatpush1.bf16.msra.mxu0 %v3905
        %4768 = vmatprep.subr.bf16.mxu0 0
        %4769 = vmatpush1.bf16.msra.mxu0 %v3906
        %4770 = vmatprep.subr.bf16.mxu0 0
        %4771 = vmatpush1.bf16.msra.mxu0 %v3907
        %4772 = vmatprep.subr.bf16.mxu0 0
        %4773 = vmatpush1.bf16.msra.mxu0 %v3908
        %4774 = vmatprep.subr.bf16.mxu0 0
        %4775 = vmatpush1.bf16.msra.mxu0 %v3909
        %4776 = vmatprep.subr.bf16.mxu0 0
        %4777 = vmatpush1.bf16.msra.mxu0 %v3910
        %4778 = vmatprep.subr.bf16.mxu0 0
        %4779 = vmatpush1.bf16.msra.mxu0 %v3911
        %4780 = vmatprep.subr.bf16.mxu0 0
        %4781 = vmatpush1.bf16.msra.mxu0 %v3912
        %4782 = vmatprep.subr.bf16.mxu0 0
        %4783 = vmatpush1.bf16.msra.mxu0 %v3913
        %4784 = vmatprep.subr.bf16.mxu0 0
        %4785 = vmatpush1.bf16.msra.mxu0 %v3914
        %4786 = vmatprep.mubr.bf16.mxu0 %v2794
        %4787 = vmatmul.mubr.bf16.gmra.mrb[0].mxu0 %v2793
        %v4788 = vpop.f32.mrb[0].mxu0
        %v4789 = vadd.f32 %v4692, %v4788
        %v4790 = vpop.f32.mrb[0].mxu0
        %v4791 = vpop.f32.mrb[0].mxu0
        %v4792 = vadd.f32 %v4695, %v4791
        %v4793 = vpop.f32.mrb[0].mxu0
        %4794 = vmatprep.mubr.bf16.mxu0 %v2812
        %4795 = vmatmul.mubr.bf16.gmra.mrb[0].mxu0 %v2811
        %v4796 = vpop.f32.mrb[0].mxu0
        %v4797 = vadd.f32 %v4700, %v4796
        %v4798 = vpop.f32.mrb[0].mxu0
        %v4799 = vpop.f32.mrb[0].mxu0
        %v4800 = vadd.f32 %v4703, %v4799
        %v4801 = vpop.f32.mrb[0].mxu0
        %4802 = vmatprep.mubr.bf16.mxu0 %v2830
        %4803 = vmatmul.mubr.bf16.gmra.mrb[0].mxu0 %v2829
        %v4804 = vpop.f32.mrb[0].mxu0
        %v4805 = vadd.f32 %v4708, %v4804
        %v4806 = vpop.f32.mrb[0].mxu0
        %v4807 = vpop.f32.mrb[0].mxu0
        %v4808 = vadd.f32 %v4711, %v4807
        %v4809 = vpop.f32.mrb[0].mxu0
        %4810 = vmatprep.mubr.bf16.mxu0 %v2848
        %4811 = vmatmul.mubr.bf16.gmra.mrb[0].mxu0 %v2847
        %v4812 = vpop.f32.mrb[0].mxu0
        %v4813 = vadd.f32 %v4716, %v4812
        %v4814 = vpop.f32.mrb[0].mxu0
        %v4815 = vpop.f32.mrb[0].mxu0
        %v4816 = vadd.f32 %v4719, %v4815
        %v4817 = vpop.f32.mrb[0].mxu0
        %4818 = vmatprep.mubr.bf16.mxu0 %v2866
        %4819 = vmatmul.mubr.bf16.gmra.mrb[0].mxu0 %v2865
        %v4820 = vpop.f32.mrb[0].mxu0
        %v4821 = vadd.f32 %v4724, %v4820
        %v4822 = vpop.f32.mrb[0].mxu0
        %v4823 = vpop.f32.mrb[0].mxu0
        %v4824 = vadd.f32 %v4727, %v4823
        %v4825 = vpop.f32.mrb[0].mxu0
        %4826 = vmatprep.mubr.bf16.mxu0 %v2884
        %4827 = vmatmul.mubr.bf16.gmra.mrb[0].mxu0 %v2883
        %v4828 = vpop.f32.mrb[0].mxu0
        %v4829 = vadd.f32 %v4732, %v4828
        %v4830 = vpop.f32.mrb[0].mxu0
        %v4831 = vpop.f32.mrb[0].mxu0
        %v4832 = vadd.f32 %v4735, %v4831
        %v4833 = vpop.f32.mrb[0].mxu0
        %4834 = vmatprep.mubr.bf16.mxu0 %v2902
        %4835 = vmatmul.mubr.bf16.gmra.mrb[0].mxu0 %v2901
        %v4836 = vpop.f32.mrb[0].mxu0
        %v4837 = vadd.f32 %v4740, %v4836
        %v4838 = vpop.f32.mrb[0].mxu0
        %v4839 = vpop.f32.mrb[0].mxu0
        %v4840 = vadd.f32 %v4743, %v4839
        %v4841 = vpop.f32.mrb[0].mxu0
        %4842 = vmatprep.mubr.bf16.mxu0 %v2920
        %4843 = vmatmul.mubr.bf16.gmra.mrb[0].mxu0 %v2919
        %v4844 = vpop.f32.mrb[0].mxu0
        %v4845 = vadd.f32 %v4748, %v4844
        %v4846 = vpop.f32.mrb[0].mxu0
        %v4847 = vpop.f32.mrb[0].mxu0
        %v4848 = vadd.f32 %v4751, %v4847
        %v4849 = vpop.f32.mrb[0].mxu0
        %4850 = vdwg.mxu0
        %4851 = vmatprep.subr.bf16.mxu0 0
        %4852 = vmatpush1.bf16.msra.mxu0 %v3915
        %4853 = vmatprep.subr.bf16.mxu0 0
        %4854 = vmatpush1.bf16.msra.mxu0 %v3916
        %4855 = vmatprep.subr.bf16.mxu0 0
        %4856 = vmatpush1.bf16.msra.mxu0 %v3917
        %4857 = vmatprep.subr.bf16.mxu0 0
        %4858 = vmatpush1.bf16.msra.mxu0 %v3918
        %4859 = vmatprep.subr.bf16.mxu0 0
        %4860 = vmatpush1.bf16.msra.mxu0 %v3919
        %4861 = vmatprep.subr.bf16.mxu0 0
        %4862 = vmatpush1.bf16.msra.mxu0 %v3920
        %4863 = vmatprep.subr.bf16.mxu0 0
        %4864 = vmatpush1.bf16.msra.mxu0 %v3921
        %4865 = vmatprep.subr.bf16.mxu0 0
        %4866 = vmatpush1.bf16.msra.mxu0 %v3922
        %4867 = vmatprep.subr.bf16.mxu0 0
        %4868 = vmatpush1.bf16.msra.mxu0 %v3923
        %4869 = vmatprep.subr.bf16.mxu0 0
        %4870 = vmatpush1.bf16.msra.mxu0 %v3924
        %4871 = vmatprep.subr.bf16.mxu0 0
        %4872 = vmatpush1.bf16.msra.mxu0 %v3925
        %4873 = vmatprep.subr.bf16.mxu0 0
        %4874 = vmatpush1.bf16.msra.mxu0 %v3926
        %4875 = vmatprep.subr.bf16.mxu0 0
        %4876 = vmatpush1.bf16.msra.mxu0 %v3927
        %4877 = vmatprep.subr.bf16.mxu0 0
        %4878 = vmatpush1.bf16.msra.mxu0 %v3928
        %4879 = vmatprep.subr.bf16.mxu0 0
        %4880 = vmatpush1.bf16.msra.mxu0 %v3929
        %4881 = vmatprep.subr.bf16.mxu0 0
        %4882 = vmatpush1.bf16.msra.mxu0 %v3930
        %4883 = vmatprep.mubr.bf16.mxu0 %v2796
        %4884 = vmatmul.mubr.bf16.gmra.mrb[0].mxu0 %v2795
        %v4885 = vpop.f32.mrb[0].mxu0
        %v4886 = vadd.f32 %v4789, %v4885
        %v4887 = vpop.f32.mrb[0].mxu0
        %v4888 = vpop.f32.mrb[0].mxu0
        %v4889 = vadd.f32 %v4792, %v4888
        %v4890 = vpop.f32.mrb[0].mxu0
        %4891 = vmatprep.mubr.bf16.mxu0 %v2814
        %4892 = vmatmul.mubr.bf16.gmra.mrb[0].mxu0 %v2813
        %v4893 = vpop.f32.mrb[0].mxu0
        %v4894 = vadd.f32 %v4797, %v4893
        %v4895 = vpop.f32.mrb[0].mxu0
        %v4896 = vpop.f32.mrb[0].mxu0
        %v4897 = vadd.f32 %v4800, %v4896
        %v4898 = vpop.f32.mrb[0].mxu0
        %4899 = vmatprep.mubr.bf16.mxu0 %v2832
        %4900 = vmatmul.mubr.bf16.gmra.mrb[0].mxu0 %v2831
        %v4901 = vpop.f32.mrb[0].mxu0
        %v4902 = vadd.f32 %v4805, %v4901
        %v4903 = vpop.f32.mrb[0].mxu0
        %v4904 = vpop.f32.mrb[0].mxu0
        %v4905 = vadd.f32 %v4808, %v4904
        %v4906 = vpop.f32.mrb[0].mxu0
        %4907 = vmatprep.mubr.bf16.mxu0 %v2850
        %4908 = vmatmul.mubr.bf16.gmra.mrb[0].mxu0 %v2849
        %v4909 = vpop.f32.mrb[0].mxu0
        %v4910 = vadd.f32 %v4813, %v4909
        %v4911 = vpop.f32.mrb[0].mxu0
        %v4912 = vpop.f32.mrb[0].mxu0
        %v4913 = vadd.f32 %v4816, %v4912
        %v4914 = vpop.f32.mrb[0].mxu0
        %4915 = vmatprep.mubr.bf16.mxu0 %v2868
        %4916 = vmatmul.mubr.bf16.gmra.mrb[0].mxu0 %v2867
        %v4917 = vpop.f32.mrb[0].mxu0
        %v4918 = vadd.f32 %v4821, %v4917
        %v4919 = vpop.f32.mrb[0].mxu0
        %v4920 = vpop.f32.mrb[0].mxu0
        %v4921 = vadd.f32 %v4824, %v4920
        %v4922 = vpop.f32.mrb[0].mxu0
        %4923 = vmatprep.mubr.bf16.mxu0 %v2886
        %4924 = vmatmul.mubr.bf16.gmra.mrb[0].mxu0 %v2885
        %v4925 = vpop.f32.mrb[0].mxu0
        %v4926 = vadd.f32 %v4829, %v4925
        %v4927 = vpop.f32.mrb[0].mxu0
        %v4928 = vpop.f32.mrb[0].mxu0
        %v4929 = vadd.f32 %v4832, %v4928
        %v4930 = vpop.f32.mrb[0].mxu0
        %4931 = vmatprep.mubr.bf16.mxu0 %v2904
        %4932 = vmatmul.mubr.bf16.gmra.mrb[0].mxu0 %v2903
        %v4933 = vpop.f32.mrb[0].mxu0
        %v4934 = vadd.f32 %v4837, %v4933
        %v4935 = vpop.f32.mrb[0].mxu0
        %v4936 = vpop.f32.mrb[0].mxu0
        %v4937 = vadd.f32 %v4840, %v4936
        %v4938 = vpop.f32.mrb[0].mxu0
        %4939 = vmatprep.mubr.bf16.mxu0 %v2922
        %4940 = vmatmul.mubr.bf16.gmra.mrb[0].mxu0 %v2921
        %v4941 = vpop.f32.mrb[0].mxu0
        %v4942 = vadd.f32 %v4845, %v4941
        %v4943 = vpop.f32.mrb[0].mxu0
        %v4944 = vpop.f32.mrb[0].mxu0
        %v4945 = vadd.f32 %v4848, %v4944
        %v4946 = vpop.f32.mrb[0].mxu0
        %4947 = vdwg.mxu0
        %v4948 = vadd.f32 %v2763, %v4886
        %v4949 = vadd.f32 %v2764, %v4889
        %v4950 = vadd.f32 %v2765, %v4894
        %v4951 = vadd.f32 %v2766, %v4897
        %v4952 = vadd.f32 %v2767, %v4902
        %v4953 = vadd.f32 %v2768, %v4905
        %v4954 = vadd.f32 %v2769, %v4910
        %v4955 = vadd.f32 %v2770, %v4913
        %v4956 = vadd.f32 %v2771, %v4918
        %v4957 = vadd.f32 %v2772, %v4921
        %v4958 = vadd.f32 %v2773, %v4926
        %v4959 = vadd.f32 %v2774, %v4929
        %v4960 = vadd.f32 %v2775, %v4934
        %v4961 = vadd.f32 %v2776, %v4937
        %v4962 = vadd.f32 %v2777, %v4942
        %v4963 = vadd.f32 %v2778, %v4945
        %vm4964 = vcmask 523264
        %4965 = vst.msk [vmem:[#allocation3] sm:$0xff] %vm4964, %v4948
        %4966 = vst.msk [vmem:[#allocation3 + $0x8] sm:$0xff] %vm4964, %v4949
        %4967 = vst.msk [vmem:[#allocation3 + $0x10] sm:$0xff] %vm4964, %v4950
        %4968 = vst.msk [vmem:[#allocation3 + $0x18] sm:$0xff] %vm4964, %v4951
        %4969 = vst.msk [vmem:[#allocation3 + $0x20] sm:$0xff] %vm4964, %v4952
        %4970 = vst.msk [vmem:[#allocation3 + $0x28] sm:$0xff] %vm4964, %v4953
        %4971 = vst.msk [vmem:[#allocation3 + $0x30] sm:$0xff] %vm4964, %v4954
        %4972 = vst.msk [vmem:[#allocation3 + $0x38] sm:$0xff] %vm4964, %v4955
        %4973 = vst.msk [vmem:[#allocation3 + $0x40] sm:$0xff] %vm4964, %v4956
        %4974 = vst.msk [vmem:[#allocation3 + $0x48] sm:$0xff] %vm4964, %v4957
        %4975 = vst.msk [vmem:[#allocation3 + $0x50] sm:$0xff] %vm4964, %v4958
        %4976 = vst.msk [vmem:[#allocation3 + $0x58] sm:$0xff] %vm4964, %v4959
        %4977 = vst.msk [vmem:[#allocation3 + $0x60] sm:$0xff] %vm4964, %v4960
        %4978 = vst.msk [vmem:[#allocation3 + $0x68] sm:$0xff] %vm4964, %v4961
        %4979 = vst.msk [vmem:[#allocation3 + $0x70] sm:$0xff] %vm4964, %v4962
        %4980 = vst.msk [vmem:[#allocation3 + $0x78] sm:$0xff] %vm4964, %v4963
        %p4981 = scmp.eq.s32.totalorder %s19, 8
        // Predicated region
        $region53: #{super_resolution_forward.1} parent=47 // pred_check
          %p4982 = pneg %p4981
        $region54: #{super_resolution_forward.1} parent=47 // pred_check_branch
          %4984 = sbr.rel (%p4982) target = $region56
        $region55: #{super_resolution_forward.1} parent=47 // pred_region
          %v4985 = vld [vmem:[#allocation3] sm:$0xff]
          %v4986 = vld [vmem:[#allocation3 + $0x8] sm:$0xff]
          %v4987 = vld [vmem:[#allocation3 + $0x10] sm:$0xff]
          %v4988 = vld [vmem:[#allocation3 + $0x18] sm:$0xff]
          %v4989 = vld [vmem:[#allocation3 + $0x20] sm:$0xff]
          %v4990 = vld [vmem:[#allocation3 + $0x28] sm:$0xff]
          %v4991 = vld [vmem:[#allocation3 + $0x30] sm:$0xff]
          %v4992 = vld [vmem:[#allocation3 + $0x38] sm:$0xff]
          %v4993 = vld [vmem:[#allocation3 + $0x40] sm:$0xff]
          %v4994 = vld [vmem:[#allocation3 + $0x48] sm:$0xff]
          %v4995 = vld [vmem:[#allocation3 + $0x50] sm:$0xff]
          %v4996 = vld [vmem:[#allocation3 + $0x58] sm:$0xff]
          %v4997 = vld [vmem:[#allocation3 + $0x60] sm:$0xff]
          %v4998 = vld [vmem:[#allocation3 + $0x68] sm:$0xff]
          %v4999 = vld [vmem:[#allocation3 + $0x70] sm:$0xff]
          %v5000 = vld [vmem:[#allocation3 + $0x78] sm:$0xff]
          %v5001 = vld [vmem:[%s2] sm:$0x1]
          %v5003 = vlaneseq
          %v5004 = vshrl.u32 %v5003, 7
          %v5005 = vsub.s32 0, %v5004
          %v5006 = vrot.slane %v5001, %v5005
          %v5008 = vadd.f32 %v4985, %v5006
          %v5009 = vadd.f32 %v4986, %v5006
          %v5010 = vadd.f32 %v4987, %v5006
          %v5011 = vadd.f32 %v4988, %v5006
          %v5012 = vadd.f32 %v4989, %v5006
          %v5013 = vadd.f32 %v4990, %v5006
          %v5014 = vadd.f32 %v4991, %v5006
          %v5015 = vadd.f32 %v4992, %v5006
          %v5016 = vadd.f32 %v4993, %v5006
          %v5017 = vadd.f32 %v4994, %v5006
          %v5018 = vadd.f32 %v4995, %v5006
          %v5019 = vadd.f32 %v4996, %v5006
          %v5020 = vadd.f32 %v4997, %v5006
          %v5021 = vadd.f32 %v4998, %v5006
          %v5022 = vadd.f32 %v4999, %v5006
          %v5023 = vadd.f32 %v5000, %v5006
          %v5024 = vmax.f32 %v5008, 0.0
          %v5025 = vmax.f32 %v5009, 0.0
          %v5026 = vmax.f32 %v5010, 0.0
          %v5027 = vmax.f32 %v5011, 0.0
          %v5028 = vmax.f32 %v5012, 0.0
          %v5029 = vmax.f32 %v5013, 0.0
          %v5030 = vmax.f32 %v5014, 0.0
          %v5031 = vmax.f32 %v5015, 0.0
          %v5032 = vmax.f32 %v5016, 0.0
          %v5033 = vmax.f32 %v5017, 0.0
          %v5034 = vmax.f32 %v5018, 0.0
          %v5035 = vmax.f32 %v5019, 0.0
          %v5036 = vmax.f32 %v5020, 0.0
          %v5037 = vmax.f32 %v5021, 0.0
          %v5038 = vmax.f32 %v5022, 0.0
          %v5039 = vmax.f32 %v5023, 0.0
          %v5040 = vpack.c.bf16 %v5025, %v5024
          %v5041 = vpack.c.bf16 %v5027, %v5026
          %v5042 = vpack.c.bf16 %v5029, %v5028
          %v5043 = vpack.c.bf16 %v5031, %v5030
          %v5044 = vpack.c.bf16 %v5033, %v5032
          %v5045 = vpack.c.bf16 %v5035, %v5034
          %v5046 = vpack.c.bf16 %v5037, %v5036
          %v5047 = vpack.c.bf16 %v5039, %v5038
          %v5048 = vld [vmem:[%s3] sm:$0xf]
          %v5049 = vld [vmem:[%s3 + $0x4] sm:$0xf]
          %v5050 = vld [vmem:[%s3 + $0x8] sm:$0xf]
          %v5051 = vld [vmem:[%s3 + $0xc] sm:$0xf]
          %v5052 = vld [vmem:[%s3 + $0x10] sm:$0xf]
          %v5053 = vld [vmem:[%s3 + $0x14] sm:$0xf]
          %v5054 = vld [vmem:[%s3 + $0x18] sm:$0xf]
          %v5055 = vld [vmem:[%s3 + $0x1c] sm:$0xf]
          %v5056 = vld [vmem:[%s4] sm:$0x1]
          %v5058 = vlaneseq
          %v5059 = vshrl.u32 %v5058, 7
          %v5060 = vsub.s32 0, %v5059
          %v5061 = vrot.slane %v5056, %v5060
          %v5071 = vunpack.c.l.b16 %v5048
          %v5072 = vunpack.c.l.b16 %v5049
          %v5073 = vunpack.c.l.b16 %v5050
          %v5074 = vunpack.c.l.b16 %v5051
          %v5075 = vunpack.c.l.b16 %v5052
          %v5076 = vunpack.c.l.b16 %v5053
          %v5077 = vunpack.c.l.b16 %v5054
          %v5078 = vunpack.c.l.b16 %v5055
          %v5079 = vpack.c.b16 %v5072, %v5071
          %v5080 = vpack.c.b16 %v5074, %v5073
          %v5081 = vpack.c.b16 %v5076, %v5075
          %v5082 = vpack.c.b16 %v5078, %v5077
          %v5088 = vsel %vm4964, %v5040, 0
          %v5091 = vsel %vm4964, %v5041, 0
          %v5094 = vsel %vm4964, %v5042, 0
          %v5097 = vsel %vm4964, %v5043, 0
          %v5100 = vsel %vm4964, %v5044, 0
          %v5103 = vsel %vm4964, %v5045, 0
          %v5106 = vsel %vm4964, %v5046, 0
          %v5109 = vsel %vm4964, %v5047, 0
          %5111 = vmatprep.subr.bf16.mxu0 0
          %5112 = vmatpush1.bf16.msra.mxu0 %v5079
          %5113 = vmatprep.subr.bf16.mxu0 0
          %5114 = vmatpush1.bf16.msra.mxu0 %v5080
          %5115 = vmatprep.subr.bf16.mxu0 0
          %5116 = vmatpush1.bf16.msra.mxu0 %v5081
          %5117 = vmatprep.subr.bf16.mxu0 0
          %5118 = vmatpush1.bf16.msra.mxu0 %v5082
          %5119 = vmatprep.subr.bf16.mxu0 0
          %5120 = vmatpush1.bf16.msra.mxu0 0
          %5121 = vmatprep.subr.bf16.mxu0 0
          %5122 = vmatpush1.bf16.msra.mxu0 0
          %5123 = vmatprep.subr.bf16.mxu0 0
          %5124 = vmatpush1.bf16.msra.mxu0 0
          %5125 = vmatprep.subr.bf16.mxu0 0
          %5126 = vmatpush1.bf16.msra.mxu0 0
          %5127 = vmatprep.subr.bf16.mxu0 0
          %5128 = vmatpush1.bf16.msra.mxu0 0
          %5129 = vmatprep.subr.bf16.mxu0 0
          %5130 = vmatpush1.bf16.msra.mxu0 0
          %5131 = vmatprep.subr.bf16.mxu0 0
          %5132 = vmatpush1.bf16.msra.mxu0 0
          %5133 = vmatprep.subr.bf16.mxu0 0
          %5134 = vmatpush1.bf16.msra.mxu0 0
          %5135 = vmatprep.subr.bf16.mxu0 0
          %5136 = vmatpush1.bf16.msra.mxu0 0
          %5137 = vmatprep.subr.bf16.mxu0 0
          %5138 = vmatpush1.bf16.msra.mxu0 0
          %5139 = vmatprep.subr.bf16.mxu0 0
          %5140 = vmatpush1.bf16.msra.mxu0 0
          %5141 = vmatprep.subr.bf16.mxu0 0
          %5142 = vmatpush1.bf16.msra.mxu0 0
          %5143 = vmatprep.mubr.bf16.mxu0 0
          %5144 = vmatmul.mubr.bf16.gmra.mrb[0].mxu0 %v5088
          %v5145 = vpop.f32.mrb[0].mxu0
          %v5146 = vadd.f32 %v5061, %v5145
          %v5147 = vpop.f32.mrb[0].mxu0
          %v5148 = vpop.f32.mrb[0].mxu0
          %v5149 = vadd.f32 %v5061, %v5148
          %v5150 = vpop.f32.mrb[0].mxu0
          %5151 = vmatprep.mubr.bf16.mxu0 0
          %5152 = vmatmul.mubr.bf16.gmra.mrb[0].mxu0 %v5091
          %v5153 = vpop.f32.mrb[0].mxu0
          %v5154 = vadd.f32 %v5061, %v5153
          %v5155 = vpop.f32.mrb[0].mxu0
          %v5156 = vpop.f32.mrb[0].mxu0
          %v5157 = vadd.f32 %v5061, %v5156
          %v5158 = vpop.f32.mrb[0].mxu0
          %5159 = vmatprep.mubr.bf16.mxu0 0
          %5160 = vmatmul.mubr.bf16.gmra.mrb[0].mxu0 %v5094
          %v5161 = vpop.f32.mrb[0].mxu0
          %v5162 = vadd.f32 %v5061, %v5161
          %v5163 = vpop.f32.mrb[0].mxu0
          %v5164 = vpop.f32.mrb[0].mxu0
          %v5165 = vadd.f32 %v5061, %v5164
          %v5166 = vpop.f32.mrb[0].mxu0
          %5167 = vmatprep.mubr.bf16.mxu0 0
          %5168 = vmatmul.mubr.bf16.gmra.mrb[0].mxu0 %v5097
          %v5169 = vpop.f32.mrb[0].mxu0
          %v5170 = vadd.f32 %v5061, %v5169
          %v5171 = vpop.f32.mrb[0].mxu0
          %v5172 = vpop.f32.mrb[0].mxu0
          %v5173 = vadd.f32 %v5061, %v5172
          %v5174 = vpop.f32.mrb[0].mxu0
          %5175 = vmatprep.mubr.bf16.mxu0 0
          %5176 = vmatmul.mubr.bf16.gmra.mrb[0].mxu0 %v5100
          %v5177 = vpop.f32.mrb[0].mxu0
          %v5178 = vadd.f32 %v5061, %v5177
          %v5179 = vpop.f32.mrb[0].mxu0
          %v5180 = vpop.f32.mrb[0].mxu0
          %v5181 = vadd.f32 %v5061, %v5180
          %v5182 = vpop.f32.mrb[0].mxu0
          %5183 = vmatprep.mubr.bf16.mxu0 0
          %5184 = vmatmul.mubr.bf16.gmra.mrb[0].mxu0 %v5103
          %v5185 = vpop.f32.mrb[0].mxu0
          %v5186 = vadd.f32 %v5061, %v5185
          %v5187 = vpop.f32.mrb[0].mxu0
          %v5188 = vpop.f32.mrb[0].mxu0
          %v5189 = vadd.f32 %v5061, %v5188
          %v5190 = vpop.f32.mrb[0].mxu0
          %5191 = vmatprep.mubr.bf16.mxu0 0
          %5192 = vmatmul.mubr.bf16.gmra.mrb[0].mxu0 %v5106
          %v5193 = vpop.f32.mrb[0].mxu0
          %v5194 = vadd.f32 %v5061, %v5193
          %v5195 = vpop.f32.mrb[0].mxu0
          %v5196 = vpop.f32.mrb[0].mxu0
          %v5197 = vadd.f32 %v5061, %v5196
          %v5198 = vpop.f32.mrb[0].mxu0
          %5199 = vmatprep.mubr.bf16.mxu0 0
          %5200 = vmatmul.mubr.bf16.gmra.mrb[0].mxu0 %v5109
          %v5201 = vpop.f32.mrb[0].mxu0
          %v5202 = vadd.f32 %v5061, %v5201
          %v5203 = vpop.f32.mrb[0].mxu0
          %v5204 = vpop.f32.mrb[0].mxu0
          %v5205 = vadd.f32 %v5061, %v5204
          %v5206 = vpop.f32.mrb[0].mxu0
          %5207 = vdwg.mxu0
          %v5208 = vmax.f32 %v5146, 0.0
          %v5209 = vmax.f32 %v5149, 0.0
          %v5210 = vmax.f32 %v5154, 0.0
          %v5211 = vmax.f32 %v5157, 0.0
          %v5212 = vmax.f32 %v5162, 0.0
          %v5213 = vmax.f32 %v5165, 0.0
          %v5214 = vmax.f32 %v5170, 0.0
          %v5215 = vmax.f32 %v5173, 0.0
          %v5216 = vmax.f32 %v5178, 0.0
          %v5217 = vmax.f32 %v5181, 0.0
          %v5218 = vmax.f32 %v5186, 0.0
          %v5219 = vmax.f32 %v5189, 0.0
          %v5220 = vmax.f32 %v5194, 0.0
          %v5221 = vmax.f32 %v5197, 0.0
          %v5222 = vmax.f32 %v5202, 0.0
          %v5223 = vmax.f32 %v5205, 0.0
          %v5224 = vpack.c.bf16 %v5209, %v5208
          %v5225 = vpack.c.bf16 %v5211, %v5210
          %v5226 = vpack.c.bf16 %v5213, %v5212
          %v5227 = vpack.c.bf16 %v5215, %v5214
          %v5228 = vpack.c.bf16 %v5217, %v5216
          %v5229 = vpack.c.bf16 %v5219, %v5218
          %v5230 = vpack.c.bf16 %v5221, %v5220
          %v5231 = vpack.c.bf16 %v5223, %v5222
          %vm5232 = vcmask 257024
          %5233 = vst.msk [vmem:[#allocation5] sm:$0xf] %vm5232, 0
          %vm5234 = vcmask 254976
          %5235 = vst.msk [vmem:[#allocation5 + $0x4] sm:$0x3] %vm5234, 0
          %5236 = vst.msk [vmem:[#allocation5 + $0x8] sm:$0xf] %vm5232, 0
          %5237 = vst.msk [vmem:[#allocation5 + $0xc] sm:$0x3] %vm5234, 0
          %5238 = vst.msk [vmem:[#allocation5 + $0x60] sm:$0xf] %vm5232, 0
          %5239 = vst.msk [vmem:[#allocation5 + $0x64] sm:$0x3] %vm5234, 0
          %5240 = vst.msk [vmem:[#allocation5 + $0x68] sm:$0xf] %vm5232, 0
          %5241 = vst.msk [vmem:[#allocation5 + $0x6c] sm:$0x3] %vm5234, 0
          %s5242 = scalar_lea.vmem [#allocation5], 80
          %5243 = vst.msk [vmem:[%s5242] sm:$0xf] %vm5232, 0
          %5244 = vst.msk [vmem:[%s5242 + $0x4] sm:$0x3] %vm5234, 0
          %5245 = vst.msk [vmem:[%s5242 + $0x8] sm:$0xf] %vm5232, 0
          %5246 = vst.msk [vmem:[%s5242 + $0xc] sm:$0x3] %vm5234, 0
          %5247 = vst.msk [vmem:[%s5242 + $0x60] sm:$0xf] %vm5232, 0
          %5248 = vst.msk [vmem:[%s5242 + $0x64] sm:$0x3] %vm5234, 0
          %5249 = vst.msk [vmem:[%s5242 + $0x68] sm:$0xf] %vm5232, 0
          %5250 = vst.msk [vmem:[%s5242 + $0x6c] sm:$0x3] %vm5234, 0
          %s5251 = scalar_lea.vmem [#allocation5], 16
          %vm5252 = vcmask 253952
          %5253 = vst.msk [vmem:[%s5251] sm:$0x1] %vm5252, 0
          %5254 = vst.msk [vmem:[%s5251 + $0x8] sm:$0x1] %vm5252, 0
          %5255 = vst.msk [vmem:[%s5251 + $0x10] sm:$0x1] %vm5252, 0
          %5256 = vst.msk [vmem:[%s5251 + $0x18] sm:$0x1] %vm5252, 0
          %5257 = vst.msk [vmem:[%s5251 + $0x20] sm:$0x1] %vm5252, 0
          %5258 = vst.msk [vmem:[%s5251 + $0x28] sm:$0x1] %vm5252, 0
          %5259 = vst.msk [vmem:[%s5251 + $0x30] sm:$0x1] %vm5252, 0
          %5260 = vst.msk [vmem:[%s5251 + $0x38] sm:$0x1] %vm5252, 0
          %5261 = vst.msk [vmem:[%s5251 + $0x60] sm:$0x1] %vm5252, 0
          %5262 = vst.msk [vmem:[%s5251 + $0x68] sm:$0x1] %vm5252, 0
          %5263 = vst.msk [vmem:[%s5251 + $0x70] sm:$0x1] %vm5252, 0
          %5264 = vst.msk [vmem:[%s5251 + $0x78] sm:$0x1] %vm5252, 0
          %5265 = vst.msk [vmem:[%s5251 + $0x80] sm:$0x1] %vm5252, 0
          %5266 = vst.msk [vmem:[%s5251 + $0x88] sm:$0x1] %vm5252, 0
          %5267 = vst.msk [vmem:[%s5251 + $0x90] sm:$0x1] %vm5252, 0
          %5268 = vst.msk [vmem:[%s5251 + $0x98] sm:$0x1] %vm5252, 0
          %vm5269 = vcmask 254977
          %5270 = vst.msk [vmem:[%s5251 + $0x4] sm:$0x2] %vm5269, 0
          %5271 = vst.msk [vmem:[%s5251 + $0xc] sm:$0x2] %vm5269, 0
          %5272 = vst.msk [vmem:[%s5251 + $0x14] sm:$0x2] %vm5269, 0
          %5273 = vst.msk [vmem:[%s5251 + $0x1c] sm:$0x2] %vm5269, 0
          %5274 = vst.msk [vmem:[%s5251 + $0x24] sm:$0x2] %vm5269, 0
          %5275 = vst.msk [vmem:[%s5251 + $0x2c] sm:$0x2] %vm5269, 0
          %5276 = vst.msk [vmem:[%s5251 + $0x34] sm:$0x2] %vm5269, 0
          %5277 = vst.msk [vmem:[%s5251 + $0x3c] sm:$0x2] %vm5269, 0
          %5278 = vst.msk [vmem:[%s5251 + $0x64] sm:$0x2] %vm5269, 0
          %5279 = vst.msk [vmem:[%s5251 + $0x6c] sm:$0x2] %vm5269, 0
          %5280 = vst.msk [vmem:[%s5251 + $0x74] sm:$0x2] %vm5269, 0
          %5281 = vst.msk [vmem:[%s5251 + $0x7c] sm:$0x2] %vm5269, 0
          %5282 = vst.msk [vmem:[%s5251 + $0x84] sm:$0x2] %vm5269, 0
          %5283 = vst.msk [vmem:[%s5251 + $0x8c] sm:$0x2] %vm5269, 0
          %5284 = vst.msk [vmem:[%s5251 + $0x94] sm:$0x2] %vm5269, 0
          %5285 = vst.msk [vmem:[%s5251 + $0x9c] sm:$0x2] %vm5269, 0
          %v5294 = vunpack.c.l.b16 %v5224
          %v5295 = vunpack.c.h.b16 %v5224
          %v5296 = vunpack.c.l.b16 %v5225
          %v5297 = vunpack.c.h.b16 %v5225
          %v5298 = vunpack.c.l.b16 %v5226
          %v5299 = vunpack.c.h.b16 %v5226
          %v5300 = vunpack.c.l.b16 %v5227
          %v5301 = vunpack.c.h.b16 %v5227
          %v5302 = vunpack.c.l.b16 %v5228
          %v5303 = vunpack.c.h.b16 %v5228
          %v5304 = vunpack.c.l.b16 %v5229
          %v5305 = vunpack.c.h.b16 %v5229
          %v5306 = vunpack.c.l.b16 %v5230
          %v5307 = vunpack.c.h.b16 %v5230
          %v5308 = vunpack.c.l.b16 %v5231
          %v5309 = vunpack.c.h.b16 %v5231
          %v5310 = vpack.c.b16 %v5294, %v5294
          %v5311 = vpack.c.b16 %v5295, %v5295
          %v5312 = vpack.c.b16 %v5296, %v5296
          %v5313 = vpack.c.b16 %v5297, %v5297
          %v5314 = vpack.c.b16 %v5298, %v5298
          %v5315 = vpack.c.b16 %v5299, %v5299
          %v5316 = vpack.c.b16 %v5300, %v5300
          %v5317 = vpack.c.b16 %v5301, %v5301
          %v5318 = vpack.c.b16 %v5302, %v5302
          %v5319 = vpack.c.b16 %v5303, %v5303
          %v5320 = vpack.c.b16 %v5304, %v5304
          %v5321 = vpack.c.b16 %v5305, %v5305
          %v5322 = vpack.c.b16 %v5306, %v5306
          %v5323 = vpack.c.b16 %v5307, %v5307
          %v5324 = vpack.c.b16 %v5308, %v5308
          %v5325 = vpack.c.b16 %v5309, %v5309
          %v5326 = vrot.slane %v5310, 7
          %v5327 = vrot.slane %v5326, 4
          %v5328 = vrot.slane %v5311, 7
          %v5329 = vrot.slane %v5328, 4
          %v5330 = vrot.slane %v5312, 7
          %v5331 = vrot.slane %v5330, 4
          %v5332 = vrot.slane %v5313, 7
          %v5333 = vrot.slane %v5332, 4
          %v5334 = vrot.slane %v5314, 7
          %v5335 = vrot.slane %v5334, 4
          %v5336 = vrot.slane %v5315, 7
          %v5337 = vrot.slane %v5336, 4
          %v5338 = vrot.slane %v5316, 7
          %v5339 = vrot.slane %v5338, 4
          %v5340 = vrot.slane %v5317, 7
          %v5341 = vrot.slane %v5340, 4
          %v5342 = vrot.slane %v5318, 7
          %v5343 = vrot.slane %v5342, 4
          %v5344 = vrot.slane %v5319, 7
          %v5345 = vrot.slane %v5344, 4
          %v5346 = vrot.slane %v5320, 7
          %v5347 = vrot.slane %v5346, 4
          %v5348 = vrot.slane %v5321, 7
          %v5349 = vrot.slane %v5348, 4
          %v5350 = vrot.slane %v5322, 7
          %v5351 = vrot.slane %v5350, 4
          %v5352 = vrot.slane %v5323, 7
          %v5353 = vrot.slane %v5352, 4
          %v5354 = vrot.slane %v5324, 7
          %v5355 = vrot.slane %v5354, 4
          %v5356 = vrot.slane %v5325, 7
          %v5357 = vrot.slane %v5356, 4
          %vm5390 = vcmask 257025
          %5391 = vst.msk [vmem:[%s5251] sm:$0xe] %vm5390, %v5326
          %5392 = vst.msk [vmem:[%s5251 + $0x4] sm:$0x1] %vm5252, %v5327
          %5393 = vst.msk [vmem:[%s5251 + $0x8] sm:$0xe] %vm5390, %v5328
          %5394 = vst.msk [vmem:[%s5251 + $0xc] sm:$0x1] %vm5252, %v5329
          %5395 = vst.msk [vmem:[%s5251 + $0x10] sm:$0xe] %vm5390, %v5330
          %5396 = vst.msk [vmem:[%s5251 + $0x14] sm:$0x1] %vm5252, %v5331
          %5397 = vst.msk [vmem:[%s5251 + $0x18] sm:$0xe] %vm5390, %v5332
          %5398 = vst.msk [vmem:[%s5251 + $0x1c] sm:$0x1] %vm5252, %v5333
          %5399 = vst.msk [vmem:[%s5251 + $0x20] sm:$0xe] %vm5390, %v5334
          %5400 = vst.msk [vmem:[%s5251 + $0x24] sm:$0x1] %vm5252, %v5335
          %5401 = vst.msk [vmem:[%s5251 + $0x28] sm:$0xe] %vm5390, %v5336
          %5402 = vst.msk [vmem:[%s5251 + $0x2c] sm:$0x1] %vm5252, %v5337
          %5403 = vst.msk [vmem:[%s5251 + $0x30] sm:$0xe] %vm5390, %v5338
          %5404 = vst.msk [vmem:[%s5251 + $0x34] sm:$0x1] %vm5252, %v5339
          %5405 = vst.msk [vmem:[%s5251 + $0x38] sm:$0xe] %vm5390, %v5340
          %5406 = vst.msk [vmem:[%s5251 + $0x3c] sm:$0x1] %vm5252, %v5341
          %5407 = vst.msk [vmem:[%s5251 + $0x60] sm:$0xe] %vm5390, %v5342
          %5408 = vst.msk [vmem:[%s5251 + $0x64] sm:$0x1] %vm5252, %v5343
          %5409 = vst.msk [vmem:[%s5251 + $0x68] sm:$0xe] %vm5390, %v5344
          %5410 = vst.msk [vmem:[%s5251 + $0x6c] sm:$0x1] %vm5252, %v5345
          %5411 = vst.msk [vmem:[%s5251 + $0x70] sm:$0xe] %vm5390, %v5346
          %5412 = vst.msk [vmem:[%s5251 + $0x74] sm:$0x1] %vm5252, %v5347
          %5413 = vst.msk [vmem:[%s5251 + $0x78] sm:$0xe] %vm5390, %v5348
          %5414 = vst.msk [vmem:[%s5251 + $0x7c] sm:$0x1] %vm5252, %v5349
          %5415 = vst.msk [vmem:[%s5251 + $0x80] sm:$0xe] %vm5390, %v5350
          %5416 = vst.msk [vmem:[%s5251 + $0x84] sm:$0x1] %vm5252, %v5351
          %5417 = vst.msk [vmem:[%s5251 + $0x88] sm:$0xe] %vm5390, %v5352
          %5418 = vst.msk [vmem:[%s5251 + $0x8c] sm:$0x1] %vm5252, %v5353
          %5419 = vst.msk [vmem:[%s5251 + $0x90] sm:$0xe] %vm5390, %v5354
          %5420 = vst.msk [vmem:[%s5251 + $0x94] sm:$0x1] %vm5252, %v5355
          %5421 = vst.msk [vmem:[%s5251 + $0x98] sm:$0xe] %vm5390, %v5356
          %5422 = vst.msk [vmem:[%s5251 + $0x9c] sm:$0x1] %vm5252, %v5357
          %v5423 = vld [vmem:[#allocation5] sm:$0xf]
          %v5424 = vld [vmem:[#allocation5 + $0x8] sm:$0xf]
          %v5425 = vld [vmem:[#allocation5 + $0x10] sm:$0xf]
          %v5426 = vld [vmem:[#allocation5 + $0x18] sm:$0xf]
          %v5427 = vld [vmem:[#allocation5 + $0x20] sm:$0xf]
          %v5428 = vld [vmem:[#allocation5 + $0x28] sm:$0xf]
          %v5429 = vld [vmem:[#allocation5 + $0x30] sm:$0xf]
          %v5430 = vld [vmem:[#allocation5 + $0x38] sm:$0xf]
          %v5431 = vld [vmem:[#allocation5 + $0x60] sm:$0xf]
          %v5432 = vld [vmem:[#allocation5 + $0x68] sm:$0xf]
          %v5433 = vld [vmem:[#allocation5 + $0x70] sm:$0xf]
          %v5434 = vld [vmem:[#allocation5 + $0x78] sm:$0xf]
          %v5435 = vld [vmem:[#allocation5 + $0x80] sm:$0xf]
          %v5436 = vld [vmem:[#allocation5 + $0x88] sm:$0xf]
          %v5437 = vld [vmem:[#allocation5 + $0x90] sm:$0xf]
          %v5438 = vld [vmem:[#allocation5 + $0x98] sm:$0xf]
          %v5455 = vunpack.c.l.b16 %v5423
          %v5456 = vunpack.c.l.b16 %v5424
          %v5457 = vunpack.c.l.b16 %v5425
          %v5458 = vunpack.c.l.b16 %v5426
          %v5459 = vunpack.c.l.b16 %v5427
          %v5460 = vunpack.c.l.b16 %v5428
          %v5461 = vunpack.c.l.b16 %v5429
          %v5462 = vunpack.c.l.b16 %v5430
          %v5463 = vunpack.c.l.b16 %v5431
          %v5464 = vunpack.c.l.b16 %v5432
          %v5465 = vunpack.c.l.b16 %v5433
          %v5466 = vunpack.c.l.b16 %v5434
          %v5467 = vunpack.c.l.b16 %v5435
          %v5468 = vunpack.c.l.b16 %v5436
          %v5469 = vunpack.c.l.b16 %v5437
          %v5470 = vunpack.c.l.b16 %v5438
          %v5471 = vpack.c.b16 %v5456, %v5455
          %v5472 = vpack.c.b16 %v5458, %v5457
          %v5473 = vpack.c.b16 %v5460, %v5459
          %v5474 = vpack.c.b16 %v5462, %v5461
          %v5475 = vpack.c.b16 %v5464, %v5463
          %v5476 = vpack.c.b16 %v5466, %v5465
          %v5477 = vpack.c.b16 %v5468, %v5467
          %v5478 = vpack.c.b16 %v5470, %v5469
          %vm5487 = vcmask 261120
          %5488 = vst.msk [vmem:[#allocation6] sm:$0xff] %vm5487, %v5471
          %5489 = vst.msk [vmem:[#allocation6 + $0x38] sm:$0xff] %vm5487, %v5472
          %5490 = vst.msk [vmem:[#allocation6 + $0x70] sm:$0xff] %vm5487, %v5473
          %5491 = vst.msk [vmem:[#allocation6 + $0xa8] sm:$0xff] %vm5487, %v5474
          %5492 = vst.msk [vmem:[#allocation6 + $0xe0] sm:$0xff] %vm5487, %v5475
          %5493 = vst.msk [vmem:[#allocation6 + $0x118] sm:$0xff] %vm5487, %v5476
          %5494 = vst.msk [vmem:[#allocation6 + $0x150] sm:$0xff] %vm5487, %v5477
          %5495 = vst.msk [vmem:[#allocation6 + $0x188] sm:$0xff] %vm5487, %v5478
          %v5496 = vld [vmem:[#allocation5] sm:$0xf]
          %v5497 = vld [vmem:[#allocation5 + $0x4] sm:$0x1]
          %v5498 = vld [vmem:[#allocation5 + $0x8] sm:$0xf]
          %v5499 = vld [vmem:[#allocation5 + $0xc] sm:$0x1]
          %v5500 = vld [vmem:[#allocation5 + $0x10] sm:$0xf]
          %v5501 = vld [vmem:[#allocation5 + $0x14] sm:$0x1]
          %v5502 = vld [vmem:[#allocation5 + $0x18] sm:$0xf]
          %v5503 = vld [vmem:[#allocation5 + $0x1c] sm:$0x1]
          %v5504 = vld [vmem:[#allocation5 + $0x20] sm:$0xf]
          %v5505 = vld [vmem:[#allocation5 + $0x24] sm:$0x1]
          %v5506 = vld [vmem:[#allocation5 + $0x28] sm:$0xf]
          %v5507 = vld [vmem:[#allocation5 + $0x2c] sm:$0x1]
          %v5508 = vld [vmem:[#allocation5 + $0x30] sm:$0xf]
          %v5509 = vld [vmem:[#allocation5 + $0x34] sm:$0x1]
          %v5510 = vld [vmem:[#allocation5 + $0x38] sm:$0xf]
          %v5511 = vld [vmem:[#allocation5 + $0x3c] sm:$0x1]
          %v5512 = vld [vmem:[#allocation5 + $0x60] sm:$0xf]
          %v5513 = vld [vmem:[#allocation5 + $0x64] sm:$0x1]
          %v5514 = vld [vmem:[#allocation5 + $0x68] sm:$0xf]
          %v5515 = vld [vmem:[#allocation5 + $0x6c] sm:$0x1]
          %v5516 = vld [vmem:[#allocation5 + $0x70] sm:$0xf]
          %v5517 = vld [vmem:[#allocation5 + $0x74] sm:$0x1]
          %v5518 = vld [vmem:[#allocation5 + $0x78] sm:$0xf]
          %v5519 = vld [vmem:[#allocation5 + $0x7c] sm:$0x1]
          %v5520 = vld [vmem:[#allocation5 + $0x80] sm:$0xf]
          %v5521 = vld [vmem:[#allocation5 + $0x84] sm:$0x1]
          %v5522 = vld [vmem:[#allocation5 + $0x88] sm:$0xf]
          %v5523 = vld [vmem:[#allocation5 + $0x8c] sm:$0x1]
          %v5524 = vld [vmem:[#allocation5 + $0x90] sm:$0xf]
          %v5525 = vld [vmem:[#allocation5 + $0x94] sm:$0x1]
          %v5526 = vld [vmem:[#allocation5 + $0x98] sm:$0xf]
          %v5527 = vld [vmem:[#allocation5 + $0x9c] sm:$0x1]
          %vm5528 = vsmask.f32 3328
          %vm5529 = vsmask.f32 7440
          %vm5530 = vmor %vm5528, %vm5529
          %v5532 = vshrl.u32 %v5496, 16
          %v5534 = vrot.slane %v5532, 4
          %v5535 = vshll.u32 %v5496, 16
          %v5537 = vrot.slane %v5535, 5
          %v5538 = vor.u32 %v5534, %v5537
          %v5539 = vrot.slane %v5538, 4
          %v5541 = vshll.u32 %v5497, 16
          %v5543 = vrot.slane %v5541, 5
          %v5544 = vsel %vm5530, %v5539, %v5543
          %v5546 = vshrl.u32 %v5498, 16
          %v5548 = vrot.slane %v5546, 4
          %v5549 = vshll.u32 %v5498, 16
          %v5551 = vrot.slane %v5549, 5
          %v5552 = vor.u32 %v5548, %v5551
          %v5553 = vrot.slane %v5552, 4
          %v5555 = vshll.u32 %v5499, 16
          %v5557 = vrot.slane %v5555, 5
          %v5558 = vsel %vm5530, %v5553, %v5557
          %v5560 = vshrl.u32 %v5500, 16
          %v5562 = vrot.slane %v5560, 4
          %v5563 = vshll.u32 %v5500, 16
          %v5565 = vrot.slane %v5563, 5
          %v5566 = vor.u32 %v5562, %v5565
          %v5567 = vrot.slane %v5566, 4
          %v5569 = vshll.u32 %v5501, 16
          %v5571 = vrot.slane %v5569, 5
          %v5572 = vsel %vm5530, %v5567, %v5571
          %v5574 = vshrl.u32 %v5502, 16
          %v5576 = vrot.slane %v5574, 4
          %v5577 = vshll.u32 %v5502, 16
          %v5579 = vrot.slane %v5577, 5
          %v5580 = vor.u32 %v5576, %v5579
          %v5581 = vrot.slane %v5580, 4
          %v5583 = vshll.u32 %v5503, 16
          %v5585 = vrot.slane %v5583, 5
          %v5586 = vsel %vm5530, %v5581, %v5585
          %v5588 = vshrl.u32 %v5504, 16
          %v5590 = vrot.slane %v5588, 4
          %v5591 = vshll.u32 %v5504, 16
          %v5593 = vrot.slane %v5591, 5
          %v5594 = vor.u32 %v5590, %v5593
          %v5595 = vrot.slane %v5594, 4
          %v5597 = vshll.u32 %v5505, 16
          %v5599 = vrot.slane %v5597, 5
          %v5600 = vsel %vm5530, %v5595, %v5599
          %v5602 = vshrl.u32 %v5506, 16
          %v5604 = vrot.slane %v5602, 4
          %v5605 = vshll.u32 %v5506, 16
          %v5607 = vrot.slane %v5605, 5
          %v5608 = vor.u32 %v5604, %v5607
          %v5609 = vrot.slane %v5608, 4
          %v5611 = vshll.u32 %v5507, 16
          %v5613 = vrot.slane %v5611, 5
          %v5614 = vsel %vm5530, %v5609, %v5613
          %v5616 = vshrl.u32 %v5508, 16
          %v5618 = vrot.slane %v5616, 4
          %v5619 = vshll.u32 %v5508, 16
          %v5621 = vrot.slane %v5619, 5
          %v5622 = vor.u32 %v5618, %v5621
          %v5623 = vrot.slane %v5622, 4
          %v5625 = vshll.u32 %v5509, 16
          %v5627 = vrot.slane %v5625, 5
          %v5628 = vsel %vm5530, %v5623, %v5627
          %v5630 = vshrl.u32 %v5510, 16
          %v5632 = vrot.slane %v5630, 4
          %v5633 = vshll.u32 %v5510, 16
          %v5635 = vrot.slane %v5633, 5
          %v5636 = vor.u32 %v5632, %v5635
          %v5637 = vrot.slane %v5636, 4
          %v5639 = vshll.u32 %v5511, 16
          %v5641 = vrot.slane %v5639, 5
          %v5642 = vsel %vm5530, %v5637, %v5641
          %v5644 = vshrl.u32 %v5512, 16
          %v5646 = vrot.slane %v5644, 4
          %v5647 = vshll.u32 %v5512, 16
          %v5649 = vrot.slane %v5647, 5
          %v5650 = vor.u32 %v5646, %v5649
          %v5651 = vrot.slane %v5650, 4
          %v5653 = vshll.u32 %v5513, 16
          %v5655 = vrot.slane %v5653, 5
          %v5656 = vsel %vm5530, %v5651, %v5655
          %v5658 = vshrl.u32 %v5514, 16
          %v5660 = vrot.slane %v5658, 4
          %v5661 = vshll.u32 %v5514, 16
          %v5663 = vrot.slane %v5661, 5
          %v5664 = vor.u32 %v5660, %v5663
          %v5665 = vrot.slane %v5664, 4
          %v5667 = vshll.u32 %v5515, 16
          %v5669 = vrot.slane %v5667, 5
          %v5670 = vsel %vm5530, %v5665, %v5669
          %v5672 = vshrl.u32 %v5516, 16
          %v5674 = vrot.slane %v5672, 4
          %v5675 = vshll.u32 %v5516, 16
          %v5677 = vrot.slane %v5675, 5
          %v5678 = vor.u32 %v5674, %v5677
          %v5679 = vrot.slane %v5678, 4
          %v5681 = vshll.u32 %v5517, 16
          %v5683 = vrot.slane %v5681, 5
          %v5684 = vsel %vm5530, %v5679, %v5683
          %v5686 = vshrl.u32 %v5518, 16
          %v5688 = vrot.slane %v5686, 4
          %v5689 = vshll.u32 %v5518, 16
          %v5691 = vrot.slane %v5689, 5
          %v5692 = vor.u32 %v5688, %v5691
          %v5693 = vrot.slane %v5692, 4
          %v5695 = vshll.u32 %v5519, 16
          %v5697 = vrot.slane %v5695, 5
          %v5698 = vsel %vm5530, %v5693, %v5697
          %v5700 = vshrl.u32 %v5520, 16
          %v5702 = vrot.slane %v5700, 4
          %v5703 = vshll.u32 %v5520, 16
          %v5705 = vrot.slane %v5703, 5
          %v5706 = vor.u32 %v5702, %v5705
          %v5707 = vrot.slane %v5706, 4
          %v5709 = vshll.u32 %v5521, 16
          %v5711 = vrot.slane %v5709, 5
          %v5712 = vsel %vm5530, %v5707, %v5711
          %v5714 = vshrl.u32 %v5522, 16
          %v5716 = vrot.slane %v5714, 4
          %v5717 = vshll.u32 %v5522, 16
          %v5719 = vrot.slane %v5717, 5
          %v5720 = vor.u32 %v5716, %v5719
          %v5721 = vrot.slane %v5720, 4
          %v5723 = vshll.u32 %v5523, 16
          %v5725 = vrot.slane %v5723, 5
          %v5726 = vsel %vm5530, %v5721, %v5725
          %v5728 = vshrl.u32 %v5524, 16
          %v5730 = vrot.slane %v5728, 4
          %v5731 = vshll.u32 %v5524, 16
          %v5733 = vrot.slane %v5731, 5
          %v5734 = vor.u32 %v5730, %v5733
          %v5735 = vrot.slane %v5734, 4
          %v5737 = vshll.u32 %v5525, 16
          %v5739 = vrot.slane %v5737, 5
          %v5740 = vsel %vm5530, %v5735, %v5739
          %v5742 = vshrl.u32 %v5526, 16
          %v5744 = vrot.slane %v5742, 4
          %v5745 = vshll.u32 %v5526, 16
          %v5747 = vrot.slane %v5745, 5
          %v5748 = vor.u32 %v5744, %v5747
          %v5749 = vrot.slane %v5748, 4
          %v5751 = vshll.u32 %v5527, 16
          %v5753 = vrot.slane %v5751, 5
          %v5754 = vsel %vm5530, %v5749, %v5753
          %v5755 = vunpack.c.l.b16 %v5544
          %v5756 = vunpack.c.l.b16 %v5558
          %v5757 = vunpack.c.l.b16 %v5572
          %v5758 = vunpack.c.l.b16 %v5586
          %v5759 = vunpack.c.l.b16 %v5600
          %v5760 = vunpack.c.l.b16 %v5614
          %v5761 = vunpack.c.l.b16 %v5628
          %v5762 = vunpack.c.l.b16 %v5642
          %v5763 = vunpack.c.l.b16 %v5656
          %v5764 = vunpack.c.l.b16 %v5670
          %v5765 = vunpack.c.l.b16 %v5684
          %v5766 = vunpack.c.l.b16 %v5698
          %v5767 = vunpack.c.l.b16 %v5712
          %v5768 = vunpack.c.l.b16 %v5726
          %v5769 = vunpack.c.l.b16 %v5740
          %v5770 = vunpack.c.l.b16 %v5754
          %v5771 = vpack.c.b16 %v5756, %v5755
          %v5772 = vpack.c.b16 %v5758, %v5757
          %v5773 = vpack.c.b16 %v5760, %v5759
          %v5774 = vpack.c.b16 %v5762, %v5761
          %v5775 = vpack.c.b16 %v5764, %v5763
          %v5776 = vpack.c.b16 %v5766, %v5765
          %v5777 = vpack.c.b16 %v5768, %v5767
          %v5778 = vpack.c.b16 %v5770, %v5769
          %5779 = vrot.lane.b32.xlu0 %v5771, 32
          %v5780 = vpop.permute.xlu0 %5779
          %5781 = vrot.lane.b32.xlu0 %v5772, 32
          %v5782 = vpop.permute.xlu0 %5781
          %5783 = vrot.lane.b32.xlu0 %v5773, 32
          %v5784 = vpop.permute.xlu0 %5783
          %5785 = vrot.lane.b32.xlu0 %v5774, 32
          %v5786 = vpop.permute.xlu0 %5785
          %5787 = vrot.lane.b32.xlu0 %v5775, 32
          %v5788 = vpop.permute.xlu0 %5787
          %5789 = vrot.lane.b32.xlu0 %v5776, 32
          %v5790 = vpop.permute.xlu0 %5789
          %5791 = vrot.lane.b32.xlu0 %v5777, 32
          %v5792 = vpop.permute.xlu0 %5791
          %5793 = vrot.lane.b32.xlu0 %v5778, 32
          %v5794 = vpop.permute.xlu0 %5793
          %vm5803 = vcmask 523520
          %5804 = vst.msk [vmem:[#allocation6] sm:$0xff] %vm5803, %v5780
          %5805 = vst.msk [vmem:[#allocation6 + $0x38] sm:$0xff] %vm5803, %v5782
          %5806 = vst.msk [vmem:[#allocation6 + $0x70] sm:$0xff] %vm5803, %v5784
          %5807 = vst.msk [vmem:[#allocation6 + $0xa8] sm:$0xff] %vm5803, %v5786
          %5808 = vst.msk [vmem:[#allocation6 + $0xe0] sm:$0xff] %vm5803, %v5788
          %5809 = vst.msk [vmem:[#allocation6 + $0x118] sm:$0xff] %vm5803, %v5790
          %5810 = vst.msk [vmem:[#allocation6 + $0x150] sm:$0xff] %vm5803, %v5792
          %5811 = vst.msk [vmem:[#allocation6 + $0x188] sm:$0xff] %vm5803, %v5794
          %v5812 = vld [vmem:[#allocation5] sm:$0xe]
          %v5813 = vld [vmem:[#allocation5 + $0x4] sm:$0x1]
          %v5814 = vld [vmem:[#allocation5 + $0x8] sm:$0xe]
          %v5815 = vld [vmem:[#allocation5 + $0xc] sm:$0x1]
          %v5816 = vld [vmem:[#allocation5 + $0x10] sm:$0xe]
          %v5817 = vld [vmem:[#allocation5 + $0x14] sm:$0x1]
          %v5818 = vld [vmem:[#allocation5 + $0x18] sm:$0xe]
          %v5819 = vld [vmem:[#allocation5 + $0x1c] sm:$0x1]
          %v5820 = vld [vmem:[#allocation5 + $0x20] sm:$0xe]
          %v5821 = vld [vmem:[#allocation5 + $0x24] sm:$0x1]
          %v5822 = vld [vmem:[#allocation5 + $0x28] sm:$0xe]
          %v5823 = vld [vmem:[#allocation5 + $0x2c] sm:$0x1]
          %v5824 = vld [vmem:[#allocation5 + $0x30] sm:$0xe]
          %v5825 = vld [vmem:[#allocation5 + $0x34] sm:$0x1]
          %v5826 = vld [vmem:[#allocation5 + $0x38] sm:$0xe]
          %v5827 = vld [vmem:[#allocation5 + $0x3c] sm:$0x1]
          %v5828 = vld [vmem:[#allocation5 + $0x60] sm:$0xe]
          %v5829 = vld [vmem:[#allocation5 + $0x64] sm:$0x1]
          %v5830 = vld [vmem:[#allocation5 + $0x68] sm:$0xe]
          %v5831 = vld [vmem:[#allocation5 + $0x6c] sm:$0x1]
          %v5832 = vld [vmem:[#allocation5 + $0x70] sm:$0xe]
          %v5833 = vld [vmem:[#allocation5 + $0x74] sm:$0x1]
          %v5834 = vld [vmem:[#allocation5 + $0x78] sm:$0xe]
          %v5835 = vld [vmem:[#allocation5 + $0x7c] sm:$0x1]
          %v5836 = vld [vmem:[#allocation5 + $0x80] sm:$0xe]
          %v5837 = vld [vmem:[#allocation5 + $0x84] sm:$0x1]
          %v5838 = vld [vmem:[#allocation5 + $0x88] sm:$0xe]
          %v5839 = vld [vmem:[#allocation5 + $0x8c] sm:$0x1]
          %v5840 = vld [vmem:[#allocation5 + $0x90] sm:$0xe]
          %v5841 = vld [vmem:[#allocation5 + $0x94] sm:$0x1]
          %v5842 = vld [vmem:[#allocation5 + $0x98] sm:$0xe]
          %v5843 = vld [vmem:[#allocation5 + $0x9c] sm:$0x1]
          %vm5876 = vcmask 1042432
          %vm5877 = vcmask 1046532
          %vm5878 = vmor %vm5876, %vm5877
          %v5879 = vrot.slane %v5812, 5
          %v5880 = vrot.slane %v5879, 4
          %v5881 = vrot.slane %v5813, 5
          %v5882 = vsel %vm5878, %v5880, %v5881
          %v5883 = vrot.slane %v5814, 5
          %v5884 = vrot.slane %v5883, 4
          %v5885 = vrot.slane %v5815, 5
          %v5886 = vsel %vm5878, %v5884, %v5885
          %v5887 = vrot.slane %v5816, 5
          %v5888 = vrot.slane %v5887, 4
          %v5889 = vrot.slane %v5817, 5
          %v5890 = vsel %vm5878, %v5888, %v5889
          %v5891 = vrot.slane %v5818, 5
          %v5892 = vrot.slane %v5891, 4
          %v5893 = vrot.slane %v5819, 5
          %v5894 = vsel %vm5878, %v5892, %v5893
          %v5895 = vrot.slane %v5820, 5
          %v5896 = vrot.slane %v5895, 4
          %v5897 = vrot.slane %v5821, 5
          %v5898 = vsel %vm5878, %v5896, %v5897
          %v5899 = vrot.slane %v5822, 5
          %v5900 = vrot.slane %v5899, 4
          %v5901 = vrot.slane %v5823, 5
          %v5902 = vsel %vm5878, %v5900, %v5901
          %v5903 = vrot.slane %v5824, 5
          %v5904 = vrot.slane %v5903, 4
          %v5905 = vrot.slane %v5825, 5
          %v5906 = vsel %vm5878, %v5904, %v5905
          %v5907 = vrot.slane %v5826, 5
          %v5908 = vrot.slane %v5907, 4
          %v5909 = vrot.slane %v5827, 5
          %v5910 = vsel %vm5878, %v5908, %v5909
          %v5911 = vrot.slane %v5828, 5
          %v5912 = vrot.slane %v5911, 4
          %v5913 = vrot.slane %v5829, 5
          %v5914 = vsel %vm5878, %v5912, %v5913
          %v5915 = vrot.slane %v5830, 5
          %v5916 = vrot.slane %v5915, 4
          %v5917 = vrot.slane %v5831, 5
          %v5918 = vsel %vm5878, %v5916, %v5917
          %v5919 = vrot.slane %v5832, 5
          %v5920 = vrot.slane %v5919, 4
          %v5921 = vrot.slane %v5833, 5
          %v5922 = vsel %vm5878, %v5920, %v5921
          %v5923 = vrot.slane %v5834, 5
          %v5924 = vrot.slane %v5923, 4
          %v5925 = vrot.slane %v5835, 5
          %v5926 = vsel %vm5878, %v5924, %v5925
          %v5927 = vrot.slane %v5836, 5
          %v5928 = vrot.slane %v5927, 4
          %v5929 = vrot.slane %v5837, 5
          %v5930 = vsel %vm5878, %v5928, %v5929
          %v5931 = vrot.slane %v5838, 5
          %v5932 = vrot.slane %v5931, 4
          %v5933 = vrot.slane %v5839, 5
          %v5934 = vsel %vm5878, %v5932, %v5933
          %v5935 = vrot.slane %v5840, 5
          %v5936 = vrot.slane %v5935, 4
          %v5937 = vrot.slane %v5841, 5
          %v5938 = vsel %vm5878, %v5936, %v5937
          %v5939 = vrot.slane %v5842, 5
          %v5940 = vrot.slane %v5939, 4
          %v5941 = vrot.slane %v5843, 5
          %v5942 = vsel %vm5878, %v5940, %v5941
          %v5943 = vunpack.c.l.b16 %v5882
          %v5944 = vunpack.c.l.b16 %v5886
          %v5945 = vunpack.c.l.b16 %v5890
          %v5946 = vunpack.c.l.b16 %v5894
          %v5947 = vunpack.c.l.b16 %v5898
          %v5948 = vunpack.c.l.b16 %v5902
          %v5949 = vunpack.c.l.b16 %v5906
          %v5950 = vunpack.c.l.b16 %v5910
          %v5951 = vunpack.c.l.b16 %v5914
          %v5952 = vunpack.c.l.b16 %v5918
          %v5953 = vunpack.c.l.b16 %v5922
          %v5954 = vunpack.c.l.b16 %v5926
          %v5955 = vunpack.c.l.b16 %v5930
          %v5956 = vunpack.c.l.b16 %v5934
          %v5957 = vunpack.c.l.b16 %v5938
          %v5958 = vunpack.c.l.b16 %v5942
          %v5959 = vpack.c.b16 %v5944, %v5943
          %v5960 = vpack.c.b16 %v5946, %v5945
          %v5961 = vpack.c.b16 %v5948, %v5947
          %v5962 = vpack.c.b16 %v5950, %v5949
          %v5963 = vpack.c.b16 %v5952, %v5951
          %v5964 = vpack.c.b16 %v5954, %v5953
          %v5965 = vpack.c.b16 %v5956, %v5955
          %v5966 = vpack.c.b16 %v5958, %v5957
          %5967 = vrot.lane.b32.xlu0 %v5959, 64
          %v5968 = vpop.permute.xlu0 %5967
          %5969 = vrot.lane.b32.xlu0 %v5960, 64
          %v5970 = vpop.permute.xlu0 %5969
          %5971 = vrot.lane.b32.xlu0 %v5961, 64
          %v5972 = vpop.permute.xlu0 %5971
          %5973 = vrot.lane.b32.xlu0 %v5962, 64
          %v5974 = vpop.permute.xlu0 %5973
          %5975 = vrot.lane.b32.xlu0 %v5963, 64
          %v5976 = vpop.permute.xlu0 %5975
          %5977 = vrot.lane.b32.xlu0 %v5964, 64
          %v5978 = vpop.permute.xlu0 %5977
          %5979 = vrot.lane.b32.xlu0 %v5965, 64
          %v5980 = vpop.permute.xlu0 %5979
          %5981 = vrot.lane.b32.xlu0 %v5966, 64
          %v5982 = vpop.permute.xlu0 %5981
          %vm5991 = vcmask 785920
          %5992 = vst.msk [vmem:[#allocation6] sm:$0xff] %vm5991, %v5968
          %5993 = vst.msk [vmem:[#allocation6 + $0x38] sm:$0xff] %vm5991, %v5970
          %5994 = vst.msk [vmem:[#allocation6 + $0x70] sm:$0xff] %vm5991, %v5972
          %5995 = vst.msk [vmem:[#allocation6 + $0xa8] sm:$0xff] %vm5991, %v5974
          %5996 = vst.msk [vmem:[#allocation6 + $0xe0] sm:$0xff] %vm5991, %v5976
          %5997 = vst.msk [vmem:[#allocation6 + $0x118] sm:$0xff] %vm5991, %v5978
          %5998 = vst.msk [vmem:[#allocation6 + $0x150] sm:$0xff] %vm5991, %v5980
          %5999 = vst.msk [vmem:[#allocation6 + $0x188] sm:$0xff] %vm5991, %v5982
          %v6000 = vld [vmem:[#allocation5] sm:$0xe]
          %v6001 = vld [vmem:[#allocation5 + $0x4] sm:$0x3]
          %v6002 = vld [vmem:[#allocation5 + $0x8] sm:$0xe]
          %v6003 = vld [vmem:[#allocation5 + $0xc] sm:$0x3]
          %v6004 = vld [vmem:[#allocation5 + $0x10] sm:$0xe]
          %v6005 = vld [vmem:[#allocation5 + $0x14] sm:$0x3]
          %v6006 = vld [vmem:[#allocation5 + $0x18] sm:$0xe]
          %v6007 = vld [vmem:[#allocation5 + $0x1c] sm:$0x3]
          %v6008 = vld [vmem:[#allocation5 + $0x20] sm:$0xe]
          %v6009 = vld [vmem:[#allocation5 + $0x24] sm:$0x3]
          %v6010 = vld [vmem:[#allocation5 + $0x28] sm:$0xe]
          %v6011 = vld [vmem:[#allocation5 + $0x2c] sm:$0x3]
          %v6012 = vld [vmem:[#allocation5 + $0x30] sm:$0xe]
          %v6013 = vld [vmem:[#allocation5 + $0x34] sm:$0x3]
          %v6014 = vld [vmem:[#allocation5 + $0x38] sm:$0xe]
          %v6015 = vld [vmem:[#allocation5 + $0x3c] sm:$0x3]
          %v6016 = vld [vmem:[#allocation5 + $0x60] sm:$0xe]
          %v6017 = vld [vmem:[#allocation5 + $0x64] sm:$0x3]
          %v6018 = vld [vmem:[#allocation5 + $0x68] sm:$0xe]
          %v6019 = vld [vmem:[#allocation5 + $0x6c] sm:$0x3]
          %v6020 = vld [vmem:[#allocation5 + $0x70] sm:$0xe]
          %v6021 = vld [vmem:[#allocation5 + $0x74] sm:$0x3]
          %v6022 = vld [vmem:[#allocation5 + $0x78] sm:$0xe]
          %v6023 = vld [vmem:[#allocation5 + $0x7c] sm:$0x3]
          %v6024 = vld [vmem:[#allocation5 + $0x80] sm:$0xe]
          %v6025 = vld [vmem:[#allocation5 + $0x84] sm:$0x3]
          %v6026 = vld [vmem:[#allocation5 + $0x88] sm:$0xe]
          %v6027 = vld [vmem:[#allocation5 + $0x8c] sm:$0x3]
          %v6028 = vld [vmem:[#allocation5 + $0x90] sm:$0xe]
          %v6029 = vld [vmem:[#allocation5 + $0x94] sm:$0x3]
          %v6030 = vld [vmem:[#allocation5 + $0x98] sm:$0xe]
          %v6031 = vld [vmem:[#allocation5 + $0x9c] sm:$0x3]
          %vm6032 = vsmask.f32 2304
          %vm6033 = vsmask.f32 6416
          %vm6034 = vmor %vm6032, %vm6033
          %v6036 = vshrl.u32 %v6000, 16
          %v6038 = vrot.slane %v6036, 5
          %v6039 = vshll.u32 %v6000, 16
          %v6041 = vrot.slane %v6039, 6
          %v6042 = vor.u32 %v6038, %v6041
          %v6043 = vrot.slane %v6042, 4
          %v6045 = vshrl.u32 %v6001, 16
          %v6047 = vrot.slane %v6045, 5
          %v6048 = vshll.u32 %v6001, 16
          %v6050 = vrot.slane %v6048, 6
          %v6051 = vor.u32 %v6047, %v6050
          %v6052 = vsel %vm6034, %v6043, %v6051
          %v6054 = vshrl.u32 %v6002, 16
          %v6056 = vrot.slane %v6054, 5
          %v6057 = vshll.u32 %v6002, 16
          %v6059 = vrot.slane %v6057, 6
          %v6060 = vor.u32 %v6056, %v6059
          %v6061 = vrot.slane %v6060, 4
          %v6063 = vshrl.u32 %v6003, 16
          %v6065 = vrot.slane %v6063, 5
          %v6066 = vshll.u32 %v6003, 16
          %v6068 = vrot.slane %v6066, 6
          %v6069 = vor.u32 %v6065, %v6068
          %v6070 = vsel %vm6034, %v6061, %v6069
          %v6072 = vshrl.u32 %v6004, 16
          %v6074 = vrot.slane %v6072, 5
          %v6075 = vshll.u32 %v6004, 16
          %v6077 = vrot.slane %v6075, 6
          %v6078 = vor.u32 %v6074, %v6077
          %v6079 = vrot.slane %v6078, 4
          %v6081 = vshrl.u32 %v6005, 16
          %v6083 = vrot.slane %v6081, 5
          %v6084 = vshll.u32 %v6005, 16
          %v6086 = vrot.slane %v6084, 6
          %v6087 = vor.u32 %v6083, %v6086
          %v6088 = vsel %vm6034, %v6079, %v6087
          %v6090 = vshrl.u32 %v6006, 16
          %v6092 = vrot.slane %v6090, 5
          %v6093 = vshll.u32 %v6006, 16
          %v6095 = vrot.slane %v6093, 6
          %v6096 = vor.u32 %v6092, %v6095
          %v6097 = vrot.slane %v6096, 4
          %v6099 = vshrl.u32 %v6007, 16
          %v6101 = vrot.slane %v6099, 5
          %v6102 = vshll.u32 %v6007, 16
          %v6104 = vrot.slane %v6102, 6
          %v6105 = vor.u32 %v6101, %v6104
          %v6106 = vsel %vm6034, %v6097, %v6105
          %v6108 = vshrl.u32 %v6008, 16
          %v6110 = vrot.slane %v6108, 5
          %v6111 = vshll.u32 %v6008, 16
          %v6113 = vrot.slane %v6111, 6
          %v6114 = vor.u32 %v6110, %v6113
          %v6115 = vrot.slane %v6114, 4
          %v6117 = vshrl.u32 %v6009, 16
          %v6119 = vrot.slane %v6117, 5
          %v6120 = vshll.u32 %v6009, 16
          %v6122 = vrot.slane %v6120, 6
          %v6123 = vor.u32 %v6119, %v6122
          %v6124 = vsel %vm6034, %v6115, %v6123
          %v6126 = vshrl.u32 %v6010, 16
          %v6128 = vrot.slane %v6126, 5
          %v6129 = vshll.u32 %v6010, 16
          %v6131 = vrot.slane %v6129, 6
          %v6132 = vor.u32 %v6128, %v6131
          %v6133 = vrot.slane %v6132, 4
          %v6135 = vshrl.u32 %v6011, 16
          %v6137 = vrot.slane %v6135, 5
          %v6138 = vshll.u32 %v6011, 16
          %v6140 = vrot.slane %v6138, 6
          %v6141 = vor.u32 %v6137, %v6140
          %v6142 = vsel %vm6034, %v6133, %v6141
          %v6144 = vshrl.u32 %v6012, 16
          %v6146 = vrot.slane %v6144, 5
          %v6147 = vshll.u32 %v6012, 16
          %v6149 = vrot.slane %v6147, 6
          %v6150 = vor.u32 %v6146, %v6149
          %v6151 = vrot.slane %v6150, 4
          %v6153 = vshrl.u32 %v6013, 16
          %v6155 = vrot.slane %v6153, 5
          %v6156 = vshll.u32 %v6013, 16
          %v6158 = vrot.slane %v6156, 6
          %v6159 = vor.u32 %v6155, %v6158
          %v6160 = vsel %vm6034, %v6151, %v6159
          %v6162 = vshrl.u32 %v6014, 16
          %v6164 = vrot.slane %v6162, 5
          %v6165 = vshll.u32 %v6014, 16
          %v6167 = vrot.slane %v6165, 6
          %v6168 = vor.u32 %v6164, %v6167
          %v6169 = vrot.slane %v6168, 4
          %v6171 = vshrl.u32 %v6015, 16
          %v6173 = vrot.slane %v6171, 5
          %v6174 = vshll.u32 %v6015, 16
          %v6176 = vrot.slane %v6174, 6
          %v6177 = vor.u32 %v6173, %v6176
          %v6178 = vsel %vm6034, %v6169, %v6177
          %v6180 = vshrl.u32 %v6016, 16
          %v6182 = vrot.slane %v6180, 5
          %v6183 = vshll.u32 %v6016, 16
          %v6185 = vrot.slane %v6183, 6
          %v6186 = vor.u32 %v6182, %v6185
          %v6187 = vrot.slane %v6186, 4
          %v6189 = vshrl.u32 %v6017, 16
          %v6191 = vrot.slane %v6189, 5
          %v6192 = vshll.u32 %v6017, 16
          %v6194 = vrot.slane %v6192, 6
          %v6195 = vor.u32 %v6191, %v6194
          %v6196 = vsel %vm6034, %v6187, %v6195
          %v6198 = vshrl.u32 %v6018, 16
          %v6200 = vrot.slane %v6198, 5
          %v6201 = vshll.u32 %v6018, 16
          %v6203 = vrot.slane %v6201, 6
          %v6204 = vor.u32 %v6200, %v6203
          %v6205 = vrot.slane %v6204, 4
          %v6207 = vshrl.u32 %v6019, 16
          %v6209 = vrot.slane %v6207, 5
          %v6210 = vshll.u32 %v6019, 16
          %v6212 = vrot.slane %v6210, 6
          %v6213 = vor.u32 %v6209, %v6212
          %v6214 = vsel %vm6034, %v6205, %v6213
          %v6216 = vshrl.u32 %v6020, 16
          %v6218 = vrot.slane %v6216, 5
          %v6219 = vshll.u32 %v6020, 16
          %v6221 = vrot.slane %v6219, 6
          %v6222 = vor.u32 %v6218, %v6221
          %v6223 = vrot.slane %v6222, 4
          %v6225 = vshrl.u32 %v6021, 16
          %v6227 = vrot.slane %v6225, 5
          %v6228 = vshll.u32 %v6021, 16
          %v6230 = vrot.slane %v6228, 6
          %v6231 = vor.u32 %v6227, %v6230
          %v6232 = vsel %vm6034, %v6223, %v6231
          %v6234 = vshrl.u32 %v6022, 16
          %v6236 = vrot.slane %v6234, 5
          %v6237 = vshll.u32 %v6022, 16
          %v6239 = vrot.slane %v6237, 6
          %v6240 = vor.u32 %v6236, %v6239
          %v6241 = vrot.slane %v6240, 4
          %v6243 = vshrl.u32 %v6023, 16
          %v6245 = vrot.slane %v6243, 5
          %v6246 = vshll.u32 %v6023, 16
          %v6248 = vrot.slane %v6246, 6
          %v6249 = vor.u32 %v6245, %v6248
          %v6250 = vsel %vm6034, %v6241, %v6249
          %v6252 = vshrl.u32 %v6024, 16
          %v6254 = vrot.slane %v6252, 5
          %v6255 = vshll.u32 %v6024, 16
          %v6257 = vrot.slane %v6255, 6
          %v6258 = vor.u32 %v6254, %v6257
          %v6259 = vrot.slane %v6258, 4
          %v6261 = vshrl.u32 %v6025, 16
          %v6263 = vrot.slane %v6261, 5
          %v6264 = vshll.u32 %v6025, 16
          %v6266 = vrot.slane %v6264, 6
          %v6267 = vor.u32 %v6263, %v6266
          %v6268 = vsel %vm6034, %v6259, %v6267
          %v6270 = vshrl.u32 %v6026, 16
          %v6272 = vrot.slane %v6270, 5
          %v6273 = vshll.u32 %v6026, 16
          %v6275 = vrot.slane %v6273, 6
          %v6276 = vor.u32 %v6272, %v6275
          %v6277 = vrot.slane %v6276, 4
          %v6279 = vshrl.u32 %v6027, 16
          %v6281 = vrot.slane %v6279, 5
          %v6282 = vshll.u32 %v6027, 16
          %v6284 = vrot.slane %v6282, 6
          %v6285 = vor.u32 %v6281, %v6284
          %v6286 = vsel %vm6034, %v6277, %v6285
          %v6288 = vshrl.u32 %v6028, 16
          %v6290 = vrot.slane %v6288, 5
          %v6291 = vshll.u32 %v6028, 16
          %v6293 = vrot.slane %v6291, 6
          %v6294 = vor.u32 %v6290, %v6293
          %v6295 = vrot.slane %v6294, 4
          %v6297 = vshrl.u32 %v6029, 16
          %v6299 = vrot.slane %v6297, 5
          %v6300 = vshll.u32 %v6029, 16
          %v6302 = vrot.slane %v6300, 6
          %v6303 = vor.u32 %v6299, %v6302
          %v6304 = vsel %vm6034, %v6295, %v6303
          %v6306 = vshrl.u32 %v6030, 16
          %v6308 = vrot.slane %v6306, 5
          %v6309 = vshll.u32 %v6030, 16
          %v6311 = vrot.slane %v6309, 6
          %v6312 = vor.u32 %v6308, %v6311
          %v6313 = vrot.slane %v6312, 4
          %v6315 = vshrl.u32 %v6031, 16
          %v6317 = vrot.slane %v6315, 5
          %v6318 = vshll.u32 %v6031, 16
          %v6320 = vrot.slane %v6318, 6
          %v6321 = vor.u32 %v6317, %v6320
          %v6322 = vsel %vm6034, %v6313, %v6321
          %v6323 = vunpack.c.l.b16 %v6052
          %v6324 = vunpack.c.l.b16 %v6070
          %v6325 = vunpack.c.l.b16 %v6088
          %v6326 = vunpack.c.l.b16 %v6106
          %v6327 = vunpack.c.l.b16 %v6124
          %v6328 = vunpack.c.l.b16 %v6142
          %v6329 = vunpack.c.l.b16 %v6160
          %v6330 = vunpack.c.l.b16 %v6178
          %v6331 = vunpack.c.l.b16 %v6196
          %v6332 = vunpack.c.l.b16 %v6214
          %v6333 = vunpack.c.l.b16 %v6232
          %v6334 = vunpack.c.l.b16 %v6250
          %v6335 = vunpack.c.l.b16 %v6268
          %v6336 = vunpack.c.l.b16 %v6286
          %v6337 = vunpack.c.l.b16 %v6304
          %v6338 = vunpack.c.l.b16 %v6322
          %v6339 = vpack.c.b16 %v6324, %v6323
          %v6340 = vpack.c.b16 %v6326, %v6325
          %v6341 = vpack.c.b16 %v6328, %v6327
          %v6342 = vpack.c.b16 %v6330, %v6329
          %v6343 = vpack.c.b16 %v6332, %v6331
          %v6344 = vpack.c.b16 %v6334, %v6333
          %v6345 = vpack.c.b16 %v6336, %v6335
          %v6346 = vpack.c.b16 %v6338, %v6337
          %6347 = vrot.lane.b32.xlu0 %v6339, 96
          %v6348 = vpop.permute.xlu0 %6347
          %6349 = vrot.lane.b32.xlu0 %v6340, 96
          %v6350 = vpop.permute.xlu0 %6349
          %6351 = vrot.lane.b32.xlu0 %v6341, 96
          %v6352 = vpop.permute.xlu0 %6351
          %6353 = vrot.lane.b32.xlu0 %v6342, 96
          %v6354 = vpop.permute.xlu0 %6353
          %6355 = vrot.lane.b32.xlu0 %v6343, 96
          %v6356 = vpop.permute.xlu0 %6355
          %6357 = vrot.lane.b32.xlu0 %v6344, 96
          %v6358 = vpop.permute.xlu0 %6357
          %6359 = vrot.lane.b32.xlu0 %v6345, 96
          %v6360 = vpop.permute.xlu0 %6359
          %6361 = vrot.lane.b32.xlu0 %v6346, 96
          %v6362 = vpop.permute.xlu0 %6361
          %vm6371 = vcmask 1048320
          %6372 = vst.msk [vmem:[#allocation6] sm:$0xff] %vm6371, %v6348
          %6373 = vst.msk [vmem:[#allocation6 + $0x38] sm:$0xff] %vm6371, %v6350
          %6374 = vst.msk [vmem:[#allocation6 + $0x70] sm:$0xff] %vm6371, %v6352
          %6375 = vst.msk [vmem:[#allocation6 + $0xa8] sm:$0xff] %vm6371, %v6354
          %6376 = vst.msk [vmem:[#allocation6 + $0xe0] sm:$0xff] %vm6371, %v6356
          %6377 = vst.msk [vmem:[#allocation6 + $0x118] sm:$0xff] %vm6371, %v6358
          %6378 = vst.msk [vmem:[#allocation6 + $0x150] sm:$0xff] %vm6371, %v6360
          %6379 = vst.msk [vmem:[#allocation6 + $0x188] sm:$0xff] %vm6371, %v6362
          %v6380 = vld [vmem:[#allocation5] sm:$0xc]
          %v6381 = vld [vmem:[#allocation5 + $0x4] sm:$0x3]
          %v6382 = vld [vmem:[#allocation5 + $0x8] sm:$0xc]
          %v6383 = vld [vmem:[#allocation5 + $0xc] sm:$0x3]
          %v6384 = vld [vmem:[#allocation5 + $0x10] sm:$0xc]
          %v6385 = vld [vmem:[#allocation5 + $0x14] sm:$0x3]
          %v6386 = vld [vmem:[#allocation5 + $0x18] sm:$0xc]
          %v6387 = vld [vmem:[#allocation5 + $0x1c] sm:$0x3]
          %v6388 = vld [vmem:[#allocation5 + $0x20] sm:$0xc]
          %v6389 = vld [vmem:[#allocation5 + $0x24] sm:$0x3]
          %v6390 = vld [vmem:[#allocation5 + $0x28] sm:$0xc]
          %v6391 = vld [vmem:[#allocation5 + $0x2c] sm:$0x3]
          %v6392 = vld [vmem:[#allocation5 + $0x30] sm:$0xc]
          %v6393 = vld [vmem:[#allocation5 + $0x34] sm:$0x3]
          %v6394 = vld [vmem:[#allocation5 + $0x38] sm:$0xc]
          %v6395 = vld [vmem:[#allocation5 + $0x3c] sm:$0x3]
          %v6396 = vld [vmem:[#allocation5 + $0x60] sm:$0xc]
          %v6397 = vld [vmem:[#allocation5 + $0x64] sm:$0x3]
          %v6398 = vld [vmem:[#allocation5 + $0x68] sm:$0xc]
          %v6399 = vld [vmem:[#allocation5 + $0x6c] sm:$0x3]
          %v6400 = vld [vmem:[#allocation5 + $0x70] sm:$0xc]
          %v6401 = vld [vmem:[#allocation5 + $0x74] sm:$0x3]
          %v6402 = vld [vmem:[#allocation5 + $0x78] sm:$0xc]
          %v6403 = vld [vmem:[#allocation5 + $0x7c] sm:$0x3]
          %v6404 = vld [vmem:[#allocation5 + $0x80] sm:$0xc]
          %v6405 = vld [vmem:[#allocation5 + $0x84] sm:$0x3]
          %v6406 = vld [vmem:[#allocation5 + $0x88] sm:$0xc]
          %v6407 = vld [vmem:[#allocation5 + $0x8c] sm:$0x3]
          %v6408 = vld [vmem:[#allocation5 + $0x90] sm:$0xc]
          %v6409 = vld [vmem:[#allocation5 + $0x94] sm:$0x3]
          %v6410 = vld [vmem:[#allocation5 + $0x98] sm:$0xc]
          %v6411 = vld [vmem:[#allocation5 + $0x9c] sm:$0x3]
          %vm6444 = vcmask 1041408
          %vm6445 = vcmask 1045508
          %vm6446 = vmor %vm6444, %vm6445
          %v6447 = vrot.slane %v6380, 6
          %v6448 = vrot.slane %v6447, 4
          %v6449 = vrot.slane %v6381, 6
          %v6450 = vsel %vm6446, %v6448, %v6449
          %v6451 = vrot.slane %v6382, 6
          %v6452 = vrot.slane %v6451, 4
          %v6453 = vrot.slane %v6383, 6
          %v6454 = vsel %vm6446, %v6452, %v6453
          %v6455 = vrot.slane %v6384, 6
          %v6456 = vrot.slane %v6455, 4
          %v6457 = vrot.slane %v6385, 6
          %v6458 = vsel %vm6446, %v6456, %v6457
          %v6459 = vrot.slane %v6386, 6
          %v6460 = vrot.slane %v6459, 4
          %v6461 = vrot.slane %v6387, 6
          %v6462 = vsel %vm6446, %v6460, %v6461
          %v6463 = vrot.slane %v6388, 6
          %v6464 = vrot.slane %v6463, 4
          %v6465 = vrot.slane %v6389, 6
          %v6466 = vsel %vm6446, %v6464, %v6465
          %v6467 = vrot.slane %v6390, 6
          %v6468 = vrot.slane %v6467, 4
          %v6469 = vrot.slane %v6391, 6
          %v6470 = vsel %vm6446, %v6468, %v6469
          %v6471 = vrot.slane %v6392, 6
          %v6472 = vrot.slane %v6471, 4
          %v6473 = vrot.slane %v6393, 6
          %v6474 = vsel %vm6446, %v6472, %v6473
          %v6475 = vrot.slane %v6394, 6
          %v6476 = vrot.slane %v6475, 4
          %v6477 = vrot.slane %v6395, 6
          %v6478 = vsel %vm6446, %v6476, %v6477
          %v6479 = vrot.slane %v6396, 6
          %v6480 = vrot.slane %v6479, 4
          %v6481 = vrot.slane %v6397, 6
          %v6482 = vsel %vm6446, %v6480, %v6481
          %v6483 = vrot.slane %v6398, 6
          %v6484 = vrot.slane %v6483, 4
          %v6485 = vrot.slane %v6399, 6
          %v6486 = vsel %vm6446, %v6484, %v6485
          %v6487 = vrot.slane %v6400, 6
          %v6488 = vrot.slane %v6487, 4
          %v6489 = vrot.slane %v6401, 6
          %v6490 = vsel %vm6446, %v6488, %v6489
          %v6491 = vrot.slane %v6402, 6
          %v6492 = vrot.slane %v6491, 4
          %v6493 = vrot.slane %v6403, 6
          %v6494 = vsel %vm6446, %v6492, %v6493
          %v6495 = vrot.slane %v6404, 6
          %v6496 = vrot.slane %v6495, 4
          %v6497 = vrot.slane %v6405, 6
          %v6498 = vsel %vm6446, %v6496, %v6497
          %v6499 = vrot.slane %v6406, 6
          %v6500 = vrot.slane %v6499, 4
          %v6501 = vrot.slane %v6407, 6
          %v6502 = vsel %vm6446, %v6500, %v6501
          %v6503 = vrot.slane %v6408, 6
          %v6504 = vrot.slane %v6503, 4
          %v6505 = vrot.slane %v6409, 6
          %v6506 = vsel %vm6446, %v6504, %v6505
          %v6507 = vrot.slane %v6410, 6
          %v6508 = vrot.slane %v6507, 4
          %v6509 = vrot.slane %v6411, 6
          %v6510 = vsel %vm6446, %v6508, %v6509
          %v6511 = vunpack.c.l.b16 %v6450
          %v6512 = vunpack.c.l.b16 %v6454
          %v6513 = vunpack.c.l.b16 %v6458
          %v6514 = vunpack.c.l.b16 %v6462
          %v6515 = vunpack.c.l.b16 %v6466
          %v6516 = vunpack.c.l.b16 %v6470
          %v6517 = vunpack.c.l.b16 %v6474
          %v6518 = vunpack.c.l.b16 %v6478
          %v6519 = vunpack.c.l.b16 %v6482
          %v6520 = vunpack.c.l.b16 %v6486
          %v6521 = vunpack.c.l.b16 %v6490
          %v6522 = vunpack.c.l.b16 %v6494
          %v6523 = vunpack.c.l.b16 %v6498
          %v6524 = vunpack.c.l.b16 %v6502
          %v6525 = vunpack.c.l.b16 %v6506
          %v6526 = vunpack.c.l.b16 %v6510
          %v6527 = vpack.c.b16 %v6512, %v6511
          %v6528 = vpack.c.b16 %v6514, %v6513
          %v6529 = vpack.c.b16 %v6516, %v6515
          %v6530 = vpack.c.b16 %v6518, %v6517
          %v6531 = vpack.c.b16 %v6520, %v6519
          %v6532 = vpack.c.b16 %v6522, %v6521
          %v6533 = vpack.c.b16 %v6524, %v6523
          %v6534 = vpack.c.b16 %v6526, %v6525
          %6543 = vst.msk [vmem:[#allocation6 + $0x8] sm:$0xff] %vm5487, %v6527
          %6544 = vst.msk [vmem:[#allocation6 + $0x40] sm:$0xff] %vm5487, %v6528
          %6545 = vst.msk [vmem:[#allocation6 + $0x78] sm:$0xff] %vm5487, %v6529
          %6546 = vst.msk [vmem:[#allocation6 + $0xb0] sm:$0xff] %vm5487, %v6530
          %6547 = vst.msk [vmem:[#allocation6 + $0xe8] sm:$0xff] %vm5487, %v6531
          %6548 = vst.msk [vmem:[#allocation6 + $0x120] sm:$0xff] %vm5487, %v6532
          %6549 = vst.msk [vmem:[#allocation6 + $0x158] sm:$0xff] %vm5487, %v6533
          %6550 = vst.msk [vmem:[#allocation6 + $0x190] sm:$0xff] %vm5487, %v6534
          %s6551 = scalar_lea.vmem [#allocation5], 8
          %v6552 = vld [vmem:[%s6551] sm:$0xf]
          %v6553 = vld [vmem:[%s6551 + $0x8] sm:$0xf]
          %v6554 = vld [vmem:[%s6551 + $0x10] sm:$0xf]
          %v6555 = vld [vmem:[%s6551 + $0x18] sm:$0xf]
          %v6556 = vld [vmem:[%s6551 + $0x20] sm:$0xf]
          %v6557 = vld [vmem:[%s6551 + $0x28] sm:$0xf]
          %v6558 = vld [vmem:[%s6551 + $0x30] sm:$0xf]
          %v6559 = vld [vmem:[%s6551 + $0x38] sm:$0xf]
          %v6560 = vld [vmem:[%s6551 + $0x60] sm:$0xf]
          %v6561 = vld [vmem:[%s6551 + $0x68] sm:$0xf]
          %v6562 = vld [vmem:[%s6551 + $0x70] sm:$0xf]
          %v6563 = vld [vmem:[%s6551 + $0x78] sm:$0xf]
          %v6564 = vld [vmem:[%s6551 + $0x80] sm:$0xf]
          %v6565 = vld [vmem:[%s6551 + $0x88] sm:$0xf]
          %v6566 = vld [vmem:[%s6551 + $0x90] sm:$0xf]
          %v6567 = vld [vmem:[%s6551 + $0x98] sm:$0xf]
          %v6584 = vunpack.c.l.b16 %v6552
          %v6585 = vunpack.c.l.b16 %v6553
          %v6586 = vunpack.c.l.b16 %v6554
          %v6587 = vunpack.c.l.b16 %v6555
          %v6588 = vunpack.c.l.b16 %v6556
          %v6589 = vunpack.c.l.b16 %v6557
          %v6590 = vunpack.c.l.b16 %v6558
          %v6591 = vunpack.c.l.b16 %v6559
          %v6592 = vunpack.c.l.b16 %v6560
          %v6593 = vunpack.c.l.b16 %v6561
          %v6594 = vunpack.c.l.b16 %v6562
          %v6595 = vunpack.c.l.b16 %v6563
          %v6596 = vunpack.c.l.b16 %v6564
          %v6597 = vunpack.c.l.b16 %v6565
          %v6598 = vunpack.c.l.b16 %v6566
          %v6599 = vunpack.c.l.b16 %v6567
          %v6600 = vpack.c.b16 %v6585, %v6584
          %v6601 = vpack.c.b16 %v6587, %v6586
          %v6602 = vpack.c.b16 %v6589, %v6588
          %v6603 = vpack.c.b16 %v6591, %v6590
          %v6604 = vpack.c.b16 %v6593, %v6592
          %v6605 = vpack.c.b16 %v6595, %v6594
          %v6606 = vpack.c.b16 %v6597, %v6596
          %v6607 = vpack.c.b16 %v6599, %v6598
          %6608 = vrot.lane.b32.xlu0 %v6600, 32
          %v6609 = vpop.permute.xlu0 %6608
          %6610 = vrot.lane.b32.xlu0 %v6601, 32
          %v6611 = vpop.permute.xlu0 %6610
          %6612 = vrot.lane.b32.xlu0 %v6602, 32
          %v6613 = vpop.permute.xlu0 %6612
          %6614 = vrot.lane.b32.xlu0 %v6603, 32
          %v6615 = vpop.permute.xlu0 %6614
          %6616 = vrot.lane.b32.xlu0 %v6604, 32
          %v6617 = vpop.permute.xlu0 %6616
          %6618 = vrot.lane.b32.xlu0 %v6605, 32
          %v6619 = vpop.permute.xlu0 %6618
          %6620 = vrot.lane.b32.xlu0 %v6606, 32
          %v6621 = vpop.permute.xlu0 %6620
          %6622 = vrot.lane.b32.xlu0 %v6607, 32
          %v6623 = vpop.permute.xlu0 %6622
          %6632 = vst.msk [vmem:[#allocation6 + $0x8] sm:$0xff] %vm5803, %v6609
          %6633 = vst.msk [vmem:[#allocation6 + $0x40] sm:$0xff] %vm5803, %v6611
          %6634 = vst.msk [vmem:[#allocation6 + $0x78] sm:$0xff] %vm5803, %v6613
          %6635 = vst.msk [vmem:[#allocation6 + $0xb0] sm:$0xff] %vm5803, %v6615
          %6636 = vst.msk [vmem:[#allocation6 + $0xe8] sm:$0xff] %vm5803, %v6617
          %6637 = vst.msk [vmem:[#allocation6 + $0x120] sm:$0xff] %vm5803, %v6619
          %6638 = vst.msk [vmem:[#allocation6 + $0x158] sm:$0xff] %vm5803, %v6621
          %6639 = vst.msk [vmem:[#allocation6 + $0x190] sm:$0xff] %vm5803, %v6623
          %v6640 = vld [vmem:[%s6551] sm:$0xf]
          %v6641 = vld [vmem:[%s6551 + $0x4] sm:$0x1]
          %v6642 = vld [vmem:[%s6551 + $0x8] sm:$0xf]
          %v6643 = vld [vmem:[%s6551 + $0xc] sm:$0x1]
          %v6644 = vld [vmem:[%s6551 + $0x10] sm:$0xf]
          %v6645 = vld [vmem:[%s6551 + $0x14] sm:$0x1]
          %v6646 = vld [vmem:[%s6551 + $0x18] sm:$0xf]
          %v6647 = vld [vmem:[%s6551 + $0x1c] sm:$0x1]
          %v6648 = vld [vmem:[%s6551 + $0x20] sm:$0xf]
          %v6649 = vld [vmem:[%s6551 + $0x24] sm:$0x1]
          %v6650 = vld [vmem:[%s6551 + $0x28] sm:$0xf]
          %v6651 = vld [vmem:[%s6551 + $0x2c] sm:$0x1]
          %v6652 = vld [vmem:[%s6551 + $0x30] sm:$0xf]
          %v6653 = vld [vmem:[%s6551 + $0x34] sm:$0x1]
          %v6654 = vld [vmem:[%s6551 + $0x38] sm:$0xf]
          %v6655 = vld [vmem:[%s6551 + $0x3c] sm:$0x1]
          %v6656 = vld [vmem:[%s6551 + $0x60] sm:$0xf]
          %v6657 = vld [vmem:[%s6551 + $0x64] sm:$0x1]
          %v6658 = vld [vmem:[%s6551 + $0x68] sm:$0xf]
          %v6659 = vld [vmem:[%s6551 + $0x6c] sm:$0x1]
          %v6660 = vld [vmem:[%s6551 + $0x70] sm:$0xf]
          %v6661 = vld [vmem:[%s6551 + $0x74] sm:$0x1]
          %v6662 = vld [vmem:[%s6551 + $0x78] sm:$0xf]
          %v6663 = vld [vmem:[%s6551 + $0x7c] sm:$0x1]
          %v6664 = vld [vmem:[%s6551 + $0x80] sm:$0xf]
          %v6665 = vld [vmem:[%s6551 + $0x84] sm:$0x1]
          %v6666 = vld [vmem:[%s6551 + $0x88] sm:$0xf]
          %v6667 = vld [vmem:[%s6551 + $0x8c] sm:$0x1]
          %v6668 = vld [vmem:[%s6551 + $0x90] sm:$0xf]
          %v6669 = vld [vmem:[%s6551 + $0x94] sm:$0x1]
          %v6670 = vld [vmem:[%s6551 + $0x98] sm:$0xf]
          %v6671 = vld [vmem:[%s6551 + $0x9c] sm:$0x1]
          %v6673 = vshrl.u32 %v6640, 16
          %v6675 = vrot.slane %v6673, 4
          %v6676 = vshll.u32 %v6640, 16
          %v6678 = vrot.slane %v6676, 5
          %v6679 = vor.u32 %v6675, %v6678
          %v6680 = vrot.slane %v6679, 4
          %v6682 = vshll.u32 %v6641, 16
          %v6684 = vrot.slane %v6682, 5
          %v6685 = vsel %vm5530, %v6680, %v6684
          %v6687 = vshrl.u32 %v6642, 16
          %v6689 = vrot.slane %v6687, 4
          %v6690 = vshll.u32 %v6642, 16
          %v6692 = vrot.slane %v6690, 5
          %v6693 = vor.u32 %v6689, %v6692
          %v6694 = vrot.slane %v6693, 4
          %v6696 = vshll.u32 %v6643, 16
          %v6698 = vrot.slane %v6696, 5
          %v6699 = vsel %vm5530, %v6694, %v6698
          %v6701 = vshrl.u32 %v6644, 16
          %v6703 = vrot.slane %v6701, 4
          %v6704 = vshll.u32 %v6644, 16
          %v6706 = vrot.slane %v6704, 5
          %v6707 = vor.u32 %v6703, %v6706
          %v6708 = vrot.slane %v6707, 4
          %v6710 = vshll.u32 %v6645, 16
          %v6712 = vrot.slane %v6710, 5
          %v6713 = vsel %vm5530, %v6708, %v6712
          %v6715 = vshrl.u32 %v6646, 16
          %v6717 = vrot.slane %v6715, 4
          %v6718 = vshll.u32 %v6646, 16
          %v6720 = vrot.slane %v6718, 5
          %v6721 = vor.u32 %v6717, %v6720
          %v6722 = vrot.slane %v6721, 4
          %v6724 = vshll.u32 %v6647, 16
          %v6726 = vrot.slane %v6724, 5
          %v6727 = vsel %vm5530, %v6722, %v6726
          %v6729 = vshrl.u32 %v6648, 16
          %v6731 = vrot.slane %v6729, 4
          %v6732 = vshll.u32 %v6648, 16
          %v6734 = vrot.slane %v6732, 5
          %v6735 = vor.u32 %v6731, %v6734
          %v6736 = vrot.slane %v6735, 4
          %v6738 = vshll.u32 %v6649, 16
          %v6740 = vrot.slane %v6738, 5
          %v6741 = vsel %vm5530, %v6736, %v6740
          %v6743 = vshrl.u32 %v6650, 16
          %v6745 = vrot.slane %v6743, 4
          %v6746 = vshll.u32 %v6650, 16
          %v6748 = vrot.slane %v6746, 5
          %v6749 = vor.u32 %v6745, %v6748
          %v6750 = vrot.slane %v6749, 4
          %v6752 = vshll.u32 %v6651, 16
          %v6754 = vrot.slane %v6752, 5
          %v6755 = vsel %vm5530, %v6750, %v6754
          %v6757 = vshrl.u32 %v6652, 16
          %v6759 = vrot.slane %v6757, 4
          %v6760 = vshll.u32 %v6652, 16
          %v6762 = vrot.slane %v6760, 5
          %v6763 = vor.u32 %v6759, %v6762
          %v6764 = vrot.slane %v6763, 4
          %v6766 = vshll.u32 %v6653, 16
          %v6768 = vrot.slane %v6766, 5
          %v6769 = vsel %vm5530, %v6764, %v6768
          %v6771 = vshrl.u32 %v6654, 16
          %v6773 = vrot.slane %v6771, 4
          %v6774 = vshll.u32 %v6654, 16
          %v6776 = vrot.slane %v6774, 5
          %v6777 = vor.u32 %v6773, %v6776
          %v6778 = vrot.slane %v6777, 4
          %v6780 = vshll.u32 %v6655, 16
          %v6782 = vrot.slane %v6780, 5
          %v6783 = vsel %vm5530, %v6778, %v6782
          %v6785 = vshrl.u32 %v6656, 16
          %v6787 = vrot.slane %v6785, 4
          %v6788 = vshll.u32 %v6656, 16
          %v6790 = vrot.slane %v6788, 5
          %v6791 = vor.u32 %v6787, %v6790
          %v6792 = vrot.slane %v6791, 4
          %v6794 = vshll.u32 %v6657, 16
          %v6796 = vrot.slane %v6794, 5
          %v6797 = vsel %vm5530, %v6792, %v6796
          %v6799 = vshrl.u32 %v6658, 16
          %v6801 = vrot.slane %v6799, 4
          %v6802 = vshll.u32 %v6658, 16
          %v6804 = vrot.slane %v6802, 5
          %v6805 = vor.u32 %v6801, %v6804
          %v6806 = vrot.slane %v6805, 4
          %v6808 = vshll.u32 %v6659, 16
          %v6810 = vrot.slane %v6808, 5
          %v6811 = vsel %vm5530, %v6806, %v6810
          %v6813 = vshrl.u32 %v6660, 16
          %v6815 = vrot.slane %v6813, 4
          %v6816 = vshll.u32 %v6660, 16
          %v6818 = vrot.slane %v6816, 5
          %v6819 = vor.u32 %v6815, %v6818
          %v6820 = vrot.slane %v6819, 4
          %v6822 = vshll.u32 %v6661, 16
          %v6824 = vrot.slane %v6822, 5
          %v6825 = vsel %vm5530, %v6820, %v6824
          %v6827 = vshrl.u32 %v6662, 16
          %v6829 = vrot.slane %v6827, 4
          %v6830 = vshll.u32 %v6662, 16
          %v6832 = vrot.slane %v6830, 5
          %v6833 = vor.u32 %v6829, %v6832
          %v6834 = vrot.slane %v6833, 4
          %v6836 = vshll.u32 %v6663, 16
          %v6838 = vrot.slane %v6836, 5
          %v6839 = vsel %vm5530, %v6834, %v6838
          %v6841 = vshrl.u32 %v6664, 16
          %v6843 = vrot.slane %v6841, 4
          %v6844 = vshll.u32 %v6664, 16
          %v6846 = vrot.slane %v6844, 5
          %v6847 = vor.u32 %v6843, %v6846
          %v6848 = vrot.slane %v6847, 4
          %v6850 = vshll.u32 %v6665, 16
          %v6852 = vrot.slane %v6850, 5
          %v6853 = vsel %vm5530, %v6848, %v6852
          %v6855 = vshrl.u32 %v6666, 16
          %v6857 = vrot.slane %v6855, 4
          %v6858 = vshll.u32 %v6666, 16
          %v6860 = vrot.slane %v6858, 5
          %v6861 = vor.u32 %v6857, %v6860
          %v6862 = vrot.slane %v6861, 4
          %v6864 = vshll.u32 %v6667, 16
          %v6866 = vrot.slane %v6864, 5
          %v6867 = vsel %vm5530, %v6862, %v6866
          %v6869 = vshrl.u32 %v6668, 16
          %v6871 = vrot.slane %v6869, 4
          %v6872 = vshll.u32 %v6668, 16
          %v6874 = vrot.slane %v6872, 5
          %v6875 = vor.u32 %v6871, %v6874
          %v6876 = vrot.slane %v6875, 4
          %v6878 = vshll.u32 %v6669, 16
          %v6880 = vrot.slane %v6878, 5
          %v6881 = vsel %vm5530, %v6876, %v6880
          %v6883 = vshrl.u32 %v6670, 16
          %v6885 = vrot.slane %v6883, 4
          %v6886 = vshll.u32 %v6670, 16
          %v6888 = vrot.slane %v6886, 5
          %v6889 = vor.u32 %v6885, %v6888
          %v6890 = vrot.slane %v6889, 4
          %v6892 = vshll.u32 %v6671, 16
          %v6894 = vrot.slane %v6892, 5
          %v6895 = vsel %vm5530, %v6890, %v6894
          %v6896 = vunpack.c.l.b16 %v6685
          %v6897 = vunpack.c.l.b16 %v6699
          %v6898 = vunpack.c.l.b16 %v6713
          %v6899 = vunpack.c.l.b16 %v6727
          %v6900 = vunpack.c.l.b16 %v6741
          %v6901 = vunpack.c.l.b16 %v6755
          %v6902 = vunpack.c.l.b16 %v6769
          %v6903 = vunpack.c.l.b16 %v6783
          %v6904 = vunpack.c.l.b16 %v6797
          %v6905 = vunpack.c.l.b16 %v6811
          %v6906 = vunpack.c.l.b16 %v6825
          %v6907 = vunpack.c.l.b16 %v6839
          %v6908 = vunpack.c.l.b16 %v6853
          %v6909 = vunpack.c.l.b16 %v6867
          %v6910 = vunpack.c.l.b16 %v6881
          %v6911 = vunpack.c.l.b16 %v6895
          %v6912 = vpack.c.b16 %v6897, %v6896
          %v6913 = vpack.c.b16 %v6899, %v6898
          %v6914 = vpack.c.b16 %v6901, %v6900
          %v6915 = vpack.c.b16 %v6903, %v6902
          %v6916 = vpack.c.b16 %v6905, %v6904
          %v6917 = vpack.c.b16 %v6907, %v6906
          %v6918 = vpack.c.b16 %v6909, %v6908
          %v6919 = vpack.c.b16 %v6911, %v6910
          %6920 = vrot.lane.b32.xlu0 %v6912, 64
          %v6921 = vpop.permute.xlu0 %6920
          %6922 = vrot.lane.b32.xlu0 %v6913, 64
          %v6923 = vpop.permute.xlu0 %6922
          %6924 = vrot.lane.b32.xlu0 %v6914, 64
          %v6925 = vpop.permute.xlu0 %6924
          %6926 = vrot.lane.b32.xlu0 %v6915, 64
          %v6927 = vpop.permute.xlu0 %6926
          %6928 = vrot.lane.b32.xlu0 %v6916, 64
          %v6929 = vpop.permute.xlu0 %6928
          %6930 = vrot.lane.b32.xlu0 %v6917, 64
          %v6931 = vpop.permute.xlu0 %6930
          %6932 = vrot.lane.b32.xlu0 %v6918, 64
          %v6933 = vpop.permute.xlu0 %6932
          %6934 = vrot.lane.b32.xlu0 %v6919, 64
          %v6935 = vpop.permute.xlu0 %6934
          %6944 = vst.msk [vmem:[#allocation6 + $0x8] sm:$0xff] %vm5991, %v6921
          %6945 = vst.msk [vmem:[#allocation6 + $0x40] sm:$0xff] %vm5991, %v6923
          %6946 = vst.msk [vmem:[#allocation6 + $0x78] sm:$0xff] %vm5991, %v6925
          %6947 = vst.msk [vmem:[#allocation6 + $0xb0] sm:$0xff] %vm5991, %v6927
          %6948 = vst.msk [vmem:[#allocation6 + $0xe8] sm:$0xff] %vm5991, %v6929
          %6949 = vst.msk [vmem:[#allocation6 + $0x120] sm:$0xff] %vm5991, %v6931
          %6950 = vst.msk [vmem:[#allocation6 + $0x158] sm:$0xff] %vm5991, %v6933
          %6951 = vst.msk [vmem:[#allocation6 + $0x190] sm:$0xff] %vm5991, %v6935
          %v6952 = vld [vmem:[%s6551] sm:$0xe]
          %v6953 = vld [vmem:[%s6551 + $0x4] sm:$0x1]
          %v6954 = vld [vmem:[%s6551 + $0x8] sm:$0xe]
          %v6955 = vld [vmem:[%s6551 + $0xc] sm:$0x1]
          %v6956 = vld [vmem:[%s6551 + $0x10] sm:$0xe]
          %v6957 = vld [vmem:[%s6551 + $0x14] sm:$0x1]
          %v6958 = vld [vmem:[%s6551 + $0x18] sm:$0xe]
          %v6959 = vld [vmem:[%s6551 + $0x1c] sm:$0x1]
          %v6960 = vld [vmem:[%s6551 + $0x20] sm:$0xe]
          %v6961 = vld [vmem:[%s6551 + $0x24] sm:$0x1]
          %v6962 = vld [vmem:[%s6551 + $0x28] sm:$0xe]
          %v6963 = vld [vmem:[%s6551 + $0x2c] sm:$0x1]
          %v6964 = vld [vmem:[%s6551 + $0x30] sm:$0xe]
          %v6965 = vld [vmem:[%s6551 + $0x34] sm:$0x1]
          %v6966 = vld [vmem:[%s6551 + $0x38] sm:$0xe]
          %v6967 = vld [vmem:[%s6551 + $0x3c] sm:$0x1]
          %v6968 = vld [vmem:[%s6551 + $0x60] sm:$0xe]
          %v6969 = vld [vmem:[%s6551 + $0x64] sm:$0x1]
          %v6970 = vld [vmem:[%s6551 + $0x68] sm:$0xe]
          %v6971 = vld [vmem:[%s6551 + $0x6c] sm:$0x1]
          %v6972 = vld [vmem:[%s6551 + $0x70] sm:$0xe]
          %v6973 = vld [vmem:[%s6551 + $0x74] sm:$0x1]
          %v6974 = vld [vmem:[%s6551 + $0x78] sm:$0xe]
          %v6975 = vld [vmem:[%s6551 + $0x7c] sm:$0x1]
          %v6976 = vld [vmem:[%s6551 + $0x80] sm:$0xe]
          %v6977 = vld [vmem:[%s6551 + $0x84] sm:$0x1]
          %v6978 = vld [vmem:[%s6551 + $0x88] sm:$0xe]
          %v6979 = vld [vmem:[%s6551 + $0x8c] sm:$0x1]
          %v6980 = vld [vmem:[%s6551 + $0x90] sm:$0xe]
          %v6981 = vld [vmem:[%s6551 + $0x94] sm:$0x1]
          %v6982 = vld [vmem:[%s6551 + $0x98] sm:$0xe]
          %v6983 = vld [vmem:[%s6551 + $0x9c] sm:$0x1]
          %v7016 = vrot.slane %v6952, 5
          %v7017 = vrot.slane %v7016, 4
          %v7018 = vrot.slane %v6953, 5
          %v7019 = vsel %vm5878, %v7017, %v7018
          %v7020 = vrot.slane %v6954, 5
          %v7021 = vrot.slane %v7020, 4
          %v7022 = vrot.slane %v6955, 5
          %v7023 = vsel %vm5878, %v7021, %v7022
          %v7024 = vrot.slane %v6956, 5
          %v7025 = vrot.slane %v7024, 4
          %v7026 = vrot.slane %v6957, 5
          %v7027 = vsel %vm5878, %v7025, %v7026
          %v7028 = vrot.slane %v6958, 5
          %v7029 = vrot.slane %v7028, 4
          %v7030 = vrot.slane %v6959, 5
          %v7031 = vsel %vm5878, %v7029, %v7030
          %v7032 = vrot.slane %v6960, 5
          %v7033 = vrot.slane %v7032, 4
          %v7034 = vrot.slane %v6961, 5
          %v7035 = vsel %vm5878, %v7033, %v7034
          %v7036 = vrot.slane %v6962, 5
          %v7037 = vrot.slane %v7036, 4
          %v7038 = vrot.slane %v6963, 5
          %v7039 = vsel %vm5878, %v7037, %v7038
          %v7040 = vrot.slane %v6964, 5
          %v7041 = vrot.slane %v7040, 4
          %v7042 = vrot.slane %v6965, 5
          %v7043 = vsel %vm5878, %v7041, %v7042
          %v7044 = vrot.slane %v6966, 5
          %v7045 = vrot.slane %v7044, 4
          %v7046 = vrot.slane %v6967, 5
          %v7047 = vsel %vm5878, %v7045, %v7046
          %v7048 = vrot.slane %v6968, 5
          %v7049 = vrot.slane %v7048, 4
          %v7050 = vrot.slane %v6969, 5
          %v7051 = vsel %vm5878, %v7049, %v7050
          %v7052 = vrot.slane %v6970, 5
          %v7053 = vrot.slane %v7052, 4
          %v7054 = vrot.slane %v6971, 5
          %v7055 = vsel %vm5878, %v7053, %v7054
          %v7056 = vrot.slane %v6972, 5
          %v7057 = vrot.slane %v7056, 4
          %v7058 = vrot.slane %v6973, 5
          %v7059 = vsel %vm5878, %v7057, %v7058
          %v7060 = vrot.slane %v6974, 5
          %v7061 = vrot.slane %v7060, 4
          %v7062 = vrot.slane %v6975, 5
          %v7063 = vsel %vm5878, %v7061, %v7062
          %v7064 = vrot.slane %v6976, 5
          %v7065 = vrot.slane %v7064, 4
          %v7066 = vrot.slane %v6977, 5
          %v7067 = vsel %vm5878, %v7065, %v7066
          %v7068 = vrot.slane %v6978, 5
          %v7069 = vrot.slane %v7068, 4
          %v7070 = vrot.slane %v6979, 5
          %v7071 = vsel %vm5878, %v7069, %v7070
          %v7072 = vrot.slane %v6980, 5
          %v7073 = vrot.slane %v7072, 4
          %v7074 = vrot.slane %v6981, 5
          %v7075 = vsel %vm5878, %v7073, %v7074
          %v7076 = vrot.slane %v6982, 5
          %v7077 = vrot.slane %v7076, 4
          %v7078 = vrot.slane %v6983, 5
          %v7079 = vsel %vm5878, %v7077, %v7078
          %v7080 = vunpack.c.l.b16 %v7019
          %v7081 = vunpack.c.l.b16 %v7023
          %v7082 = vunpack.c.l.b16 %v7027
          %v7083 = vunpack.c.l.b16 %v7031
          %v7084 = vunpack.c.l.b16 %v7035
          %v7085 = vunpack.c.l.b16 %v7039
          %v7086 = vunpack.c.l.b16 %v7043
          %v7087 = vunpack.c.l.b16 %v7047
          %v7088 = vunpack.c.l.b16 %v7051
          %v7089 = vunpack.c.l.b16 %v7055
          %v7090 = vunpack.c.l.b16 %v7059
          %v7091 = vunpack.c.l.b16 %v7063
          %v7092 = vunpack.c.l.b16 %v7067
          %v7093 = vunpack.c.l.b16 %v7071
          %v7094 = vunpack.c.l.b16 %v7075
          %v7095 = vunpack.c.l.b16 %v7079
          %v7096 = vpack.c.b16 %v7081, %v7080
          %v7097 = vpack.c.b16 %v7083, %v7082
          %v7098 = vpack.c.b16 %v7085, %v7084
          %v7099 = vpack.c.b16 %v7087, %v7086
          %v7100 = vpack.c.b16 %v7089, %v7088
          %v7101 = vpack.c.b16 %v7091, %v7090
          %v7102 = vpack.c.b16 %v7093, %v7092
          %v7103 = vpack.c.b16 %v7095, %v7094
          %7104 = vrot.lane.b32.xlu0 %v7096, 96
          %v7105 = vpop.permute.xlu0 %7104
          %7106 = vrot.lane.b32.xlu0 %v7097, 96
          %v7107 = vpop.permute.xlu0 %7106
          %7108 = vrot.lane.b32.xlu0 %v7098, 96
          %v7109 = vpop.permute.xlu0 %7108
          %7110 = vrot.lane.b32.xlu0 %v7099, 96
          %v7111 = vpop.permute.xlu0 %7110
          %7112 = vrot.lane.b32.xlu0 %v7100, 96
          %v7113 = vpop.permute.xlu0 %7112
          %7114 = vrot.lane.b32.xlu0 %v7101, 96
          %v7115 = vpop.permute.xlu0 %7114
          %7116 = vrot.lane.b32.xlu0 %v7102, 96
          %v7117 = vpop.permute.xlu0 %7116
          %7118 = vrot.lane.b32.xlu0 %v7103, 96
          %v7119 = vpop.permute.xlu0 %7118
          %7128 = vst.msk [vmem:[#allocation6 + $0x8] sm:$0xff] %vm6371, %v7105
          %7129 = vst.msk [vmem:[#allocation6 + $0x40] sm:$0xff] %vm6371, %v7107
          %7130 = vst.msk [vmem:[#allocation6 + $0x78] sm:$0xff] %vm6371, %v7109
          %7131 = vst.msk [vmem:[#allocation6 + $0xb0] sm:$0xff] %vm6371, %v7111
          %7132 = vst.msk [vmem:[#allocation6 + $0xe8] sm:$0xff] %vm6371, %v7113
          %7133 = vst.msk [vmem:[#allocation6 + $0x120] sm:$0xff] %vm6371, %v7115
          %7134 = vst.msk [vmem:[#allocation6 + $0x158] sm:$0xff] %vm6371, %v7117
          %7135 = vst.msk [vmem:[#allocation6 + $0x190] sm:$0xff] %vm6371, %v7119
          %v7136 = vld [vmem:[%s6551] sm:$0xe]
          %v7137 = vld [vmem:[%s6551 + $0x4] sm:$0x3]
          %v7138 = vld [vmem:[%s6551 + $0x8] sm:$0xe]
          %v7139 = vld [vmem:[%s6551 + $0xc] sm:$0x3]
          %v7140 = vld [vmem:[%s6551 + $0x10] sm:$0xe]
          %v7141 = vld [vmem:[%s6551 + $0x14] sm:$0x3]
          %v7142 = vld [vmem:[%s6551 + $0x18] sm:$0xe]
          %v7143 = vld [vmem:[%s6551 + $0x1c] sm:$0x3]
          %v7144 = vld [vmem:[%s6551 + $0x20] sm:$0xe]
          %v7145 = vld [vmem:[%s6551 + $0x24] sm:$0x3]
          %v7146 = vld [vmem:[%s6551 + $0x28] sm:$0xe]
          %v7147 = vld [vmem:[%s6551 + $0x2c] sm:$0x3]
          %v7148 = vld [vmem:[%s6551 + $0x30] sm:$0xe]
          %v7149 = vld [vmem:[%s6551 + $0x34] sm:$0x3]
          %v7150 = vld [vmem:[%s6551 + $0x38] sm:$0xe]
          %v7151 = vld [vmem:[%s6551 + $0x3c] sm:$0x3]
          %v7152 = vld [vmem:[%s6551 + $0x60] sm:$0xe]
          %v7153 = vld [vmem:[%s6551 + $0x64] sm:$0x3]
          %v7154 = vld [vmem:[%s6551 + $0x68] sm:$0xe]
          %v7155 = vld [vmem:[%s6551 + $0x6c] sm:$0x3]
          %v7156 = vld [vmem:[%s6551 + $0x70] sm:$0xe]
          %v7157 = vld [vmem:[%s6551 + $0x74] sm:$0x3]
          %v7158 = vld [vmem:[%s6551 + $0x78] sm:$0xe]
          %v7159 = vld [vmem:[%s6551 + $0x7c] sm:$0x3]
          %v7160 = vld [vmem:[%s6551 + $0x80] sm:$0xe]
          %v7161 = vld [vmem:[%s6551 + $0x84] sm:$0x3]
          %v7162 = vld [vmem:[%s6551 + $0x88] sm:$0xe]
          %v7163 = vld [vmem:[%s6551 + $0x8c] sm:$0x3]
          %v7164 = vld [vmem:[%s6551 + $0x90] sm:$0xe]
          %v7165 = vld [vmem:[%s6551 + $0x94] sm:$0x3]
          %v7166 = vld [vmem:[%s6551 + $0x98] sm:$0xe]
          %v7167 = vld [vmem:[%s6551 + $0x9c] sm:$0x3]
          %v7169 = vshrl.u32 %v7136, 16
          %v7171 = vrot.slane %v7169, 5
          %v7172 = vshll.u32 %v7136, 16
          %v7174 = vrot.slane %v7172, 6
          %v7175 = vor.u32 %v7171, %v7174
          %v7176 = vrot.slane %v7175, 4
          %v7178 = vshrl.u32 %v7137, 16
          %v7180 = vrot.slane %v7178, 5
          %v7181 = vshll.u32 %v7137, 16
          %v7183 = vrot.slane %v7181, 6
          %v7184 = vor.u32 %v7180, %v7183
          %v7185 = vsel %vm6034, %v7176, %v7184
          %v7187 = vshrl.u32 %v7138, 16
          %v7189 = vrot.slane %v7187, 5
          %v7190 = vshll.u32 %v7138, 16
          %v7192 = vrot.slane %v7190, 6
          %v7193 = vor.u32 %v7189, %v7192
          %v7194 = vrot.slane %v7193, 4
          %v7196 = vshrl.u32 %v7139, 16
          %v7198 = vrot.slane %v7196, 5
          %v7199 = vshll.u32 %v7139, 16
          %v7201 = vrot.slane %v7199, 6
          %v7202 = vor.u32 %v7198, %v7201
          %v7203 = vsel %vm6034, %v7194, %v7202
          %v7205 = vshrl.u32 %v7140, 16
          %v7207 = vrot.slane %v7205, 5
          %v7208 = vshll.u32 %v7140, 16
          %v7210 = vrot.slane %v7208, 6
          %v7211 = vor.u32 %v7207, %v7210
          %v7212 = vrot.slane %v7211, 4
          %v7214 = vshrl.u32 %v7141, 16
          %v7216 = vrot.slane %v7214, 5
          %v7217 = vshll.u32 %v7141, 16
          %v7219 = vrot.slane %v7217, 6
          %v7220 = vor.u32 %v7216, %v7219
          %v7221 = vsel %vm6034, %v7212, %v7220
          %v7223 = vshrl.u32 %v7142, 16
          %v7225 = vrot.slane %v7223, 5
          %v7226 = vshll.u32 %v7142, 16
          %v7228 = vrot.slane %v7226, 6
          %v7229 = vor.u32 %v7225, %v7228
          %v7230 = vrot.slane %v7229, 4
          %v7232 = vshrl.u32 %v7143, 16
          %v7234 = vrot.slane %v7232, 5
          %v7235 = vshll.u32 %v7143, 16
          %v7237 = vrot.slane %v7235, 6
          %v7238 = vor.u32 %v7234, %v7237
          %v7239 = vsel %vm6034, %v7230, %v7238
          %v7241 = vshrl.u32 %v7144, 16
          %v7243 = vrot.slane %v7241, 5
          %v7244 = vshll.u32 %v7144, 16
          %v7246 = vrot.slane %v7244, 6
          %v7247 = vor.u32 %v7243, %v7246
          %v7248 = vrot.slane %v7247, 4
          %v7250 = vshrl.u32 %v7145, 16
          %v7252 = vrot.slane %v7250, 5
          %v7253 = vshll.u32 %v7145, 16
          %v7255 = vrot.slane %v7253, 6
          %v7256 = vor.u32 %v7252, %v7255
          %v7257 = vsel %vm6034, %v7248, %v7256
          %v7259 = vshrl.u32 %v7146, 16
          %v7261 = vrot.slane %v7259, 5
          %v7262 = vshll.u32 %v7146, 16
          %v7264 = vrot.slane %v7262, 6
          %v7265 = vor.u32 %v7261, %v7264
          %v7266 = vrot.slane %v7265, 4
          %v7268 = vshrl.u32 %v7147, 16
          %v7270 = vrot.slane %v7268, 5
          %v7271 = vshll.u32 %v7147, 16
          %v7273 = vrot.slane %v7271, 6
          %v7274 = vor.u32 %v7270, %v7273
          %v7275 = vsel %vm6034, %v7266, %v7274
          %v7277 = vshrl.u32 %v7148, 16
          %v7279 = vrot.slane %v7277, 5
          %v7280 = vshll.u32 %v7148, 16
          %v7282 = vrot.slane %v7280, 6
          %v7283 = vor.u32 %v7279, %v7282
          %v7284 = vrot.slane %v7283, 4
          %v7286 = vshrl.u32 %v7149, 16
          %v7288 = vrot.slane %v7286, 5
          %v7289 = vshll.u32 %v7149, 16
          %v7291 = vrot.slane %v7289, 6
          %v7292 = vor.u32 %v7288, %v7291
          %v7293 = vsel %vm6034, %v7284, %v7292
          %v7295 = vshrl.u32 %v7150, 16
          %v7297 = vrot.slane %v7295, 5
          %v7298 = vshll.u32 %v7150, 16
          %v7300 = vrot.slane %v7298, 6
          %v7301 = vor.u32 %v7297, %v7300
          %v7302 = vrot.slane %v7301, 4
          %v7304 = vshrl.u32 %v7151, 16
          %v7306 = vrot.slane %v7304, 5
          %v7307 = vshll.u32 %v7151, 16
          %v7309 = vrot.slane %v7307, 6
          %v7310 = vor.u32 %v7306, %v7309
          %v7311 = vsel %vm6034, %v7302, %v7310
          %v7313 = vshrl.u32 %v7152, 16
          %v7315 = vrot.slane %v7313, 5
          %v7316 = vshll.u32 %v7152, 16
          %v7318 = vrot.slane %v7316, 6
          %v7319 = vor.u32 %v7315, %v7318
          %v7320 = vrot.slane %v7319, 4
          %v7322 = vshrl.u32 %v7153, 16
          %v7324 = vrot.slane %v7322, 5
          %v7325 = vshll.u32 %v7153, 16
          %v7327 = vrot.slane %v7325, 6
          %v7328 = vor.u32 %v7324, %v7327
          %v7329 = vsel %vm6034, %v7320, %v7328
          %v7331 = vshrl.u32 %v7154, 16
          %v7333 = vrot.slane %v7331, 5
          %v7334 = vshll.u32 %v7154, 16
          %v7336 = vrot.slane %v7334, 6
          %v7337 = vor.u32 %v7333, %v7336
          %v7338 = vrot.slane %v7337, 4
          %v7340 = vshrl.u32 %v7155, 16
          %v7342 = vrot.slane %v7340, 5
          %v7343 = vshll.u32 %v7155, 16
          %v7345 = vrot.slane %v7343, 6
          %v7346 = vor.u32 %v7342, %v7345
          %v7347 = vsel %vm6034, %v7338, %v7346
          %v7349 = vshrl.u32 %v7156, 16
          %v7351 = vrot.slane %v7349, 5
          %v7352 = vshll.u32 %v7156, 16
          %v7354 = vrot.slane %v7352, 6
          %v7355 = vor.u32 %v7351, %v7354
          %v7356 = vrot.slane %v7355, 4
          %v7358 = vshrl.u32 %v7157, 16
          %v7360 = vrot.slane %v7358, 5
          %v7361 = vshll.u32 %v7157, 16
          %v7363 = vrot.slane %v7361, 6
          %v7364 = vor.u32 %v7360, %v7363
          %v7365 = vsel %vm6034, %v7356, %v7364
          %v7367 = vshrl.u32 %v7158, 16
          %v7369 = vrot.slane %v7367, 5
          %v7370 = vshll.u32 %v7158, 16
          %v7372 = vrot.slane %v7370, 6
          %v7373 = vor.u32 %v7369, %v7372
          %v7374 = vrot.slane %v7373, 4
          %v7376 = vshrl.u32 %v7159, 16
          %v7378 = vrot.slane %v7376, 5
          %v7379 = vshll.u32 %v7159, 16
          %v7381 = vrot.slane %v7379, 6
          %v7382 = vor.u32 %v7378, %v7381
          %v7383 = vsel %vm6034, %v7374, %v7382
          %v7385 = vshrl.u32 %v7160, 16
          %v7387 = vrot.slane %v7385, 5
          %v7388 = vshll.u32 %v7160, 16
          %v7390 = vrot.slane %v7388, 6
          %v7391 = vor.u32 %v7387, %v7390
          %v7392 = vrot.slane %v7391, 4
          %v7394 = vshrl.u32 %v7161, 16
          %v7396 = vrot.slane %v7394, 5
          %v7397 = vshll.u32 %v7161, 16
          %v7399 = vrot.slane %v7397, 6
          %v7400 = vor.u32 %v7396, %v7399
          %v7401 = vsel %vm6034, %v7392, %v7400
          %v7403 = vshrl.u32 %v7162, 16
          %v7405 = vrot.slane %v7403, 5
          %v7406 = vshll.u32 %v7162, 16
          %v7408 = vrot.slane %v7406, 6
          %v7409 = vor.u32 %v7405, %v7408
          %v7410 = vrot.slane %v7409, 4
          %v7412 = vshrl.u32 %v7163, 16
          %v7414 = vrot.slane %v7412, 5
          %v7415 = vshll.u32 %v7163, 16
          %v7417 = vrot.slane %v7415, 6
          %v7418 = vor.u32 %v7414, %v7417
          %v7419 = vsel %vm6034, %v7410, %v7418
          %v7421 = vshrl.u32 %v7164, 16
          %v7423 = vrot.slane %v7421, 5
          %v7424 = vshll.u32 %v7164, 16
          %v7426 = vrot.slane %v7424, 6
          %v7427 = vor.u32 %v7423, %v7426
          %v7428 = vrot.slane %v7427, 4
          %v7430 = vshrl.u32 %v7165, 16
          %v7432 = vrot.slane %v7430, 5
          %v7433 = vshll.u32 %v7165, 16
          %v7435 = vrot.slane %v7433, 6
          %v7436 = vor.u32 %v7432, %v7435
          %v7437 = vsel %vm6034, %v7428, %v7436
          %v7439 = vshrl.u32 %v7166, 16
          %v7441 = vrot.slane %v7439, 5
          %v7442 = vshll.u32 %v7166, 16
          %v7444 = vrot.slane %v7442, 6
          %v7445 = vor.u32 %v7441, %v7444
          %v7446 = vrot.slane %v7445, 4
          %v7448 = vshrl.u32 %v7167, 16
          %v7450 = vrot.slane %v7448, 5
          %v7451 = vshll.u32 %v7167, 16
          %v7453 = vrot.slane %v7451, 6
          %v7454 = vor.u32 %v7450, %v7453
          %v7455 = vsel %vm6034, %v7446, %v7454
          %v7456 = vunpack.c.l.b16 %v7185
          %v7457 = vunpack.c.l.b16 %v7203
          %v7458 = vunpack.c.l.b16 %v7221
          %v7459 = vunpack.c.l.b16 %v7239
          %v7460 = vunpack.c.l.b16 %v7257
          %v7461 = vunpack.c.l.b16 %v7275
          %v7462 = vunpack.c.l.b16 %v7293
          %v7463 = vunpack.c.l.b16 %v7311
          %v7464 = vunpack.c.l.b16 %v7329
          %v7465 = vunpack.c.l.b16 %v7347
          %v7466 = vunpack.c.l.b16 %v7365
          %v7467 = vunpack.c.l.b16 %v7383
          %v7468 = vunpack.c.l.b16 %v7401
          %v7469 = vunpack.c.l.b16 %v7419
          %v7470 = vunpack.c.l.b16 %v7437
          %v7471 = vunpack.c.l.b16 %v7455
          %v7472 = vpack.c.b16 %v7457, %v7456
          %v7473 = vpack.c.b16 %v7459, %v7458
          %v7474 = vpack.c.b16 %v7461, %v7460
          %v7475 = vpack.c.b16 %v7463, %v7462
          %v7476 = vpack.c.b16 %v7465, %v7464
          %v7477 = vpack.c.b16 %v7467, %v7466
          %v7478 = vpack.c.b16 %v7469, %v7468
          %v7479 = vpack.c.b16 %v7471, %v7470
          %7488 = vst.msk [vmem:[#allocation6 + $0x10] sm:$0xff] %vm5487, %v7472
          %7489 = vst.msk [vmem:[#allocation6 + $0x48] sm:$0xff] %vm5487, %v7473
          %7490 = vst.msk [vmem:[#allocation6 + $0x80] sm:$0xff] %vm5487, %v7474
          %7491 = vst.msk [vmem:[#allocation6 + $0xb8] sm:$0xff] %vm5487, %v7475
          %7492 = vst.msk [vmem:[#allocation6 + $0xf0] sm:$0xff] %vm5487, %v7476
          %7493 = vst.msk [vmem:[#allocation6 + $0x128] sm:$0xff] %vm5487, %v7477
          %7494 = vst.msk [vmem:[#allocation6 + $0x160] sm:$0xff] %vm5487, %v7478
          %7495 = vst.msk [vmem:[#allocation6 + $0x198] sm:$0xff] %vm5487, %v7479
          %v7496 = vld [vmem:[%s6551] sm:$0xc]
          %v7497 = vld [vmem:[%s6551 + $0x4] sm:$0x3]
          %v7498 = vld [vmem:[%s6551 + $0x8] sm:$0xc]
          %v7499 = vld [vmem:[%s6551 + $0xc] sm:$0x3]
          %v7500 = vld [vmem:[%s6551 + $0x10] sm:$0xc]
          %v7501 = vld [vmem:[%s6551 + $0x14] sm:$0x3]
          %v7502 = vld [vmem:[%s6551 + $0x18] sm:$0xc]
          %v7503 = vld [vmem:[%s6551 + $0x1c] sm:$0x3]
          %v7504 = vld [vmem:[%s6551 + $0x20] sm:$0xc]
          %v7505 = vld [vmem:[%s6551 + $0x24] sm:$0x3]
          %v7506 = vld [vmem:[%s6551 + $0x28] sm:$0xc]
          %v7507 = vld [vmem:[%s6551 + $0x2c] sm:$0x3]
          %v7508 = vld [vmem:[%s6551 + $0x30] sm:$0xc]
          %v7509 = vld [vmem:[%s6551 + $0x34] sm:$0x3]
          %v7510 = vld [vmem:[%s6551 + $0x38] sm:$0xc]
          %v7511 = vld [vmem:[%s6551 + $0x3c] sm:$0x3]
          %v7512 = vld [vmem:[%s6551 + $0x60] sm:$0xc]
          %v7513 = vld [vmem:[%s6551 + $0x64] sm:$0x3]
          %v7514 = vld [vmem:[%s6551 + $0x68] sm:$0xc]
          %v7515 = vld [vmem:[%s6551 + $0x6c] sm:$0x3]
          %v7516 = vld [vmem:[%s6551 + $0x70] sm:$0xc]
          %v7517 = vld [vmem:[%s6551 + $0x74] sm:$0x3]
          %v7518 = vld [vmem:[%s6551 + $0x78] sm:$0xc]
          %v7519 = vld [vmem:[%s6551 + $0x7c] sm:$0x3]
          %v7520 = vld [vmem:[%s6551 + $0x80] sm:$0xc]
          %v7521 = vld [vmem:[%s6551 + $0x84] sm:$0x3]
          %v7522 = vld [vmem:[%s6551 + $0x88] sm:$0xc]
          %v7523 = vld [vmem:[%s6551 + $0x8c] sm:$0x3]
          %v7524 = vld [vmem:[%s6551 + $0x90] sm:$0xc]
          %v7525 = vld [vmem:[%s6551 + $0x94] sm:$0x3]
          %v7526 = vld [vmem:[%s6551 + $0x98] sm:$0xc]
          %v7527 = vld [vmem:[%s6551 + $0x9c] sm:$0x3]
          %v7560 = vrot.slane %v7496, 6
          %v7561 = vrot.slane %v7560, 4
          %v7562 = vrot.slane %v7497, 6
          %v7563 = vsel %vm6446, %v7561, %v7562
          %v7564 = vrot.slane %v7498, 6
          %v7565 = vrot.slane %v7564, 4
          %v7566 = vrot.slane %v7499, 6
          %v7567 = vsel %vm6446, %v7565, %v7566
          %v7568 = vrot.slane %v7500, 6
          %v7569 = vrot.slane %v7568, 4
          %v7570 = vrot.slane %v7501, 6
          %v7571 = vsel %vm6446, %v7569, %v7570
          %v7572 = vrot.slane %v7502, 6
          %v7573 = vrot.slane %v7572, 4
          %v7574 = vrot.slane %v7503, 6
          %v7575 = vsel %vm6446, %v7573, %v7574
          %v7576 = vrot.slane %v7504, 6
          %v7577 = vrot.slane %v7576, 4
          %v7578 = vrot.slane %v7505, 6
          %v7579 = vsel %vm6446, %v7577, %v7578
          %v7580 = vrot.slane %v7506, 6
          %v7581 = vrot.slane %v7580, 4
          %v7582 = vrot.slane %v7507, 6
          %v7583 = vsel %vm6446, %v7581, %v7582
          %v7584 = vrot.slane %v7508, 6
          %v7585 = vrot.slane %v7584, 4
          %v7586 = vrot.slane %v7509, 6
          %v7587 = vsel %vm6446, %v7585, %v7586
          %v7588 = vrot.slane %v7510, 6
          %v7589 = vrot.slane %v7588, 4
          %v7590 = vrot.slane %v7511, 6
          %v7591 = vsel %vm6446, %v7589, %v7590
          %v7592 = vrot.slane %v7512, 6
          %v7593 = vrot.slane %v7592, 4
          %v7594 = vrot.slane %v7513, 6
          %v7595 = vsel %vm6446, %v7593, %v7594
          %v7596 = vrot.slane %v7514, 6
          %v7597 = vrot.slane %v7596, 4
          %v7598 = vrot.slane %v7515, 6
          %v7599 = vsel %vm6446, %v7597, %v7598
          %v7600 = vrot.slane %v7516, 6
          %v7601 = vrot.slane %v7600, 4
          %v7602 = vrot.slane %v7517, 6
          %v7603 = vsel %vm6446, %v7601, %v7602
          %v7604 = vrot.slane %v7518, 6
          %v7605 = vrot.slane %v7604, 4
          %v7606 = vrot.slane %v7519, 6
          %v7607 = vsel %vm6446, %v7605, %v7606
          %v7608 = vrot.slane %v7520, 6
          %v7609 = vrot.slane %v7608, 4
          %v7610 = vrot.slane %v7521, 6
          %v7611 = vsel %vm6446, %v7609, %v7610
          %v7612 = vrot.slane %v7522, 6
          %v7613 = vrot.slane %v7612, 4
          %v7614 = vrot.slane %v7523, 6
          %v7615 = vsel %vm6446, %v7613, %v7614
          %v7616 = vrot.slane %v7524, 6
          %v7617 = vrot.slane %v7616, 4
          %v7618 = vrot.slane %v7525, 6
          %v7619 = vsel %vm6446, %v7617, %v7618
          %v7620 = vrot.slane %v7526, 6
          %v7621 = vrot.slane %v7620, 4
          %v7622 = vrot.slane %v7527, 6
          %v7623 = vsel %vm6446, %v7621, %v7622
          %v7624 = vunpack.c.l.b16 %v7563
          %v7625 = vunpack.c.l.b16 %v7567
          %v7626 = vunpack.c.l.b16 %v7571
          %v7627 = vunpack.c.l.b16 %v7575
          %v7628 = vunpack.c.l.b16 %v7579
          %v7629 = vunpack.c.l.b16 %v7583
          %v7630 = vunpack.c.l.b16 %v7587
          %v7631 = vunpack.c.l.b16 %v7591
          %v7632 = vunpack.c.l.b16 %v7595
          %v7633 = vunpack.c.l.b16 %v7599
          %v7634 = vunpack.c.l.b16 %v7603
          %v7635 = vunpack.c.l.b16 %v7607
          %v7636 = vunpack.c.l.b16 %v7611
          %v7637 = vunpack.c.l.b16 %v7615
          %v7638 = vunpack.c.l.b16 %v7619
          %v7639 = vunpack.c.l.b16 %v7623
          %v7640 = vpack.c.b16 %v7625, %v7624
          %v7641 = vpack.c.b16 %v7627, %v7626
          %v7642 = vpack.c.b16 %v7629, %v7628
          %v7643 = vpack.c.b16 %v7631, %v7630
          %v7644 = vpack.c.b16 %v7633, %v7632
          %v7645 = vpack.c.b16 %v7635, %v7634
          %v7646 = vpack.c.b16 %v7637, %v7636
          %v7647 = vpack.c.b16 %v7639, %v7638
          %7648 = vrot.lane.b32.xlu0 %v7640, 32
          %v7649 = vpop.permute.xlu0 %7648
          %7650 = vrot.lane.b32.xlu0 %v7641, 32
          %v7651 = vpop.permute.xlu0 %7650
          %7652 = vrot.lane.b32.xlu0 %v7642, 32
          %v7653 = vpop.permute.xlu0 %7652
          %7654 = vrot.lane.b32.xlu0 %v7643, 32
          %v7655 = vpop.permute.xlu0 %7654
          %7656 = vrot.lane.b32.xlu0 %v7644, 32
          %v7657 = vpop.permute.xlu0 %7656
          %7658 = vrot.lane.b32.xlu0 %v7645, 32
          %v7659 = vpop.permute.xlu0 %7658
          %7660 = vrot.lane.b32.xlu0 %v7646, 32
          %v7661 = vpop.permute.xlu0 %7660
          %7662 = vrot.lane.b32.xlu0 %v7647, 32
          %v7663 = vpop.permute.xlu0 %7662
          %7672 = vst.msk [vmem:[#allocation6 + $0x10] sm:$0xff] %vm5803, %v7649
          %7673 = vst.msk [vmem:[#allocation6 + $0x48] sm:$0xff] %vm5803, %v7651
          %7674 = vst.msk [vmem:[#allocation6 + $0x80] sm:$0xff] %vm5803, %v7653
          %7675 = vst.msk [vmem:[#allocation6 + $0xb8] sm:$0xff] %vm5803, %v7655
          %7676 = vst.msk [vmem:[#allocation6 + $0xf0] sm:$0xff] %vm5803, %v7657
          %7677 = vst.msk [vmem:[#allocation6 + $0x128] sm:$0xff] %vm5803, %v7659
          %7678 = vst.msk [vmem:[#allocation6 + $0x160] sm:$0xff] %vm5803, %v7661
          %7679 = vst.msk [vmem:[#allocation6 + $0x198] sm:$0xff] %vm5803, %v7663
          %v7680 = vld [vmem:[%s5251] sm:$0xf]
          %v7681 = vld [vmem:[%s5251 + $0x8] sm:$0xf]
          %v7682 = vld [vmem:[%s5251 + $0x10] sm:$0xf]
          %v7683 = vld [vmem:[%s5251 + $0x18] sm:$0xf]
          %v7684 = vld [vmem:[%s5251 + $0x20] sm:$0xf]
          %v7685 = vld [vmem:[%s5251 + $0x28] sm:$0xf]
          %v7686 = vld [vmem:[%s5251 + $0x30] sm:$0xf]
          %v7687 = vld [vmem:[%s5251 + $0x38] sm:$0xf]
          %v7688 = vld [vmem:[%s5251 + $0x60] sm:$0xf]
          %v7689 = vld [vmem:[%s5251 + $0x68] sm:$0xf]
          %v7690 = vld [vmem:[%s5251 + $0x70] sm:$0xf]
          %v7691 = vld [vmem:[%s5251 + $0x78] sm:$0xf]
          %v7692 = vld [vmem:[%s5251 + $0x80] sm:$0xf]
          %v7693 = vld [vmem:[%s5251 + $0x88] sm:$0xf]
          %v7694 = vld [vmem:[%s5251 + $0x90] sm:$0xf]
          %v7695 = vld [vmem:[%s5251 + $0x98] sm:$0xf]
          %v7712 = vunpack.c.l.b16 %v7680
          %v7713 = vunpack.c.l.b16 %v7681
          %v7714 = vunpack.c.l.b16 %v7682
          %v7715 = vunpack.c.l.b16 %v7683
          %v7716 = vunpack.c.l.b16 %v7684
          %v7717 = vunpack.c.l.b16 %v7685
          %v7718 = vunpack.c.l.b16 %v7686
          %v7719 = vunpack.c.l.b16 %v7687
          %v7720 = vunpack.c.l.b16 %v7688
          %v7721 = vunpack.c.l.b16 %v7689
          %v7722 = vunpack.c.l.b16 %v7690
          %v7723 = vunpack.c.l.b16 %v7691
          %v7724 = vunpack.c.l.b16 %v7692
          %v7725 = vunpack.c.l.b16 %v7693
          %v7726 = vunpack.c.l.b16 %v7694
          %v7727 = vunpack.c.l.b16 %v7695
          %v7728 = vpack.c.b16 %v7713, %v7712
          %v7729 = vpack.c.b16 %v7715, %v7714
          %v7730 = vpack.c.b16 %v7717, %v7716
          %v7731 = vpack.c.b16 %v7719, %v7718
          %v7732 = vpack.c.b16 %v7721, %v7720
          %v7733 = vpack.c.b16 %v7723, %v7722
          %v7734 = vpack.c.b16 %v7725, %v7724
          %v7735 = vpack.c.b16 %v7727, %v7726
          %7736 = vrot.lane.b32.xlu0 %v7728, 64
          %v7737 = vpop.permute.xlu0 %7736
          %7738 = vrot.lane.b32.xlu0 %v7729, 64
          %v7739 = vpop.permute.xlu0 %7738
          %7740 = vrot.lane.b32.xlu0 %v7730, 64
          %v7741 = vpop.permute.xlu0 %7740
          %7742 = vrot.lane.b32.xlu0 %v7731, 64
          %v7743 = vpop.permute.xlu0 %7742
          %7744 = vrot.lane.b32.xlu0 %v7732, 64
          %v7745 = vpop.permute.xlu0 %7744
          %7746 = vrot.lane.b32.xlu0 %v7733, 64
          %v7747 = vpop.permute.xlu0 %7746
          %7748 = vrot.lane.b32.xlu0 %v7734, 64
          %v7749 = vpop.permute.xlu0 %7748
          %7750 = vrot.lane.b32.xlu0 %v7735, 64
          %v7751 = vpop.permute.xlu0 %7750
          %7760 = vst.msk [vmem:[#allocation6 + $0x10] sm:$0xff] %vm5991, %v7737
          %7761 = vst.msk [vmem:[#allocation6 + $0x48] sm:$0xff] %vm5991, %v7739
          %7762 = vst.msk [vmem:[#allocation6 + $0x80] sm:$0xff] %vm5991, %v7741
          %7763 = vst.msk [vmem:[#allocation6 + $0xb8] sm:$0xff] %vm5991, %v7743
          %7764 = vst.msk [vmem:[#allocation6 + $0xf0] sm:$0xff] %vm5991, %v7745
          %7765 = vst.msk [vmem:[#allocation6 + $0x128] sm:$0xff] %vm5991, %v7747
          %7766 = vst.msk [vmem:[#allocation6 + $0x160] sm:$0xff] %vm5991, %v7749
          %7767 = vst.msk [vmem:[#allocation6 + $0x198] sm:$0xff] %vm5991, %v7751
          %v7768 = vld [vmem:[%s5251] sm:$0xf]
          %v7769 = vld [vmem:[%s5251 + $0x4] sm:$0x1]
          %v7770 = vld [vmem:[%s5251 + $0x8] sm:$0xf]
          %v7771 = vld [vmem:[%s5251 + $0xc] sm:$0x1]
          %v7772 = vld [vmem:[%s5251 + $0x10] sm:$0xf]
          %v7773 = vld [vmem:[%s5251 + $0x14] sm:$0x1]
          %v7774 = vld [vmem:[%s5251 + $0x18] sm:$0xf]
          %v7775 = vld [vmem:[%s5251 + $0x1c] sm:$0x1]
          %v7776 = vld [vmem:[%s5251 + $0x20] sm:$0xf]
          %v7777 = vld [vmem:[%s5251 + $0x24] sm:$0x1]
          %v7778 = vld [vmem:[%s5251 + $0x28] sm:$0xf]
          %v7779 = vld [vmem:[%s5251 + $0x2c] sm:$0x1]
          %v7780 = vld [vmem:[%s5251 + $0x30] sm:$0xf]
          %v7781 = vld [vmem:[%s5251 + $0x34] sm:$0x1]
          %v7782 = vld [vmem:[%s5251 + $0x38] sm:$0xf]
          %v7783 = vld [vmem:[%s5251 + $0x3c] sm:$0x1]
          %v7784 = vld [vmem:[%s5251 + $0x60] sm:$0xf]
          %v7785 = vld [vmem:[%s5251 + $0x64] sm:$0x1]
          %v7786 = vld [vmem:[%s5251 + $0x68] sm:$0xf]
          %v7787 = vld [vmem:[%s5251 + $0x6c] sm:$0x1]
          %v7788 = vld [vmem:[%s5251 + $0x70] sm:$0xf]
          %v7789 = vld [vmem:[%s5251 + $0x74] sm:$0x1]
          %v7790 = vld [vmem:[%s5251 + $0x78] sm:$0xf]
          %v7791 = vld [vmem:[%s5251 + $0x7c] sm:$0x1]
          %v7792 = vld [vmem:[%s5251 + $0x80] sm:$0xf]
          %v7793 = vld [vmem:[%s5251 + $0x84] sm:$0x1]
          %v7794 = vld [vmem:[%s5251 + $0x88] sm:$0xf]
          %v7795 = vld [vmem:[%s5251 + $0x8c] sm:$0x1]
          %v7796 = vld [vmem:[%s5251 + $0x90] sm:$0xf]
          %v7797 = vld [vmem:[%s5251 + $0x94] sm:$0x1]
          %v7798 = vld [vmem:[%s5251 + $0x98] sm:$0xf]
          %v7799 = vld [vmem:[%s5251 + $0x9c] sm:$0x1]
          %v7801 = vshrl.u32 %v7768, 16
          %v7803 = vrot.slane %v7801, 4
          %v7804 = vshll.u32 %v7768, 16
          %v7806 = vrot.slane %v7804, 5
          %v7807 = vor.u32 %v7803, %v7806
          %v7808 = vrot.slane %v7807, 4
          %v7810 = vshll.u32 %v7769, 16
          %v7812 = vrot.slane %v7810, 5
          %v7813 = vsel %vm5530, %v7808, %v7812
          %v7815 = vshrl.u32 %v7770, 16
          %v7817 = vrot.slane %v7815, 4
          %v7818 = vshll.u32 %v7770, 16
          %v7820 = vrot.slane %v7818, 5
          %v7821 = vor.u32 %v7817, %v7820
          %v7822 = vrot.slane %v7821, 4
          %v7824 = vshll.u32 %v7771, 16
          %v7826 = vrot.slane %v7824, 5
          %v7827 = vsel %vm5530, %v7822, %v7826
          %v7829 = vshrl.u32 %v7772, 16
          %v7831 = vrot.slane %v7829, 4
          %v7832 = vshll.u32 %v7772, 16
          %v7834 = vrot.slane %v7832, 5
          %v7835 = vor.u32 %v7831, %v7834
          %v7836 = vrot.slane %v7835, 4
          %v7838 = vshll.u32 %v7773, 16
          %v7840 = vrot.slane %v7838, 5
          %v7841 = vsel %vm5530, %v7836, %v7840
          %v7843 = vshrl.u32 %v7774, 16
          %v7845 = vrot.slane %v7843, 4
          %v7846 = vshll.u32 %v7774, 16
          %v7848 = vrot.slane %v7846, 5
          %v7849 = vor.u32 %v7845, %v7848
          %v7850 = vrot.slane %v7849, 4
          %v7852 = vshll.u32 %v7775, 16
          %v7854 = vrot.slane %v7852, 5
          %v7855 = vsel %vm5530, %v7850, %v7854
          %v7857 = vshrl.u32 %v7776, 16
          %v7859 = vrot.slane %v7857, 4
          %v7860 = vshll.u32 %v7776, 16
          %v7862 = vrot.slane %v7860, 5
          %v7863 = vor.u32 %v7859, %v7862
          %v7864 = vrot.slane %v7863, 4
          %v7866 = vshll.u32 %v7777, 16
          %v7868 = vrot.slane %v7866, 5
          %v7869 = vsel %vm5530, %v7864, %v7868
          %v7871 = vshrl.u32 %v7778, 16
          %v7873 = vrot.slane %v7871, 4
          %v7874 = vshll.u32 %v7778, 16
          %v7876 = vrot.slane %v7874, 5
          %v7877 = vor.u32 %v7873, %v7876
          %v7878 = vrot.slane %v7877, 4
          %v7880 = vshll.u32 %v7779, 16
          %v7882 = vrot.slane %v7880, 5
          %v7883 = vsel %vm5530, %v7878, %v7882
          %v7885 = vshrl.u32 %v7780, 16
          %v7887 = vrot.slane %v7885, 4
          %v7888 = vshll.u32 %v7780, 16
          %v7890 = vrot.slane %v7888, 5
          %v7891 = vor.u32 %v7887, %v7890
          %v7892 = vrot.slane %v7891, 4
          %v7894 = vshll.u32 %v7781, 16
          %v7896 = vrot.slane %v7894, 5
          %v7897 = vsel %vm5530, %v7892, %v7896
          %v7899 = vshrl.u32 %v7782, 16
          %v7901 = vrot.slane %v7899, 4
          %v7902 = vshll.u32 %v7782, 16
          %v7904 = vrot.slane %v7902, 5
          %v7905 = vor.u32 %v7901, %v7904
          %v7906 = vrot.slane %v7905, 4
          %v7908 = vshll.u32 %v7783, 16
          %v7910 = vrot.slane %v7908, 5
          %v7911 = vsel %vm5530, %v7906, %v7910
          %v7913 = vshrl.u32 %v7784, 16
          %v7915 = vrot.slane %v7913, 4
          %v7916 = vshll.u32 %v7784, 16
          %v7918 = vrot.slane %v7916, 5
          %v7919 = vor.u32 %v7915, %v7918
          %v7920 = vrot.slane %v7919, 4
          %v7922 = vshll.u32 %v7785, 16
          %v7924 = vrot.slane %v7922, 5
          %v7925 = vsel %vm5530, %v7920, %v7924
          %v7927 = vshrl.u32 %v7786, 16
          %v7929 = vrot.slane %v7927, 4
          %v7930 = vshll.u32 %v7786, 16
          %v7932 = vrot.slane %v7930, 5
          %v7933 = vor.u32 %v7929, %v7932
          %v7934 = vrot.slane %v7933, 4
          %v7936 = vshll.u32 %v7787, 16
          %v7938 = vrot.slane %v7936, 5
          %v7939 = vsel %vm5530, %v7934, %v7938
          %v7941 = vshrl.u32 %v7788, 16
          %v7943 = vrot.slane %v7941, 4
          %v7944 = vshll.u32 %v7788, 16
          %v7946 = vrot.slane %v7944, 5
          %v7947 = vor.u32 %v7943, %v7946
          %v7948 = vrot.slane %v7947, 4
          %v7950 = vshll.u32 %v7789, 16
          %v7952 = vrot.slane %v7950, 5
          %v7953 = vsel %vm5530, %v7948, %v7952
          %v7955 = vshrl.u32 %v7790, 16
          %v7957 = vrot.slane %v7955, 4
          %v7958 = vshll.u32 %v7790, 16
          %v7960 = vrot.slane %v7958, 5
          %v7961 = vor.u32 %v7957, %v7960
          %v7962 = vrot.slane %v7961, 4
          %v7964 = vshll.u32 %v7791, 16
          %v7966 = vrot.slane %v7964, 5
          %v7967 = vsel %vm5530, %v7962, %v7966
          %v7969 = vshrl.u32 %v7792, 16
          %v7971 = vrot.slane %v7969, 4
          %v7972 = vshll.u32 %v7792, 16
          %v7974 = vrot.slane %v7972, 5
          %v7975 = vor.u32 %v7971, %v7974
          %v7976 = vrot.slane %v7975, 4
          %v7978 = vshll.u32 %v7793, 16
          %v7980 = vrot.slane %v7978, 5
          %v7981 = vsel %vm5530, %v7976, %v7980
          %v7983 = vshrl.u32 %v7794, 16
          %v7985 = vrot.slane %v7983, 4
          %v7986 = vshll.u32 %v7794, 16
          %v7988 = vrot.slane %v7986, 5
          %v7989 = vor.u32 %v7985, %v7988
          %v7990 = vrot.slane %v7989, 4
          %v7992 = vshll.u32 %v7795, 16
          %v7994 = vrot.slane %v7992, 5
          %v7995 = vsel %vm5530, %v7990, %v7994
          %v7997 = vshrl.u32 %v7796, 16
          %v7999 = vrot.slane %v7997, 4
          %v8000 = vshll.u32 %v7796, 16
          %v8002 = vrot.slane %v8000, 5
          %v8003 = vor.u32 %v7999, %v8002
          %v8004 = vrot.slane %v8003, 4
          %v8006 = vshll.u32 %v7797, 16
          %v8008 = vrot.slane %v8006, 5
          %v8009 = vsel %vm5530, %v8004, %v8008
          %v8011 = vshrl.u32 %v7798, 16
          %v8013 = vrot.slane %v8011, 4
          %v8014 = vshll.u32 %v7798, 16
          %v8016 = vrot.slane %v8014, 5
          %v8017 = vor.u32 %v8013, %v8016
          %v8018 = vrot.slane %v8017, 4
          %v8020 = vshll.u32 %v7799, 16
          %v8022 = vrot.slane %v8020, 5
          %v8023 = vsel %vm5530, %v8018, %v8022
          %v8024 = vunpack.c.l.b16 %v7813
          %v8025 = vunpack.c.l.b16 %v7827
          %v8026 = vunpack.c.l.b16 %v7841
          %v8027 = vunpack.c.l.b16 %v7855
          %v8028 = vunpack.c.l.b16 %v7869
          %v8029 = vunpack.c.l.b16 %v7883
          %v8030 = vunpack.c.l.b16 %v7897
          %v8031 = vunpack.c.l.b16 %v7911
          %v8032 = vunpack.c.l.b16 %v7925
          %v8033 = vunpack.c.l.b16 %v7939
          %v8034 = vunpack.c.l.b16 %v7953
          %v8035 = vunpack.c.l.b16 %v7967
          %v8036 = vunpack.c.l.b16 %v7981
          %v8037 = vunpack.c.l.b16 %v7995
          %v8038 = vunpack.c.l.b16 %v8009
          %v8039 = vunpack.c.l.b16 %v8023
          %v8040 = vpack.c.b16 %v8025, %v8024
          %v8041 = vpack.c.b16 %v8027, %v8026
          %v8042 = vpack.c.b16 %v8029, %v8028
          %v8043 = vpack.c.b16 %v8031, %v8030
          %v8044 = vpack.c.b16 %v8033, %v8032
          %v8045 = vpack.c.b16 %v8035, %v8034
          %v8046 = vpack.c.b16 %v8037, %v8036
          %v8047 = vpack.c.b16 %v8039, %v8038
          %8048 = vrot.lane.b32.xlu0 %v8040, 96
          %v8049 = vpop.permute.xlu0 %8048
          %8050 = vrot.lane.b32.xlu0 %v8041, 96
          %v8051 = vpop.permute.xlu0 %8050
          %8052 = vrot.lane.b32.xlu0 %v8042, 96
          %v8053 = vpop.permute.xlu0 %8052
          %8054 = vrot.lane.b32.xlu0 %v8043, 96
          %v8055 = vpop.permute.xlu0 %8054
          %8056 = vrot.lane.b32.xlu0 %v8044, 96
          %v8057 = vpop.permute.xlu0 %8056
          %8058 = vrot.lane.b32.xlu0 %v8045, 96
          %v8059 = vpop.permute.xlu0 %8058
          %8060 = vrot.lane.b32.xlu0 %v8046, 96
          %v8061 = vpop.permute.xlu0 %8060
          %8062 = vrot.lane.b32.xlu0 %v8047, 96
          %v8063 = vpop.permute.xlu0 %8062
          %8072 = vst.msk [vmem:[#allocation6 + $0x10] sm:$0xff] %vm6371, %v8049
          %8073 = vst.msk [vmem:[#allocation6 + $0x48] sm:$0xff] %vm6371, %v8051
          %8074 = vst.msk [vmem:[#allocation6 + $0x80] sm:$0xff] %vm6371, %v8053
          %8075 = vst.msk [vmem:[#allocation6 + $0xb8] sm:$0xff] %vm6371, %v8055
          %8076 = vst.msk [vmem:[#allocation6 + $0xf0] sm:$0xff] %vm6371, %v8057
          %8077 = vst.msk [vmem:[#allocation6 + $0x128] sm:$0xff] %vm6371, %v8059
          %8078 = vst.msk [vmem:[#allocation6 + $0x160] sm:$0xff] %vm6371, %v8061
          %8079 = vst.msk [vmem:[#allocation6 + $0x198] sm:$0xff] %vm6371, %v8063
          %v8080 = vld [vmem:[%s5251] sm:$0xe]
          %v8081 = vld [vmem:[%s5251 + $0x4] sm:$0x1]
          %v8082 = vld [vmem:[%s5251 + $0x8] sm:$0xe]
          %v8083 = vld [vmem:[%s5251 + $0xc] sm:$0x1]
          %v8084 = vld [vmem:[%s5251 + $0x10] sm:$0xe]
          %v8085 = vld [vmem:[%s5251 + $0x14] sm:$0x1]
          %v8086 = vld [vmem:[%s5251 + $0x18] sm:$0xe]
          %v8087 = vld [vmem:[%s5251 + $0x1c] sm:$0x1]
          %v8088 = vld [vmem:[%s5251 + $0x20] sm:$0xe]
          %v8089 = vld [vmem:[%s5251 + $0x24] sm:$0x1]
          %v8090 = vld [vmem:[%s5251 + $0x28] sm:$0xe]
          %v8091 = vld [vmem:[%s5251 + $0x2c] sm:$0x1]
          %v8092 = vld [vmem:[%s5251 + $0x30] sm:$0xe]
          %v8093 = vld [vmem:[%s5251 + $0x34] sm:$0x1]
          %v8094 = vld [vmem:[%s5251 + $0x38] sm:$0xe]
          %v8095 = vld [vmem:[%s5251 + $0x3c] sm:$0x1]
          %v8096 = vld [vmem:[%s5251 + $0x60] sm:$0xe]
          %v8097 = vld [vmem:[%s5251 + $0x64] sm:$0x1]
          %v8098 = vld [vmem:[%s5251 + $0x68] sm:$0xe]
          %v8099 = vld [vmem:[%s5251 + $0x6c] sm:$0x1]
          %v8100 = vld [vmem:[%s5251 + $0x70] sm:$0xe]
          %v8101 = vld [vmem:[%s5251 + $0x74] sm:$0x1]
          %v8102 = vld [vmem:[%s5251 + $0x78] sm:$0xe]
          %v8103 = vld [vmem:[%s5251 + $0x7c] sm:$0x1]
          %v8104 = vld [vmem:[%s5251 + $0x80] sm:$0xe]
          %v8105 = vld [vmem:[%s5251 + $0x84] sm:$0x1]
          %v8106 = vld [vmem:[%s5251 + $0x88] sm:$0xe]
          %v8107 = vld [vmem:[%s5251 + $0x8c] sm:$0x1]
          %v8108 = vld [vmem:[%s5251 + $0x90] sm:$0xe]
          %v8109 = vld [vmem:[%s5251 + $0x94] sm:$0x1]
          %v8110 = vld [vmem:[%s5251 + $0x98] sm:$0xe]
          %v8111 = vld [vmem:[%s5251 + $0x9c] sm:$0x1]
          %v8144 = vrot.slane %v8080, 5
          %v8145 = vrot.slane %v8144, 4
          %v8146 = vrot.slane %v8081, 5
          %v8147 = vsel %vm5878, %v8145, %v8146
          %v8148 = vrot.slane %v8082, 5
          %v8149 = vrot.slane %v8148, 4
          %v8150 = vrot.slane %v8083, 5
          %v8151 = vsel %vm5878, %v8149, %v8150
          %v8152 = vrot.slane %v8084, 5
          %v8153 = vrot.slane %v8152, 4
          %v8154 = vrot.slane %v8085, 5
          %v8155 = vsel %vm5878, %v8153, %v8154
          %v8156 = vrot.slane %v8086, 5
          %v8157 = vrot.slane %v8156, 4
          %v8158 = vrot.slane %v8087, 5
          %v8159 = vsel %vm5878, %v8157, %v8158
          %v8160 = vrot.slane %v8088, 5
          %v8161 = vrot.slane %v8160, 4
          %v8162 = vrot.slane %v8089, 5
          %v8163 = vsel %vm5878, %v8161, %v8162
          %v8164 = vrot.slane %v8090, 5
          %v8165 = vrot.slane %v8164, 4
          %v8166 = vrot.slane %v8091, 5
          %v8167 = vsel %vm5878, %v8165, %v8166
          %v8168 = vrot.slane %v8092, 5
          %v8169 = vrot.slane %v8168, 4
          %v8170 = vrot.slane %v8093, 5
          %v8171 = vsel %vm5878, %v8169, %v8170
          %v8172 = vrot.slane %v8094, 5
          %v8173 = vrot.slane %v8172, 4
          %v8174 = vrot.slane %v8095, 5
          %v8175 = vsel %vm5878, %v8173, %v8174
          %v8176 = vrot.slane %v8096, 5
          %v8177 = vrot.slane %v8176, 4
          %v8178 = vrot.slane %v8097, 5
          %v8179 = vsel %vm5878, %v8177, %v8178
          %v8180 = vrot.slane %v8098, 5
          %v8181 = vrot.slane %v8180, 4
          %v8182 = vrot.slane %v8099, 5
          %v8183 = vsel %vm5878, %v8181, %v8182
          %v8184 = vrot.slane %v8100, 5
          %v8185 = vrot.slane %v8184, 4
          %v8186 = vrot.slane %v8101, 5
          %v8187 = vsel %vm5878, %v8185, %v8186
          %v8188 = vrot.slane %v8102, 5
          %v8189 = vrot.slane %v8188, 4
          %v8190 = vrot.slane %v8103, 5
          %v8191 = vsel %vm5878, %v8189, %v8190
          %v8192 = vrot.slane %v8104, 5
          %v8193 = vrot.slane %v8192, 4
          %v8194 = vrot.slane %v8105, 5
          %v8195 = vsel %vm5878, %v8193, %v8194
          %v8196 = vrot.slane %v8106, 5
          %v8197 = vrot.slane %v8196, 4
          %v8198 = vrot.slane %v8107, 5
          %v8199 = vsel %vm5878, %v8197, %v8198
          %v8200 = vrot.slane %v8108, 5
          %v8201 = vrot.slane %v8200, 4
          %v8202 = vrot.slane %v8109, 5
          %v8203 = vsel %vm5878, %v8201, %v8202
          %v8204 = vrot.slane %v8110, 5
          %v8205 = vrot.slane %v8204, 4
          %v8206 = vrot.slane %v8111, 5
          %v8207 = vsel %vm5878, %v8205, %v8206
          %v8208 = vunpack.c.l.b16 %v8147
          %v8209 = vunpack.c.l.b16 %v8151
          %v8210 = vunpack.c.l.b16 %v8155
          %v8211 = vunpack.c.l.b16 %v8159
          %v8212 = vunpack.c.l.b16 %v8163
          %v8213 = vunpack.c.l.b16 %v8167
          %v8214 = vunpack.c.l.b16 %v8171
          %v8215 = vunpack.c.l.b16 %v8175
          %v8216 = vunpack.c.l.b16 %v8179
          %v8217 = vunpack.c.l.b16 %v8183
          %v8218 = vunpack.c.l.b16 %v8187
          %v8219 = vunpack.c.l.b16 %v8191
          %v8220 = vunpack.c.l.b16 %v8195
          %v8221 = vunpack.c.l.b16 %v8199
          %v8222 = vunpack.c.l.b16 %v8203
          %v8223 = vunpack.c.l.b16 %v8207
          %v8224 = vpack.c.b16 %v8209, %v8208
          %v8225 = vpack.c.b16 %v8211, %v8210
          %v8226 = vpack.c.b16 %v8213, %v8212
          %v8227 = vpack.c.b16 %v8215, %v8214
          %v8228 = vpack.c.b16 %v8217, %v8216
          %v8229 = vpack.c.b16 %v8219, %v8218
          %v8230 = vpack.c.b16 %v8221, %v8220
          %v8231 = vpack.c.b16 %v8223, %v8222
          %8240 = vst.msk [vmem:[#allocation6 + $0x18] sm:$0xff] %vm5487, %v8224
          %8241 = vst.msk [vmem:[#allocation6 + $0x50] sm:$0xff] %vm5487, %v8225
          %8242 = vst.msk [vmem:[#allocation6 + $0x88] sm:$0xff] %vm5487, %v8226
          %8243 = vst.msk [vmem:[#allocation6 + $0xc0] sm:$0xff] %vm5487, %v8227
          %8244 = vst.msk [vmem:[#allocation6 + $0xf8] sm:$0xff] %vm5487, %v8228
          %8245 = vst.msk [vmem:[#allocation6 + $0x130] sm:$0xff] %vm5487, %v8229
          %8246 = vst.msk [vmem:[#allocation6 + $0x168] sm:$0xff] %vm5487, %v8230
          %8247 = vst.msk [vmem:[#allocation6 + $0x1a0] sm:$0xff] %vm5487, %v8231
          %v8248 = vld [vmem:[%s5251] sm:$0xe]
          %v8249 = vld [vmem:[%s5251 + $0x4] sm:$0x3]
          %v8250 = vld [vmem:[%s5251 + $0x8] sm:$0xe]
          %v8251 = vld [vmem:[%s5251 + $0xc] sm:$0x3]
          %v8252 = vld [vmem:[%s5251 + $0x10] sm:$0xe]
          %v8253 = vld [vmem:[%s5251 + $0x14] sm:$0x3]
          %v8254 = vld [vmem:[%s5251 + $0x18] sm:$0xe]
          %v8255 = vld [vmem:[%s5251 + $0x1c] sm:$0x3]
          %v8256 = vld [vmem:[%s5251 + $0x20] sm:$0xe]
          %v8257 = vld [vmem:[%s5251 + $0x24] sm:$0x3]
          %v8258 = vld [vmem:[%s5251 + $0x28] sm:$0xe]
          %v8259 = vld [vmem:[%s5251 + $0x2c] sm:$0x3]
          %v8260 = vld [vmem:[%s5251 + $0x30] sm:$0xe]
          %v8261 = vld [vmem:[%s5251 + $0x34] sm:$0x3]
          %v8262 = vld [vmem:[%s5251 + $0x38] sm:$0xe]
          %v8263 = vld [vmem:[%s5251 + $0x3c] sm:$0x3]
          %v8264 = vld [vmem:[%s5251 + $0x60] sm:$0xe]
          %v8265 = vld [vmem:[%s5251 + $0x64] sm:$0x3]
          %v8266 = vld [vmem:[%s5251 + $0x68] sm:$0xe]
          %v8267 = vld [vmem:[%s5251 + $0x6c] sm:$0x3]
          %v8268 = vld [vmem:[%s5251 + $0x70] sm:$0xe]
          %v8269 = vld [vmem:[%s5251 + $0x74] sm:$0x3]
          %v8270 = vld [vmem:[%s5251 + $0x78] sm:$0xe]
          %v8271 = vld [vmem:[%s5251 + $0x7c] sm:$0x3]
          %v8272 = vld [vmem:[%s5251 + $0x80] sm:$0xe]
          %v8273 = vld [vmem:[%s5251 + $0x84] sm:$0x3]
          %v8274 = vld [vmem:[%s5251 + $0x88] sm:$0xe]
          %v8275 = vld [vmem:[%s5251 + $0x8c] sm:$0x3]
          %v8276 = vld [vmem:[%s5251 + $0x90] sm:$0xe]
          %v8277 = vld [vmem:[%s5251 + $0x94] sm:$0x3]
          %v8278 = vld [vmem:[%s5251 + $0x98] sm:$0xe]
          %v8279 = vld [vmem:[%s5251 + $0x9c] sm:$0x3]
          %v8281 = vshrl.u32 %v8248, 16
          %v8283 = vrot.slane %v8281, 5
          %v8284 = vshll.u32 %v8248, 16
          %v8286 = vrot.slane %v8284, 6
          %v8287 = vor.u32 %v8283, %v8286
          %v8288 = vrot.slane %v8287, 4
          %v8290 = vshrl.u32 %v8249, 16
          %v8292 = vrot.slane %v8290, 5
          %v8293 = vshll.u32 %v8249, 16
          %v8295 = vrot.slane %v8293, 6
          %v8296 = vor.u32 %v8292, %v8295
          %v8297 = vsel %vm6034, %v8288, %v8296
          %v8299 = vshrl.u32 %v8250, 16
          %v8301 = vrot.slane %v8299, 5
          %v8302 = vshll.u32 %v8250, 16
          %v8304 = vrot.slane %v8302, 6
          %v8305 = vor.u32 %v8301, %v8304
          %v8306 = vrot.slane %v8305, 4
          %v8308 = vshrl.u32 %v8251, 16
          %v8310 = vrot.slane %v8308, 5
          %v8311 = vshll.u32 %v8251, 16
          %v8313 = vrot.slane %v8311, 6
          %v8314 = vor.u32 %v8310, %v8313
          %v8315 = vsel %vm6034, %v8306, %v8314
          %v8317 = vshrl.u32 %v8252, 16
          %v8319 = vrot.slane %v8317, 5
          %v8320 = vshll.u32 %v8252, 16
          %v8322 = vrot.slane %v8320, 6
          %v8323 = vor.u32 %v8319, %v8322
          %v8324 = vrot.slane %v8323, 4
          %v8326 = vshrl.u32 %v8253, 16
          %v8328 = vrot.slane %v8326, 5
          %v8329 = vshll.u32 %v8253, 16
          %v8331 = vrot.slane %v8329, 6
          %v8332 = vor.u32 %v8328, %v8331
          %v8333 = vsel %vm6034, %v8324, %v8332
          %v8335 = vshrl.u32 %v8254, 16
          %v8337 = vrot.slane %v8335, 5
          %v8338 = vshll.u32 %v8254, 16
          %v8340 = vrot.slane %v8338, 6
          %v8341 = vor.u32 %v8337, %v8340
          %v8342 = vrot.slane %v8341, 4
          %v8344 = vshrl.u32 %v8255, 16
          %v8346 = vrot.slane %v8344, 5
          %v8347 = vshll.u32 %v8255, 16
          %v8349 = vrot.slane %v8347, 6
          %v8350 = vor.u32 %v8346, %v8349
          %v8351 = vsel %vm6034, %v8342, %v8350
          %v8353 = vshrl.u32 %v8256, 16
          %v8355 = vrot.slane %v8353, 5
          %v8356 = vshll.u32 %v8256, 16
          %v8358 = vrot.slane %v8356, 6
          %v8359 = vor.u32 %v8355, %v8358
          %v8360 = vrot.slane %v8359, 4
          %v8362 = vshrl.u32 %v8257, 16
          %v8364 = vrot.slane %v8362, 5
          %v8365 = vshll.u32 %v8257, 16
          %v8367 = vrot.slane %v8365, 6
          %v8368 = vor.u32 %v8364, %v8367
          %v8369 = vsel %vm6034, %v8360, %v8368
          %v8371 = vshrl.u32 %v8258, 16
          %v8373 = vrot.slane %v8371, 5
          %v8374 = vshll.u32 %v8258, 16
          %v8376 = vrot.slane %v8374, 6
          %v8377 = vor.u32 %v8373, %v8376
          %v8378 = vrot.slane %v8377, 4
          %v8380 = vshrl.u32 %v8259, 16
          %v8382 = vrot.slane %v8380, 5
          %v8383 = vshll.u32 %v8259, 16
          %v8385 = vrot.slane %v8383, 6
          %v8386 = vor.u32 %v8382, %v8385
          %v8387 = vsel %vm6034, %v8378, %v8386
          %v8389 = vshrl.u32 %v8260, 16
          %v8391 = vrot.slane %v8389, 5
          %v8392 = vshll.u32 %v8260, 16
          %v8394 = vrot.slane %v8392, 6
          %v8395 = vor.u32 %v8391, %v8394
          %v8396 = vrot.slane %v8395, 4
          %v8398 = vshrl.u32 %v8261, 16
          %v8400 = vrot.slane %v8398, 5
          %v8401 = vshll.u32 %v8261, 16
          %v8403 = vrot.slane %v8401, 6
          %v8404 = vor.u32 %v8400, %v8403
          %v8405 = vsel %vm6034, %v8396, %v8404
          %v8407 = vshrl.u32 %v8262, 16
          %v8409 = vrot.slane %v8407, 5
          %v8410 = vshll.u32 %v8262, 16
          %v8412 = vrot.slane %v8410, 6
          %v8413 = vor.u32 %v8409, %v8412
          %v8414 = vrot.slane %v8413, 4
          %v8416 = vshrl.u32 %v8263, 16
          %v8418 = vrot.slane %v8416, 5
          %v8419 = vshll.u32 %v8263, 16
          %v8421 = vrot.slane %v8419, 6
          %v8422 = vor.u32 %v8418, %v8421
          %v8423 = vsel %vm6034, %v8414, %v8422
          %v8425 = vshrl.u32 %v8264, 16
          %v8427 = vrot.slane %v8425, 5
          %v8428 = vshll.u32 %v8264, 16
          %v8430 = vrot.slane %v8428, 6
          %v8431 = vor.u32 %v8427, %v8430
          %v8432 = vrot.slane %v8431, 4
          %v8434 = vshrl.u32 %v8265, 16
          %v8436 = vrot.slane %v8434, 5
          %v8437 = vshll.u32 %v8265, 16
          %v8439 = vrot.slane %v8437, 6
          %v8440 = vor.u32 %v8436, %v8439
          %v8441 = vsel %vm6034, %v8432, %v8440
          %v8443 = vshrl.u32 %v8266, 16
          %v8445 = vrot.slane %v8443, 5
          %v8446 = vshll.u32 %v8266, 16
          %v8448 = vrot.slane %v8446, 6
          %v8449 = vor.u32 %v8445, %v8448
          %v8450 = vrot.slane %v8449, 4
          %v8452 = vshrl.u32 %v8267, 16
          %v8454 = vrot.slane %v8452, 5
          %v8455 = vshll.u32 %v8267, 16
          %v8457 = vrot.slane %v8455, 6
          %v8458 = vor.u32 %v8454, %v8457
          %v8459 = vsel %vm6034, %v8450, %v8458
          %v8461 = vshrl.u32 %v8268, 16
          %v8463 = vrot.slane %v8461, 5
          %v8464 = vshll.u32 %v8268, 16
          %v8466 = vrot.slane %v8464, 6
          %v8467 = vor.u32 %v8463, %v8466
          %v8468 = vrot.slane %v8467, 4
          %v8470 = vshrl.u32 %v8269, 16
          %v8472 = vrot.slane %v8470, 5
          %v8473 = vshll.u32 %v8269, 16
          %v8475 = vrot.slane %v8473, 6
          %v8476 = vor.u32 %v8472, %v8475
          %v8477 = vsel %vm6034, %v8468, %v8476
          %v8479 = vshrl.u32 %v8270, 16
          %v8481 = vrot.slane %v8479, 5
          %v8482 = vshll.u32 %v8270, 16
          %v8484 = vrot.slane %v8482, 6
          %v8485 = vor.u32 %v8481, %v8484
          %v8486 = vrot.slane %v8485, 4
          %v8488 = vshrl.u32 %v8271, 16
          %v8490 = vrot.slane %v8488, 5
          %v8491 = vshll.u32 %v8271, 16
          %v8493 = vrot.slane %v8491, 6
          %v8494 = vor.u32 %v8490, %v8493
          %v8495 = vsel %vm6034, %v8486, %v8494
          %v8497 = vshrl.u32 %v8272, 16
          %v8499 = vrot.slane %v8497, 5
          %v8500 = vshll.u32 %v8272, 16
          %v8502 = vrot.slane %v8500, 6
          %v8503 = vor.u32 %v8499, %v8502
          %v8504 = vrot.slane %v8503, 4
          %v8506 = vshrl.u32 %v8273, 16
          %v8508 = vrot.slane %v8506, 5
          %v8509 = vshll.u32 %v8273, 16
          %v8511 = vrot.slane %v8509, 6
          %v8512 = vor.u32 %v8508, %v8511
          %v8513 = vsel %vm6034, %v8504, %v8512
          %v8515 = vshrl.u32 %v8274, 16
          %v8517 = vrot.slane %v8515, 5
          %v8518 = vshll.u32 %v8274, 16
          %v8520 = vrot.slane %v8518, 6
          %v8521 = vor.u32 %v8517, %v8520
          %v8522 = vrot.slane %v8521, 4
          %v8524 = vshrl.u32 %v8275, 16
          %v8526 = vrot.slane %v8524, 5
          %v8527 = vshll.u32 %v8275, 16
          %v8529 = vrot.slane %v8527, 6
          %v8530 = vor.u32 %v8526, %v8529
          %v8531 = vsel %vm6034, %v8522, %v8530
          %v8533 = vshrl.u32 %v8276, 16
          %v8535 = vrot.slane %v8533, 5
          %v8536 = vshll.u32 %v8276, 16
          %v8538 = vrot.slane %v8536, 6
          %v8539 = vor.u32 %v8535, %v8538
          %v8540 = vrot.slane %v8539, 4
          %v8542 = vshrl.u32 %v8277, 16
          %v8544 = vrot.slane %v8542, 5
          %v8545 = vshll.u32 %v8277, 16
          %v8547 = vrot.slane %v8545, 6
          %v8548 = vor.u32 %v8544, %v8547
          %v8549 = vsel %vm6034, %v8540, %v8548
          %v8551 = vshrl.u32 %v8278, 16
          %v8553 = vrot.slane %v8551, 5
          %v8554 = vshll.u32 %v8278, 16
          %v8556 = vrot.slane %v8554, 6
          %v8557 = vor.u32 %v8553, %v8556
          %v8558 = vrot.slane %v8557, 4
          %v8560 = vshrl.u32 %v8279, 16
          %v8562 = vrot.slane %v8560, 5
          %v8563 = vshll.u32 %v8279, 16
          %v8565 = vrot.slane %v8563, 6
          %v8566 = vor.u32 %v8562, %v8565
          %v8567 = vsel %vm6034, %v8558, %v8566
          %v8568 = vunpack.c.l.b16 %v8297
          %v8569 = vunpack.c.l.b16 %v8315
          %v8570 = vunpack.c.l.b16 %v8333
          %v8571 = vunpack.c.l.b16 %v8351
          %v8572 = vunpack.c.l.b16 %v8369
          %v8573 = vunpack.c.l.b16 %v8387
          %v8574 = vunpack.c.l.b16 %v8405
          %v8575 = vunpack.c.l.b16 %v8423
          %v8576 = vunpack.c.l.b16 %v8441
          %v8577 = vunpack.c.l.b16 %v8459
          %v8578 = vunpack.c.l.b16 %v8477
          %v8579 = vunpack.c.l.b16 %v8495
          %v8580 = vunpack.c.l.b16 %v8513
          %v8581 = vunpack.c.l.b16 %v8531
          %v8582 = vunpack.c.l.b16 %v8549
          %v8583 = vunpack.c.l.b16 %v8567
          %v8584 = vpack.c.b16 %v8569, %v8568
          %v8585 = vpack.c.b16 %v8571, %v8570
          %v8586 = vpack.c.b16 %v8573, %v8572
          %v8587 = vpack.c.b16 %v8575, %v8574
          %v8588 = vpack.c.b16 %v8577, %v8576
          %v8589 = vpack.c.b16 %v8579, %v8578
          %v8590 = vpack.c.b16 %v8581, %v8580
          %v8591 = vpack.c.b16 %v8583, %v8582
          %8592 = vrot.lane.b32.xlu0 %v8584, 32
          %v8593 = vpop.permute.xlu0 %8592
          %8594 = vrot.lane.b32.xlu0 %v8585, 32
          %v8595 = vpop.permute.xlu0 %8594
          %8596 = vrot.lane.b32.xlu0 %v8586, 32
          %v8597 = vpop.permute.xlu0 %8596
          %8598 = vrot.lane.b32.xlu0 %v8587, 32
          %v8599 = vpop.permute.xlu0 %8598
          %8600 = vrot.lane.b32.xlu0 %v8588, 32
          %v8601 = vpop.permute.xlu0 %8600
          %8602 = vrot.lane.b32.xlu0 %v8589, 32
          %v8603 = vpop.permute.xlu0 %8602
          %8604 = vrot.lane.b32.xlu0 %v8590, 32
          %v8605 = vpop.permute.xlu0 %8604
          %8606 = vrot.lane.b32.xlu0 %v8591, 32
          %v8607 = vpop.permute.xlu0 %8606
          %8616 = vst.msk [vmem:[#allocation6 + $0x18] sm:$0xff] %vm5803, %v8593
          %8617 = vst.msk [vmem:[#allocation6 + $0x50] sm:$0xff] %vm5803, %v8595
          %8618 = vst.msk [vmem:[#allocation6 + $0x88] sm:$0xff] %vm5803, %v8597
          %8619 = vst.msk [vmem:[#allocation6 + $0xc0] sm:$0xff] %vm5803, %v8599
          %8620 = vst.msk [vmem:[#allocation6 + $0xf8] sm:$0xff] %vm5803, %v8601
          %8621 = vst.msk [vmem:[#allocation6 + $0x130] sm:$0xff] %vm5803, %v8603
          %8622 = vst.msk [vmem:[#allocation6 + $0x168] sm:$0xff] %vm5803, %v8605
          %8623 = vst.msk [vmem:[#allocation6 + $0x1a0] sm:$0xff] %vm5803, %v8607
          %v8624 = vld [vmem:[%s5251] sm:$0xc]
          %v8625 = vld [vmem:[%s5251 + $0x4] sm:$0x3]
          %v8626 = vld [vmem:[%s5251 + $0x8] sm:$0xc]
          %v8627 = vld [vmem:[%s5251 + $0xc] sm:$0x3]
          %v8628 = vld [vmem:[%s5251 + $0x10] sm:$0xc]
          %v8629 = vld [vmem:[%s5251 + $0x14] sm:$0x3]
          %v8630 = vld [vmem:[%s5251 + $0x18] sm:$0xc]
          %v8631 = vld [vmem:[%s5251 + $0x1c] sm:$0x3]
          %v8632 = vld [vmem:[%s5251 + $0x20] sm:$0xc]
          %v8633 = vld [vmem:[%s5251 + $0x24] sm:$0x3]
          %v8634 = vld [vmem:[%s5251 + $0x28] sm:$0xc]
          %v8635 = vld [vmem:[%s5251 + $0x2c] sm:$0x3]
          %v8636 = vld [vmem:[%s5251 + $0x30] sm:$0xc]
          %v8637 = vld [vmem:[%s5251 + $0x34] sm:$0x3]
          %v8638 = vld [vmem:[%s5251 + $0x38] sm:$0xc]
          %v8639 = vld [vmem:[%s5251 + $0x3c] sm:$0x3]
          %v8640 = vld [vmem:[%s5251 + $0x60] sm:$0xc]
          %v8641 = vld [vmem:[%s5251 + $0x64] sm:$0x3]
          %v8642 = vld [vmem:[%s5251 + $0x68] sm:$0xc]
          %v8643 = vld [vmem:[%s5251 + $0x6c] sm:$0x3]
          %v8644 = vld [vmem:[%s5251 + $0x70] sm:$0xc]
          %v8645 = vld [vmem:[%s5251 + $0x74] sm:$0x3]
          %v8646 = vld [vmem:[%s5251 + $0x78] sm:$0xc]
          %v8647 = vld [vmem:[%s5251 + $0x7c] sm:$0x3]
          %v8648 = vld [vmem:[%s5251 + $0x80] sm:$0xc]
          %v8649 = vld [vmem:[%s5251 + $0x84] sm:$0x3]
          %v8650 = vld [vmem:[%s5251 + $0x88] sm:$0xc]
          %v8651 = vld [vmem:[%s5251 + $0x8c] sm:$0x3]
          %v8652 = vld [vmem:[%s5251 + $0x90] sm:$0xc]
          %v8653 = vld [vmem:[%s5251 + $0x94] sm:$0x3]
          %v8654 = vld [vmem:[%s5251 + $0x98] sm:$0xc]
          %v8655 = vld [vmem:[%s5251 + $0x9c] sm:$0x3]
          %v8688 = vrot.slane %v8624, 6
          %v8689 = vrot.slane %v8688, 4
          %v8690 = vrot.slane %v8625, 6
          %v8691 = vsel %vm6446, %v8689, %v8690
          %v8692 = vrot.slane %v8626, 6
          %v8693 = vrot.slane %v8692, 4
          %v8694 = vrot.slane %v8627, 6
          %v8695 = vsel %vm6446, %v8693, %v8694
          %v8696 = vrot.slane %v8628, 6
          %v8697 = vrot.slane %v8696, 4
          %v8698 = vrot.slane %v8629, 6
          %v8699 = vsel %vm6446, %v8697, %v8698
          %v8700 = vrot.slane %v8630, 6
          %v8701 = vrot.slane %v8700, 4
          %v8702 = vrot.slane %v8631, 6
          %v8703 = vsel %vm6446, %v8701, %v8702
          %v8704 = vrot.slane %v8632, 6
          %v8705 = vrot.slane %v8704, 4
          %v8706 = vrot.slane %v8633, 6
          %v8707 = vsel %vm6446, %v8705, %v8706
          %v8708 = vrot.slane %v8634, 6
          %v8709 = vrot.slane %v8708, 4
          %v8710 = vrot.slane %v8635, 6
          %v8711 = vsel %vm6446, %v8709, %v8710
          %v8712 = vrot.slane %v8636, 6
          %v8713 = vrot.slane %v8712, 4
          %v8714 = vrot.slane %v8637, 6
          %v8715 = vsel %vm6446, %v8713, %v8714
          %v8716 = vrot.slane %v8638, 6
          %v8717 = vrot.slane %v8716, 4
          %v8718 = vrot.slane %v8639, 6
          %v8719 = vsel %vm6446, %v8717, %v8718
          %v8720 = vrot.slane %v8640, 6
          %v8721 = vrot.slane %v8720, 4
          %v8722 = vrot.slane %v8641, 6
          %v8723 = vsel %vm6446, %v8721, %v8722
          %v8724 = vrot.slane %v8642, 6
          %v8725 = vrot.slane %v8724, 4
          %v8726 = vrot.slane %v8643, 6
          %v8727 = vsel %vm6446, %v8725, %v8726
          %v8728 = vrot.slane %v8644, 6
          %v8729 = vrot.slane %v8728, 4
          %v8730 = vrot.slane %v8645, 6
          %v8731 = vsel %vm6446, %v8729, %v8730
          %v8732 = vrot.slane %v8646, 6
          %v8733 = vrot.slane %v8732, 4
          %v8734 = vrot.slane %v8647, 6
          %v8735 = vsel %vm6446, %v8733, %v8734
          %v8736 = vrot.slane %v8648, 6
          %v8737 = vrot.slane %v8736, 4
          %v8738 = vrot.slane %v8649, 6
          %v8739 = vsel %vm6446, %v8737, %v8738
          %v8740 = vrot.slane %v8650, 6
          %v8741 = vrot.slane %v8740, 4
          %v8742 = vrot.slane %v8651, 6
          %v8743 = vsel %vm6446, %v8741, %v8742
          %v8744 = vrot.slane %v8652, 6
          %v8745 = vrot.slane %v8744, 4
          %v8746 = vrot.slane %v8653, 6
          %v8747 = vsel %vm6446, %v8745, %v8746
          %v8748 = vrot.slane %v8654, 6
          %v8749 = vrot.slane %v8748, 4
          %v8750 = vrot.slane %v8655, 6
          %v8751 = vsel %vm6446, %v8749, %v8750
          %v8752 = vunpack.c.l.b16 %v8691
          %v8753 = vunpack.c.l.b16 %v8695
          %v8754 = vunpack.c.l.b16 %v8699
          %v8755 = vunpack.c.l.b16 %v8703
          %v8756 = vunpack.c.l.b16 %v8707
          %v8757 = vunpack.c.l.b16 %v8711
          %v8758 = vunpack.c.l.b16 %v8715
          %v8759 = vunpack.c.l.b16 %v8719
          %v8760 = vunpack.c.l.b16 %v8723
          %v8761 = vunpack.c.l.b16 %v8727
          %v8762 = vunpack.c.l.b16 %v8731
          %v8763 = vunpack.c.l.b16 %v8735
          %v8764 = vunpack.c.l.b16 %v8739
          %v8765 = vunpack.c.l.b16 %v8743
          %v8766 = vunpack.c.l.b16 %v8747
          %v8767 = vunpack.c.l.b16 %v8751
          %v8768 = vpack.c.b16 %v8753, %v8752
          %v8769 = vpack.c.b16 %v8755, %v8754
          %v8770 = vpack.c.b16 %v8757, %v8756
          %v8771 = vpack.c.b16 %v8759, %v8758
          %v8772 = vpack.c.b16 %v8761, %v8760
          %v8773 = vpack.c.b16 %v8763, %v8762
          %v8774 = vpack.c.b16 %v8765, %v8764
          %v8775 = vpack.c.b16 %v8767, %v8766
          %8776 = vrot.lane.b32.xlu0 %v8768, 64
          %v8777 = vpop.permute.xlu0 %8776
          %8778 = vrot.lane.b32.xlu0 %v8769, 64
          %v8779 = vpop.permute.xlu0 %8778
          %8780 = vrot.lane.b32.xlu0 %v8770, 64
          %v8781 = vpop.permute.xlu0 %8780
          %8782 = vrot.lane.b32.xlu0 %v8771, 64
          %v8783 = vpop.permute.xlu0 %8782
          %8784 = vrot.lane.b32.xlu0 %v8772, 64
          %v8785 = vpop.permute.xlu0 %8784
          %8786 = vrot.lane.b32.xlu0 %v8773, 64
          %v8787 = vpop.permute.xlu0 %8786
          %8788 = vrot.lane.b32.xlu0 %v8774, 64
          %v8789 = vpop.permute.xlu0 %8788
          %8790 = vrot.lane.b32.xlu0 %v8775, 64
          %v8791 = vpop.permute.xlu0 %8790
          %8800 = vst.msk [vmem:[#allocation6 + $0x18] sm:$0xff] %vm5991, %v8777
          %8801 = vst.msk [vmem:[#allocation6 + $0x50] sm:$0xff] %vm5991, %v8779
          %8802 = vst.msk [vmem:[#allocation6 + $0x88] sm:$0xff] %vm5991, %v8781
          %8803 = vst.msk [vmem:[#allocation6 + $0xc0] sm:$0xff] %vm5991, %v8783
          %8804 = vst.msk [vmem:[#allocation6 + $0xf8] sm:$0xff] %vm5991, %v8785
          %8805 = vst.msk [vmem:[#allocation6 + $0x130] sm:$0xff] %vm5991, %v8787
          %8806 = vst.msk [vmem:[#allocation6 + $0x168] sm:$0xff] %vm5991, %v8789
          %8807 = vst.msk [vmem:[#allocation6 + $0x1a0] sm:$0xff] %vm5991, %v8791
          %s8808 = scalar_lea.vmem [#allocation5], 24
          %v8809 = vld [vmem:[%s8808] sm:$0xf]
          %v8810 = vld [vmem:[%s8808 + $0x8] sm:$0xf]
          %v8811 = vld [vmem:[%s8808 + $0x10] sm:$0xf]
          %v8812 = vld [vmem:[%s8808 + $0x18] sm:$0xf]
          %v8813 = vld [vmem:[%s8808 + $0x20] sm:$0xf]
          %v8814 = vld [vmem:[%s8808 + $0x28] sm:$0xf]
          %v8815 = vld [vmem:[%s8808 + $0x30] sm:$0xf]
          %v8816 = vld [vmem:[%s8808 + $0x38] sm:$0xf]
          %v8817 = vld [vmem:[%s8808 + $0x60] sm:$0xf]
          %v8818 = vld [vmem:[%s8808 + $0x68] sm:$0xf]
          %v8819 = vld [vmem:[%s8808 + $0x70] sm:$0xf]
          %v8820 = vld [vmem:[%s8808 + $0x78] sm:$0xf]
          %v8821 = vld [vmem:[%s8808 + $0x80] sm:$0xf]
          %v8822 = vld [vmem:[%s8808 + $0x88] sm:$0xf]
          %v8823 = vld [vmem:[%s8808 + $0x90] sm:$0xf]
          %v8824 = vld [vmem:[%s8808 + $0x98] sm:$0xf]
          %v8841 = vunpack.c.l.b16 %v8809
          %v8842 = vunpack.c.l.b16 %v8810
          %v8843 = vunpack.c.l.b16 %v8811
          %v8844 = vunpack.c.l.b16 %v8812
          %v8845 = vunpack.c.l.b16 %v8813
          %v8846 = vunpack.c.l.b16 %v8814
          %v8847 = vunpack.c.l.b16 %v8815
          %v8848 = vunpack.c.l.b16 %v8816
          %v8849 = vunpack.c.l.b16 %v8817
          %v8850 = vunpack.c.l.b16 %v8818
          %v8851 = vunpack.c.l.b16 %v8819
          %v8852 = vunpack.c.l.b16 %v8820
          %v8853 = vunpack.c.l.b16 %v8821
          %v8854 = vunpack.c.l.b16 %v8822
          %v8855 = vunpack.c.l.b16 %v8823
          %v8856 = vunpack.c.l.b16 %v8824
          %v8857 = vpack.c.b16 %v8842, %v8841
          %v8858 = vpack.c.b16 %v8844, %v8843
          %v8859 = vpack.c.b16 %v8846, %v8845
          %v8860 = vpack.c.b16 %v8848, %v8847
          %v8861 = vpack.c.b16 %v8850, %v8849
          %v8862 = vpack.c.b16 %v8852, %v8851
          %v8863 = vpack.c.b16 %v8854, %v8853
          %v8864 = vpack.c.b16 %v8856, %v8855
          %8865 = vrot.lane.b32.xlu0 %v8857, 96
          %v8866 = vpop.permute.xlu0 %8865
          %8867 = vrot.lane.b32.xlu0 %v8858, 96
          %v8868 = vpop.permute.xlu0 %8867
          %8869 = vrot.lane.b32.xlu0 %v8859, 96
          %v8870 = vpop.permute.xlu0 %8869
          %8871 = vrot.lane.b32.xlu0 %v8860, 96
          %v8872 = vpop.permute.xlu0 %8871
          %8873 = vrot.lane.b32.xlu0 %v8861, 96
          %v8874 = vpop.permute.xlu0 %8873
          %8875 = vrot.lane.b32.xlu0 %v8862, 96
          %v8876 = vpop.permute.xlu0 %8875
          %8877 = vrot.lane.b32.xlu0 %v8863, 96
          %v8878 = vpop.permute.xlu0 %8877
          %8879 = vrot.lane.b32.xlu0 %v8864, 96
          %v8880 = vpop.permute.xlu0 %8879
          %8889 = vst.msk [vmem:[#allocation6 + $0x18] sm:$0xff] %vm6371, %v8866
          %8890 = vst.msk [vmem:[#allocation6 + $0x50] sm:$0xff] %vm6371, %v8868
          %8891 = vst.msk [vmem:[#allocation6 + $0x88] sm:$0xff] %vm6371, %v8870
          %8892 = vst.msk [vmem:[#allocation6 + $0xc0] sm:$0xff] %vm6371, %v8872
          %8893 = vst.msk [vmem:[#allocation6 + $0xf8] sm:$0xff] %vm6371, %v8874
          %8894 = vst.msk [vmem:[#allocation6 + $0x130] sm:$0xff] %vm6371, %v8876
          %8895 = vst.msk [vmem:[#allocation6 + $0x168] sm:$0xff] %vm6371, %v8878
          %8896 = vst.msk [vmem:[#allocation6 + $0x1a0] sm:$0xff] %vm6371, %v8880
          %v8897 = vld [vmem:[%s8808] sm:$0xf]
          %v8898 = vld [vmem:[%s8808 + $0x4] sm:$0x1]
          %v8899 = vld [vmem:[%s8808 + $0x8] sm:$0xf]
          %v8900 = vld [vmem:[%s8808 + $0xc] sm:$0x1]
          %v8901 = vld [vmem:[%s8808 + $0x10] sm:$0xf]
          %v8902 = vld [vmem:[%s8808 + $0x14] sm:$0x1]
          %v8903 = vld [vmem:[%s8808 + $0x18] sm:$0xf]
          %v8904 = vld [vmem:[%s8808 + $0x1c] sm:$0x1]
          %v8905 = vld [vmem:[%s8808 + $0x20] sm:$0xf]
          %v8906 = vld [vmem:[%s8808 + $0x24] sm:$0x1]
          %v8907 = vld [vmem:[%s8808 + $0x28] sm:$0xf]
          %v8908 = vld [vmem:[%s8808 + $0x2c] sm:$0x1]
          %v8909 = vld [vmem:[%s8808 + $0x30] sm:$0xf]
          %v8910 = vld [vmem:[%s8808 + $0x34] sm:$0x1]
          %v8911 = vld [vmem:[%s8808 + $0x38] sm:$0xf]
          %v8912 = vld [vmem:[%s8808 + $0x3c] sm:$0x1]
          %v8913 = vld [vmem:[%s8808 + $0x60] sm:$0xf]
          %v8914 = vld [vmem:[%s8808 + $0x64] sm:$0x1]
          %v8915 = vld [vmem:[%s8808 + $0x68] sm:$0xf]
          %v8916 = vld [vmem:[%s8808 + $0x6c] sm:$0x1]
          %v8917 = vld [vmem:[%s8808 + $0x70] sm:$0xf]
          %v8918 = vld [vmem:[%s8808 + $0x74] sm:$0x1]
          %v8919 = vld [vmem:[%s8808 + $0x78] sm:$0xf]
          %v8920 = vld [vmem:[%s8808 + $0x7c] sm:$0x1]
          %v8921 = vld [vmem:[%s8808 + $0x80] sm:$0xf]
          %v8922 = vld [vmem:[%s8808 + $0x84] sm:$0x1]
          %v8923 = vld [vmem:[%s8808 + $0x88] sm:$0xf]
          %v8924 = vld [vmem:[%s8808 + $0x8c] sm:$0x1]
          %v8925 = vld [vmem:[%s8808 + $0x90] sm:$0xf]
          %v8926 = vld [vmem:[%s8808 + $0x94] sm:$0x1]
          %v8927 = vld [vmem:[%s8808 + $0x98] sm:$0xf]
          %v8928 = vld [vmem:[%s8808 + $0x9c] sm:$0x1]
          %v8930 = vshrl.u32 %v8897, 16
          %v8932 = vrot.slane %v8930, 4
          %v8933 = vshll.u32 %v8897, 16
          %v8935 = vrot.slane %v8933, 5
          %v8936 = vor.u32 %v8932, %v8935
          %v8937 = vrot.slane %v8936, 4
          %v8939 = vshll.u32 %v8898, 16
          %v8941 = vrot.slane %v8939, 5
          %v8942 = vsel %vm5530, %v8937, %v8941
          %v8944 = vshrl.u32 %v8899, 16
          %v8946 = vrot.slane %v8944, 4
          %v8947 = vshll.u32 %v8899, 16
          %v8949 = vrot.slane %v8947, 5
          %v8950 = vor.u32 %v8946, %v8949
          %v8951 = vrot.slane %v8950, 4
          %v8953 = vshll.u32 %v8900, 16
          %v8955 = vrot.slane %v8953, 5
          %v8956 = vsel %vm5530, %v8951, %v8955
          %v8958 = vshrl.u32 %v8901, 16
          %v8960 = vrot.slane %v8958, 4
          %v8961 = vshll.u32 %v8901, 16
          %v8963 = vrot.slane %v8961, 5
          %v8964 = vor.u32 %v8960, %v8963
          %v8965 = vrot.slane %v8964, 4
          %v8967 = vshll.u32 %v8902, 16
          %v8969 = vrot.slane %v8967, 5
          %v8970 = vsel %vm5530, %v8965, %v8969
          %v8972 = vshrl.u32 %v8903, 16
          %v8974 = vrot.slane %v8972, 4
          %v8975 = vshll.u32 %v8903, 16
          %v8977 = vrot.slane %v8975, 5
          %v8978 = vor.u32 %v8974, %v8977
          %v8979 = vrot.slane %v8978, 4
          %v8981 = vshll.u32 %v8904, 16
          %v8983 = vrot.slane %v8981, 5
          %v8984 = vsel %vm5530, %v8979, %v8983
          %v8986 = vshrl.u32 %v8905, 16
          %v8988 = vrot.slane %v8986, 4
          %v8989 = vshll.u32 %v8905, 16
          %v8991 = vrot.slane %v8989, 5
          %v8992 = vor.u32 %v8988, %v8991
          %v8993 = vrot.slane %v8992, 4
          %v8995 = vshll.u32 %v8906, 16
          %v8997 = vrot.slane %v8995, 5
          %v8998 = vsel %vm5530, %v8993, %v8997
          %v9000 = vshrl.u32 %v8907, 16
          %v9002 = vrot.slane %v9000, 4
          %v9003 = vshll.u32 %v8907, 16
          %v9005 = vrot.slane %v9003, 5
          %v9006 = vor.u32 %v9002, %v9005
          %v9007 = vrot.slane %v9006, 4
          %v9009 = vshll.u32 %v8908, 16
          %v9011 = vrot.slane %v9009, 5
          %v9012 = vsel %vm5530, %v9007, %v9011
          %v9014 = vshrl.u32 %v8909, 16
          %v9016 = vrot.slane %v9014, 4
          %v9017 = vshll.u32 %v8909, 16
          %v9019 = vrot.slane %v9017, 5
          %v9020 = vor.u32 %v9016, %v9019
          %v9021 = vrot.slane %v9020, 4
          %v9023 = vshll.u32 %v8910, 16
          %v9025 = vrot.slane %v9023, 5
          %v9026 = vsel %vm5530, %v9021, %v9025
          %v9028 = vshrl.u32 %v8911, 16
          %v9030 = vrot.slane %v9028, 4
          %v9031 = vshll.u32 %v8911, 16
          %v9033 = vrot.slane %v9031, 5
          %v9034 = vor.u32 %v9030, %v9033
          %v9035 = vrot.slane %v9034, 4
          %v9037 = vshll.u32 %v8912, 16
          %v9039 = vrot.slane %v9037, 5
          %v9040 = vsel %vm5530, %v9035, %v9039
          %v9042 = vshrl.u32 %v8913, 16
          %v9044 = vrot.slane %v9042, 4
          %v9045 = vshll.u32 %v8913, 16
          %v9047 = vrot.slane %v9045, 5
          %v9048 = vor.u32 %v9044, %v9047
          %v9049 = vrot.slane %v9048, 4
          %v9051 = vshll.u32 %v8914, 16
          %v9053 = vrot.slane %v9051, 5
          %v9054 = vsel %vm5530, %v9049, %v9053
          %v9056 = vshrl.u32 %v8915, 16
          %v9058 = vrot.slane %v9056, 4
          %v9059 = vshll.u32 %v8915, 16
          %v9061 = vrot.slane %v9059, 5
          %v9062 = vor.u32 %v9058, %v9061
          %v9063 = vrot.slane %v9062, 4
          %v9065 = vshll.u32 %v8916, 16
          %v9067 = vrot.slane %v9065, 5
          %v9068 = vsel %vm5530, %v9063, %v9067
          %v9070 = vshrl.u32 %v8917, 16
          %v9072 = vrot.slane %v9070, 4
          %v9073 = vshll.u32 %v8917, 16
          %v9075 = vrot.slane %v9073, 5
          %v9076 = vor.u32 %v9072, %v9075
          %v9077 = vrot.slane %v9076, 4
          %v9079 = vshll.u32 %v8918, 16
          %v9081 = vrot.slane %v9079, 5
          %v9082 = vsel %vm5530, %v9077, %v9081
          %v9084 = vshrl.u32 %v8919, 16
          %v9086 = vrot.slane %v9084, 4
          %v9087 = vshll.u32 %v8919, 16
          %v9089 = vrot.slane %v9087, 5
          %v9090 = vor.u32 %v9086, %v9089
          %v9091 = vrot.slane %v9090, 4
          %v9093 = vshll.u32 %v8920, 16
          %v9095 = vrot.slane %v9093, 5
          %v9096 = vsel %vm5530, %v9091, %v9095
          %v9098 = vshrl.u32 %v8921, 16
          %v9100 = vrot.slane %v9098, 4
          %v9101 = vshll.u32 %v8921, 16
          %v9103 = vrot.slane %v9101, 5
          %v9104 = vor.u32 %v9100, %v9103
          %v9105 = vrot.slane %v9104, 4
          %v9107 = vshll.u32 %v8922, 16
          %v9109 = vrot.slane %v9107, 5
          %v9110 = vsel %vm5530, %v9105, %v9109
          %v9112 = vshrl.u32 %v8923, 16
          %v9114 = vrot.slane %v9112, 4
          %v9115 = vshll.u32 %v8923, 16
          %v9117 = vrot.slane %v9115, 5
          %v9118 = vor.u32 %v9114, %v9117
          %v9119 = vrot.slane %v9118, 4
          %v9121 = vshll.u32 %v8924, 16
          %v9123 = vrot.slane %v9121, 5
          %v9124 = vsel %vm5530, %v9119, %v9123
          %v9126 = vshrl.u32 %v8925, 16
          %v9128 = vrot.slane %v9126, 4
          %v9129 = vshll.u32 %v8925, 16
          %v9131 = vrot.slane %v9129, 5
          %v9132 = vor.u32 %v9128, %v9131
          %v9133 = vrot.slane %v9132, 4
          %v9135 = vshll.u32 %v8926, 16
          %v9137 = vrot.slane %v9135, 5
          %v9138 = vsel %vm5530, %v9133, %v9137
          %v9140 = vshrl.u32 %v8927, 16
          %v9142 = vrot.slane %v9140, 4
          %v9143 = vshll.u32 %v8927, 16
          %v9145 = vrot.slane %v9143, 5
          %v9146 = vor.u32 %v9142, %v9145
          %v9147 = vrot.slane %v9146, 4
          %v9149 = vshll.u32 %v8928, 16
          %v9151 = vrot.slane %v9149, 5
          %v9152 = vsel %vm5530, %v9147, %v9151
          %v9153 = vunpack.c.l.b16 %v8942
          %v9154 = vunpack.c.l.b16 %v8956
          %v9155 = vunpack.c.l.b16 %v8970
          %v9156 = vunpack.c.l.b16 %v8984
          %v9157 = vunpack.c.l.b16 %v8998
          %v9158 = vunpack.c.l.b16 %v9012
          %v9159 = vunpack.c.l.b16 %v9026
          %v9160 = vunpack.c.l.b16 %v9040
          %v9161 = vunpack.c.l.b16 %v9054
          %v9162 = vunpack.c.l.b16 %v9068
          %v9163 = vunpack.c.l.b16 %v9082
          %v9164 = vunpack.c.l.b16 %v9096
          %v9165 = vunpack.c.l.b16 %v9110
          %v9166 = vunpack.c.l.b16 %v9124
          %v9167 = vunpack.c.l.b16 %v9138
          %v9168 = vunpack.c.l.b16 %v9152
          %v9169 = vpack.c.b16 %v9154, %v9153
          %v9170 = vpack.c.b16 %v9156, %v9155
          %v9171 = vpack.c.b16 %v9158, %v9157
          %v9172 = vpack.c.b16 %v9160, %v9159
          %v9173 = vpack.c.b16 %v9162, %v9161
          %v9174 = vpack.c.b16 %v9164, %v9163
          %v9175 = vpack.c.b16 %v9166, %v9165
          %v9176 = vpack.c.b16 %v9168, %v9167
          %9185 = vst.msk [vmem:[#allocation6 + $0x20] sm:$0xff] %vm5487, %v9169
          %9186 = vst.msk [vmem:[#allocation6 + $0x58] sm:$0xff] %vm5487, %v9170
          %9187 = vst.msk [vmem:[#allocation6 + $0x90] sm:$0xff] %vm5487, %v9171
          %9188 = vst.msk [vmem:[#allocation6 + $0xc8] sm:$0xff] %vm5487, %v9172
          %9189 = vst.msk [vmem:[#allocation6 + $0x100] sm:$0xff] %vm5487, %v9173
          %9190 = vst.msk [vmem:[#allocation6 + $0x138] sm:$0xff] %vm5487, %v9174
          %9191 = vst.msk [vmem:[#allocation6 + $0x170] sm:$0xff] %vm5487, %v9175
          %9192 = vst.msk [vmem:[#allocation6 + $0x1a8] sm:$0xff] %vm5487, %v9176
          %v9193 = vld [vmem:[%s8808] sm:$0xe]
          %v9194 = vld [vmem:[%s8808 + $0x4] sm:$0x1]
          %v9195 = vld [vmem:[%s8808 + $0x8] sm:$0xe]
          %v9196 = vld [vmem:[%s8808 + $0xc] sm:$0x1]
          %v9197 = vld [vmem:[%s8808 + $0x10] sm:$0xe]
          %v9198 = vld [vmem:[%s8808 + $0x14] sm:$0x1]
          %v9199 = vld [vmem:[%s8808 + $0x18] sm:$0xe]
          %v9200 = vld [vmem:[%s8808 + $0x1c] sm:$0x1]
          %v9201 = vld [vmem:[%s8808 + $0x20] sm:$0xe]
          %v9202 = vld [vmem:[%s8808 + $0x24] sm:$0x1]
          %v9203 = vld [vmem:[%s8808 + $0x28] sm:$0xe]
          %v9204 = vld [vmem:[%s8808 + $0x2c] sm:$0x1]
          %v9205 = vld [vmem:[%s8808 + $0x30] sm:$0xe]
          %v9206 = vld [vmem:[%s8808 + $0x34] sm:$0x1]
          %v9207 = vld [vmem:[%s8808 + $0x38] sm:$0xe]
          %v9208 = vld [vmem:[%s8808 + $0x3c] sm:$0x1]
          %v9209 = vld [vmem:[%s8808 + $0x60] sm:$0xe]
          %v9210 = vld [vmem:[%s8808 + $0x64] sm:$0x1]
          %v9211 = vld [vmem:[%s8808 + $0x68] sm:$0xe]
          %v9212 = vld [vmem:[%s8808 + $0x6c] sm:$0x1]
          %v9213 = vld [vmem:[%s8808 + $0x70] sm:$0xe]
          %v9214 = vld [vmem:[%s8808 + $0x74] sm:$0x1]
          %v9215 = vld [vmem:[%s8808 + $0x78] sm:$0xe]
          %v9216 = vld [vmem:[%s8808 + $0x7c] sm:$0x1]
          %v9217 = vld [vmem:[%s8808 + $0x80] sm:$0xe]
          %v9218 = vld [vmem:[%s8808 + $0x84] sm:$0x1]
          %v9219 = vld [vmem:[%s8808 + $0x88] sm:$0xe]
          %v9220 = vld [vmem:[%s8808 + $0x8c] sm:$0x1]
          %v9221 = vld [vmem:[%s8808 + $0x90] sm:$0xe]
          %v9222 = vld [vmem:[%s8808 + $0x94] sm:$0x1]
          %v9223 = vld [vmem:[%s8808 + $0x98] sm:$0xe]
          %v9224 = vld [vmem:[%s8808 + $0x9c] sm:$0x1]
          %v9257 = vrot.slane %v9193, 5
          %v9258 = vrot.slane %v9257, 4
          %v9259 = vrot.slane %v9194, 5
          %v9260 = vsel %vm5878, %v9258, %v9259
          %v9261 = vrot.slane %v9195, 5
          %v9262 = vrot.slane %v9261, 4
          %v9263 = vrot.slane %v9196, 5
          %v9264 = vsel %vm5878, %v9262, %v9263
          %v9265 = vrot.slane %v9197, 5
          %v9266 = vrot.slane %v9265, 4
          %v9267 = vrot.slane %v9198, 5
          %v9268 = vsel %vm5878, %v9266, %v9267
          %v9269 = vrot.slane %v9199, 5
          %v9270 = vrot.slane %v9269, 4
          %v9271 = vrot.slane %v9200, 5
          %v9272 = vsel %vm5878, %v9270, %v9271
          %v9273 = vrot.slane %v9201, 5
          %v9274 = vrot.slane %v9273, 4
          %v9275 = vrot.slane %v9202, 5
          %v9276 = vsel %vm5878, %v9274, %v9275
          %v9277 = vrot.slane %v9203, 5
          %v9278 = vrot.slane %v9277, 4
          %v9279 = vrot.slane %v9204, 5
          %v9280 = vsel %vm5878, %v9278, %v9279
          %v9281 = vrot.slane %v9205, 5
          %v9282 = vrot.slane %v9281, 4
          %v9283 = vrot.slane %v9206, 5
          %v9284 = vsel %vm5878, %v9282, %v9283
          %v9285 = vrot.slane %v9207, 5
          %v9286 = vrot.slane %v9285, 4
          %v9287 = vrot.slane %v9208, 5
          %v9288 = vsel %vm5878, %v9286, %v9287
          %v9289 = vrot.slane %v9209, 5
          %v9290 = vrot.slane %v9289, 4
          %v9291 = vrot.slane %v9210, 5
          %v9292 = vsel %vm5878, %v9290, %v9291
          %v9293 = vrot.slane %v9211, 5
          %v9294 = vrot.slane %v9293, 4
          %v9295 = vrot.slane %v9212, 5
          %v9296 = vsel %vm5878, %v9294, %v9295
          %v9297 = vrot.slane %v9213, 5
          %v9298 = vrot.slane %v9297, 4
          %v9299 = vrot.slane %v9214, 5
          %v9300 = vsel %vm5878, %v9298, %v9299
          %v9301 = vrot.slane %v9215, 5
          %v9302 = vrot.slane %v9301, 4
          %v9303 = vrot.slane %v9216, 5
          %v9304 = vsel %vm5878, %v9302, %v9303
          %v9305 = vrot.slane %v9217, 5
          %v9306 = vrot.slane %v9305, 4
          %v9307 = vrot.slane %v9218, 5
          %v9308 = vsel %vm5878, %v9306, %v9307
          %v9309 = vrot.slane %v9219, 5
          %v9310 = vrot.slane %v9309, 4
          %v9311 = vrot.slane %v9220, 5
          %v9312 = vsel %vm5878, %v9310, %v9311
          %v9313 = vrot.slane %v9221, 5
          %v9314 = vrot.slane %v9313, 4
          %v9315 = vrot.slane %v9222, 5
          %v9316 = vsel %vm5878, %v9314, %v9315
          %v9317 = vrot.slane %v9223, 5
          %v9318 = vrot.slane %v9317, 4
          %v9319 = vrot.slane %v9224, 5
          %v9320 = vsel %vm5878, %v9318, %v9319
          %v9321 = vunpack.c.l.b16 %v9260
          %v9322 = vunpack.c.l.b16 %v9264
          %v9323 = vunpack.c.l.b16 %v9268
          %v9324 = vunpack.c.l.b16 %v9272
          %v9325 = vunpack.c.l.b16 %v9276
          %v9326 = vunpack.c.l.b16 %v9280
          %v9327 = vunpack.c.l.b16 %v9284
          %v9328 = vunpack.c.l.b16 %v9288
          %v9329 = vunpack.c.l.b16 %v9292
          %v9330 = vunpack.c.l.b16 %v9296
          %v9331 = vunpack.c.l.b16 %v9300
          %v9332 = vunpack.c.l.b16 %v9304
          %v9333 = vunpack.c.l.b16 %v9308
          %v9334 = vunpack.c.l.b16 %v9312
          %v9335 = vunpack.c.l.b16 %v9316
          %v9336 = vunpack.c.l.b16 %v9320
          %v9337 = vpack.c.b16 %v9322, %v9321
          %v9338 = vpack.c.b16 %v9324, %v9323
          %v9339 = vpack.c.b16 %v9326, %v9325
          %v9340 = vpack.c.b16 %v9328, %v9327
          %v9341 = vpack.c.b16 %v9330, %v9329
          %v9342 = vpack.c.b16 %v9332, %v9331
          %v9343 = vpack.c.b16 %v9334, %v9333
          %v9344 = vpack.c.b16 %v9336, %v9335
          %9345 = vrot.lane.b32.xlu0 %v9337, 32
          %v9346 = vpop.permute.xlu0 %9345
          %9347 = vrot.lane.b32.xlu0 %v9338, 32
          %v9348 = vpop.permute.xlu0 %9347
          %9349 = vrot.lane.b32.xlu0 %v9339, 32
          %v9350 = vpop.permute.xlu0 %9349
          %9351 = vrot.lane.b32.xlu0 %v9340, 32
          %v9352 = vpop.permute.xlu0 %9351
          %9353 = vrot.lane.b32.xlu0 %v9341, 32
          %v9354 = vpop.permute.xlu0 %9353
          %9355 = vrot.lane.b32.xlu0 %v9342, 32
          %v9356 = vpop.permute.xlu0 %9355
          %9357 = vrot.lane.b32.xlu0 %v9343, 32
          %v9358 = vpop.permute.xlu0 %9357
          %9359 = vrot.lane.b32.xlu0 %v9344, 32
          %v9360 = vpop.permute.xlu0 %9359
          %9369 = vst.msk [vmem:[#allocation6 + $0x20] sm:$0xff] %vm5803, %v9346
          %9370 = vst.msk [vmem:[#allocation6 + $0x58] sm:$0xff] %vm5803, %v9348
          %9371 = vst.msk [vmem:[#allocation6 + $0x90] sm:$0xff] %vm5803, %v9350
          %9372 = vst.msk [vmem:[#allocation6 + $0xc8] sm:$0xff] %vm5803, %v9352
          %9373 = vst.msk [vmem:[#allocation6 + $0x100] sm:$0xff] %vm5803, %v9354
          %9374 = vst.msk [vmem:[#allocation6 + $0x138] sm:$0xff] %vm5803, %v9356
          %9375 = vst.msk [vmem:[#allocation6 + $0x170] sm:$0xff] %vm5803, %v9358
          %9376 = vst.msk [vmem:[#allocation6 + $0x1a8] sm:$0xff] %vm5803, %v9360
          %v9377 = vld [vmem:[%s8808] sm:$0xe]
          %v9378 = vld [vmem:[%s8808 + $0x4] sm:$0x3]
          %v9379 = vld [vmem:[%s8808 + $0x8] sm:$0xe]
          %v9380 = vld [vmem:[%s8808 + $0xc] sm:$0x3]
          %v9381 = vld [vmem:[%s8808 + $0x10] sm:$0xe]
          %v9382 = vld [vmem:[%s8808 + $0x14] sm:$0x3]
          %v9383 = vld [vmem:[%s8808 + $0x18] sm:$0xe]
          %v9384 = vld [vmem:[%s8808 + $0x1c] sm:$0x3]
          %v9385 = vld [vmem:[%s8808 + $0x20] sm:$0xe]
          %v9386 = vld [vmem:[%s8808 + $0x24] sm:$0x3]
          %v9387 = vld [vmem:[%s8808 + $0x28] sm:$0xe]
          %v9388 = vld [vmem:[%s8808 + $0x2c] sm:$0x3]
          %v9389 = vld [vmem:[%s8808 + $0x30] sm:$0xe]
          %v9390 = vld [vmem:[%s8808 + $0x34] sm:$0x3]
          %v9391 = vld [vmem:[%s8808 + $0x38] sm:$0xe]
          %v9392 = vld [vmem:[%s8808 + $0x3c] sm:$0x3]
          %v9393 = vld [vmem:[%s8808 + $0x60] sm:$0xe]
          %v9394 = vld [vmem:[%s8808 + $0x64] sm:$0x3]
          %v9395 = vld [vmem:[%s8808 + $0x68] sm:$0xe]
          %v9396 = vld [vmem:[%s8808 + $0x6c] sm:$0x3]
          %v9397 = vld [vmem:[%s8808 + $0x70] sm:$0xe]
          %v9398 = vld [vmem:[%s8808 + $0x74] sm:$0x3]
          %v9399 = vld [vmem:[%s8808 + $0x78] sm:$0xe]
          %v9400 = vld [vmem:[%s8808 + $0x7c] sm:$0x3]
          %v9401 = vld [vmem:[%s8808 + $0x80] sm:$0xe]
          %v9402 = vld [vmem:[%s8808 + $0x84] sm:$0x3]
          %v9403 = vld [vmem:[%s8808 + $0x88] sm:$0xe]
          %v9404 = vld [vmem:[%s8808 + $0x8c] sm:$0x3]
          %v9405 = vld [vmem:[%s8808 + $0x90] sm:$0xe]
          %v9406 = vld [vmem:[%s8808 + $0x94] sm:$0x3]
          %v9407 = vld [vmem:[%s8808 + $0x98] sm:$0xe]
          %v9408 = vld [vmem:[%s8808 + $0x9c] sm:$0x3]
          %v9410 = vshrl.u32 %v9377, 16
          %v9412 = vrot.slane %v9410, 5
          %v9413 = vshll.u32 %v9377, 16
          %v9415 = vrot.slane %v9413, 6
          %v9416 = vor.u32 %v9412, %v9415
          %v9417 = vrot.slane %v9416, 4
          %v9419 = vshrl.u32 %v9378, 16
          %v9421 = vrot.slane %v9419, 5
          %v9422 = vshll.u32 %v9378, 16
          %v9424 = vrot.slane %v9422, 6
          %v9425 = vor.u32 %v9421, %v9424
          %v9426 = vsel %vm6034, %v9417, %v9425
          %v9428 = vshrl.u32 %v9379, 16
          %v9430 = vrot.slane %v9428, 5
          %v9431 = vshll.u32 %v9379, 16
          %v9433 = vrot.slane %v9431, 6
          %v9434 = vor.u32 %v9430, %v9433
          %v9435 = vrot.slane %v9434, 4
          %v9437 = vshrl.u32 %v9380, 16
          %v9439 = vrot.slane %v9437, 5
          %v9440 = vshll.u32 %v9380, 16
          %v9442 = vrot.slane %v9440, 6
          %v9443 = vor.u32 %v9439, %v9442
          %v9444 = vsel %vm6034, %v9435, %v9443
          %v9446 = vshrl.u32 %v9381, 16
          %v9448 = vrot.slane %v9446, 5
          %v9449 = vshll.u32 %v9381, 16
          %v9451 = vrot.slane %v9449, 6
          %v9452 = vor.u32 %v9448, %v9451
          %v9453 = vrot.slane %v9452, 4
          %v9455 = vshrl.u32 %v9382, 16
          %v9457 = vrot.slane %v9455, 5
          %v9458 = vshll.u32 %v9382, 16
          %v9460 = vrot.slane %v9458, 6
          %v9461 = vor.u32 %v9457, %v9460
          %v9462 = vsel %vm6034, %v9453, %v9461
          %v9464 = vshrl.u32 %v9383, 16
          %v9466 = vrot.slane %v9464, 5
          %v9467 = vshll.u32 %v9383, 16
          %v9469 = vrot.slane %v9467, 6
          %v9470 = vor.u32 %v9466, %v9469
          %v9471 = vrot.slane %v9470, 4
          %v9473 = vshrl.u32 %v9384, 16
          %v9475 = vrot.slane %v9473, 5
          %v9476 = vshll.u32 %v9384, 16
          %v9478 = vrot.slane %v9476, 6
          %v9479 = vor.u32 %v9475, %v9478
          %v9480 = vsel %vm6034, %v9471, %v9479
          %v9482 = vshrl.u32 %v9385, 16
          %v9484 = vrot.slane %v9482, 5
          %v9485 = vshll.u32 %v9385, 16
          %v9487 = vrot.slane %v9485, 6
          %v9488 = vor.u32 %v9484, %v9487
          %v9489 = vrot.slane %v9488, 4
          %v9491 = vshrl.u32 %v9386, 16
          %v9493 = vrot.slane %v9491, 5
          %v9494 = vshll.u32 %v9386, 16
          %v9496 = vrot.slane %v9494, 6
          %v9497 = vor.u32 %v9493, %v9496
          %v9498 = vsel %vm6034, %v9489, %v9497
          %v9500 = vshrl.u32 %v9387, 16
          %v9502 = vrot.slane %v9500, 5
          %v9503 = vshll.u32 %v9387, 16
          %v9505 = vrot.slane %v9503, 6
          %v9506 = vor.u32 %v9502, %v9505
          %v9507 = vrot.slane %v9506, 4
          %v9509 = vshrl.u32 %v9388, 16
          %v9511 = vrot.slane %v9509, 5
          %v9512 = vshll.u32 %v9388, 16
          %v9514 = vrot.slane %v9512, 6
          %v9515 = vor.u32 %v9511, %v9514
          %v9516 = vsel %vm6034, %v9507, %v9515
          %v9518 = vshrl.u32 %v9389, 16
          %v9520 = vrot.slane %v9518, 5
          %v9521 = vshll.u32 %v9389, 16
          %v9523 = vrot.slane %v9521, 6
          %v9524 = vor.u32 %v9520, %v9523
          %v9525 = vrot.slane %v9524, 4
          %v9527 = vshrl.u32 %v9390, 16
          %v9529 = vrot.slane %v9527, 5
          %v9530 = vshll.u32 %v9390, 16
          %v9532 = vrot.slane %v9530, 6
          %v9533 = vor.u32 %v9529, %v9532
          %v9534 = vsel %vm6034, %v9525, %v9533
          %v9536 = vshrl.u32 %v9391, 16
          %v9538 = vrot.slane %v9536, 5
          %v9539 = vshll.u32 %v9391, 16
          %v9541 = vrot.slane %v9539, 6
          %v9542 = vor.u32 %v9538, %v9541
          %v9543 = vrot.slane %v9542, 4
          %v9545 = vshrl.u32 %v9392, 16
          %v9547 = vrot.slane %v9545, 5
          %v9548 = vshll.u32 %v9392, 16
          %v9550 = vrot.slane %v9548, 6
          %v9551 = vor.u32 %v9547, %v9550
          %v9552 = vsel %vm6034, %v9543, %v9551
          %v9554 = vshrl.u32 %v9393, 16
          %v9556 = vrot.slane %v9554, 5
          %v9557 = vshll.u32 %v9393, 16
          %v9559 = vrot.slane %v9557, 6
          %v9560 = vor.u32 %v9556, %v9559
          %v9561 = vrot.slane %v9560, 4
          %v9563 = vshrl.u32 %v9394, 16
          %v9565 = vrot.slane %v9563, 5
          %v9566 = vshll.u32 %v9394, 16
          %v9568 = vrot.slane %v9566, 6
          %v9569 = vor.u32 %v9565, %v9568
          %v9570 = vsel %vm6034, %v9561, %v9569
          %v9572 = vshrl.u32 %v9395, 16
          %v9574 = vrot.slane %v9572, 5
          %v9575 = vshll.u32 %v9395, 16
          %v9577 = vrot.slane %v9575, 6
          %v9578 = vor.u32 %v9574, %v9577
          %v9579 = vrot.slane %v9578, 4
          %v9581 = vshrl.u32 %v9396, 16
          %v9583 = vrot.slane %v9581, 5
          %v9584 = vshll.u32 %v9396, 16
          %v9586 = vrot.slane %v9584, 6
          %v9587 = vor.u32 %v9583, %v9586
          %v9588 = vsel %vm6034, %v9579, %v9587
          %v9590 = vshrl.u32 %v9397, 16
          %v9592 = vrot.slane %v9590, 5
          %v9593 = vshll.u32 %v9397, 16
          %v9595 = vrot.slane %v9593, 6
          %v9596 = vor.u32 %v9592, %v9595
          %v9597 = vrot.slane %v9596, 4
          %v9599 = vshrl.u32 %v9398, 16
          %v9601 = vrot.slane %v9599, 5
          %v9602 = vshll.u32 %v9398, 16
          %v9604 = vrot.slane %v9602, 6
          %v9605 = vor.u32 %v9601, %v9604
          %v9606 = vsel %vm6034, %v9597, %v9605
          %v9608 = vshrl.u32 %v9399, 16
          %v9610 = vrot.slane %v9608, 5
          %v9611 = vshll.u32 %v9399, 16
          %v9613 = vrot.slane %v9611, 6
          %v9614 = vor.u32 %v9610, %v9613
          %v9615 = vrot.slane %v9614, 4
          %v9617 = vshrl.u32 %v9400, 16
          %v9619 = vrot.slane %v9617, 5
          %v9620 = vshll.u32 %v9400, 16
          %v9622 = vrot.slane %v9620, 6
          %v9623 = vor.u32 %v9619, %v9622
          %v9624 = vsel %vm6034, %v9615, %v9623
          %v9626 = vshrl.u32 %v9401, 16
          %v9628 = vrot.slane %v9626, 5
          %v9629 = vshll.u32 %v9401, 16
          %v9631 = vrot.slane %v9629, 6
          %v9632 = vor.u32 %v9628, %v9631
          %v9633 = vrot.slane %v9632, 4
          %v9635 = vshrl.u32 %v9402, 16
          %v9637 = vrot.slane %v9635, 5
          %v9638 = vshll.u32 %v9402, 16
          %v9640 = vrot.slane %v9638, 6
          %v9641 = vor.u32 %v9637, %v9640
          %v9642 = vsel %vm6034, %v9633, %v9641
          %v9644 = vshrl.u32 %v9403, 16
          %v9646 = vrot.slane %v9644, 5
          %v9647 = vshll.u32 %v9403, 16
          %v9649 = vrot.slane %v9647, 6
          %v9650 = vor.u32 %v9646, %v9649
          %v9651 = vrot.slane %v9650, 4
          %v9653 = vshrl.u32 %v9404, 16
          %v9655 = vrot.slane %v9653, 5
          %v9656 = vshll.u32 %v9404, 16
          %v9658 = vrot.slane %v9656, 6
          %v9659 = vor.u32 %v9655, %v9658
          %v9660 = vsel %vm6034, %v9651, %v9659
          %v9662 = vshrl.u32 %v9405, 16
          %v9664 = vrot.slane %v9662, 5
          %v9665 = vshll.u32 %v9405, 16
          %v9667 = vrot.slane %v9665, 6
          %v9668 = vor.u32 %v9664, %v9667
          %v9669 = vrot.slane %v9668, 4
          %v9671 = vshrl.u32 %v9406, 16
          %v9673 = vrot.slane %v9671, 5
          %v9674 = vshll.u32 %v9406, 16
          %v9676 = vrot.slane %v9674, 6
          %v9677 = vor.u32 %v9673, %v9676
          %v9678 = vsel %vm6034, %v9669, %v9677
          %v9680 = vshrl.u32 %v9407, 16
          %v9682 = vrot.slane %v9680, 5
          %v9683 = vshll.u32 %v9407, 16
          %v9685 = vrot.slane %v9683, 6
          %v9686 = vor.u32 %v9682, %v9685
          %v9687 = vrot.slane %v9686, 4
          %v9689 = vshrl.u32 %v9408, 16
          %v9691 = vrot.slane %v9689, 5
          %v9692 = vshll.u32 %v9408, 16
          %v9694 = vrot.slane %v9692, 6
          %v9695 = vor.u32 %v9691, %v9694
          %v9696 = vsel %vm6034, %v9687, %v9695
          %v9697 = vunpack.c.l.b16 %v9426
          %v9698 = vunpack.c.l.b16 %v9444
          %v9699 = vunpack.c.l.b16 %v9462
          %v9700 = vunpack.c.l.b16 %v9480
          %v9701 = vunpack.c.l.b16 %v9498
          %v9702 = vunpack.c.l.b16 %v9516
          %v9703 = vunpack.c.l.b16 %v9534
          %v9704 = vunpack.c.l.b16 %v9552
          %v9705 = vunpack.c.l.b16 %v9570
          %v9706 = vunpack.c.l.b16 %v9588
          %v9707 = vunpack.c.l.b16 %v9606
          %v9708 = vunpack.c.l.b16 %v9624
          %v9709 = vunpack.c.l.b16 %v9642
          %v9710 = vunpack.c.l.b16 %v9660
          %v9711 = vunpack.c.l.b16 %v9678
          %v9712 = vunpack.c.l.b16 %v9696
          %v9713 = vpack.c.b16 %v9698, %v9697
          %v9714 = vpack.c.b16 %v9700, %v9699
          %v9715 = vpack.c.b16 %v9702, %v9701
          %v9716 = vpack.c.b16 %v9704, %v9703
          %v9717 = vpack.c.b16 %v9706, %v9705
          %v9718 = vpack.c.b16 %v9708, %v9707
          %v9719 = vpack.c.b16 %v9710, %v9709
          %v9720 = vpack.c.b16 %v9712, %v9711
          %9721 = vrot.lane.b32.xlu0 %v9713, 64
          %v9722 = vpop.permute.xlu0 %9721
          %9723 = vrot.lane.b32.xlu0 %v9714, 64
          %v9724 = vpop.permute.xlu0 %9723
          %9725 = vrot.lane.b32.xlu0 %v9715, 64
          %v9726 = vpop.permute.xlu0 %9725
          %9727 = vrot.lane.b32.xlu0 %v9716, 64
          %v9728 = vpop.permute.xlu0 %9727
          %9729 = vrot.lane.b32.xlu0 %v9717, 64
          %v9730 = vpop.permute.xlu0 %9729
          %9731 = vrot.lane.b32.xlu0 %v9718, 64
          %v9732 = vpop.permute.xlu0 %9731
          %9733 = vrot.lane.b32.xlu0 %v9719, 64
          %v9734 = vpop.permute.xlu0 %9733
          %9735 = vrot.lane.b32.xlu0 %v9720, 64
          %v9736 = vpop.permute.xlu0 %9735
          %9745 = vst.msk [vmem:[#allocation6 + $0x20] sm:$0xff] %vm5991, %v9722
          %9746 = vst.msk [vmem:[#allocation6 + $0x58] sm:$0xff] %vm5991, %v9724
          %9747 = vst.msk [vmem:[#allocation6 + $0x90] sm:$0xff] %vm5991, %v9726
          %9748 = vst.msk [vmem:[#allocation6 + $0xc8] sm:$0xff] %vm5991, %v9728
          %9749 = vst.msk [vmem:[#allocation6 + $0x100] sm:$0xff] %vm5991, %v9730
          %9750 = vst.msk [vmem:[#allocation6 + $0x138] sm:$0xff] %vm5991, %v9732
          %9751 = vst.msk [vmem:[#allocation6 + $0x170] sm:$0xff] %vm5991, %v9734
          %9752 = vst.msk [vmem:[#allocation6 + $0x1a8] sm:$0xff] %vm5991, %v9736
          %v9753 = vld [vmem:[%s8808] sm:$0xc]
          %v9754 = vld [vmem:[%s8808 + $0x4] sm:$0x3]
          %v9755 = vld [vmem:[%s8808 + $0x8] sm:$0xc]
          %v9756 = vld [vmem:[%s8808 + $0xc] sm:$0x3]
          %v9757 = vld [vmem:[%s8808 + $0x10] sm:$0xc]
          %v9758 = vld [vmem:[%s8808 + $0x14] sm:$0x3]
          %v9759 = vld [vmem:[%s8808 + $0x18] sm:$0xc]
          %v9760 = vld [vmem:[%s8808 + $0x1c] sm:$0x3]
          %v9761 = vld [vmem:[%s8808 + $0x20] sm:$0xc]
          %v9762 = vld [vmem:[%s8808 + $0x24] sm:$0x3]
          %v9763 = vld [vmem:[%s8808 + $0x28] sm:$0xc]
          %v9764 = vld [vmem:[%s8808 + $0x2c] sm:$0x3]
          %v9765 = vld [vmem:[%s8808 + $0x30] sm:$0xc]
          %v9766 = vld [vmem:[%s8808 + $0x34] sm:$0x3]
          %v9767 = vld [vmem:[%s8808 + $0x38] sm:$0xc]
          %v9768 = vld [vmem:[%s8808 + $0x3c] sm:$0x3]
          %v9769 = vld [vmem:[%s8808 + $0x60] sm:$0xc]
          %v9770 = vld [vmem:[%s8808 + $0x64] sm:$0x3]
          %v9771 = vld [vmem:[%s8808 + $0x68] sm:$0xc]
          %v9772 = vld [vmem:[%s8808 + $0x6c] sm:$0x3]
          %v9773 = vld [vmem:[%s8808 + $0x70] sm:$0xc]
          %v9774 = vld [vmem:[%s8808 + $0x74] sm:$0x3]
          %v9775 = vld [vmem:[%s8808 + $0x78] sm:$0xc]
          %v9776 = vld [vmem:[%s8808 + $0x7c] sm:$0x3]
          %v9777 = vld [vmem:[%s8808 + $0x80] sm:$0xc]
          %v9778 = vld [vmem:[%s8808 + $0x84] sm:$0x3]
          %v9779 = vld [vmem:[%s8808 + $0x88] sm:$0xc]
          %v9780 = vld [vmem:[%s8808 + $0x8c] sm:$0x3]
          %v9781 = vld [vmem:[%s8808 + $0x90] sm:$0xc]
          %v9782 = vld [vmem:[%s8808 + $0x94] sm:$0x3]
          %v9783 = vld [vmem:[%s8808 + $0x98] sm:$0xc]
          %v9784 = vld [vmem:[%s8808 + $0x9c] sm:$0x3]
          %v9817 = vrot.slane %v9753, 6
          %v9818 = vrot.slane %v9817, 4
          %v9819 = vrot.slane %v9754, 6
          %v9820 = vsel %vm6446, %v9818, %v9819
          %v9821 = vrot.slane %v9755, 6
          %v9822 = vrot.slane %v9821, 4
          %v9823 = vrot.slane %v9756, 6
          %v9824 = vsel %vm6446, %v9822, %v9823
          %v9825 = vrot.slane %v9757, 6
          %v9826 = vrot.slane %v9825, 4
          %v9827 = vrot.slane %v9758, 6
          %v9828 = vsel %vm6446, %v9826, %v9827
          %v9829 = vrot.slane %v9759, 6
          %v9830 = vrot.slane %v9829, 4
          %v9831 = vrot.slane %v9760, 6
          %v9832 = vsel %vm6446, %v9830, %v9831
          %v9833 = vrot.slane %v9761, 6
          %v9834 = vrot.slane %v9833, 4
          %v9835 = vrot.slane %v9762, 6
          %v9836 = vsel %vm6446, %v9834, %v9835
          %v9837 = vrot.slane %v9763, 6
          %v9838 = vrot.slane %v9837, 4
          %v9839 = vrot.slane %v9764, 6
          %v9840 = vsel %vm6446, %v9838, %v9839
          %v9841 = vrot.slane %v9765, 6
          %v9842 = vrot.slane %v9841, 4
          %v9843 = vrot.slane %v9766, 6
          %v9844 = vsel %vm6446, %v9842, %v9843
          %v9845 = vrot.slane %v9767, 6
          %v9846 = vrot.slane %v9845, 4
          %v9847 = vrot.slane %v9768, 6
          %v9848 = vsel %vm6446, %v9846, %v9847
          %v9849 = vrot.slane %v9769, 6
          %v9850 = vrot.slane %v9849, 4
          %v9851 = vrot.slane %v9770, 6
          %v9852 = vsel %vm6446, %v9850, %v9851
          %v9853 = vrot.slane %v9771, 6
          %v9854 = vrot.slane %v9853, 4
          %v9855 = vrot.slane %v9772, 6
          %v9856 = vsel %vm6446, %v9854, %v9855
          %v9857 = vrot.slane %v9773, 6
          %v9858 = vrot.slane %v9857, 4
          %v9859 = vrot.slane %v9774, 6
          %v9860 = vsel %vm6446, %v9858, %v9859
          %v9861 = vrot.slane %v9775, 6
          %v9862 = vrot.slane %v9861, 4
          %v9863 = vrot.slane %v9776, 6
          %v9864 = vsel %vm6446, %v9862, %v9863
          %v9865 = vrot.slane %v9777, 6
          %v9866 = vrot.slane %v9865, 4
          %v9867 = vrot.slane %v9778, 6
          %v9868 = vsel %vm6446, %v9866, %v9867
          %v9869 = vrot.slane %v9779, 6
          %v9870 = vrot.slane %v9869, 4
          %v9871 = vrot.slane %v9780, 6
          %v9872 = vsel %vm6446, %v9870, %v9871
          %v9873 = vrot.slane %v9781, 6
          %v9874 = vrot.slane %v9873, 4
          %v9875 = vrot.slane %v9782, 6
          %v9876 = vsel %vm6446, %v9874, %v9875
          %v9877 = vrot.slane %v9783, 6
          %v9878 = vrot.slane %v9877, 4
          %v9879 = vrot.slane %v9784, 6
          %v9880 = vsel %vm6446, %v9878, %v9879
          %v9881 = vunpack.c.l.b16 %v9820
          %v9882 = vunpack.c.l.b16 %v9824
          %v9883 = vunpack.c.l.b16 %v9828
          %v9884 = vunpack.c.l.b16 %v9832
          %v9885 = vunpack.c.l.b16 %v9836
          %v9886 = vunpack.c.l.b16 %v9840
          %v9887 = vunpack.c.l.b16 %v9844
          %v9888 = vunpack.c.l.b16 %v9848
          %v9889 = vunpack.c.l.b16 %v9852
          %v9890 = vunpack.c.l.b16 %v9856
          %v9891 = vunpack.c.l.b16 %v9860
          %v9892 = vunpack.c.l.b16 %v9864
          %v9893 = vunpack.c.l.b16 %v9868
          %v9894 = vunpack.c.l.b16 %v9872
          %v9895 = vunpack.c.l.b16 %v9876
          %v9896 = vunpack.c.l.b16 %v9880
          %v9897 = vpack.c.b16 %v9882, %v9881
          %v9898 = vpack.c.b16 %v9884, %v9883
          %v9899 = vpack.c.b16 %v9886, %v9885
          %v9900 = vpack.c.b16 %v9888, %v9887
          %v9901 = vpack.c.b16 %v9890, %v9889
          %v9902 = vpack.c.b16 %v9892, %v9891
          %v9903 = vpack.c.b16 %v9894, %v9893
          %v9904 = vpack.c.b16 %v9896, %v9895
          %9905 = vrot.lane.b32.xlu0 %v9897, 96
          %v9906 = vpop.permute.xlu0 %9905
          %9907 = vrot.lane.b32.xlu0 %v9898, 96
          %v9908 = vpop.permute.xlu0 %9907
          %9909 = vrot.lane.b32.xlu0 %v9899, 96
          %v9910 = vpop.permute.xlu0 %9909
          %9911 = vrot.lane.b32.xlu0 %v9900, 96
          %v9912 = vpop.permute.xlu0 %9911
          %9913 = vrot.lane.b32.xlu0 %v9901, 96
          %v9914 = vpop.permute.xlu0 %9913
          %9915 = vrot.lane.b32.xlu0 %v9902, 96
          %v9916 = vpop.permute.xlu0 %9915
          %9917 = vrot.lane.b32.xlu0 %v9903, 96
          %v9918 = vpop.permute.xlu0 %9917
          %9919 = vrot.lane.b32.xlu0 %v9904, 96
          %v9920 = vpop.permute.xlu0 %9919
          %9929 = vst.msk [vmem:[#allocation6 + $0x20] sm:$0xff] %vm6371, %v9906
          %9930 = vst.msk [vmem:[#allocation6 + $0x58] sm:$0xff] %vm6371, %v9908
          %9931 = vst.msk [vmem:[#allocation6 + $0x90] sm:$0xff] %vm6371, %v9910
          %9932 = vst.msk [vmem:[#allocation6 + $0xc8] sm:$0xff] %vm6371, %v9912
          %9933 = vst.msk [vmem:[#allocation6 + $0x100] sm:$0xff] %vm6371, %v9914
          %9934 = vst.msk [vmem:[#allocation6 + $0x138] sm:$0xff] %vm6371, %v9916
          %9935 = vst.msk [vmem:[#allocation6 + $0x170] sm:$0xff] %vm6371, %v9918
          %9936 = vst.msk [vmem:[#allocation6 + $0x1a8] sm:$0xff] %vm6371, %v9920
          %s9937 = scalar_lea.vmem [#allocation5], 32
          %v9938 = vld [vmem:[%s9937] sm:$0xf]
          %v9939 = vld [vmem:[%s9937 + $0x8] sm:$0xf]
          %v9940 = vld [vmem:[%s9937 + $0x10] sm:$0xf]
          %v9941 = vld [vmem:[%s9937 + $0x18] sm:$0xf]
          %v9942 = vld [vmem:[%s9937 + $0x20] sm:$0xf]
          %v9943 = vld [vmem:[%s9937 + $0x28] sm:$0xf]
          %v9944 = vld [vmem:[%s9937 + $0x30] sm:$0xf]
          %v9945 = vld [vmem:[%s9937 + $0x38] sm:$0xf]
          %v9946 = vld [vmem:[%s9937 + $0x60] sm:$0xf]
          %v9947 = vld [vmem:[%s9937 + $0x68] sm:$0xf]
          %v9948 = vld [vmem:[%s9937 + $0x70] sm:$0xf]
          %v9949 = vld [vmem:[%s9937 + $0x78] sm:$0xf]
          %v9950 = vld [vmem:[%s9937 + $0x80] sm:$0xf]
          %v9951 = vld [vmem:[%s9937 + $0x88] sm:$0xf]
          %v9952 = vld [vmem:[%s9937 + $0x90] sm:$0xf]
          %v9953 = vld [vmem:[%s9937 + $0x98] sm:$0xf]
          %v9970 = vunpack.c.l.b16 %v9938
          %v9971 = vunpack.c.l.b16 %v9939
          %v9972 = vunpack.c.l.b16 %v9940
          %v9973 = vunpack.c.l.b16 %v9941
          %v9974 = vunpack.c.l.b16 %v9942
          %v9975 = vunpack.c.l.b16 %v9943
          %v9976 = vunpack.c.l.b16 %v9944
          %v9977 = vunpack.c.l.b16 %v9945
          %v9978 = vunpack.c.l.b16 %v9946
          %v9979 = vunpack.c.l.b16 %v9947
          %v9980 = vunpack.c.l.b16 %v9948
          %v9981 = vunpack.c.l.b16 %v9949
          %v9982 = vunpack.c.l.b16 %v9950
          %v9983 = vunpack.c.l.b16 %v9951
          %v9984 = vunpack.c.l.b16 %v9952
          %v9985 = vunpack.c.l.b16 %v9953
          %v9986 = vpack.c.b16 %v9971, %v9970
          %v9987 = vpack.c.b16 %v9973, %v9972
          %v9988 = vpack.c.b16 %v9975, %v9974
          %v9989 = vpack.c.b16 %v9977, %v9976
          %v9990 = vpack.c.b16 %v9979, %v9978
          %v9991 = vpack.c.b16 %v9981, %v9980
          %v9992 = vpack.c.b16 %v9983, %v9982
          %v9993 = vpack.c.b16 %v9985, %v9984
          %10002 = vst.msk [vmem:[#allocation6 + $0x28] sm:$0xff] %vm5487, %v9986
          %10003 = vst.msk [vmem:[#allocation6 + $0x60] sm:$0xff] %vm5487, %v9987
          %10004 = vst.msk [vmem:[#allocation6 + $0x98] sm:$0xff] %vm5487, %v9988
          %10005 = vst.msk [vmem:[#allocation6 + $0xd0] sm:$0xff] %vm5487, %v9989
          %10006 = vst.msk [vmem:[#allocation6 + $0x108] sm:$0xff] %vm5487, %v9990
          %10007 = vst.msk [vmem:[#allocation6 + $0x140] sm:$0xff] %vm5487, %v9991
          %10008 = vst.msk [vmem:[#allocation6 + $0x178] sm:$0xff] %vm5487, %v9992
          %10009 = vst.msk [vmem:[#allocation6 + $0x1b0] sm:$0xff] %vm5487, %v9993
          %v10010 = vld [vmem:[%s9937] sm:$0xf]
          %v10011 = vld [vmem:[%s9937 + $0x4] sm:$0x1]
          %v10012 = vld [vmem:[%s9937 + $0x8] sm:$0xf]
          %v10013 = vld [vmem:[%s9937 + $0xc] sm:$0x1]
          %v10014 = vld [vmem:[%s9937 + $0x10] sm:$0xf]
          %v10015 = vld [vmem:[%s9937 + $0x14] sm:$0x1]
          %v10016 = vld [vmem:[%s9937 + $0x18] sm:$0xf]
          %v10017 = vld [vmem:[%s9937 + $0x1c] sm:$0x1]
          %v10018 = vld [vmem:[%s9937 + $0x20] sm:$0xf]
          %v10019 = vld [vmem:[%s9937 + $0x24] sm:$0x1]
          %v10020 = vld [vmem:[%s9937 + $0x28] sm:$0xf]
          %v10021 = vld [vmem:[%s9937 + $0x2c] sm:$0x1]
          %v10022 = vld [vmem:[%s9937 + $0x30] sm:$0xf]
          %v10023 = vld [vmem:[%s9937 + $0x34] sm:$0x1]
          %v10024 = vld [vmem:[%s9937 + $0x38] sm:$0xf]
          %v10025 = vld [vmem:[%s9937 + $0x3c] sm:$0x1]
          %v10026 = vld [vmem:[%s9937 + $0x60] sm:$0xf]
          %v10027 = vld [vmem:[%s9937 + $0x64] sm:$0x1]
          %v10028 = vld [vmem:[%s9937 + $0x68] sm:$0xf]
          %v10029 = vld [vmem:[%s9937 + $0x6c] sm:$0x1]
          %v10030 = vld [vmem:[%s9937 + $0x70] sm:$0xf]
          %v10031 = vld [vmem:[%s9937 + $0x74] sm:$0x1]
          %v10032 = vld [vmem:[%s9937 + $0x78] sm:$0xf]
          %v10033 = vld [vmem:[%s9937 + $0x7c] sm:$0x1]
          %v10034 = vld [vmem:[%s9937 + $0x80] sm:$0xf]
          %v10035 = vld [vmem:[%s9937 + $0x84] sm:$0x1]
          %v10036 = vld [vmem:[%s9937 + $0x88] sm:$0xf]
          %v10037 = vld [vmem:[%s9937 + $0x8c] sm:$0x1]
          %v10038 = vld [vmem:[%s9937 + $0x90] sm:$0xf]
          %v10039 = vld [vmem:[%s9937 + $0x94] sm:$0x1]
          %v10040 = vld [vmem:[%s9937 + $0x98] sm:$0xf]
          %v10041 = vld [vmem:[%s9937 + $0x9c] sm:$0x1]
          %v10043 = vshrl.u32 %v10010, 16
          %v10045 = vrot.slane %v10043, 4
          %v10046 = vshll.u32 %v10010, 16
          %v10048 = vrot.slane %v10046, 5
          %v10049 = vor.u32 %v10045, %v10048
          %v10050 = vrot.slane %v10049, 4
          %v10052 = vshll.u32 %v10011, 16
          %v10054 = vrot.slane %v10052, 5
          %v10055 = vsel %vm5530, %v10050, %v10054
          %v10057 = vshrl.u32 %v10012, 16
          %v10059 = vrot.slane %v10057, 4
          %v10060 = vshll.u32 %v10012, 16
          %v10062 = vrot.slane %v10060, 5
          %v10063 = vor.u32 %v10059, %v10062
          %v10064 = vrot.slane %v10063, 4
          %v10066 = vshll.u32 %v10013, 16
          %v10068 = vrot.slane %v10066, 5
          %v10069 = vsel %vm5530, %v10064, %v10068
          %v10071 = vshrl.u32 %v10014, 16
          %v10073 = vrot.slane %v10071, 4
          %v10074 = vshll.u32 %v10014, 16
          %v10076 = vrot.slane %v10074, 5
          %v10077 = vor.u32 %v10073, %v10076
          %v10078 = vrot.slane %v10077, 4
          %v10080 = vshll.u32 %v10015, 16
          %v10082 = vrot.slane %v10080, 5
          %v10083 = vsel %vm5530, %v10078, %v10082
          %v10085 = vshrl.u32 %v10016, 16
          %v10087 = vrot.slane %v10085, 4
          %v10088 = vshll.u32 %v10016, 16
          %v10090 = vrot.slane %v10088, 5
          %v10091 = vor.u32 %v10087, %v10090
          %v10092 = vrot.slane %v10091, 4
          %v10094 = vshll.u32 %v10017, 16
          %v10096 = vrot.slane %v10094, 5
          %v10097 = vsel %vm5530, %v10092, %v10096
          %v10099 = vshrl.u32 %v10018, 16
          %v10101 = vrot.slane %v10099, 4
          %v10102 = vshll.u32 %v10018, 16
          %v10104 = vrot.slane %v10102, 5
          %v10105 = vor.u32 %v10101, %v10104
          %v10106 = vrot.slane %v10105, 4
          %v10108 = vshll.u32 %v10019, 16
          %v10110 = vrot.slane %v10108, 5
          %v10111 = vsel %vm5530, %v10106, %v10110
          %v10113 = vshrl.u32 %v10020, 16
          %v10115 = vrot.slane %v10113, 4
          %v10116 = vshll.u32 %v10020, 16
          %v10118 = vrot.slane %v10116, 5
          %v10119 = vor.u32 %v10115, %v10118
          %v10120 = vrot.slane %v10119, 4
          %v10122 = vshll.u32 %v10021, 16
          %v10124 = vrot.slane %v10122, 5
          %v10125 = vsel %vm5530, %v10120, %v10124
          %v10127 = vshrl.u32 %v10022, 16
          %v10129 = vrot.slane %v10127, 4
          %v10130 = vshll.u32 %v10022, 16
          %v10132 = vrot.slane %v10130, 5
          %v10133 = vor.u32 %v10129, %v10132
          %v10134 = vrot.slane %v10133, 4
          %v10136 = vshll.u32 %v10023, 16
          %v10138 = vrot.slane %v10136, 5
          %v10139 = vsel %vm5530, %v10134, %v10138
          %v10141 = vshrl.u32 %v10024, 16
          %v10143 = vrot.slane %v10141, 4
          %v10144 = vshll.u32 %v10024, 16
          %v10146 = vrot.slane %v10144, 5
          %v10147 = vor.u32 %v10143, %v10146
          %v10148 = vrot.slane %v10147, 4
          %v10150 = vshll.u32 %v10025, 16
          %v10152 = vrot.slane %v10150, 5
          %v10153 = vsel %vm5530, %v10148, %v10152
          %v10155 = vshrl.u32 %v10026, 16
          %v10157 = vrot.slane %v10155, 4
          %v10158 = vshll.u32 %v10026, 16
          %v10160 = vrot.slane %v10158, 5
          %v10161 = vor.u32 %v10157, %v10160
          %v10162 = vrot.slane %v10161, 4
          %v10164 = vshll.u32 %v10027, 16
          %v10166 = vrot.slane %v10164, 5
          %v10167 = vsel %vm5530, %v10162, %v10166
          %v10169 = vshrl.u32 %v10028, 16
          %v10171 = vrot.slane %v10169, 4
          %v10172 = vshll.u32 %v10028, 16
          %v10174 = vrot.slane %v10172, 5
          %v10175 = vor.u32 %v10171, %v10174
          %v10176 = vrot.slane %v10175, 4
          %v10178 = vshll.u32 %v10029, 16
          %v10180 = vrot.slane %v10178, 5
          %v10181 = vsel %vm5530, %v10176, %v10180
          %v10183 = vshrl.u32 %v10030, 16
          %v10185 = vrot.slane %v10183, 4
          %v10186 = vshll.u32 %v10030, 16
          %v10188 = vrot.slane %v10186, 5
          %v10189 = vor.u32 %v10185, %v10188
          %v10190 = vrot.slane %v10189, 4
          %v10192 = vshll.u32 %v10031, 16
          %v10194 = vrot.slane %v10192, 5
          %v10195 = vsel %vm5530, %v10190, %v10194
          %v10197 = vshrl.u32 %v10032, 16
          %v10199 = vrot.slane %v10197, 4
          %v10200 = vshll.u32 %v10032, 16
          %v10202 = vrot.slane %v10200, 5
          %v10203 = vor.u32 %v10199, %v10202
          %v10204 = vrot.slane %v10203, 4
          %v10206 = vshll.u32 %v10033, 16
          %v10208 = vrot.slane %v10206, 5
          %v10209 = vsel %vm5530, %v10204, %v10208
          %v10211 = vshrl.u32 %v10034, 16
          %v10213 = vrot.slane %v10211, 4
          %v10214 = vshll.u32 %v10034, 16
          %v10216 = vrot.slane %v10214, 5
          %v10217 = vor.u32 %v10213, %v10216
          %v10218 = vrot.slane %v10217, 4
          %v10220 = vshll.u32 %v10035, 16
          %v10222 = vrot.slane %v10220, 5
          %v10223 = vsel %vm5530, %v10218, %v10222
          %v10225 = vshrl.u32 %v10036, 16
          %v10227 = vrot.slane %v10225, 4
          %v10228 = vshll.u32 %v10036, 16
          %v10230 = vrot.slane %v10228, 5
          %v10231 = vor.u32 %v10227, %v10230
          %v10232 = vrot.slane %v10231, 4
          %v10234 = vshll.u32 %v10037, 16
          %v10236 = vrot.slane %v10234, 5
          %v10237 = vsel %vm5530, %v10232, %v10236
          %v10239 = vshrl.u32 %v10038, 16
          %v10241 = vrot.slane %v10239, 4
          %v10242 = vshll.u32 %v10038, 16
          %v10244 = vrot.slane %v10242, 5
          %v10245 = vor.u32 %v10241, %v10244
          %v10246 = vrot.slane %v10245, 4
          %v10248 = vshll.u32 %v10039, 16
          %v10250 = vrot.slane %v10248, 5
          %v10251 = vsel %vm5530, %v10246, %v10250
          %v10253 = vshrl.u32 %v10040, 16
          %v10255 = vrot.slane %v10253, 4
          %v10256 = vshll.u32 %v10040, 16
          %v10258 = vrot.slane %v10256, 5
          %v10259 = vor.u32 %v10255, %v10258
          %v10260 = vrot.slane %v10259, 4
          %v10262 = vshll.u32 %v10041, 16
          %v10264 = vrot.slane %v10262, 5
          %v10265 = vsel %vm5530, %v10260, %v10264
          %v10266 = vunpack.c.l.b16 %v10055
          %v10267 = vunpack.c.l.b16 %v10069
          %v10268 = vunpack.c.l.b16 %v10083
          %v10269 = vunpack.c.l.b16 %v10097
          %v10270 = vunpack.c.l.b16 %v10111
          %v10271 = vunpack.c.l.b16 %v10125
          %v10272 = vunpack.c.l.b16 %v10139
          %v10273 = vunpack.c.l.b16 %v10153
          %v10274 = vunpack.c.l.b16 %v10167
          %v10275 = vunpack.c.l.b16 %v10181
          %v10276 = vunpack.c.l.b16 %v10195
          %v10277 = vunpack.c.l.b16 %v10209
          %v10278 = vunpack.c.l.b16 %v10223
          %v10279 = vunpack.c.l.b16 %v10237
          %v10280 = vunpack.c.l.b16 %v10251
          %v10281 = vunpack.c.l.b16 %v10265
          %v10282 = vpack.c.b16 %v10267, %v10266
          %v10283 = vpack.c.b16 %v10269, %v10268
          %v10284 = vpack.c.b16 %v10271, %v10270
          %v10285 = vpack.c.b16 %v10273, %v10272
          %v10286 = vpack.c.b16 %v10275, %v10274
          %v10287 = vpack.c.b16 %v10277, %v10276
          %v10288 = vpack.c.b16 %v10279, %v10278
          %v10289 = vpack.c.b16 %v10281, %v10280
          %10290 = vrot.lane.b32.xlu0 %v10282, 32
          %v10291 = vpop.permute.xlu0 %10290
          %10292 = vrot.lane.b32.xlu0 %v10283, 32
          %v10293 = vpop.permute.xlu0 %10292
          %10294 = vrot.lane.b32.xlu0 %v10284, 32
          %v10295 = vpop.permute.xlu0 %10294
          %10296 = vrot.lane.b32.xlu0 %v10285, 32
          %v10297 = vpop.permute.xlu0 %10296
          %10298 = vrot.lane.b32.xlu0 %v10286, 32
          %v10299 = vpop.permute.xlu0 %10298
          %10300 = vrot.lane.b32.xlu0 %v10287, 32
          %v10301 = vpop.permute.xlu0 %10300
          %10302 = vrot.lane.b32.xlu0 %v10288, 32
          %v10303 = vpop.permute.xlu0 %10302
          %10304 = vrot.lane.b32.xlu0 %v10289, 32
          %v10305 = vpop.permute.xlu0 %10304
          %10314 = vst.msk [vmem:[#allocation6 + $0x28] sm:$0xff] %vm5803, %v10291
          %10315 = vst.msk [vmem:[#allocation6 + $0x60] sm:$0xff] %vm5803, %v10293
          %10316 = vst.msk [vmem:[#allocation6 + $0x98] sm:$0xff] %vm5803, %v10295
          %10317 = vst.msk [vmem:[#allocation6 + $0xd0] sm:$0xff] %vm5803, %v10297
          %10318 = vst.msk [vmem:[#allocation6 + $0x108] sm:$0xff] %vm5803, %v10299
          %10319 = vst.msk [vmem:[#allocation6 + $0x140] sm:$0xff] %vm5803, %v10301
          %10320 = vst.msk [vmem:[#allocation6 + $0x178] sm:$0xff] %vm5803, %v10303
          %10321 = vst.msk [vmem:[#allocation6 + $0x1b0] sm:$0xff] %vm5803, %v10305
          %v10322 = vld [vmem:[%s9937] sm:$0xe]
          %v10323 = vld [vmem:[%s9937 + $0x4] sm:$0x1]
          %v10324 = vld [vmem:[%s9937 + $0x8] sm:$0xe]
          %v10325 = vld [vmem:[%s9937 + $0xc] sm:$0x1]
          %v10326 = vld [vmem:[%s9937 + $0x10] sm:$0xe]
          %v10327 = vld [vmem:[%s9937 + $0x14] sm:$0x1]
          %v10328 = vld [vmem:[%s9937 + $0x18] sm:$0xe]
          %v10329 = vld [vmem:[%s9937 + $0x1c] sm:$0x1]
          %v10330 = vld [vmem:[%s9937 + $0x20] sm:$0xe]
          %v10331 = vld [vmem:[%s9937 + $0x24] sm:$0x1]
          %v10332 = vld [vmem:[%s9937 + $0x28] sm:$0xe]
          %v10333 = vld [vmem:[%s9937 + $0x2c] sm:$0x1]
          %v10334 = vld [vmem:[%s9937 + $0x30] sm:$0xe]
          %v10335 = vld [vmem:[%s9937 + $0x34] sm:$0x1]
          %v10336 = vld [vmem:[%s9937 + $0x38] sm:$0xe]
          %v10337 = vld [vmem:[%s9937 + $0x3c] sm:$0x1]
          %v10338 = vld [vmem:[%s9937 + $0x60] sm:$0xe]
          %v10339 = vld [vmem:[%s9937 + $0x64] sm:$0x1]
          %v10340 = vld [vmem:[%s9937 + $0x68] sm:$0xe]
          %v10341 = vld [vmem:[%s9937 + $0x6c] sm:$0x1]
          %v10342 = vld [vmem:[%s9937 + $0x70] sm:$0xe]
          %v10343 = vld [vmem:[%s9937 + $0x74] sm:$0x1]
          %v10344 = vld [vmem:[%s9937 + $0x78] sm:$0xe]
          %v10345 = vld [vmem:[%s9937 + $0x7c] sm:$0x1]
          %v10346 = vld [vmem:[%s9937 + $0x80] sm:$0xe]
          %v10347 = vld [vmem:[%s9937 + $0x84] sm:$0x1]
          %v10348 = vld [vmem:[%s9937 + $0x88] sm:$0xe]
          %v10349 = vld [vmem:[%s9937 + $0x8c] sm:$0x1]
          %v10350 = vld [vmem:[%s9937 + $0x90] sm:$0xe]
          %v10351 = vld [vmem:[%s9937 + $0x94] sm:$0x1]
          %v10352 = vld [vmem:[%s9937 + $0x98] sm:$0xe]
          %v10353 = vld [vmem:[%s9937 + $0x9c] sm:$0x1]
          %v10386 = vrot.slane %v10322, 5
          %v10387 = vrot.slane %v10386, 4
          %v10388 = vrot.slane %v10323, 5
          %v10389 = vsel %vm5878, %v10387, %v10388
          %v10390 = vrot.slane %v10324, 5
          %v10391 = vrot.slane %v10390, 4
          %v10392 = vrot.slane %v10325, 5
          %v10393 = vsel %vm5878, %v10391, %v10392
          %v10394 = vrot.slane %v10326, 5
          %v10395 = vrot.slane %v10394, 4
          %v10396 = vrot.slane %v10327, 5
          %v10397 = vsel %vm5878, %v10395, %v10396
          %v10398 = vrot.slane %v10328, 5
          %v10399 = vrot.slane %v10398, 4
          %v10400 = vrot.slane %v10329, 5
          %v10401 = vsel %vm5878, %v10399, %v10400
          %v10402 = vrot.slane %v10330, 5
          %v10403 = vrot.slane %v10402, 4
          %v10404 = vrot.slane %v10331, 5
          %v10405 = vsel %vm5878, %v10403, %v10404
          %v10406 = vrot.slane %v10332, 5
          %v10407 = vrot.slane %v10406, 4
          %v10408 = vrot.slane %v10333, 5
          %v10409 = vsel %vm5878, %v10407, %v10408
          %v10410 = vrot.slane %v10334, 5
          %v10411 = vrot.slane %v10410, 4
          %v10412 = vrot.slane %v10335, 5
          %v10413 = vsel %vm5878, %v10411, %v10412
          %v10414 = vrot.slane %v10336, 5
          %v10415 = vrot.slane %v10414, 4
          %v10416 = vrot.slane %v10337, 5
          %v10417 = vsel %vm5878, %v10415, %v10416
          %v10418 = vrot.slane %v10338, 5
          %v10419 = vrot.slane %v10418, 4
          %v10420 = vrot.slane %v10339, 5
          %v10421 = vsel %vm5878, %v10419, %v10420
          %v10422 = vrot.slane %v10340, 5
          %v10423 = vrot.slane %v10422, 4
          %v10424 = vrot.slane %v10341, 5
          %v10425 = vsel %vm5878, %v10423, %v10424
          %v10426 = vrot.slane %v10342, 5
          %v10427 = vrot.slane %v10426, 4
          %v10428 = vrot.slane %v10343, 5
          %v10429 = vsel %vm5878, %v10427, %v10428
          %v10430 = vrot.slane %v10344, 5
          %v10431 = vrot.slane %v10430, 4
          %v10432 = vrot.slane %v10345, 5
          %v10433 = vsel %vm5878, %v10431, %v10432
          %v10434 = vrot.slane %v10346, 5
          %v10435 = vrot.slane %v10434, 4
          %v10436 = vrot.slane %v10347, 5
          %v10437 = vsel %vm5878, %v10435, %v10436
          %v10438 = vrot.slane %v10348, 5
          %v10439 = vrot.slane %v10438, 4
          %v10440 = vrot.slane %v10349, 5
          %v10441 = vsel %vm5878, %v10439, %v10440
          %v10442 = vrot.slane %v10350, 5
          %v10443 = vrot.slane %v10442, 4
          %v10444 = vrot.slane %v10351, 5
          %v10445 = vsel %vm5878, %v10443, %v10444
          %v10446 = vrot.slane %v10352, 5
          %v10447 = vrot.slane %v10446, 4
          %v10448 = vrot.slane %v10353, 5
          %v10449 = vsel %vm5878, %v10447, %v10448
          %v10450 = vunpack.c.l.b16 %v10389
          %v10451 = vunpack.c.l.b16 %v10393
          %v10452 = vunpack.c.l.b16 %v10397
          %v10453 = vunpack.c.l.b16 %v10401
          %v10454 = vunpack.c.l.b16 %v10405
          %v10455 = vunpack.c.l.b16 %v10409
          %v10456 = vunpack.c.l.b16 %v10413
          %v10457 = vunpack.c.l.b16 %v10417
          %v10458 = vunpack.c.l.b16 %v10421
          %v10459 = vunpack.c.l.b16 %v10425
          %v10460 = vunpack.c.l.b16 %v10429
          %v10461 = vunpack.c.l.b16 %v10433
          %v10462 = vunpack.c.l.b16 %v10437
          %v10463 = vunpack.c.l.b16 %v10441
          %v10464 = vunpack.c.l.b16 %v10445
          %v10465 = vunpack.c.l.b16 %v10449
          %v10466 = vpack.c.b16 %v10451, %v10450
          %v10467 = vpack.c.b16 %v10453, %v10452
          %v10468 = vpack.c.b16 %v10455, %v10454
          %v10469 = vpack.c.b16 %v10457, %v10456
          %v10470 = vpack.c.b16 %v10459, %v10458
          %v10471 = vpack.c.b16 %v10461, %v10460
          %v10472 = vpack.c.b16 %v10463, %v10462
          %v10473 = vpack.c.b16 %v10465, %v10464
          %10474 = vrot.lane.b32.xlu0 %v10466, 64
          %v10475 = vpop.permute.xlu0 %10474
          %10476 = vrot.lane.b32.xlu0 %v10467, 64
          %v10477 = vpop.permute.xlu0 %10476
          %10478 = vrot.lane.b32.xlu0 %v10468, 64
          %v10479 = vpop.permute.xlu0 %10478
          %10480 = vrot.lane.b32.xlu0 %v10469, 64
          %v10481 = vpop.permute.xlu0 %10480
          %10482 = vrot.lane.b32.xlu0 %v10470, 64
          %v10483 = vpop.permute.xlu0 %10482
          %10484 = vrot.lane.b32.xlu0 %v10471, 64
          %v10485 = vpop.permute.xlu0 %10484
          %10486 = vrot.lane.b32.xlu0 %v10472, 64
          %v10487 = vpop.permute.xlu0 %10486
          %10488 = vrot.lane.b32.xlu0 %v10473, 64
          %v10489 = vpop.permute.xlu0 %10488
          %10498 = vst.msk [vmem:[#allocation6 + $0x28] sm:$0xff] %vm5991, %v10475
          %10499 = vst.msk [vmem:[#allocation6 + $0x60] sm:$0xff] %vm5991, %v10477
          %10500 = vst.msk [vmem:[#allocation6 + $0x98] sm:$0xff] %vm5991, %v10479
          %10501 = vst.msk [vmem:[#allocation6 + $0xd0] sm:$0xff] %vm5991, %v10481
          %10502 = vst.msk [vmem:[#allocation6 + $0x108] sm:$0xff] %vm5991, %v10483
          %10503 = vst.msk [vmem:[#allocation6 + $0x140] sm:$0xff] %vm5991, %v10485
          %10504 = vst.msk [vmem:[#allocation6 + $0x178] sm:$0xff] %vm5991, %v10487
          %10505 = vst.msk [vmem:[#allocation6 + $0x1b0] sm:$0xff] %vm5991, %v10489
          %v10506 = vld [vmem:[%s9937] sm:$0xe]
          %v10507 = vld [vmem:[%s9937 + $0x4] sm:$0x3]
          %v10508 = vld [vmem:[%s9937 + $0x8] sm:$0xe]
          %v10509 = vld [vmem:[%s9937 + $0xc] sm:$0x3]
          %v10510 = vld [vmem:[%s9937 + $0x10] sm:$0xe]
          %v10511 = vld [vmem:[%s9937 + $0x14] sm:$0x3]
          %v10512 = vld [vmem:[%s9937 + $0x18] sm:$0xe]
          %v10513 = vld [vmem:[%s9937 + $0x1c] sm:$0x3]
          %v10514 = vld [vmem:[%s9937 + $0x20] sm:$0xe]
          %v10515 = vld [vmem:[%s9937 + $0x24] sm:$0x3]
          %v10516 = vld [vmem:[%s9937 + $0x28] sm:$0xe]
          %v10517 = vld [vmem:[%s9937 + $0x2c] sm:$0x3]
          %v10518 = vld [vmem:[%s9937 + $0x30] sm:$0xe]
          %v10519 = vld [vmem:[%s9937 + $0x34] sm:$0x3]
          %v10520 = vld [vmem:[%s9937 + $0x38] sm:$0xe]
          %v10521 = vld [vmem:[%s9937 + $0x3c] sm:$0x3]
          %v10522 = vld [vmem:[%s9937 + $0x60] sm:$0xe]
          %v10523 = vld [vmem:[%s9937 + $0x64] sm:$0x3]
          %v10524 = vld [vmem:[%s9937 + $0x68] sm:$0xe]
          %v10525 = vld [vmem:[%s9937 + $0x6c] sm:$0x3]
          %v10526 = vld [vmem:[%s9937 + $0x70] sm:$0xe]
          %v10527 = vld [vmem:[%s9937 + $0x74] sm:$0x3]
          %v10528 = vld [vmem:[%s9937 + $0x78] sm:$0xe]
          %v10529 = vld [vmem:[%s9937 + $0x7c] sm:$0x3]
          %v10530 = vld [vmem:[%s9937 + $0x80] sm:$0xe]
          %v10531 = vld [vmem:[%s9937 + $0x84] sm:$0x3]
          %v10532 = vld [vmem:[%s9937 + $0x88] sm:$0xe]
          %v10533 = vld [vmem:[%s9937 + $0x8c] sm:$0x3]
          %v10534 = vld [vmem:[%s9937 + $0x90] sm:$0xe]
          %v10535 = vld [vmem:[%s9937 + $0x94] sm:$0x3]
          %v10536 = vld [vmem:[%s9937 + $0x98] sm:$0xe]
          %v10537 = vld [vmem:[%s9937 + $0x9c] sm:$0x3]
          %v10539 = vshrl.u32 %v10506, 16
          %v10541 = vrot.slane %v10539, 5
          %v10542 = vshll.u32 %v10506, 16
          %v10544 = vrot.slane %v10542, 6
          %v10545 = vor.u32 %v10541, %v10544
          %v10546 = vrot.slane %v10545, 4
          %v10548 = vshrl.u32 %v10507, 16
          %v10550 = vrot.slane %v10548, 5
          %v10551 = vshll.u32 %v10507, 16
          %v10553 = vrot.slane %v10551, 6
          %v10554 = vor.u32 %v10550, %v10553
          %v10555 = vsel %vm6034, %v10546, %v10554
          %v10557 = vshrl.u32 %v10508, 16
          %v10559 = vrot.slane %v10557, 5
          %v10560 = vshll.u32 %v10508, 16
          %v10562 = vrot.slane %v10560, 6
          %v10563 = vor.u32 %v10559, %v10562
          %v10564 = vrot.slane %v10563, 4
          %v10566 = vshrl.u32 %v10509, 16
          %v10568 = vrot.slane %v10566, 5
          %v10569 = vshll.u32 %v10509, 16
          %v10571 = vrot.slane %v10569, 6
          %v10572 = vor.u32 %v10568, %v10571
          %v10573 = vsel %vm6034, %v10564, %v10572
          %v10575 = vshrl.u32 %v10510, 16
          %v10577 = vrot.slane %v10575, 5
          %v10578 = vshll.u32 %v10510, 16
          %v10580 = vrot.slane %v10578, 6
          %v10581 = vor.u32 %v10577, %v10580
          %v10582 = vrot.slane %v10581, 4
          %v10584 = vshrl.u32 %v10511, 16
          %v10586 = vrot.slane %v10584, 5
          %v10587 = vshll.u32 %v10511, 16
          %v10589 = vrot.slane %v10587, 6
          %v10590 = vor.u32 %v10586, %v10589
          %v10591 = vsel %vm6034, %v10582, %v10590
          %v10593 = vshrl.u32 %v10512, 16
          %v10595 = vrot.slane %v10593, 5
          %v10596 = vshll.u32 %v10512, 16
          %v10598 = vrot.slane %v10596, 6
          %v10599 = vor.u32 %v10595, %v10598
          %v10600 = vrot.slane %v10599, 4
          %v10602 = vshrl.u32 %v10513, 16
          %v10604 = vrot.slane %v10602, 5
          %v10605 = vshll.u32 %v10513, 16
          %v10607 = vrot.slane %v10605, 6
          %v10608 = vor.u32 %v10604, %v10607
          %v10609 = vsel %vm6034, %v10600, %v10608
          %v10611 = vshrl.u32 %v10514, 16
          %v10613 = vrot.slane %v10611, 5
          %v10614 = vshll.u32 %v10514, 16
          %v10616 = vrot.slane %v10614, 6
          %v10617 = vor.u32 %v10613, %v10616
          %v10618 = vrot.slane %v10617, 4
          %v10620 = vshrl.u32 %v10515, 16
          %v10622 = vrot.slane %v10620, 5
          %v10623 = vshll.u32 %v10515, 16
          %v10625 = vrot.slane %v10623, 6
          %v10626 = vor.u32 %v10622, %v10625
          %v10627 = vsel %vm6034, %v10618, %v10626
          %v10629 = vshrl.u32 %v10516, 16
          %v10631 = vrot.slane %v10629, 5
          %v10632 = vshll.u32 %v10516, 16
          %v10634 = vrot.slane %v10632, 6
          %v10635 = vor.u32 %v10631, %v10634
          %v10636 = vrot.slane %v10635, 4
          %v10638 = vshrl.u32 %v10517, 16
          %v10640 = vrot.slane %v10638, 5
          %v10641 = vshll.u32 %v10517, 16
          %v10643 = vrot.slane %v10641, 6
          %v10644 = vor.u32 %v10640, %v10643
          %v10645 = vsel %vm6034, %v10636, %v10644
          %v10647 = vshrl.u32 %v10518, 16
          %v10649 = vrot.slane %v10647, 5
          %v10650 = vshll.u32 %v10518, 16
          %v10652 = vrot.slane %v10650, 6
          %v10653 = vor.u32 %v10649, %v10652
          %v10654 = vrot.slane %v10653, 4
          %v10656 = vshrl.u32 %v10519, 16
          %v10658 = vrot.slane %v10656, 5
          %v10659 = vshll.u32 %v10519, 16
          %v10661 = vrot.slane %v10659, 6
          %v10662 = vor.u32 %v10658, %v10661
          %v10663 = vsel %vm6034, %v10654, %v10662
          %v10665 = vshrl.u32 %v10520, 16
          %v10667 = vrot.slane %v10665, 5
          %v10668 = vshll.u32 %v10520, 16
          %v10670 = vrot.slane %v10668, 6
          %v10671 = vor.u32 %v10667, %v10670
          %v10672 = vrot.slane %v10671, 4
          %v10674 = vshrl.u32 %v10521, 16
          %v10676 = vrot.slane %v10674, 5
          %v10677 = vshll.u32 %v10521, 16
          %v10679 = vrot.slane %v10677, 6
          %v10680 = vor.u32 %v10676, %v10679
          %v10681 = vsel %vm6034, %v10672, %v10680
          %v10683 = vshrl.u32 %v10522, 16
          %v10685 = vrot.slane %v10683, 5
          %v10686 = vshll.u32 %v10522, 16
          %v10688 = vrot.slane %v10686, 6
          %v10689 = vor.u32 %v10685, %v10688
          %v10690 = vrot.slane %v10689, 4
          %v10692 = vshrl.u32 %v10523, 16
          %v10694 = vrot.slane %v10692, 5
          %v10695 = vshll.u32 %v10523, 16
          %v10697 = vrot.slane %v10695, 6
          %v10698 = vor.u32 %v10694, %v10697
          %v10699 = vsel %vm6034, %v10690, %v10698
          %v10701 = vshrl.u32 %v10524, 16
          %v10703 = vrot.slane %v10701, 5
          %v10704 = vshll.u32 %v10524, 16
          %v10706 = vrot.slane %v10704, 6
          %v10707 = vor.u32 %v10703, %v10706
          %v10708 = vrot.slane %v10707, 4
          %v10710 = vshrl.u32 %v10525, 16
          %v10712 = vrot.slane %v10710, 5
          %v10713 = vshll.u32 %v10525, 16
          %v10715 = vrot.slane %v10713, 6
          %v10716 = vor.u32 %v10712, %v10715
          %v10717 = vsel %vm6034, %v10708, %v10716
          %v10719 = vshrl.u32 %v10526, 16
          %v10721 = vrot.slane %v10719, 5
          %v10722 = vshll.u32 %v10526, 16
          %v10724 = vrot.slane %v10722, 6
          %v10725 = vor.u32 %v10721, %v10724
          %v10726 = vrot.slane %v10725, 4
          %v10728 = vshrl.u32 %v10527, 16
          %v10730 = vrot.slane %v10728, 5
          %v10731 = vshll.u32 %v10527, 16
          %v10733 = vrot.slane %v10731, 6
          %v10734 = vor.u32 %v10730, %v10733
          %v10735 = vsel %vm6034, %v10726, %v10734
          %v10737 = vshrl.u32 %v10528, 16
          %v10739 = vrot.slane %v10737, 5
          %v10740 = vshll.u32 %v10528, 16
          %v10742 = vrot.slane %v10740, 6
          %v10743 = vor.u32 %v10739, %v10742
          %v10744 = vrot.slane %v10743, 4
          %v10746 = vshrl.u32 %v10529, 16
          %v10748 = vrot.slane %v10746, 5
          %v10749 = vshll.u32 %v10529, 16
          %v10751 = vrot.slane %v10749, 6
          %v10752 = vor.u32 %v10748, %v10751
          %v10753 = vsel %vm6034, %v10744, %v10752
          %v10755 = vshrl.u32 %v10530, 16
          %v10757 = vrot.slane %v10755, 5
          %v10758 = vshll.u32 %v10530, 16
          %v10760 = vrot.slane %v10758, 6
          %v10761 = vor.u32 %v10757, %v10760
          %v10762 = vrot.slane %v10761, 4
          %v10764 = vshrl.u32 %v10531, 16
          %v10766 = vrot.slane %v10764, 5
          %v10767 = vshll.u32 %v10531, 16
          %v10769 = vrot.slane %v10767, 6
          %v10770 = vor.u32 %v10766, %v10769
          %v10771 = vsel %vm6034, %v10762, %v10770
          %v10773 = vshrl.u32 %v10532, 16
          %v10775 = vrot.slane %v10773, 5
          %v10776 = vshll.u32 %v10532, 16
          %v10778 = vrot.slane %v10776, 6
          %v10779 = vor.u32 %v10775, %v10778
          %v10780 = vrot.slane %v10779, 4
          %v10782 = vshrl.u32 %v10533, 16
          %v10784 = vrot.slane %v10782, 5
          %v10785 = vshll.u32 %v10533, 16
          %v10787 = vrot.slane %v10785, 6
          %v10788 = vor.u32 %v10784, %v10787
          %v10789 = vsel %vm6034, %v10780, %v10788
          %v10791 = vshrl.u32 %v10534, 16
          %v10793 = vrot.slane %v10791, 5
          %v10794 = vshll.u32 %v10534, 16
          %v10796 = vrot.slane %v10794, 6
          %v10797 = vor.u32 %v10793, %v10796
          %v10798 = vrot.slane %v10797, 4
          %v10800 = vshrl.u32 %v10535, 16
          %v10802 = vrot.slane %v10800, 5
          %v10803 = vshll.u32 %v10535, 16
          %v10805 = vrot.slane %v10803, 6
          %v10806 = vor.u32 %v10802, %v10805
          %v10807 = vsel %vm6034, %v10798, %v10806
          %v10809 = vshrl.u32 %v10536, 16
          %v10811 = vrot.slane %v10809, 5
          %v10812 = vshll.u32 %v10536, 16
          %v10814 = vrot.slane %v10812, 6
          %v10815 = vor.u32 %v10811, %v10814
          %v10816 = vrot.slane %v10815, 4
          %v10818 = vshrl.u32 %v10537, 16
          %v10820 = vrot.slane %v10818, 5
          %v10821 = vshll.u32 %v10537, 16
          %v10823 = vrot.slane %v10821, 6
          %v10824 = vor.u32 %v10820, %v10823
          %v10825 = vsel %vm6034, %v10816, %v10824
          %v10826 = vunpack.c.l.b16 %v10555
          %v10827 = vunpack.c.l.b16 %v10573
          %v10828 = vunpack.c.l.b16 %v10591
          %v10829 = vunpack.c.l.b16 %v10609
          %v10830 = vunpack.c.l.b16 %v10627
          %v10831 = vunpack.c.l.b16 %v10645
          %v10832 = vunpack.c.l.b16 %v10663
          %v10833 = vunpack.c.l.b16 %v10681
          %v10834 = vunpack.c.l.b16 %v10699
          %v10835 = vunpack.c.l.b16 %v10717
          %v10836 = vunpack.c.l.b16 %v10735
          %v10837 = vunpack.c.l.b16 %v10753
          %v10838 = vunpack.c.l.b16 %v10771
          %v10839 = vunpack.c.l.b16 %v10789
          %v10840 = vunpack.c.l.b16 %v10807
          %v10841 = vunpack.c.l.b16 %v10825
          %v10842 = vpack.c.b16 %v10827, %v10826
          %v10843 = vpack.c.b16 %v10829, %v10828
          %v10844 = vpack.c.b16 %v10831, %v10830
          %v10845 = vpack.c.b16 %v10833, %v10832
          %v10846 = vpack.c.b16 %v10835, %v10834
          %v10847 = vpack.c.b16 %v10837, %v10836
          %v10848 = vpack.c.b16 %v10839, %v10838
          %v10849 = vpack.c.b16 %v10841, %v10840
          %10850 = vrot.lane.b32.xlu0 %v10842, 96
          %v10851 = vpop.permute.xlu0 %10850
          %10852 = vrot.lane.b32.xlu0 %v10843, 96
          %v10853 = vpop.permute.xlu0 %10852
          %10854 = vrot.lane.b32.xlu0 %v10844, 96
          %v10855 = vpop.permute.xlu0 %10854
          %10856 = vrot.lane.b32.xlu0 %v10845, 96
          %v10857 = vpop.permute.xlu0 %10856
          %10858 = vrot.lane.b32.xlu0 %v10846, 96
          %v10859 = vpop.permute.xlu0 %10858
          %10860 = vrot.lane.b32.xlu0 %v10847, 96
          %v10861 = vpop.permute.xlu0 %10860
          %10862 = vrot.lane.b32.xlu0 %v10848, 96
          %v10863 = vpop.permute.xlu0 %10862
          %10864 = vrot.lane.b32.xlu0 %v10849, 96
          %v10865 = vpop.permute.xlu0 %10864
          %10874 = vst.msk [vmem:[#allocation6 + $0x28] sm:$0xff] %vm6371, %v10851
          %10875 = vst.msk [vmem:[#allocation6 + $0x60] sm:$0xff] %vm6371, %v10853
          %10876 = vst.msk [vmem:[#allocation6 + $0x98] sm:$0xff] %vm6371, %v10855
          %10877 = vst.msk [vmem:[#allocation6 + $0xd0] sm:$0xff] %vm6371, %v10857
          %10878 = vst.msk [vmem:[#allocation6 + $0x108] sm:$0xff] %vm6371, %v10859
          %10879 = vst.msk [vmem:[#allocation6 + $0x140] sm:$0xff] %vm6371, %v10861
          %10880 = vst.msk [vmem:[#allocation6 + $0x178] sm:$0xff] %vm6371, %v10863
          %10881 = vst.msk [vmem:[#allocation6 + $0x1b0] sm:$0xff] %vm6371, %v10865
          %v10882 = vld [vmem:[%s9937] sm:$0xc]
          %v10883 = vld [vmem:[%s9937 + $0x4] sm:$0x3]
          %v10884 = vld [vmem:[%s9937 + $0x8] sm:$0xc]
          %v10885 = vld [vmem:[%s9937 + $0xc] sm:$0x3]
          %v10886 = vld [vmem:[%s9937 + $0x10] sm:$0xc]
          %v10887 = vld [vmem:[%s9937 + $0x14] sm:$0x3]
          %v10888 = vld [vmem:[%s9937 + $0x18] sm:$0xc]
          %v10889 = vld [vmem:[%s9937 + $0x1c] sm:$0x3]
          %v10890 = vld [vmem:[%s9937 + $0x20] sm:$0xc]
          %v10891 = vld [vmem:[%s9937 + $0x24] sm:$0x3]
          %v10892 = vld [vmem:[%s9937 + $0x28] sm:$0xc]
          %v10893 = vld [vmem:[%s9937 + $0x2c] sm:$0x3]
          %v10894 = vld [vmem:[%s9937 + $0x30] sm:$0xc]
          %v10895 = vld [vmem:[%s9937 + $0x34] sm:$0x3]
          %v10896 = vld [vmem:[%s9937 + $0x38] sm:$0xc]
          %v10897 = vld [vmem:[%s9937 + $0x3c] sm:$0x3]
          %v10898 = vld [vmem:[%s9937 + $0x60] sm:$0xc]
          %v10899 = vld [vmem:[%s9937 + $0x64] sm:$0x3]
          %v10900 = vld [vmem:[%s9937 + $0x68] sm:$0xc]
          %v10901 = vld [vmem:[%s9937 + $0x6c] sm:$0x3]
          %v10902 = vld [vmem:[%s9937 + $0x70] sm:$0xc]
          %v10903 = vld [vmem:[%s9937 + $0x74] sm:$0x3]
          %v10904 = vld [vmem:[%s9937 + $0x78] sm:$0xc]
          %v10905 = vld [vmem:[%s9937 + $0x7c] sm:$0x3]
          %v10906 = vld [vmem:[%s9937 + $0x80] sm:$0xc]
          %v10907 = vld [vmem:[%s9937 + $0x84] sm:$0x3]
          %v10908 = vld [vmem:[%s9937 + $0x88] sm:$0xc]
          %v10909 = vld [vmem:[%s9937 + $0x8c] sm:$0x3]
          %v10910 = vld [vmem:[%s9937 + $0x90] sm:$0xc]
          %v10911 = vld [vmem:[%s9937 + $0x94] sm:$0x3]
          %v10912 = vld [vmem:[%s9937 + $0x98] sm:$0xc]
          %v10913 = vld [vmem:[%s9937 + $0x9c] sm:$0x3]
          %v10946 = vrot.slane %v10882, 6
          %v10947 = vrot.slane %v10946, 4
          %v10948 = vrot.slane %v10883, 6
          %v10949 = vsel %vm6446, %v10947, %v10948
          %v10950 = vrot.slane %v10884, 6
          %v10951 = vrot.slane %v10950, 4
          %v10952 = vrot.slane %v10885, 6
          %v10953 = vsel %vm6446, %v10951, %v10952
          %v10954 = vrot.slane %v10886, 6
          %v10955 = vrot.slane %v10954, 4
          %v10956 = vrot.slane %v10887, 6
          %v10957 = vsel %vm6446, %v10955, %v10956
          %v10958 = vrot.slane %v10888, 6
          %v10959 = vrot.slane %v10958, 4
          %v10960 = vrot.slane %v10889, 6
          %v10961 = vsel %vm6446, %v10959, %v10960
          %v10962 = vrot.slane %v10890, 6
          %v10963 = vrot.slane %v10962, 4
          %v10964 = vrot.slane %v10891, 6
          %v10965 = vsel %vm6446, %v10963, %v10964
          %v10966 = vrot.slane %v10892, 6
          %v10967 = vrot.slane %v10966, 4
          %v10968 = vrot.slane %v10893, 6
          %v10969 = vsel %vm6446, %v10967, %v10968
          %v10970 = vrot.slane %v10894, 6
          %v10971 = vrot.slane %v10970, 4
          %v10972 = vrot.slane %v10895, 6
          %v10973 = vsel %vm6446, %v10971, %v10972
          %v10974 = vrot.slane %v10896, 6
          %v10975 = vrot.slane %v10974, 4
          %v10976 = vrot.slane %v10897, 6
          %v10977 = vsel %vm6446, %v10975, %v10976
          %v10978 = vrot.slane %v10898, 6
          %v10979 = vrot.slane %v10978, 4
          %v10980 = vrot.slane %v10899, 6
          %v10981 = vsel %vm6446, %v10979, %v10980
          %v10982 = vrot.slane %v10900, 6
          %v10983 = vrot.slane %v10982, 4
          %v10984 = vrot.slane %v10901, 6
          %v10985 = vsel %vm6446, %v10983, %v10984
          %v10986 = vrot.slane %v10902, 6
          %v10987 = vrot.slane %v10986, 4
          %v10988 = vrot.slane %v10903, 6
          %v10989 = vsel %vm6446, %v10987, %v10988
          %v10990 = vrot.slane %v10904, 6
          %v10991 = vrot.slane %v10990, 4
          %v10992 = vrot.slane %v10905, 6
          %v10993 = vsel %vm6446, %v10991, %v10992
          %v10994 = vrot.slane %v10906, 6
          %v10995 = vrot.slane %v10994, 4
          %v10996 = vrot.slane %v10907, 6
          %v10997 = vsel %vm6446, %v10995, %v10996
          %v10998 = vrot.slane %v10908, 6
          %v10999 = vrot.slane %v10998, 4
          %v11000 = vrot.slane %v10909, 6
          %v11001 = vsel %vm6446, %v10999, %v11000
          %v11002 = vrot.slane %v10910, 6
          %v11003 = vrot.slane %v11002, 4
          %v11004 = vrot.slane %v10911, 6
          %v11005 = vsel %vm6446, %v11003, %v11004
          %v11006 = vrot.slane %v10912, 6
          %v11007 = vrot.slane %v11006, 4
          %v11008 = vrot.slane %v10913, 6
          %v11009 = vsel %vm6446, %v11007, %v11008
          %v11010 = vunpack.c.l.b16 %v10949
          %v11011 = vunpack.c.l.b16 %v10953
          %v11012 = vunpack.c.l.b16 %v10957
          %v11013 = vunpack.c.l.b16 %v10961
          %v11014 = vunpack.c.l.b16 %v10965
          %v11015 = vunpack.c.l.b16 %v10969
          %v11016 = vunpack.c.l.b16 %v10973
          %v11017 = vunpack.c.l.b16 %v10977
          %v11018 = vunpack.c.l.b16 %v10981
          %v11019 = vunpack.c.l.b16 %v10985
          %v11020 = vunpack.c.l.b16 %v10989
          %v11021 = vunpack.c.l.b16 %v10993
          %v11022 = vunpack.c.l.b16 %v10997
          %v11023 = vunpack.c.l.b16 %v11001
          %v11024 = vunpack.c.l.b16 %v11005
          %v11025 = vunpack.c.l.b16 %v11009
          %v11026 = vpack.c.b16 %v11011, %v11010
          %v11027 = vpack.c.b16 %v11013, %v11012
          %v11028 = vpack.c.b16 %v11015, %v11014
          %v11029 = vpack.c.b16 %v11017, %v11016
          %v11030 = vpack.c.b16 %v11019, %v11018
          %v11031 = vpack.c.b16 %v11021, %v11020
          %v11032 = vpack.c.b16 %v11023, %v11022
          %v11033 = vpack.c.b16 %v11025, %v11024
          %11042 = vst.msk [vmem:[#allocation6 + $0x30] sm:$0xff] %vm5487, %v11026
          %11043 = vst.msk [vmem:[#allocation6 + $0x68] sm:$0xff] %vm5487, %v11027
          %11044 = vst.msk [vmem:[#allocation6 + $0xa0] sm:$0xff] %vm5487, %v11028
          %11045 = vst.msk [vmem:[#allocation6 + $0xd8] sm:$0xff] %vm5487, %v11029
          %11046 = vst.msk [vmem:[#allocation6 + $0x110] sm:$0xff] %vm5487, %v11030
          %11047 = vst.msk [vmem:[#allocation6 + $0x148] sm:$0xff] %vm5487, %v11031
          %11048 = vst.msk [vmem:[#allocation6 + $0x180] sm:$0xff] %vm5487, %v11032
          %11049 = vst.msk [vmem:[#allocation6 + $0x1b8] sm:$0xff] %vm5487, %v11033
          %v11050 = vld [vmem:[#allocation6] sm:$0xff]
          %v11051 = vld [vmem:[#allocation6 + $0x8] sm:$0xff]
          %v11052 = vld [vmem:[#allocation6 + $0x10] sm:$0xff]
          %v11053 = vld [vmem:[#allocation6 + $0x18] sm:$0xff]
          %v11054 = vld [vmem:[#allocation6 + $0x20] sm:$0xff]
          %v11055 = vld [vmem:[#allocation6 + $0x28] sm:$0xff]
          %v11056 = vld [vmem:[#allocation6 + $0x30] sm:$0xff]
          %v11057 = vld [vmem:[#allocation6 + $0x38] sm:$0xff]
          %v11058 = vld [vmem:[#allocation6 + $0x40] sm:$0xff]
          %v11059 = vld [vmem:[#allocation6 + $0x48] sm:$0xff]
          %v11060 = vld [vmem:[#allocation6 + $0x50] sm:$0xff]
          %v11061 = vld [vmem:[#allocation6 + $0x58] sm:$0xff]
          %v11062 = vld [vmem:[#allocation6 + $0x60] sm:$0xff]
          %v11063 = vld [vmem:[#allocation6 + $0x68] sm:$0xff]
          %v11064 = vld [vmem:[#allocation6 + $0x70] sm:$0xff]
          %v11065 = vld [vmem:[#allocation6 + $0x78] sm:$0xff]
          %v11066 = vld [vmem:[#allocation6 + $0x80] sm:$0xff]
          %v11067 = vld [vmem:[#allocation6 + $0x88] sm:$0xff]
          %v11068 = vld [vmem:[#allocation6 + $0x90] sm:$0xff]
          %v11069 = vld [vmem:[#allocation6 + $0x98] sm:$0xff]
          %v11070 = vld [vmem:[#allocation6 + $0xa0] sm:$0xff]
          %v11071 = vld [vmem:[#allocation6 + $0xa8] sm:$0xff]
          %v11072 = vld [vmem:[#allocation6 + $0xb0] sm:$0xff]
          %v11073 = vld [vmem:[#allocation6 + $0xb8] sm:$0xff]
          %v11074 = vld [vmem:[#allocation6 + $0xc0] sm:$0xff]
          %v11075 = vld [vmem:[#allocation6 + $0xc8] sm:$0xff]
          %v11076 = vld [vmem:[#allocation6 + $0xd0] sm:$0xff]
          %v11077 = vld [vmem:[#allocation6 + $0xd8] sm:$0xff]
          %v11078 = vld [vmem:[#allocation6 + $0xe0] sm:$0xff]
          %v11079 = vld [vmem:[#allocation6 + $0xe8] sm:$0xff]
          %v11080 = vld [vmem:[#allocation6 + $0xf0] sm:$0xff]
          %v11081 = vld [vmem:[#allocation6 + $0xf8] sm:$0xff]
          %v11082 = vld [vmem:[#allocation6 + $0x100] sm:$0xff]
          %v11083 = vld [vmem:[#allocation6 + $0x108] sm:$0xff]
          %v11084 = vld [vmem:[#allocation6 + $0x110] sm:$0xff]
          %v11085 = vld [vmem:[#allocation6 + $0x118] sm:$0xff]
          %v11086 = vld [vmem:[#allocation6 + $0x120] sm:$0xff]
          %v11087 = vld [vmem:[#allocation6 + $0x128] sm:$0xff]
          %v11088 = vld [vmem:[#allocation6 + $0x130] sm:$0xff]
          %v11089 = vld [vmem:[#allocation6 + $0x138] sm:$0xff]
          %v11090 = vld [vmem:[#allocation6 + $0x140] sm:$0xff]
          %v11091 = vld [vmem:[#allocation6 + $0x148] sm:$0xff]
          %v11092 = vld [vmem:[#allocation6 + $0x150] sm:$0xff]
          %v11093 = vld [vmem:[#allocation6 + $0x158] sm:$0xff]
          %v11094 = vld [vmem:[#allocation6 + $0x160] sm:$0xff]
          %v11095 = vld [vmem:[#allocation6 + $0x168] sm:$0xff]
          %v11096 = vld [vmem:[#allocation6 + $0x170] sm:$0xff]
          %v11097 = vld [vmem:[#allocation6 + $0x178] sm:$0xff]
          %v11098 = vld [vmem:[#allocation6 + $0x180] sm:$0xff]
          %v11099 = vld [vmem:[#allocation6 + $0x188] sm:$0xff]
          %v11100 = vld [vmem:[#allocation6 + $0x190] sm:$0xff]
          %v11101 = vld [vmem:[#allocation6 + $0x198] sm:$0xff]
          %v11102 = vld [vmem:[#allocation6 + $0x1a0] sm:$0xff]
          %v11103 = vld [vmem:[#allocation6 + $0x1a8] sm:$0xff]
          %v11104 = vld [vmem:[#allocation6 + $0x1b0] sm:$0xff]
          %v11105 = vld [vmem:[#allocation6 + $0x1b8] sm:$0xff]
          %v11106 = vld [vmem:[%s5] sm:$0xff]
          %v11107 = vld [vmem:[%s5 + $0x8] sm:$0xff]
          %v11108 = vld [vmem:[%s5 + $0x10] sm:$0xff]
          %v11109 = vld [vmem:[%s5 + $0x18] sm:$0xff]
          %v11110 = vld [vmem:[%s5 + $0x20] sm:$0xff]
          %v11111 = vld [vmem:[%s5 + $0x28] sm:$0xff]
          %v11112 = vld [vmem:[%s5 + $0x30] sm:$0xff]
          %v11113 = vld [vmem:[%s5 + $0x38] sm:$0xff]
          %v11114 = vld [vmem:[%s5 + $0x40] sm:$0xff]
          %v11115 = vld [vmem:[%s5 + $0x48] sm:$0xff]
          %v11116 = vld [vmem:[%s5 + $0x50] sm:$0xff]
          %v11117 = vld [vmem:[%s5 + $0x58] sm:$0xff]
          %v11118 = vld [vmem:[%s5 + $0x60] sm:$0xff]
          %v11119 = vld [vmem:[%s5 + $0x68] sm:$0xff]
          %v11120 = vld [vmem:[%s5 + $0x70] sm:$0xff]
          %v11121 = vld [vmem:[%s5 + $0x78] sm:$0xff]
          %v11122 = vld [vmem:[%s5 + $0x80] sm:$0xff]
          %v11123 = vld [vmem:[%s5 + $0x88] sm:$0xff]
          %v11124 = vld [vmem:[%s5 + $0x90] sm:$0xff]
          %v11125 = vld [vmem:[%s5 + $0x98] sm:$0xff]
          %v11126 = vld [vmem:[%s5 + $0xa0] sm:$0xff]
          %v11127 = vld [vmem:[%s5 + $0xa8] sm:$0xff]
          %v11128 = vld [vmem:[%s5 + $0xb0] sm:$0xff]
          %v11129 = vld [vmem:[%s5 + $0xb8] sm:$0xff]
          %v11130 = vld [vmem:[%s5 + $0xc0] sm:$0xff]
          %v11131 = vld [vmem:[%s5 + $0xc8] sm:$0xff]
          %v11132 = vld [vmem:[%s5 + $0xd0] sm:$0xff]
          %v11133 = vld [vmem:[%s5 + $0xd8] sm:$0xff]
          %v11134 = vld [vmem:[%s5 + $0xe0] sm:$0xff]
          %v11135 = vld [vmem:[%s5 + $0xe8] sm:$0xff]
          %v11136 = vld [vmem:[%s5 + $0xf0] sm:$0xff]
          %v11137 = vld [vmem:[%s5 + $0xf8] sm:$0xff]
          %v11138 = vld [vmem:[%s5 + $0x100] sm:$0xff]
          %v11139 = vld [vmem:[%s5 + $0x108] sm:$0xff]
          %v11140 = vld [vmem:[%s5 + $0x110] sm:$0xff]
          %v11141 = vld [vmem:[%s5 + $0x118] sm:$0xff]
          %v11142 = vld [vmem:[%s5 + $0x120] sm:$0xff]
          %v11143 = vld [vmem:[%s5 + $0x128] sm:$0xff]
          %v11144 = vld [vmem:[%s5 + $0x130] sm:$0xff]
          %v11145 = vld [vmem:[%s5 + $0x138] sm:$0xff]
          %v11146 = vld [vmem:[%s5 + $0x140] sm:$0xff]
          %v11147 = vld [vmem:[%s5 + $0x148] sm:$0xff]
          %v11148 = vld [vmem:[%s5 + $0x150] sm:$0xff]
          %v11149 = vld [vmem:[%s5 + $0x158] sm:$0xff]
          %v11150 = vld [vmem:[%s5 + $0x160] sm:$0xff]
          %v11151 = vld [vmem:[%s5 + $0x168] sm:$0xff]
          %v11152 = vld [vmem:[%s5 + $0x170] sm:$0xff]
          %v11153 = vld [vmem:[%s5 + $0x178] sm:$0xff]
          %v11154 = vld [vmem:[%s5 + $0x180] sm:$0xff]
          %v11155 = vld [vmem:[%s5 + $0x188] sm:$0xff]
          %v11156 = vld [vmem:[%s5 + $0x190] sm:$0xff]
          %v11157 = vld [vmem:[%s5 + $0x198] sm:$0xff]
          %v11158 = vld [vmem:[%s5 + $0x1a0] sm:$0xff]
          %v11159 = vld [vmem:[%s5 + $0x1a8] sm:$0xff]
          %v11160 = vld [vmem:[%s5 + $0x1b0] sm:$0xff]
          %v11161 = vld [vmem:[%s5 + $0x1b8] sm:$0xff]
          %v11162 = vld [vmem:[%s5 + $0x1c0] sm:$0xff]
          %v11163 = vld [vmem:[%s5 + $0x1c8] sm:$0xff]
          %v11164 = vld [vmem:[%s5 + $0x1d0] sm:$0xff]
          %v11165 = vld [vmem:[%s5 + $0x1d8] sm:$0xff]
          %v11166 = vld [vmem:[%s5 + $0x1e0] sm:$0xff]
          %v11167 = vld [vmem:[%s5 + $0x1e8] sm:$0xff]
          %v11168 = vld [vmem:[%s5 + $0x1f0] sm:$0xff]
          %v11169 = vld [vmem:[%s5 + $0x1f8] sm:$0xff]
          %v11170 = vld [vmem:[%s5 + $0x200] sm:$0xff]
          %v11171 = vld [vmem:[%s5 + $0x208] sm:$0xff]
          %v11172 = vld [vmem:[%s5 + $0x210] sm:$0xff]
          %v11173 = vld [vmem:[%s5 + $0x218] sm:$0xff]
          %v11174 = vld [vmem:[%s5 + $0x220] sm:$0xff]
          %v11175 = vld [vmem:[%s5 + $0x228] sm:$0xff]
          %v11176 = vld [vmem:[%s5 + $0x230] sm:$0xff]
          %v11177 = vld [vmem:[%s5 + $0x238] sm:$0xff]
          %v11178 = vld [vmem:[%s5 + $0x240] sm:$0xff]
          %v11179 = vld [vmem:[%s5 + $0x248] sm:$0xff]
          %v11180 = vld [vmem:[%s5 + $0x250] sm:$0xff]
          %v11181 = vld [vmem:[%s5 + $0x258] sm:$0xff]
          %v11182 = vld [vmem:[%s5 + $0x260] sm:$0xff]
          %v11183 = vld [vmem:[%s5 + $0x268] sm:$0xff]
          %v11184 = vld [vmem:[%s5 + $0x270] sm:$0xff]
          %v11185 = vld [vmem:[%s5 + $0x278] sm:$0xff]
          %v11186 = vld [vmem:[%s5 + $0x280] sm:$0xff]
          %v11187 = vld [vmem:[%s5 + $0x288] sm:$0xff]
          %v11188 = vld [vmem:[%s5 + $0x290] sm:$0xff]
          %v11189 = vld [vmem:[%s5 + $0x298] sm:$0xff]
          %v11190 = vld [vmem:[%s5 + $0x2a0] sm:$0xff]
          %v11191 = vld [vmem:[%s5 + $0x2a8] sm:$0xff]
          %v11192 = vld [vmem:[%s5 + $0x2b0] sm:$0xff]
          %v11193 = vld [vmem:[%s5 + $0x2b8] sm:$0xff]
          %v11194 = vld [vmem:[%s5 + $0x2c0] sm:$0xff]
          %v11195 = vld [vmem:[%s5 + $0x2c8] sm:$0xff]
          %v11196 = vld [vmem:[%s5 + $0x2d0] sm:$0xff]
          %v11197 = vld [vmem:[%s5 + $0x2d8] sm:$0xff]
          %v11198 = vld [vmem:[%s5 + $0x2e0] sm:$0xff]
          %v11199 = vld [vmem:[%s5 + $0x2e8] sm:$0xff]
          %v11200 = vld [vmem:[%s5 + $0x2f0] sm:$0xff]
          %v11201 = vld [vmem:[%s5 + $0x2f8] sm:$0xff]
          %v11202 = vld [vmem:[%s5 + $0x300] sm:$0xff]
          %v11203 = vld [vmem:[%s5 + $0x308] sm:$0xff]
          %v11204 = vld [vmem:[%s5 + $0x310] sm:$0xff]
          %v11205 = vld [vmem:[%s5 + $0x318] sm:$0xff]
          %v11206 = vld [vmem:[%s6] sm:$0x3]
          %v11208 = vlaneseq
          %v11209 = vshrl.u32 %v11208, 7
          %v11210 = vsub.s32 0, %v11209
          %v11211 = vrot.slane %v11206, %v11210
          %v11212 = vlaneseq
          %v11213 = vshrl.u32 %v11212, 7
          %v11214 = vsub.s32 1, %v11213
          %v11215 = vrot.slane %v11206, %v11214
          %v11318 = vunpack.c.l.b16 %v11106
          %v11319 = vunpack.c.h.b16 %v11106
          %v11320 = vunpack.c.l.b16 %v11107
          %v11321 = vunpack.c.h.b16 %v11107
          %v11322 = vunpack.c.l.b16 %v11108
          %v11323 = vunpack.c.h.b16 %v11108
          %v11324 = vunpack.c.l.b16 %v11109
          %v11325 = vunpack.c.h.b16 %v11109
          %v11326 = vunpack.c.l.b16 %v11110
          %v11327 = vunpack.c.h.b16 %v11110
          %v11328 = vunpack.c.l.b16 %v11111
          %v11329 = vunpack.c.h.b16 %v11111
          %v11330 = vunpack.c.l.b16 %v11112
          %v11331 = vunpack.c.h.b16 %v11112
          %v11332 = vunpack.c.l.b16 %v11113
          %v11333 = vunpack.c.h.b16 %v11113
          %v11334 = vunpack.c.l.b16 %v11114
          %v11335 = vunpack.c.h.b16 %v11114
          %v11336 = vunpack.c.l.b16 %v11115
          %v11337 = vunpack.c.h.b16 %v11115
          %v11338 = vunpack.c.l.b16 %v11116
          %v11339 = vunpack.c.h.b16 %v11116
          %v11340 = vunpack.c.l.b16 %v11117
          %v11341 = vunpack.c.h.b16 %v11117
          %v11342 = vunpack.c.l.b16 %v11118
          %v11343 = vunpack.c.h.b16 %v11118
          %v11344 = vunpack.c.l.b16 %v11119
          %v11345 = vunpack.c.h.b16 %v11119
          %v11346 = vunpack.c.l.b16 %v11120
          %v11347 = vunpack.c.h.b16 %v11120
          %v11348 = vunpack.c.l.b16 %v11121
          %v11349 = vunpack.c.h.b16 %v11121
          %v11350 = vunpack.c.l.b16 %v11122
          %v11351 = vunpack.c.h.b16 %v11122
          %v11352 = vunpack.c.l.b16 %v11123
          %v11353 = vunpack.c.h.b16 %v11123
          %v11354 = vunpack.c.l.b16 %v11124
          %v11355 = vunpack.c.h.b16 %v11124
          %v11356 = vunpack.c.l.b16 %v11125
          %v11357 = vunpack.c.h.b16 %v11125
          %v11358 = vunpack.c.l.b16 %v11126
          %v11359 = vunpack.c.h.b16 %v11126
          %v11360 = vunpack.c.l.b16 %v11127
          %v11361 = vunpack.c.h.b16 %v11127
          %v11362 = vunpack.c.l.b16 %v11128
          %v11363 = vunpack.c.h.b16 %v11128
          %v11364 = vunpack.c.l.b16 %v11129
          %v11365 = vunpack.c.h.b16 %v11129
          %v11366 = vunpack.c.l.b16 %v11130
          %v11367 = vunpack.c.h.b16 %v11130
          %v11368 = vunpack.c.l.b16 %v11131
          %v11369 = vunpack.c.h.b16 %v11131
          %v11370 = vunpack.c.l.b16 %v11132
          %v11371 = vunpack.c.h.b16 %v11132
          %v11372 = vunpack.c.l.b16 %v11133
          %v11373 = vunpack.c.h.b16 %v11133
          %v11374 = vunpack.c.l.b16 %v11134
          %v11375 = vunpack.c.h.b16 %v11134
          %v11376 = vunpack.c.l.b16 %v11135
          %v11377 = vunpack.c.h.b16 %v11135
          %v11378 = vunpack.c.l.b16 %v11136
          %v11379 = vunpack.c.h.b16 %v11136
          %v11380 = vunpack.c.l.b16 %v11137
          %v11381 = vunpack.c.h.b16 %v11137
          %v11382 = vunpack.c.l.b16 %v11138
          %v11383 = vunpack.c.h.b16 %v11138
          %v11384 = vunpack.c.l.b16 %v11139
          %v11385 = vunpack.c.h.b16 %v11139
          %v11386 = vunpack.c.l.b16 %v11140
          %v11387 = vunpack.c.h.b16 %v11140
          %v11388 = vunpack.c.l.b16 %v11141
          %v11389 = vunpack.c.h.b16 %v11141
          %v11390 = vunpack.c.l.b16 %v11142
          %v11391 = vunpack.c.h.b16 %v11142
          %v11392 = vunpack.c.l.b16 %v11143
          %v11393 = vunpack.c.h.b16 %v11143
          %v11394 = vunpack.c.l.b16 %v11144
          %v11395 = vunpack.c.h.b16 %v11144
          %v11396 = vunpack.c.l.b16 %v11145
          %v11397 = vunpack.c.h.b16 %v11145
          %v11398 = vunpack.c.l.b16 %v11146
          %v11399 = vunpack.c.h.b16 %v11146
          %v11400 = vunpack.c.l.b16 %v11147
          %v11401 = vunpack.c.h.b16 %v11147
          %v11402 = vunpack.c.l.b16 %v11148
          %v11403 = vunpack.c.h.b16 %v11148
          %v11404 = vunpack.c.l.b16 %v11149
          %v11405 = vunpack.c.h.b16 %v11149
          %v11406 = vunpack.c.l.b16 %v11150
          %v11407 = vunpack.c.h.b16 %v11150
          %v11408 = vunpack.c.l.b16 %v11151
          %v11409 = vunpack.c.h.b16 %v11151
          %v11410 = vunpack.c.l.b16 %v11152
          %v11411 = vunpack.c.h.b16 %v11152
          %v11412 = vunpack.c.l.b16 %v11153
          %v11413 = vunpack.c.h.b16 %v11153
          %v11414 = vunpack.c.l.b16 %v11154
          %v11415 = vunpack.c.h.b16 %v11154
          %v11416 = vunpack.c.l.b16 %v11155
          %v11417 = vunpack.c.h.b16 %v11155
          %v11418 = vunpack.c.l.b16 %v11156
          %v11419 = vunpack.c.h.b16 %v11156
          %v11420 = vunpack.c.l.b16 %v11157
          %v11421 = vunpack.c.h.b16 %v11157
          %v11422 = vunpack.c.l.b16 %v11158
          %v11423 = vunpack.c.h.b16 %v11158
          %v11424 = vunpack.c.l.b16 %v11159
          %v11425 = vunpack.c.h.b16 %v11159
          %v11426 = vunpack.c.l.b16 %v11160
          %v11427 = vunpack.c.h.b16 %v11160
          %v11428 = vunpack.c.l.b16 %v11161
          %v11429 = vunpack.c.h.b16 %v11161
          %v11430 = vunpack.c.l.b16 %v11162
          %v11431 = vunpack.c.h.b16 %v11162
          %v11432 = vunpack.c.l.b16 %v11163
          %v11433 = vunpack.c.h.b16 %v11163
          %v11434 = vunpack.c.l.b16 %v11164
          %v11435 = vunpack.c.h.b16 %v11164
          %v11436 = vunpack.c.l.b16 %v11165
          %v11437 = vunpack.c.h.b16 %v11165
          %v11438 = vunpack.c.l.b16 %v11166
          %v11439 = vunpack.c.h.b16 %v11166
          %v11440 = vunpack.c.l.b16 %v11167
          %v11441 = vunpack.c.h.b16 %v11167
          %v11442 = vunpack.c.l.b16 %v11168
          %v11443 = vunpack.c.h.b16 %v11168
          %v11444 = vunpack.c.l.b16 %v11169
          %v11445 = vunpack.c.h.b16 %v11169
          %v11446 = vunpack.c.l.b16 %v11170
          %v11447 = vunpack.c.h.b16 %v11170
          %v11448 = vunpack.c.l.b16 %v11171
          %v11449 = vunpack.c.h.b16 %v11171
          %v11450 = vunpack.c.l.b16 %v11172
          %v11451 = vunpack.c.h.b16 %v11172
          %v11452 = vunpack.c.l.b16 %v11173
          %v11453 = vunpack.c.h.b16 %v11173
          %v11454 = vunpack.c.l.b16 %v11174
          %v11455 = vunpack.c.h.b16 %v11174
          %v11456 = vunpack.c.l.b16 %v11175
          %v11457 = vunpack.c.h.b16 %v11175
          %v11458 = vunpack.c.l.b16 %v11176
          %v11459 = vunpack.c.h.b16 %v11176
          %v11460 = vunpack.c.l.b16 %v11177
          %v11461 = vunpack.c.h.b16 %v11177
          %v11462 = vunpack.c.l.b16 %v11178
          %v11463 = vunpack.c.h.b16 %v11178
          %v11464 = vunpack.c.l.b16 %v11179
          %v11465 = vunpack.c.h.b16 %v11179
          %v11466 = vunpack.c.l.b16 %v11180
          %v11467 = vunpack.c.h.b16 %v11180
          %v11468 = vunpack.c.l.b16 %v11181
          %v11469 = vunpack.c.h.b16 %v11181
          %v11470 = vunpack.c.l.b16 %v11182
          %v11471 = vunpack.c.h.b16 %v11182
          %v11472 = vunpack.c.l.b16 %v11183
          %v11473 = vunpack.c.h.b16 %v11183
          %v11474 = vunpack.c.l.b16 %v11184
          %v11475 = vunpack.c.h.b16 %v11184
          %v11476 = vunpack.c.l.b16 %v11185
          %v11477 = vunpack.c.h.b16 %v11185
          %v11478 = vunpack.c.l.b16 %v11186
          %v11479 = vunpack.c.h.b16 %v11186
          %v11480 = vunpack.c.l.b16 %v11187
          %v11481 = vunpack.c.h.b16 %v11187
          %v11482 = vunpack.c.l.b16 %v11188
          %v11483 = vunpack.c.h.b16 %v11188
          %v11484 = vunpack.c.l.b16 %v11189
          %v11485 = vunpack.c.h.b16 %v11189
          %v11486 = vunpack.c.l.b16 %v11190
          %v11487 = vunpack.c.h.b16 %v11190
          %v11488 = vunpack.c.l.b16 %v11191
          %v11489 = vunpack.c.h.b16 %v11191
          %v11490 = vunpack.c.l.b16 %v11192
          %v11491 = vunpack.c.h.b16 %v11192
          %v11492 = vunpack.c.l.b16 %v11193
          %v11493 = vunpack.c.h.b16 %v11193
          %v11494 = vunpack.c.l.b16 %v11194
          %v11495 = vunpack.c.h.b16 %v11194
          %v11496 = vunpack.c.l.b16 %v11195
          %v11497 = vunpack.c.h.b16 %v11195
          %v11498 = vunpack.c.l.b16 %v11196
          %v11499 = vunpack.c.h.b16 %v11196
          %v11500 = vunpack.c.l.b16 %v11197
          %v11501 = vunpack.c.h.b16 %v11197
          %v11502 = vunpack.c.l.b16 %v11198
          %v11503 = vunpack.c.h.b16 %v11198
          %v11504 = vunpack.c.l.b16 %v11199
          %v11505 = vunpack.c.h.b16 %v11199
          %v11506 = vunpack.c.l.b16 %v11200
          %v11507 = vunpack.c.h.b16 %v11200
          %v11508 = vunpack.c.l.b16 %v11201
          %v11509 = vunpack.c.h.b16 %v11201
          %v11510 = vunpack.c.l.b16 %v11202
          %v11511 = vunpack.c.h.b16 %v11202
          %v11512 = vunpack.c.l.b16 %v11203
          %v11513 = vunpack.c.h.b16 %v11203
          %v11514 = vunpack.c.l.b16 %v11204
          %v11515 = vunpack.c.h.b16 %v11204
          %v11516 = vunpack.c.l.b16 %v11205
          %v11517 = vunpack.c.h.b16 %v11205
          %v11518 = vpack.c.b16 %v11320, %v11318
          %v11519 = vpack.c.b16 %v11321, %v11319
          %v11520 = vpack.c.b16 %v11324, %v11322
          %v11521 = vpack.c.b16 %v11325, %v11323
          %v11522 = vpack.c.b16 %v11328, %v11326
          %v11523 = vpack.c.b16 %v11329, %v11327
          %v11524 = vpack.c.b16 %v11332, %v11330
          %v11525 = vpack.c.b16 %v11333, %v11331
          %v11526 = vpack.c.b16 %v11336, %v11334
          %v11527 = vpack.c.b16 %v11337, %v11335
          %v11528 = vpack.c.b16 %v11340, %v11338
          %v11529 = vpack.c.b16 %v11341, %v11339
          %v11530 = vpack.c.b16 %v11344, %v11342
          %v11531 = vpack.c.b16 %v11345, %v11343
          %v11532 = vpack.c.b16 %v11348, %v11346
          %v11533 = vpack.c.b16 %v11349, %v11347
          %v11534 = vpack.c.b16 %v11352, %v11350
          %v11535 = vpack.c.b16 %v11353, %v11351
          %v11536 = vpack.c.b16 %v11356, %v11354
          %v11537 = vpack.c.b16 %v11357, %v11355
          %v11538 = vpack.c.b16 %v11360, %v11358
          %v11539 = vpack.c.b16 %v11361, %v11359
          %v11540 = vpack.c.b16 %v11364, %v11362
          %v11541 = vpack.c.b16 %v11365, %v11363
          %v11542 = vpack.c.b16 %v11368, %v11366
          %v11543 = vpack.c.b16 %v11369, %v11367
          %v11544 = vpack.c.b16 %v11372, %v11370
          %v11545 = vpack.c.b16 %v11373, %v11371
          %v11546 = vpack.c.b16 %v11376, %v11374
          %v11547 = vpack.c.b16 %v11377, %v11375
          %v11548 = vpack.c.b16 %v11380, %v11378
          %v11549 = vpack.c.b16 %v11381, %v11379
          %v11550 = vpack.c.b16 %v11384, %v11382
          %v11551 = vpack.c.b16 %v11385, %v11383
          %v11552 = vpack.c.b16 %v11388, %v11386
          %v11553 = vpack.c.b16 %v11389, %v11387
          %v11554 = vpack.c.b16 %v11392, %v11390
          %v11555 = vpack.c.b16 %v11393, %v11391
          %v11556 = vpack.c.b16 %v11396, %v11394
          %v11557 = vpack.c.b16 %v11397, %v11395
          %v11558 = vpack.c.b16 %v11400, %v11398
          %v11559 = vpack.c.b16 %v11401, %v11399
          %v11560 = vpack.c.b16 %v11404, %v11402
          %v11561 = vpack.c.b16 %v11405, %v11403
          %v11562 = vpack.c.b16 %v11408, %v11406
          %v11563 = vpack.c.b16 %v11409, %v11407
          %v11564 = vpack.c.b16 %v11412, %v11410
          %v11565 = vpack.c.b16 %v11413, %v11411
          %v11566 = vpack.c.b16 %v11416, %v11414
          %v11567 = vpack.c.b16 %v11417, %v11415
          %v11568 = vpack.c.b16 %v11420, %v11418
          %v11569 = vpack.c.b16 %v11421, %v11419
          %v11570 = vpack.c.b16 %v11424, %v11422
          %v11571 = vpack.c.b16 %v11425, %v11423
          %v11572 = vpack.c.b16 %v11428, %v11426
          %v11573 = vpack.c.b16 %v11429, %v11427
          %v11574 = vpack.c.b16 %v11432, %v11430
          %v11575 = vpack.c.b16 %v11433, %v11431
          %v11576 = vpack.c.b16 %v11436, %v11434
          %v11577 = vpack.c.b16 %v11437, %v11435
          %v11578 = vpack.c.b16 %v11440, %v11438
          %v11579 = vpack.c.b16 %v11441, %v11439
          %v11580 = vpack.c.b16 %v11444, %v11442
          %v11581 = vpack.c.b16 %v11445, %v11443
          %v11582 = vpack.c.b16 %v11448, %v11446
          %v11583 = vpack.c.b16 %v11449, %v11447
          %v11584 = vpack.c.b16 %v11452, %v11450
          %v11585 = vpack.c.b16 %v11453, %v11451
          %v11586 = vpack.c.b16 %v11456, %v11454
          %v11587 = vpack.c.b16 %v11457, %v11455
          %v11588 = vpack.c.b16 %v11460, %v11458
          %v11589 = vpack.c.b16 %v11461, %v11459
          %v11590 = vpack.c.b16 %v11464, %v11462
          %v11591 = vpack.c.b16 %v11465, %v11463
          %v11592 = vpack.c.b16 %v11468, %v11466
          %v11593 = vpack.c.b16 %v11469, %v11467
          %v11594 = vpack.c.b16 %v11472, %v11470
          %v11595 = vpack.c.b16 %v11473, %v11471
          %v11596 = vpack.c.b16 %v11476, %v11474
          %v11597 = vpack.c.b16 %v11477, %v11475
          %v11598 = vpack.c.b16 %v11480, %v11478
          %v11599 = vpack.c.b16 %v11481, %v11479
          %v11600 = vpack.c.b16 %v11484, %v11482
          %v11601 = vpack.c.b16 %v11485, %v11483
          %v11602 = vpack.c.b16 %v11488, %v11486
          %v11603 = vpack.c.b16 %v11489, %v11487
          %v11604 = vpack.c.b16 %v11492, %v11490
          %v11605 = vpack.c.b16 %v11493, %v11491
          %v11606 = vpack.c.b16 %v11496, %v11494
          %v11607 = vpack.c.b16 %v11497, %v11495
          %v11608 = vpack.c.b16 %v11500, %v11498
          %v11609 = vpack.c.b16 %v11501, %v11499
          %v11610 = vpack.c.b16 %v11504, %v11502
          %v11611 = vpack.c.b16 %v11505, %v11503
          %v11612 = vpack.c.b16 %v11508, %v11506
          %v11613 = vpack.c.b16 %v11509, %v11507
          %v11614 = vpack.c.b16 %v11512, %v11510
          %v11615 = vpack.c.b16 %v11513, %v11511
          %v11616 = vpack.c.b16 %v11516, %v11514
          %v11617 = vpack.c.b16 %v11517, %v11515
          %v11719 = vsel %vm5487, %v11056, 0
          %v11722 = vsel %vm5487, %v11063, 0
          %v11725 = vsel %vm5487, %v11070, 0
          %v11728 = vsel %vm5487, %v11077, 0
          %v11731 = vsel %vm5487, %v11084, 0
          %v11734 = vsel %vm5487, %v11091, 0
          %v11737 = vsel %vm5487, %v11098, 0
          %v11740 = vsel %vm5487, %v11105, 0
          %11742 = vmatprep.subr.bf16.mxu0 %v11519
          %11743 = vmatpush1.bf16.msra.mxu0 %v11518
          %11744 = vmatprep.subr.bf16.mxu0 %v11521
          %11745 = vmatpush1.bf16.msra.mxu0 %v11520
          %11746 = vmatprep.subr.bf16.mxu0 %v11523
          %11747 = vmatpush1.bf16.msra.mxu0 %v11522
          %11748 = vmatprep.subr.bf16.mxu0 %v11525
          %11749 = vmatpush1.bf16.msra.mxu0 %v11524
          %11750 = vmatprep.subr.bf16.mxu0 %v11527
          %11751 = vmatpush1.bf16.msra.mxu0 %v11526
          %11752 = vmatprep.subr.bf16.mxu0 %v11529
          %11753 = vmatpush1.bf16.msra.mxu0 %v11528
          %11754 = vmatprep.subr.bf16.mxu0 %v11531
          %11755 = vmatpush1.bf16.msra.mxu0 %v11530
          %11756 = vmatprep.subr.bf16.mxu0 %v11533
          %11757 = vmatpush1.bf16.msra.mxu0 %v11532
          %11758 = vmatprep.subr.bf16.mxu0 %v11535
          %11759 = vmatpush1.bf16.msra.mxu0 %v11534
          %11760 = vmatprep.subr.bf16.mxu0 %v11537
          %11761 = vmatpush1.bf16.msra.mxu0 %v11536
          %11762 = vmatprep.subr.bf16.mxu0 %v11539
          %11763 = vmatpush1.bf16.msra.mxu0 %v11538
          %11764 = vmatprep.subr.bf16.mxu0 %v11541
          %11765 = vmatpush1.bf16.msra.mxu0 %v11540
          %11766 = vmatprep.subr.bf16.mxu0 %v11543
          %11767 = vmatpush1.bf16.msra.mxu0 %v11542
          %11768 = vmatprep.subr.bf16.mxu0 %v11545
          %11769 = vmatpush1.bf16.msra.mxu0 %v11544
          %11770 = vmatprep.subr.bf16.mxu0 %v11547
          %11771 = vmatpush1.bf16.msra.mxu0 %v11546
          %11772 = vmatprep.subr.bf16.mxu0 %v11549
          %11773 = vmatpush1.bf16.msra.mxu0 %v11548
          %11774 = vmatprep.mubr.bf16.mxu0 %v11051
          %11775 = vmatmul.mubr.bf16.gmra.mrb[0].mxu0 %v11050
          %v11776 = vpop.f32.mrb[0].mxu0
          %v11777 = vadd.f32 %v11211, %v11776
          %v11778 = vpop.f32.mrb[0].mxu0
          %v11779 = vadd.f32 %v11215, %v11778
          %v11780 = vpop.f32.mrb[0].mxu0
          %v11781 = vadd.f32 %v11211, %v11780
          %v11782 = vpop.f32.mrb[0].mxu0
          %v11783 = vadd.f32 %v11215, %v11782
          %11784 = vmatprep.mubr.bf16.mxu0 %v11058
          %11785 = vmatmul.mubr.bf16.gmra.mrb[0].mxu0 %v11057
          %v11786 = vpop.f32.mrb[0].mxu0
          %v11787 = vadd.f32 %v11211, %v11786
          %v11788 = vpop.f32.mrb[0].mxu0
          %v11789 = vadd.f32 %v11215, %v11788
          %v11790 = vpop.f32.mrb[0].mxu0
          %v11791 = vadd.f32 %v11211, %v11790
          %v11792 = vpop.f32.mrb[0].mxu0
          %v11793 = vadd.f32 %v11215, %v11792
          %11794 = vmatprep.mubr.bf16.mxu0 %v11065
          %11795 = vmatmul.mubr.bf16.gmra.mrb[0].mxu0 %v11064
          %v11796 = vpop.f32.mrb[0].mxu0
          %v11797 = vadd.f32 %v11211, %v11796
          %v11798 = vpop.f32.mrb[0].mxu0
          %v11799 = vadd.f32 %v11215, %v11798
          %v11800 = vpop.f32.mrb[0].mxu0
          %v11801 = vadd.f32 %v11211, %v11800
          %v11802 = vpop.f32.mrb[0].mxu0
          %v11803 = vadd.f32 %v11215, %v11802
          %11804 = vmatprep.mubr.bf16.mxu0 %v11072
          %11805 = vmatmul.mubr.bf16.gmra.mrb[0].mxu0 %v11071
          %v11806 = vpop.f32.mrb[0].mxu0
          %v11807 = vadd.f32 %v11211, %v11806
          %v11808 = vpop.f32.mrb[0].mxu0
          %v11809 = vadd.f32 %v11215, %v11808
          %v11810 = vpop.f32.mrb[0].mxu0
          %v11811 = vadd.f32 %v11211, %v11810
          %v11812 = vpop.f32.mrb[0].mxu0
          %v11813 = vadd.f32 %v11215, %v11812
          %11814 = vmatprep.mubr.bf16.mxu0 %v11079
          %11815 = vmatmul.mubr.bf16.gmra.mrb[0].mxu0 %v11078
          %v11816 = vpop.f32.mrb[0].mxu0
          %v11817 = vadd.f32 %v11211, %v11816
          %v11818 = vpop.f32.mrb[0].mxu0
          %v11819 = vadd.f32 %v11215, %v11818
          %v11820 = vpop.f32.mrb[0].mxu0
          %v11821 = vadd.f32 %v11211, %v11820
          %v11822 = vpop.f32.mrb[0].mxu0
          %v11823 = vadd.f32 %v11215, %v11822
          %11824 = vmatprep.mubr.bf16.mxu0 %v11086
          %11825 = vmatmul.mubr.bf16.gmra.mrb[0].mxu0 %v11085
          %v11826 = vpop.f32.mrb[0].mxu0
          %v11827 = vadd.f32 %v11211, %v11826
          %v11828 = vpop.f32.mrb[0].mxu0
          %v11829 = vadd.f32 %v11215, %v11828
          %v11830 = vpop.f32.mrb[0].mxu0
          %v11831 = vadd.f32 %v11211, %v11830
          %v11832 = vpop.f32.mrb[0].mxu0
          %v11833 = vadd.f32 %v11215, %v11832
          %11834 = vmatprep.mubr.bf16.mxu0 %v11093
          %11835 = vmatmul.mubr.bf16.gmra.mrb[0].mxu0 %v11092
          %v11836 = vpop.f32.mrb[0].mxu0
          %v11837 = vadd.f32 %v11211, %v11836
          %v11838 = vpop.f32.mrb[0].mxu0
          %v11839 = vadd.f32 %v11215, %v11838
          %v11840 = vpop.f32.mrb[0].mxu0
          %v11841 = vadd.f32 %v11211, %v11840
          %v11842 = vpop.f32.mrb[0].mxu0
          %v11843 = vadd.f32 %v11215, %v11842
          %11844 = vmatprep.mubr.bf16.mxu0 %v11100
          %11845 = vmatmul.mubr.bf16.gmra.mrb[0].mxu0 %v11099
          %v11846 = vpop.f32.mrb[0].mxu0
          %v11847 = vadd.f32 %v11211, %v11846
          %v11848 = vpop.f32.mrb[0].mxu0
          %v11849 = vadd.f32 %v11215, %v11848
          %v11850 = vpop.f32.mrb[0].mxu0
          %v11851 = vadd.f32 %v11211, %v11850
          %v11852 = vpop.f32.mrb[0].mxu0
          %v11853 = vadd.f32 %v11215, %v11852
          %11854 = vdwg.mxu0
          %11855 = vmatprep.subr.bf16.mxu0 %v11551
          %11856 = vmatpush1.bf16.msra.mxu0 %v11550
          %11857 = vmatprep.subr.bf16.mxu0 %v11553
          %11858 = vmatpush1.bf16.msra.mxu0 %v11552
          %11859 = vmatprep.subr.bf16.mxu0 %v11555
          %11860 = vmatpush1.bf16.msra.mxu0 %v11554
          %11861 = vmatprep.subr.bf16.mxu0 %v11557
          %11862 = vmatpush1.bf16.msra.mxu0 %v11556
          %11863 = vmatprep.subr.bf16.mxu0 %v11559
          %11864 = vmatpush1.bf16.msra.mxu0 %v11558
          %11865 = vmatprep.subr.bf16.mxu0 %v11561
          %11866 = vmatpush1.bf16.msra.mxu0 %v11560
          %11867 = vmatprep.subr.bf16.mxu0 %v11563
          %11868 = vmatpush1.bf16.msra.mxu0 %v11562
          %11869 = vmatprep.subr.bf16.mxu0 %v11565
          %11870 = vmatpush1.bf16.msra.mxu0 %v11564
          %11871 = vmatprep.subr.bf16.mxu0 %v11567
          %11872 = vmatpush1.bf16.msra.mxu0 %v11566
          %11873 = vmatprep.subr.bf16.mxu0 %v11569
          %11874 = vmatpush1.bf16.msra.mxu0 %v11568
          %11875 = vmatprep.subr.bf16.mxu0 %v11571
          %11876 = vmatpush1.bf16.msra.mxu0 %v11570
          %11877 = vmatprep.subr.bf16.mxu0 %v11573
          %11878 = vmatpush1.bf16.msra.mxu0 %v11572
          %11879 = vmatprep.subr.bf16.mxu0 %v11575
          %11880 = vmatpush1.bf16.msra.mxu0 %v11574
          %11881 = vmatprep.subr.bf16.mxu0 %v11577
          %11882 = vmatpush1.bf16.msra.mxu0 %v11576
          %11883 = vmatprep.subr.bf16.mxu0 %v11579
          %11884 = vmatpush1.bf16.msra.mxu0 %v11578
          %11885 = vmatprep.subr.bf16.mxu0 %v11581
          %11886 = vmatpush1.bf16.msra.mxu0 %v11580
          %11887 = vmatprep.mubr.bf16.mxu0 %v11053
          %11888 = vmatmul.mubr.bf16.gmra.mrb[0].mxu0 %v11052
          %v11889 = vpop.f32.mrb[0].mxu0
          %v11890 = vadd.f32 %v11777, %v11889
          %v11891 = vpop.f32.mrb[0].mxu0
          %v11892 = vadd.f32 %v11779, %v11891
          %v11893 = vpop.f32.mrb[0].mxu0
          %v11894 = vadd.f32 %v11781, %v11893
          %v11895 = vpop.f32.mrb[0].mxu0
          %v11896 = vadd.f32 %v11783, %v11895
          %11897 = vmatprep.mubr.bf16.mxu0 %v11060
          %11898 = vmatmul.mubr.bf16.gmra.mrb[0].mxu0 %v11059
          %v11899 = vpop.f32.mrb[0].mxu0
          %v11900 = vadd.f32 %v11787, %v11899
          %v11901 = vpop.f32.mrb[0].mxu0
          %v11902 = vadd.f32 %v11789, %v11901
          %v11903 = vpop.f32.mrb[0].mxu0
          %v11904 = vadd.f32 %v11791, %v11903
          %v11905 = vpop.f32.mrb[0].mxu0
          %v11906 = vadd.f32 %v11793, %v11905
          %11907 = vmatprep.mubr.bf16.mxu0 %v11067
          %11908 = vmatmul.mubr.bf16.gmra.mrb[0].mxu0 %v11066
          %v11909 = vpop.f32.mrb[0].mxu0
          %v11910 = vadd.f32 %v11797, %v11909
          %v11911 = vpop.f32.mrb[0].mxu0
          %v11912 = vadd.f32 %v11799, %v11911
          %v11913 = vpop.f32.mrb[0].mxu0
          %v11914 = vadd.f32 %v11801, %v11913
          %v11915 = vpop.f32.mrb[0].mxu0
          %v11916 = vadd.f32 %v11803, %v11915
          %11917 = vmatprep.mubr.bf16.mxu0 %v11074
          %11918 = vmatmul.mubr.bf16.gmra.mrb[0].mxu0 %v11073
          %v11919 = vpop.f32.mrb[0].mxu0
          %v11920 = vadd.f32 %v11807, %v11919
          %v11921 = vpop.f32.mrb[0].mxu0
          %v11922 = vadd.f32 %v11809, %v11921
          %v11923 = vpop.f32.mrb[0].mxu0
          %v11924 = vadd.f32 %v11811, %v11923
          %v11925 = vpop.f32.mrb[0].mxu0
          %v11926 = vadd.f32 %v11813, %v11925
          %11927 = vmatprep.mubr.bf16.mxu0 %v11081
          %11928 = vmatmul.mubr.bf16.gmra.mrb[0].mxu0 %v11080
          %v11929 = vpop.f32.mrb[0].mxu0
          %v11930 = vadd.f32 %v11817, %v11929
          %v11931 = vpop.f32.mrb[0].mxu0
          %v11932 = vadd.f32 %v11819, %v11931
          %v11933 = vpop.f32.mrb[0].mxu0
          %v11934 = vadd.f32 %v11821, %v11933
          %v11935 = vpop.f32.mrb[0].mxu0
          %v11936 = vadd.f32 %v11823, %v11935
          %11937 = vmatprep.mubr.bf16.mxu0 %v11088
          %11938 = vmatmul.mubr.bf16.gmra.mrb[0].mxu0 %v11087
          %v11939 = vpop.f32.mrb[0].mxu0
          %v11940 = vadd.f32 %v11827, %v11939
          %v11941 = vpop.f32.mrb[0].mxu0
          %v11942 = vadd.f32 %v11829, %v11941
          %v11943 = vpop.f32.mrb[0].mxu0
          %v11944 = vadd.f32 %v11831, %v11943
          %v11945 = vpop.f32.mrb[0].mxu0
          %v11946 = vadd.f32 %v11833, %v11945
          %11947 = vmatprep.mubr.bf16.mxu0 %v11095
          %11948 = vmatmul.mubr.bf16.gmra.mrb[0].mxu0 %v11094
          %v11949 = vpop.f32.mrb[0].mxu0
          %v11950 = vadd.f32 %v11837, %v11949
          %v11951 = vpop.f32.mrb[0].mxu0
          %v11952 = vadd.f32 %v11839, %v11951
          %v11953 = vpop.f32.mrb[0].mxu0
          %v11954 = vadd.f32 %v11841, %v11953
          %v11955 = vpop.f32.mrb[0].mxu0
          %v11956 = vadd.f32 %v11843, %v11955
          %11957 = vmatprep.mubr.bf16.mxu0 %v11102
          %11958 = vmatmul.mubr.bf16.gmra.mrb[0].mxu0 %v11101
          %v11959 = vpop.f32.mrb[0].mxu0
          %v11960 = vadd.f32 %v11847, %v11959
          %v11961 = vpop.f32.mrb[0].mxu0
          %v11962 = vadd.f32 %v11849, %v11961
          %v11963 = vpop.f32.mrb[0].mxu0
          %v11964 = vadd.f32 %v11851, %v11963
          %v11965 = vpop.f32.mrb[0].mxu0
          %v11966 = vadd.f32 %v11853, %v11965
          %11967 = vdwg.mxu0
          %11968 = vmatprep.subr.bf16.mxu0 %v11583
          %11969 = vmatpush1.bf16.msra.mxu0 %v11582
          %11970 = vmatprep.subr.bf16.mxu0 %v11585
          %11971 = vmatpush1.bf16.msra.mxu0 %v11584
          %11972 = vmatprep.subr.bf16.mxu0 %v11587
          %11973 = vmatpush1.bf16.msra.mxu0 %v11586
          %11974 = vmatprep.subr.bf16.mxu0 %v11589
          %11975 = vmatpush1.bf16.msra.mxu0 %v11588
          %11976 = vmatprep.subr.bf16.mxu0 %v11591
          %11977 = vmatpush1.bf16.msra.mxu0 %v11590
          %11978 = vmatprep.subr.bf16.mxu0 %v11593
          %11979 = vmatpush1.bf16.msra.mxu0 %v11592
          %11980 = vmatprep.subr.bf16.mxu0 %v11595
          %11981 = vmatpush1.bf16.msra.mxu0 %v11594
          %11982 = vmatprep.subr.bf16.mxu0 %v11597
          %11983 = vmatpush1.bf16.msra.mxu0 %v11596
          %11984 = vmatprep.subr.bf16.mxu0 %v11599
          %11985 = vmatpush1.bf16.msra.mxu0 %v11598
          %11986 = vmatprep.subr.bf16.mxu0 %v11601
          %11987 = vmatpush1.bf16.msra.mxu0 %v11600
          %11988 = vmatprep.subr.bf16.mxu0 %v11603
          %11989 = vmatpush1.bf16.msra.mxu0 %v11602
          %11990 = vmatprep.subr.bf16.mxu0 %v11605
          %11991 = vmatpush1.bf16.msra.mxu0 %v11604
          %11992 = vmatprep.subr.bf16.mxu0 %v11607
          %11993 = vmatpush1.bf16.msra.mxu0 %v11606
          %11994 = vmatprep.subr.bf16.mxu0 %v11609
          %11995 = vmatpush1.bf16.msra.mxu0 %v11608
          %11996 = vmatprep.subr.bf16.mxu0 %v11611
          %11997 = vmatpush1.bf16.msra.mxu0 %v11610
          %11998 = vmatprep.subr.bf16.mxu0 %v11613
          %11999 = vmatpush1.bf16.msra.mxu0 %v11612
          %12000 = vmatprep.mubr.bf16.mxu0 %v11055
          %12001 = vmatmul.mubr.bf16.gmra.mrb[0].mxu0 %v11054
          %v12002 = vpop.f32.mrb[0].mxu0
          %v12003 = vadd.f32 %v11890, %v12002
          %v12004 = vpop.f32.mrb[0].mxu0
          %v12005 = vadd.f32 %v11892, %v12004
          %v12006 = vpop.f32.mrb[0].mxu0
          %v12007 = vadd.f32 %v11894, %v12006
          %v12008 = vpop.f32.mrb[0].mxu0
          %v12009 = vadd.f32 %v11896, %v12008
          %12010 = vmatprep.mubr.bf16.mxu0 %v11062
          %12011 = vmatmul.mubr.bf16.gmra.mrb[0].mxu0 %v11061
          %v12012 = vpop.f32.mrb[0].mxu0
          %v12013 = vadd.f32 %v11900, %v12012
          %v12014 = vpop.f32.mrb[0].mxu0
          %v12015 = vadd.f32 %v11902, %v12014
          %v12016 = vpop.f32.mrb[0].mxu0
          %v12017 = vadd.f32 %v11904, %v12016
          %v12018 = vpop.f32.mrb[0].mxu0
          %v12019 = vadd.f32 %v11906, %v12018
          %12020 = vmatprep.mubr.bf16.mxu0 %v11069
          %12021 = vmatmul.mubr.bf16.gmra.mrb[0].mxu0 %v11068
          %v12022 = vpop.f32.mrb[0].mxu0
          %v12023 = vadd.f32 %v11910, %v12022
          %v12024 = vpop.f32.mrb[0].mxu0
          %v12025 = vadd.f32 %v11912, %v12024
          %v12026 = vpop.f32.mrb[0].mxu0
          %v12027 = vadd.f32 %v11914, %v12026
          %v12028 = vpop.f32.mrb[0].mxu0
          %v12029 = vadd.f32 %v11916, %v12028
          %12030 = vmatprep.mubr.bf16.mxu0 %v11076
          %12031 = vmatmul.mubr.bf16.gmra.mrb[0].mxu0 %v11075
          %v12032 = vpop.f32.mrb[0].mxu0
          %v12033 = vadd.f32 %v11920, %v12032
          %v12034 = vpop.f32.mrb[0].mxu0
          %v12035 = vadd.f32 %v11922, %v12034
          %v12036 = vpop.f32.mrb[0].mxu0
          %v12037 = vadd.f32 %v11924, %v12036
          %v12038 = vpop.f32.mrb[0].mxu0
          %v12039 = vadd.f32 %v11926, %v12038
          %12040 = vmatprep.mubr.bf16.mxu0 %v11083
          %12041 = vmatmul.mubr.bf16.gmra.mrb[0].mxu0 %v11082
          %v12042 = vpop.f32.mrb[0].mxu0
          %v12043 = vadd.f32 %v11930, %v12042
          %v12044 = vpop.f32.mrb[0].mxu0
          %v12045 = vadd.f32 %v11932, %v12044
          %v12046 = vpop.f32.mrb[0].mxu0
          %v12047 = vadd.f32 %v11934, %v12046
          %v12048 = vpop.f32.mrb[0].mxu0
          %v12049 = vadd.f32 %v11936, %v12048
          %12050 = vmatprep.mubr.bf16.mxu0 %v11090
          %12051 = vmatmul.mubr.bf16.gmra.mrb[0].mxu0 %v11089
          %v12052 = vpop.f32.mrb[0].mxu0
          %v12053 = vadd.f32 %v11940, %v12052
          %v12054 = vpop.f32.mrb[0].mxu0
          %v12055 = vadd.f32 %v11942, %v12054
          %v12056 = vpop.f32.mrb[0].mxu0
          %v12057 = vadd.f32 %v11944, %v12056
          %v12058 = vpop.f32.mrb[0].mxu0
          %v12059 = vadd.f32 %v11946, %v12058
          %12060 = vmatprep.mubr.bf16.mxu0 %v11097
          %12061 = vmatmul.mubr.bf16.gmra.mrb[0].mxu0 %v11096
          %v12062 = vpop.f32.mrb[0].mxu0
          %v12063 = vadd.f32 %v11950, %v12062
          %v12064 = vpop.f32.mrb[0].mxu0
          %v12065 = vadd.f32 %v11952, %v12064
          %v12066 = vpop.f32.mrb[0].mxu0
          %v12067 = vadd.f32 %v11954, %v12066
          %v12068 = vpop.f32.mrb[0].mxu0
          %v12069 = vadd.f32 %v11956, %v12068
          %12070 = vmatprep.mubr.bf16.mxu0 %v11104
          %12071 = vmatmul.mubr.bf16.gmra.mrb[0].mxu0 %v11103
          %v12072 = vpop.f32.mrb[0].mxu0
          %v12073 = vadd.f32 %v11960, %v12072
          %v12074 = vpop.f32.mrb[0].mxu0
          %v12075 = vadd.f32 %v11962, %v12074
          %v12076 = vpop.f32.mrb[0].mxu0
          %v12077 = vadd.f32 %v11964, %v12076
          %v12078 = vpop.f32.mrb[0].mxu0
          %v12079 = vadd.f32 %v11966, %v12078
          %12080 = vdwg.mxu0
          %12081 = vmatprep.subr.bf16.mxu0 %v11615
          %12082 = vmatpush1.bf16.msra.mxu0 %v11614
          %12083 = vmatprep.subr.bf16.mxu0 %v11617
          %12084 = vmatpush1.bf16.msra.mxu0 %v11616
          %12085 = vmatprep.subr.bf16.mxu0 0
          %12086 = vmatpush1.bf16.msra.mxu0 0
          %12087 = vmatprep.subr.bf16.mxu0 0
          %12088 = vmatpush1.bf16.msra.mxu0 0
          %12089 = vmatprep.subr.bf16.mxu0 0
          %12090 = vmatpush1.bf16.msra.mxu0 0
          %12091 = vmatprep.subr.bf16.mxu0 0
          %12092 = vmatpush1.bf16.msra.mxu0 0
          %12093 = vmatprep.subr.bf16.mxu0 0
          %12094 = vmatpush1.bf16.msra.mxu0 0
          %12095 = vmatprep.subr.bf16.mxu0 0
          %12096 = vmatpush1.bf16.msra.mxu0 0
          %12097 = vmatprep.subr.bf16.mxu0 0
          %12098 = vmatpush1.bf16.msra.mxu0 0
          %12099 = vmatprep.subr.bf16.mxu0 0
          %12100 = vmatpush1.bf16.msra.mxu0 0
          %12101 = vmatprep.subr.bf16.mxu0 0
          %12102 = vmatpush1.bf16.msra.mxu0 0
          %12103 = vmatprep.subr.bf16.mxu0 0
          %12104 = vmatpush1.bf16.msra.mxu0 0
          %12105 = vmatprep.subr.bf16.mxu0 0
          %12106 = vmatpush1.bf16.msra.mxu0 0
          %12107 = vmatprep.subr.bf16.mxu0 0
          %12108 = vmatpush1.bf16.msra.mxu0 0
          %12109 = vmatprep.subr.bf16.mxu0 0
          %12110 = vmatpush1.bf16.msra.mxu0 0
          %12111 = vmatprep.subr.bf16.mxu0 0
          %12112 = vmatpush1.bf16.msra.mxu0 0
          %12113 = vmatprep.mubr.bf16.mxu0 0
          %12114 = vmatmul.mubr.bf16.gmra.mrb[0].mxu0 %v11719
          %v12115 = vpop.f32.mrb[0].mxu0
          %v12116 = vadd.f32 %v12003, %v12115
          %v12117 = vpop.f32.mrb[0].mxu0
          %v12118 = vadd.f32 %v12005, %v12117
          %v12119 = vpop.f32.mrb[0].mxu0
          %v12120 = vadd.f32 %v12007, %v12119
          %v12121 = vpop.f32.mrb[0].mxu0
          %v12122 = vadd.f32 %v12009, %v12121
          %12123 = vmatprep.mubr.bf16.mxu0 0
          %12124 = vmatmul.mubr.bf16.gmra.mrb[0].mxu0 %v11722
          %v12125 = vpop.f32.mrb[0].mxu0
          %v12126 = vadd.f32 %v12013, %v12125
          %v12127 = vpop.f32.mrb[0].mxu0
          %v12128 = vadd.f32 %v12015, %v12127
          %v12129 = vpop.f32.mrb[0].mxu0
          %v12130 = vadd.f32 %v12017, %v12129
          %v12131 = vpop.f32.mrb[0].mxu0
          %v12132 = vadd.f32 %v12019, %v12131
          %12133 = vmatprep.mubr.bf16.mxu0 0
          %12134 = vmatmul.mubr.bf16.gmra.mrb[0].mxu0 %v11725
          %v12135 = vpop.f32.mrb[0].mxu0
          %v12136 = vadd.f32 %v12023, %v12135
          %v12137 = vpop.f32.mrb[0].mxu0
          %v12138 = vadd.f32 %v12025, %v12137
          %v12139 = vpop.f32.mrb[0].mxu0
          %v12140 = vadd.f32 %v12027, %v12139
          %v12141 = vpop.f32.mrb[0].mxu0
          %v12142 = vadd.f32 %v12029, %v12141
          %12143 = vmatprep.mubr.bf16.mxu0 0
          %12144 = vmatmul.mubr.bf16.gmra.mrb[0].mxu0 %v11728
          %v12145 = vpop.f32.mrb[0].mxu0
          %v12146 = vadd.f32 %v12033, %v12145
          %v12147 = vpop.f32.mrb[0].mxu0
          %v12148 = vadd.f32 %v12035, %v12147
          %v12149 = vpop.f32.mrb[0].mxu0
          %v12150 = vadd.f32 %v12037, %v12149
          %v12151 = vpop.f32.mrb[0].mxu0
          %v12152 = vadd.f32 %v12039, %v12151
          %12153 = vmatprep.mubr.bf16.mxu0 0
          %12154 = vmatmul.mubr.bf16.gmra.mrb[0].mxu0 %v11731
          %v12155 = vpop.f32.mrb[0].mxu0
          %v12156 = vadd.f32 %v12043, %v12155
          %v12157 = vpop.f32.mrb[0].mxu0
          %v12158 = vadd.f32 %v12045, %v12157
          %v12159 = vpop.f32.mrb[0].mxu0
          %v12160 = vadd.f32 %v12047, %v12159
          %v12161 = vpop.f32.mrb[0].mxu0
          %v12162 = vadd.f32 %v12049, %v12161
          %12163 = vmatprep.mubr.bf16.mxu0 0
          %12164 = vmatmul.mubr.bf16.gmra.mrb[0].mxu0 %v11734
          %v12165 = vpop.f32.mrb[0].mxu0
          %v12166 = vadd.f32 %v12053, %v12165
          %v12167 = vpop.f32.mrb[0].mxu0
          %v12168 = vadd.f32 %v12055, %v12167
          %v12169 = vpop.f32.mrb[0].mxu0
          %v12170 = vadd.f32 %v12057, %v12169
          %v12171 = vpop.f32.mrb[0].mxu0
          %v12172 = vadd.f32 %v12059, %v12171
          %12173 = vmatprep.mubr.bf16.mxu0 0
          %12174 = vmatmul.mubr.bf16.gmra.mrb[0].mxu0 %v11737
          %v12175 = vpop.f32.mrb[0].mxu0
          %v12176 = vadd.f32 %v12063, %v12175
          %v12177 = vpop.f32.mrb[0].mxu0
          %v12178 = vadd.f32 %v12065, %v12177
          %v12179 = vpop.f32.mrb[0].mxu0
          %v12180 = vadd.f32 %v12067, %v12179
          %v12181 = vpop.f32.mrb[0].mxu0
          %v12182 = vadd.f32 %v12069, %v12181
          %12183 = vmatprep.mubr.bf16.mxu0 0
          %12184 = vmatmul.mubr.bf16.gmra.mrb[0].mxu0 %v11740
          %v12185 = vpop.f32.mrb[0].mxu0
          %v12186 = vadd.f32 %v12073, %v12185
          %v12187 = vpop.f32.mrb[0].mxu0
          %v12188 = vadd.f32 %v12075, %v12187
          %v12189 = vpop.f32.mrb[0].mxu0
          %v12190 = vadd.f32 %v12077, %v12189
          %v12191 = vpop.f32.mrb[0].mxu0
          %v12192 = vadd.f32 %v12079, %v12191
          %12193 = vdwg.mxu0
          %12194 = vst [vmem:[#allocation7] sm:$0xff] %v12116
          %12195 = vst [vmem:[#allocation7 + $0x8] sm:$0xff] %v12118
          %12196 = vst [vmem:[#allocation7 + $0x10] sm:$0xff] %v12120
          %12197 = vst [vmem:[#allocation7 + $0x18] sm:$0xff] %v12122
          %12198 = vst [vmem:[#allocation7 + $0x20] sm:$0xff] %v12126
          %12199 = vst [vmem:[#allocation7 + $0x28] sm:$0xff] %v12128
          %12200 = vst [vmem:[#allocation7 + $0x30] sm:$0xff] %v12130
          %12201 = vst [vmem:[#allocation7 + $0x38] sm:$0xff] %v12132
          %12202 = vst [vmem:[#allocation7 + $0x40] sm:$0xff] %v12136
          %12203 = vst [vmem:[#allocation7 + $0x48] sm:$0xff] %v12138
          %12204 = vst [vmem:[#allocation7 + $0x50] sm:$0xff] %v12140
          %12205 = vst [vmem:[#allocation7 + $0x58] sm:$0xff] %v12142
          %12206 = vst [vmem:[#allocation7 + $0x60] sm:$0xff] %v12146
          %12207 = vst [vmem:[#allocation7 + $0x68] sm:$0xff] %v12148
          %12208 = vst [vmem:[#allocation7 + $0x70] sm:$0xff] %v12150
          %12209 = vst [vmem:[#allocation7 + $0x78] sm:$0xff] %v12152
          %12210 = vst [vmem:[#allocation7 + $0x80] sm:$0xff] %v12156
          %12211 = vst [vmem:[#allocation7 + $0x88] sm:$0xff] %v12158
          %12212 = vst [vmem:[#allocation7 + $0x90] sm:$0xff] %v12160
          %12213 = vst [vmem:[#allocation7 + $0x98] sm:$0xff] %v12162
          %12214 = vst [vmem:[#allocation7 + $0xa0] sm:$0xff] %v12166
          %12215 = vst [vmem:[#allocation7 + $0xa8] sm:$0xff] %v12168
          %12216 = vst [vmem:[#allocation7 + $0xb0] sm:$0xff] %v12170
          %12217 = vst [vmem:[#allocation7 + $0xb8] sm:$0xff] %v12172
          %12218 = vst [vmem:[#allocation7 + $0xc0] sm:$0xff] %v12176
          %12219 = vst [vmem:[#allocation7 + $0xc8] sm:$0xff] %v12178
          %12220 = vst [vmem:[#allocation7 + $0xd0] sm:$0xff] %v12180
          %12221 = vst [vmem:[#allocation7 + $0xd8] sm:$0xff] %v12182
          %12222 = vst [vmem:[#allocation7 + $0xe0] sm:$0xff] %v12186
          %12223 = vst [vmem:[#allocation7 + $0xe8] sm:$0xff] %v12188
          %12224 = vst [vmem:[#allocation7 + $0xf0] sm:$0xff] %v12190
          %12225 = vst [vmem:[#allocation7 + $0xf8] sm:$0xff] %v12192
        $region56: #{super_resolution_forward.1} parent=47 // pred_fallthru
          _
        // Predicated region
        $region57: #{super_resolution_forward.1} parent=47 // pred_check
          %p12226 = pneg %p184
        $region58: #{super_resolution_forward.1} parent=47 // pred_check_branch
          %12228 = sbr.rel (%p12226) target = $region60
        $region59: #{super_resolution_forward.1} parent=47 // pred_region
          %s12230 = ssub.s32 4096, 4096
          %12231 = vsyncadd [#allocation8], %s12230
          %s12232 = sshll.u32 [#allocation7], 4
          %s12233 = int_to_ptr.vmem [resolvable:$true] %s12232
          %12238 = dma.vmem_to_hbm [thread:$0]  %s12233, 4096, %s7, [#allocation8], 256, 256, 16
        $region60: #{super_resolution_forward.1} parent=47 // pred_fallthru
          _
        // Predicated region
        $region61: #{super_resolution_forward.1} parent=47 // pred_check
          %p12239 = pneg %p184
        $region62: #{super_resolution_forward.1} parent=47 // pred_check_branch
          %12241 = sbr.rel (%p12239) target = $region64
        $region63: #{super_resolution_forward.1} parent=47 // pred_region
          %12242 = dma.done [#allocation8], 4096
        $region64: #{super_resolution_forward.1} parent=47 // pred_fallthru
          _
      $region48: #{super_resolution_forward.1} parent=5 // pred_fallthru
        _
      %p12243 = scmp.le.s32.totalorder 2, %s14
      // Predicated region
      $region65: #{super_resolution_forward.1} parent=5 // pred_check
        %p12244 = pneg %p12243
      $region66: #{super_resolution_forward.1} parent=5 // pred_check_branch
        %12246 = sbr.rel (%p12244) target = $region68
      $region67: #{super_resolution_forward.1} parent=5 // pred_region
        %s12247 = ssub.s32 %s14, 2
      $region68: #{super_resolution_forward.1} parent=5 // pred_fallthru
        _
    $region6: #{super_resolution_forward.1} parent=1 // loop_footer
      %s18 = sadd.s32 1, %s14
    $region7: #{super_resolution_forward.1} parent=1 // loop_footer_branch
      %13 = sbr.rel target = $region3
    $region8: #{super_resolution_forward.1} parent=1 // loop_exit
      _
    %12248 = vsyncpa [#allocation8], 1
    %s12249 = scalar_lea.sflag [#allocation8], 1
    %12250 = vsyncpa %s12249, 1

</llo_original>
